<compile_context>
chip_gen: v7x
topology: tpu7x:2x2x1
jax: 0.10.0
libtpu: 0.0.40
codegen_flags: <defaults>
</compile_context>

<pallas_src>
import jax
import jax.numpy as jnp
from jax import lax
from jax.experimental import pallas as pl
from jax.experimental.pallas import tpu as pltpu

_HIGH = lax.Precision.HIGHEST  # reference model only


def _round_up(x, m):
    return (x + m - 1) // m * m


def _elu(y):
    # exp only on the non-positive branch -> no spurious overflow for large positives
    return jnp.where(y > 0, y, jnp.exp(jnp.minimum(y, 0.0)) - 1.0)


def _bn_fold(gamma, beta, mean, var, eps=1e-5):
    scale = gamma / jnp.sqrt(var + eps)
    bias = beta - mean * scale
    return scale, bias


# ----------------------------- fused Pallas kernel -----------------------------

def _make_fused_kernel(H, W, B, Cp, has_proj):
    """Fused ResNet block processing B images per grid step."""
    HW = H * W
    M = B * HW
    Hp, Wp = H + 2, W + 2

    def body(xcol_ref, xres_ref, w1_ref, b1_ref, w2_ref, wsc_ref, b2_ref,
             out_ref, h1p_ref, tap_ref):
        # conv1 + folded BN1 as ONE matmul (K = 9*Cin), then ELU -> bf16.
        y1 = jnp.dot(xcol_ref[...], w1_ref[...],
                     preferred_element_type=jnp.float32) + b1_ref[...]
        h1 = _elu(y1).astype(jnp.bfloat16).reshape(B, H, W, Cp)

        # Stage zero-padded h1 in VMEM.  Zero only the 1-pixel halo; the interior
        # is fully overwritten every step.
        zrow = jnp.zeros((1, Wp, Cp), jnp.bfloat16)
        zcol = jnp.zeros((Hp, 1, Cp), jnp.bfloat16)
        for b in range(B):
            h1p_ref[b, 0:1, :, :] = zrow
            h1p_ref[b, Hp - 1:Hp, :, :] = zrow
            h1p_ref[b, :, 0:1, :] = zcol
            h1p_ref[b, :, Wp - 1:Wp, :] = zcol
            h1p_ref[b, pl.ds(1, H), pl.ds(1, W), :] = h1[b]

        # Build the 9 shifted conv2 taps once into an (M, 9*Cp) bf16 scratch so
        # conv2 accumulates inside the MXU K dimension (one matmul, one pop).
        for b in range(B):
            for t in range(9):
                dy, dx = divmod(t, 3)
                tap_ref[pl.ds(b * HW, HW), pl.ds(t * Cp, Cp)] = (
                    h1p_ref[b, pl.ds(dy, H), pl.ds(dx, W), :].reshape(HW, Cp))

        # conv2 + folded BN2: one (M, 9*Cp) x (9*Cp, Cp) matmul.
        acc = jnp.dot(tap_ref[...], w2_ref[...], preferred_element_type=jnp.float32)

        # Shortcut: 1x1 projection conv (BN folded) or identity (direct VPU add).
        if has_proj:
            acc = acc + jnp.dot(xres_ref[...], wsc_ref[...],
                                preferred_element_type=jnp.float32)
        else:
            acc = acc + xres_ref[...].astype(jnp.float32)

        out_ref[...] = _elu(acc + b2_ref[...]).astype(out_ref.dtype)

    if has_proj:
        def kernel(xcol_ref, xres_ref, w1_ref, b1_ref, w2_ref, wsc_ref, b2_ref,
                   out_ref, h1p_ref, tap_ref):
            body(xcol_ref, xres_ref, w1_ref, b1_ref, w2_ref, wsc_ref, b2_ref,
                 out_ref, h1p_ref, tap_ref)
    else:
        def kernel(xcol_ref, xres_ref, w1_ref, b1_ref, w2_ref, b2_ref,
                   out_ref, h1p_ref, tap_ref):
            body(xcol_ref, xres_ref, w1_ref, b1_ref, w2_ref, None, b2_ref,
                 out_ref, h1p_ref, tap_ref)

    return kernel


# ------------------------------ pallas_call glue ------------------------------

def _fused_block(xcol, xres, w1, b1, w2, wsc, b2, *, H, W, B, Cp, has_proj):
    rows, k1 = xcol.shape
    HW = H * W
    M = B * HW
    steps = rows // M
    c_res = xres.shape[1]

    in_specs = [
        pl.BlockSpec((M, k1), lambda i: (i, 0)),        # conv1 im2col rows
        pl.BlockSpec((M, c_res), lambda i: (i, 0)),     # residual rows
        pl.BlockSpec((k1, Cp), lambda i: (0, 0)),       # conv1 weights (BN folded)
        pl.BlockSpec((1, Cp), lambda i: (0, 0)),        # BN1 bias
        pl.BlockSpec((9 * Cp, Cp), lambda i: (0, 0)),   # conv2 weights (BN folded)
    ]
    args = [xcol, xres, w1, b1, w2]
    if has_proj:
        in_specs.append(pl.BlockSpec((wsc.shape[0], Cp), lambda i: (0, 0)))
        args.append(wsc)
    in_specs.append(pl.BlockSpec((1, Cp), lambda i: (0, 0)))  # merged BN2(+BNs) bias
    args.append(b2)

    kernel = _make_fused_kernel(H, W, B, Cp, has_proj)
    return pl.pallas_call(
        kernel,
        out_shape=jax.ShapeDtypeStruct((rows, Cp), jnp.bfloat16),
        grid_spec=pltpu.PrefetchScalarGridSpec(
            num_scalar_prefetch=0,
            grid=(steps,),
            in_specs=in_specs,
            out_specs=pl.BlockSpec((M, Cp), lambda i: (i, 0)),
            scratch_shapes=[
                pltpu.VMEM((B, H + 2, W + 2, Cp), jnp.bfloat16),   # padded h1
                pltpu.VMEM((M, 9 * Cp), jnp.bfloat16),             # conv2 im2col taps
            ],
        ),
        compiler_params=pltpu.CompilerParams(dimension_semantics=("parallel",)),
    )(*args)


# ---------------------------- wrapper (plain JAX) -----------------------------

def _im2col3x3(x_nhwc, stride):
    n, h, w, c = x_nhwc.shape
    ho = (h + 2 - 3) // stride + 1
    wo = (w + 2 - 3) // stride + 1
    xp = jnp.pad(x_nhwc, ((0, 0), (1, 1), (1, 1), (0, 0)))
    taps = []
    for dy in range(3):
        for dx in range(3):
            taps.append(xp[:, dy:dy + stride * (ho - 1) + 1:stride,
                           dx:dx + stride * (wo - 1) + 1:stride, :])
    col = jnp.stack(taps, axis=3)                        # (N, Ho, Wo, 9, C)
    return col.reshape(n, ho * wo, 9 * c), ho, wo


def _pick_image_block(n, hw, cp):
    # Largest divisor of n with M = b*hw <= 2048 rows and tap scratch <= 8 MiB.
    best = 1
    for b in range(1, n + 1):
        if n % b:
            continue
        if b * hw <= 2048 and b * hw * 9 * cp * 2 <= (8 << 20):
            best = b
    return best


def resnet_block_forward(params, x_nchw, stride=1):
    x = jnp.transpose(x_nchw, (0, 2, 3, 1)).astype(jnp.float32)   # NCHW -> NHWC
    n, h, w, cin = x.shape
    cout = params["w1"].shape[0]
    cp = _round_up(cout, 128)                       # lane-dense matmul N / output dim

    s1, b1 = _bn_fold(*params["bn1"])
    s2, b2 = _bn_fold(*params["bn2"])

    # Conv weights OIHW -> (tap=ky*3+kx major, cin, cout), BN scale folded per cout.
    w1 = jnp.transpose(params["w1"], (2, 3, 1, 0)).reshape(9 * cin, cout) * s1
    w2 = jnp.transpose(params["w2"], (2, 3, 1, 0)).reshape(9, cout, cout) * s2

    has_proj = (stride != 1) or (cin != cout)
    if has_proj:
        ss, bs = _bn_fold(*params["bns"])
        wsc = jnp.transpose(params["ws"][:, :, 0, 0], (1, 0)) * ss   # (cin, cout)
        b_out = b2 + bs
    else:
        wsc = None
        b_out = b2

    # Pad output-channel dims to cp (zero weights/bias -> padded channels stay
    # exactly ELU(0)=0 and are sliced off); pad w2's K rows to cp (matches padded h1).
    pad_o = cp - cout
    w1p = jnp.pad(w1, ((0, 0), (0, pad_o))).astype(jnp.bfloat16)            # (9*cin, cp)
    w2p = jnp.pad(w2, ((0, 0), (0, pad_o), (0, pad_o)))
    w2p = w2p.reshape(9 * cp, cp).astype(jnp.bfloat16)                      # (9*cp, cp)
    b1p = jnp.pad(b1, ((0, pad_o),)).reshape(1, cp).astype(jnp.float32)
    bop = jnp.pad(b_out, ((0, pad_o),)).reshape(1, cp).astype(jnp.float32)

    # conv1 im2col (K = 9*cin, tiny) built once in the wrapper; works for any stride.
    xcol, ho, wo = _im2col3x3(x, stride)
    hw = ho * wo
    xcol = xcol.reshape(n * hw, 9 * cin).astype(jnp.bfloat16)
    xres = x[:, ::stride, ::stride, :].reshape(n * hw, cin)
    if has_proj:
        wscp = jnp.pad(wsc, ((0, 0), (0, pad_o))).astype(jnp.bfloat16)
        xres = xres.astype(jnp.bfloat16)
    else:
        wscp = None
        xres = jnp.pad(xres, ((0, 0), (0, pad_o))).astype(jnp.bfloat16)      # direct add

    b_blk = _pick_image_block(n, hw, cp)
    out = _fused_block(xcol, xres, w1p, b1p, w2p, wscp, bop,
                       H=ho, W=wo, B=b_blk, Cp=cp, has_proj=has_proj)

    out = out[:, :cout].reshape(n, ho, wo, cout).astype(jnp.float32)
    return jnp.transpose(out, (0, 3, 1, 2))                                 # -> NCHW


# --------------------------- params & reference model -------------------------

def init_params(key, in_channels, out_channels, stride=1):
    ks = jax.random.split(key, 6)

    def bn_init(k):
        k1, k2, k3, k4 = jax.random.split(k, 4)
        gamma = jax.random.uniform(k1, (out_channels,), jnp.float32, 0.5, 1.5)
        beta = 0.1 * jax.random.normal(k2, (out_channels,), jnp.float32)
        mean = 0.1 * jax.random.normal(k3, (out_channels,), jnp.float32)
        var = jax.random.uniform(k4, (out_channels,), jnp.float32, 0.5, 1.5)
        return (gamma, beta, mean, var)

    p = {
        "w1": 0.2 * jax.random.normal(ks[0], (out_channels, in_channels, 3, 3), jnp.float32),
        "w2": 0.2 * jax.random.normal(ks[1], (out_channels, out_channels, 3, 3), jnp.float32),
        "bn1": bn_init(ks[2]),
        "bn2": bn_init(ks[3]),
    }
    if stride != 1 or in_channels != out_channels:
        p["ws"] = 0.2 * jax.random.normal(ks[4], (out_channels, in_channels, 1, 1), jnp.float32)
        p["bns"] = bn_init(ks[5])
    return p


def ref_forward(params, x_nchw, stride=1):
    eps = 1e-5

    def conv(x, w, s, pad):
        return lax.conv_general_dilated(
            x, w, (s, s), ((pad, pad), (pad, pad)),
            dimension_numbers=("NCHW", "OIHW", "NCHW"), precision=_HIGH)

    def bn(x, bnp):
        g, b, m, v = bnp
        sc = g / jnp.sqrt(v + eps)
        return x * sc[None, :, None, None] + (b - m * sc)[None, :, None, None]

    def elu(x):
        return jnp.where(x > 0, x, jnp.exp(jnp.minimum(x, 0.0)) - 1.0)

    out = elu(bn(conv(x_nchw, params["w1"], stride, 1), params["bn1"]))
    out = bn(conv(out, params["w2"], 1, 1), params["bn2"])
    cin, cout = x_nchw.shape[1], params["w1"].shape[0]
    if stride != 1 or cin != cout:
        sc = bn(conv(x_nchw, params["ws"], stride, 0), params["bns"])
    else:
        sc = x_nchw
    return elu(out + sc)


# ------------------------------------ main ------------------------------------

if __name__ == "__main__":
    key = jax.random.PRNGKey(0)
    k_x, k_p = jax.random.split(key)

    N, Cin, H, W = 2, 4, 16, 16
    Cout, stride = 8, 1            # in_channels != out_channels -> projection shortcut

    x = jax.random.normal(k_x, (N, Cin, H, W), jnp.float32)
    params = init_params(k_p, Cin, Cout, stride)

    fwd = jax.jit(lambda p, xx: resnet_block_forward(p, xx, stride))
    out = jax.block_until_ready(fwd(params, x))

    ref = ref_forward(params, x, stride)
    assert out.shape == ref.shape == (N, Cout, H, W)

    # Kernel uses bf16 MXU inputs / bf16 output with f32 accumulation; reference is
    # f32 HIGHEST, so use a bf16-level mixed abs/rel tolerance.
    max_err = float(jnp.max(jnp.abs(out - ref)))
    ref_mag = float(jnp.max(jnp.abs(ref)))
    tol = 3e-2 + 3e-2 * ref_mag
    if max_err < tol:
        print("KERNEL_OK")
    else:
        raise SystemExit(f"mismatch vs reference: max abs err = {max_err} (tol {tol})")
</pallas_src>

<mosaic_0001>
module attributes {stable_mosaic.version = 11 : i64} {
  func.func @kernel(%arg0: i32, %arg1: memref<512x36xbf16, #tpu.memory_space<vmem>>, %arg2: memref<512x4xbf16, #tpu.memory_space<vmem>>, %arg3: memref<36x128xbf16, #tpu.memory_space<vmem>>, %arg4: memref<1x128xf32, #tpu.memory_space<vmem>>, %arg5: memref<1152x128xbf16, #tpu.memory_space<vmem>>, %arg6: memref<4x128xbf16, #tpu.memory_space<vmem>>, %arg7: memref<1x128xf32, #tpu.memory_space<vmem>>, %arg8: memref<512x128xbf16, #tpu.memory_space<vmem>>, %arg9: memref<2x18x18x128xbf16, #tpu.memory_space<vmem>>, %arg10: memref<512x1152xbf16, #tpu.memory_space<vmem>>) attributes {dimension_semantics = [#tpu.dimension_semantics<parallel>], iteration_bounds = array<i64: 1>, scalar_prefetch = 0 : i64, scratch_operands = 2 : i64, tpu.core_type = #tpu.core_type<tc>, window_params = [{transform_indices = @transform_0, window_bounds = array<i64: 512, 36>}, {transform_indices = @transform_1, window_bounds = array<i64: 512, 4>}, {pipeline_mode = #tpu.pipeline_mode<synchronous>, transform_indices = @transform_2, window_bounds = array<i64: 36, 128>}, {pipeline_mode = #tpu.pipeline_mode<synchronous>, transform_indices = @transform_3, window_bounds = array<i64: 1, 128>}, {pipeline_mode = #tpu.pipeline_mode<synchronous>, transform_indices = @transform_4, window_bounds = array<i64: 1152, 128>}, {pipeline_mode = #tpu.pipeline_mode<synchronous>, transform_indices = @transform_5, window_bounds = array<i64: 4, 128>}, {pipeline_mode = #tpu.pipeline_mode<synchronous>, transform_indices = @transform_6, window_bounds = array<i64: 1, 128>}, {transform_indices = @transform_7, window_bounds = array<i64: 512, 128>}]} {
    %c0 = arith.constant 0 : index
    %c0_0 = arith.constant 0 : index
    %0 = vector.load %arg1[%c0, %c0_0] : memref<512x36xbf16, #tpu.memory_space<vmem>>, vector<512x36xbf16>
    %c0_1 = arith.constant 0 : index
    %c0_2 = arith.constant 0 : index
    %1 = vector.load %arg3[%c0_1, %c0_2] : memref<36x128xbf16, #tpu.memory_space<vmem>>, vector<36x128xbf16>
    %cst = arith.constant dense<0.000000e+00> : vector<512x128xf32>
    %2 = tpu.matmul %0, %1, %cst {dimension_numbers = #tpu.dot_dimension_numbers<[1], [0], [0], [1], [0, 0, 1, 1], [], []>} : vector<512x36xbf16>, vector<36x128xbf16>, vector<512x128xf32> -> vector<512x128xf32>
    %c0_3 = arith.constant 0 : index
    %c0_4 = arith.constant 0 : index
    %3 = vector.load %arg4[%c0_3, %c0_4] : memref<1x128xf32, #tpu.memory_space<vmem>>, vector<1x128xf32>
    %4 = vector.broadcast %3 : vector<1x128xf32> to vector<512x128xf32>
    %5 = arith.addf %2, %4 : vector<512x128xf32>
    %cst_5 = arith.constant 0.000000e+00 : f32
    %6 = vector.broadcast %cst_5 : f32 to vector<512x128xf32>
    %7 = arith.cmpf ogt, %5, %6 : vector<512x128xf32>
    %cst_6 = arith.constant 0.000000e+00 : f32
    %8 = vector.broadcast %cst_6 : f32 to vector<512x128xf32>
    %9 = arith.minimumf %5, %8 : vector<512x128xf32>
    %10 = math.exp %9 : vector<512x128xf32>
    %cst_7 = arith.constant 1.000000e+00 : f32
    %11 = vector.broadcast %cst_7 : f32 to vector<512x128xf32>
    %12 = arith.subf %10, %11 : vector<512x128xf32>
    %13 = arith.select %7, %5, %12 : vector<512x128xi1>, vector<512x128xf32>
    %14 = arith.truncf %13 : vector<512x128xf32> to vector<512x128xbf16>
    %15 = vector.shape_cast %14 : vector<512x128xbf16> to vector<2x16x16x128xbf16>
    %cst_8 = arith.constant 0.000000e+00 : bf16
    %16 = vector.broadcast %cst_8 : bf16 to vector<1x18x128xbf16>
    %cst_9 = arith.constant 0.000000e+00 : bf16
    %17 = vector.broadcast %cst_9 : bf16 to vector<18x1x128xbf16>
    %c0_10 = arith.constant 0 : index
    %c0_11 = arith.constant 0 : index
    %c0_12 = arith.constant 0 : index
    %c0_13 = arith.constant 0 : index
    %18 = vector.load %arg9[%c0_10, %c0_11, %c0_12, %c0_13] : memref<2x18x18x128xbf16, #tpu.memory_space<vmem>>, vector<1x1x18x128xbf16>
    %19 = vector.shape_cast %18 : vector<1x1x18x128xbf16> to vector<1x18x128xbf16>
    %20 = vector.shape_cast %16 : vector<1x18x128xbf16> to vector<1x1x18x128xbf16>
    tpu.vector_store %arg9[%c0_10, %c0_11, %c0_12, %c0_13], %20 {strides = array<i32>} : memref<2x18x18x128xbf16, #tpu.memory_space<vmem>>, vector<1x1x18x128xbf16>,
    %c0_14 = arith.constant 0 : index
    %c17 = arith.constant 17 : index
    %c0_15 = arith.constant 0 : index
    %c0_16 = arith.constant 0 : index
    %21 = vector.load %arg9[%c0_14, %c17, %c0_15, %c0_16] : memref<2x18x18x128xbf16, #tpu.memory_space<vmem>>, vector<1x1x18x128xbf16>
    %22 = vector.shape_cast %21 : vector<1x1x18x128xbf16> to vector<1x18x128xbf16>
    %23 = vector.shape_cast %16 : vector<1x18x128xbf16> to vector<1x1x18x128xbf16>
    tpu.vector_store %arg9[%c0_14, %c17, %c0_15, %c0_16], %23 {strides = array<i32>} : memref<2x18x18x128xbf16, #tpu.memory_space<vmem>>, vector<1x1x18x128xbf16>,
    %c0_17 = arith.constant 0 : index
    %c0_18 = arith.constant 0 : index
    %c0_19 = arith.constant 0 : index
    %c0_20 = arith.constant 0 : index
    %24 = vector.load %arg9[%c0_17, %c0_18, %c0_19, %c0_20] : memref<2x18x18x128xbf16, #tpu.memory_space<vmem>>, vector<1x18x1x128xbf16>
    %25 = vector.shape_cast %24 : vector<1x18x1x128xbf16> to vector<18x1x128xbf16>
    %26 = vector.shape_cast %17 : vector<18x1x128xbf16> to vector<1x18x1x128xbf16>
    tpu.vector_store %arg9[%c0_17, %c0_18, %c0_19, %c0_20], %26 {strides = array<i32>} : memref<2x18x18x128xbf16, #tpu.memory_space<vmem>>, vector<1x18x1x128xbf16>,
    %c0_21 = arith.constant 0 : index
    %c0_22 = arith.constant 0 : index
    %c17_23 = arith.constant 17 : index
    %c0_24 = arith.constant 0 : index
    %27 = vector.load %arg9[%c0_21, %c0_22, %c17_23, %c0_24] : memref<2x18x18x128xbf16, #tpu.memory_space<vmem>>, vector<1x18x1x128xbf16>
    %28 = vector.shape_cast %27 : vector<1x18x1x128xbf16> to vector<18x1x128xbf16>
    %29 = vector.shape_cast %17 : vector<18x1x128xbf16> to vector<1x18x1x128xbf16>
    tpu.vector_store %arg9[%c0_21, %c0_22, %c17_23, %c0_24], %29 {strides = array<i32>} : memref<2x18x18x128xbf16, #tpu.memory_space<vmem>>, vector<1x18x1x128xbf16>,
    %30 = vector.extract_strided_slice %15 {offsets = [0, 0, 0, 0], sizes = [1, 16, 16, 128], strides = [1, 1, 1, 1]} : vector<2x16x16x128xbf16> to vector<1x16x16x128xbf16>
    %31 = vector.shape_cast %30 : vector<1x16x16x128xbf16> to vector<16x16x128xbf16>
    %c0_25 = arith.constant 0 : index
    %c1 = arith.constant 1 : index
    %c1_26 = arith.constant 1 : index
    %c0_27 = arith.constant 0 : index
    %32 = vector.load %arg9[%c0_25, %c1, %c1_26, %c0_27] : memref<2x18x18x128xbf16, #tpu.memory_space<vmem>>, vector<1x16x16x128xbf16>
    %33 = vector.shape_cast %32 : vector<1x16x16x128xbf16> to vector<16x16x128xbf16>
    %34 = vector.shape_cast %31 : vector<16x16x128xbf16> to vector<1x16x16x128xbf16>
    tpu.vector_store %arg9[%c0_25, %c1, %c1_26, %c0_27], %34 {strides = array<i32>} : memref<2x18x18x128xbf16, #tpu.memory_space<vmem>>, vector<1x16x16x128xbf16>,
    %c1_28 = arith.constant 1 : index
    %c0_29 = arith.constant 0 : index
    %c0_30 = arith.constant 0 : index
    %c0_31 = arith.constant 0 : index
    %35 = vector.load %arg9[%c1_28, %c0_29, %c0_30, %c0_31] : memref<2x18x18x128xbf16, #tpu.memory_space<vmem>>, vector<1x1x18x128xbf16>
    %36 = vector.shape_cast %35 : vector<1x1x18x128xbf16> to vector<1x18x128xbf16>
    %37 = vector.shape_cast %16 : vector<1x18x128xbf16> to vector<1x1x18x128xbf16>
    tpu.vector_store %arg9[%c1_28, %c0_29, %c0_30, %c0_31], %37 {strides = array<i32>} : memref<2x18x18x128xbf16, #tpu.memory_space<vmem>>, vector<1x1x18x128xbf16>,
    %c1_32 = arith.constant 1 : index
    %c17_33 = arith.constant 17 : index
    %c0_34 = arith.constant 0 : index
    %c0_35 = arith.constant 0 : index
    %38 = vector.load %arg9[%c1_32, %c17_33, %c0_34, %c0_35] : memref<2x18x18x128xbf16, #tpu.memory_space<vmem>>, vector<1x1x18x128xbf16>
    %39 = vector.shape_cast %38 : vector<1x1x18x128xbf16> to vector<1x18x128xbf16>
    %40 = vector.shape_cast %16 : vector<1x18x128xbf16> to vector<1x1x18x128xbf16>
    tpu.vector_store %arg9[%c1_32, %c17_33, %c0_34, %c0_35], %40 {strides = array<i32>} : memref<2x18x18x128xbf16, #tpu.memory_space<vmem>>, vector<1x1x18x128xbf16>,
    %c1_36 = arith.constant 1 : index
    %c0_37 = arith.constant 0 : index
    %c0_38 = arith.constant 0 : index
    %c0_39 = arith.constant 0 : index
    %41 = vector.load %arg9[%c1_36, %c0_37, %c0_38, %c0_39] : memref<2x18x18x128xbf16, #tpu.memory_space<vmem>>, vector<1x18x1x128xbf16>
    %42 = vector.shape_cast %41 : vector<1x18x1x128xbf16> to vector<18x1x128xbf16>
    %43 = vector.shape_cast %17 : vector<18x1x128xbf16> to vector<1x18x1x128xbf16>
    tpu.vector_store %arg9[%c1_36, %c0_37, %c0_38, %c0_39], %43 {strides = array<i32>} : memref<2x18x18x128xbf16, #tpu.memory_space<vmem>>, vector<1x18x1x128xbf16>,
    %c1_40 = arith.constant 1 : index
    %c0_41 = arith.constant 0 : index
    %c17_42 = arith.constant 17 : index
    %c0_43 = arith.constant 0 : index
    %44 = vector.load %arg9[%c1_40, %c0_41, %c17_42, %c0_43] : memref<2x18x18x128xbf16, #tpu.memory_space<vmem>>, vector<1x18x1x128xbf16>
    %45 = vector.shape_cast %44 : vector<1x18x1x128xbf16> to vector<18x1x128xbf16>
    %46 = vector.shape_cast %17 : vector<18x1x128xbf16> to vector<1x18x1x128xbf16>
    tpu.vector_store %arg9[%c1_40, %c0_41, %c17_42, %c0_43], %46 {strides = array<i32>} : memref<2x18x18x128xbf16, #tpu.memory_space<vmem>>, vector<1x18x1x128xbf16>,
    %47 = vector.extract_strided_slice %15 {offsets = [1, 0, 0, 0], sizes = [1, 16, 16, 128], strides = [1, 1, 1, 1]} : vector<2x16x16x128xbf16> to vector<1x16x16x128xbf16>
    %48 = vector.shape_cast %47 : vector<1x16x16x128xbf16> to vector<16x16x128xbf16>
    %c1_44 = arith.constant 1 : index
    %c1_45 = arith.constant 1 : index
    %c1_46 = arith.constant 1 : index
    %c0_47 = arith.constant 0 : index
    %49 = vector.load %arg9[%c1_44, %c1_45, %c1_46, %c0_47] : memref<2x18x18x128xbf16, #tpu.memory_space<vmem>>, vector<1x16x16x128xbf16>
    %50 = vector.shape_cast %49 : vector<1x16x16x128xbf16> to vector<16x16x128xbf16>
    %51 = vector.shape_cast %48 : vector<16x16x128xbf16> to vector<1x16x16x128xbf16>
    tpu.vector_store %arg9[%c1_44, %c1_45, %c1_46, %c0_47], %51 {strides = array<i32>} : memref<2x18x18x128xbf16, #tpu.memory_space<vmem>>, vector<1x16x16x128xbf16>,
    %c0_48 = arith.constant 0 : index
    %c0_49 = arith.constant 0 : index
    %c0_50 = arith.constant 0 : index
    %c0_51 = arith.constant 0 : index
    %52 = vector.load %arg9[%c0_48, %c0_49, %c0_50, %c0_51] : memref<2x18x18x128xbf16, #tpu.memory_space<vmem>>, vector<1x16x16x128xbf16>
    %53 = vector.shape_cast %52 : vector<1x16x16x128xbf16> to vector<16x16x128xbf16>
    %54 = vector.shape_cast %53 : vector<16x16x128xbf16> to vector<256x128xbf16>
    %c0_52 = arith.constant 0 : index
    %c0_53 = arith.constant 0 : index
    %55 = vector.load %arg10[%c0_52, %c0_53] : memref<512x1152xbf16, #tpu.memory_space<vmem>>, vector<256x128xbf16>
    tpu.vector_store %arg10[%c0_52, %c0_53], %54 {strides = array<i32>} : memref<512x1152xbf16, #tpu.memory_space<vmem>>, vector<256x128xbf16>,
    %c0_54 = arith.constant 0 : index
    %c0_55 = arith.constant 0 : index
    %c1_56 = arith.constant 1 : index
    %c0_57 = arith.constant 0 : index
    %56 = vector.load %arg9[%c0_54, %c0_55, %c1_56, %c0_57] : memref<2x18x18x128xbf16, #tpu.memory_space<vmem>>, vector<1x16x16x128xbf16>
    %57 = vector.shape_cast %56 : vector<1x16x16x128xbf16> to vector<16x16x128xbf16>
    %58 = vector.shape_cast %57 : vector<16x16x128xbf16> to vector<256x128xbf16>
    %c0_58 = arith.constant 0 : index
    %c128 = arith.constant 128 : index
    %59 = vector.load %arg10[%c0_58, %c128] : memref<512x1152xbf16, #tpu.memory_space<vmem>>, vector<256x128xbf16>
    tpu.vector_store %arg10[%c0_58, %c128], %58 {strides = array<i32>} : memref<512x1152xbf16, #tpu.memory_space<vmem>>, vector<256x128xbf16>,
    %c0_59 = arith.constant 0 : index
    %c0_60 = arith.constant 0 : index
    %c2 = arith.constant 2 : index
    %c0_61 = arith.constant 0 : index
    %60 = vector.load %arg9[%c0_59, %c0_60, %c2, %c0_61] : memref<2x18x18x128xbf16, #tpu.memory_space<vmem>>, vector<1x16x16x128xbf16>
    %61 = vector.shape_cast %60 : vector<1x16x16x128xbf16> to vector<16x16x128xbf16>
    %62 = vector.shape_cast %61 : vector<16x16x128xbf16> to vector<256x128xbf16>
    %c0_62 = arith.constant 0 : index
    %c256 = arith.constant 256 : index
    %63 = vector.load %arg10[%c0_62, %c256] : memref<512x1152xbf16, #tpu.memory_space<vmem>>, vector<256x128xbf16>
    tpu.vector_store %arg10[%c0_62, %c256], %62 {strides = array<i32>} : memref<512x1152xbf16, #tpu.memory_space<vmem>>, vector<256x128xbf16>,
    %c0_63 = arith.constant 0 : index
    %c1_64 = arith.constant 1 : index
    %c0_65 = arith.constant 0 : index
    %c0_66 = arith.constant 0 : index
    %64 = vector.load %arg9[%c0_63, %c1_64, %c0_65, %c0_66] : memref<2x18x18x128xbf16, #tpu.memory_space<vmem>>, vector<1x16x16x128xbf16>
    %65 = vector.shape_cast %64 : vector<1x16x16x128xbf16> to vector<16x16x128xbf16>
    %66 = vector.shape_cast %65 : vector<16x16x128xbf16> to vector<256x128xbf16>
    %c0_67 = arith.constant 0 : index
    %c384 = arith.constant 384 : index
    %67 = vector.load %arg10[%c0_67, %c384] : memref<512x1152xbf16, #tpu.memory_space<vmem>>, vector<256x128xbf16>
    tpu.vector_store %arg10[%c0_67, %c384], %66 {strides = array<i32>} : memref<512x1152xbf16, #tpu.memory_space<vmem>>, vector<256x128xbf16>,
    %c0_68 = arith.constant 0 : index
    %c1_69 = arith.constant 1 : index
    %c1_70 = arith.constant 1 : index
    %c0_71 = arith.constant 0 : index
    %68 = vector.load %arg9[%c0_68, %c1_69, %c1_70, %c0_71] : memref<2x18x18x128xbf16, #tpu.memory_space<vmem>>, vector<1x16x16x128xbf16>
    %69 = vector.shape_cast %68 : vector<1x16x16x128xbf16> to vector<16x16x128xbf16>
    %70 = vector.shape_cast %69 : vector<16x16x128xbf16> to vector<256x128xbf16>
    %c0_72 = arith.constant 0 : index
    %c512 = arith.constant 512 : index
    %71 = vector.load %arg10[%c0_72, %c512] : memref<512x1152xbf16, #tpu.memory_space<vmem>>, vector<256x128xbf16>
    tpu.vector_store %arg10[%c0_72, %c512], %70 {strides = array<i32>} : memref<512x1152xbf16, #tpu.memory_space<vmem>>, vector<256x128xbf16>,
    %c0_73 = arith.constant 0 : index
    %c1_74 = arith.constant 1 : index
    %c2_75 = arith.constant 2 : index
    %c0_76 = arith.constant 0 : index
    %72 = vector.load %arg9[%c0_73, %c1_74, %c2_75, %c0_76] : memref<2x18x18x128xbf16, #tpu.memory_space<vmem>>, vector<1x16x16x128xbf16>
    %73 = vector.shape_cast %72 : vector<1x16x16x128xbf16> to vector<16x16x128xbf16>
    %74 = vector.shape_cast %73 : vector<16x16x128xbf16> to vector<256x128xbf16>
    %c0_77 = arith.constant 0 : index
    %c640 = arith.constant 640 : index
    %75 = vector.load %arg10[%c0_77, %c640] : memref<512x1152xbf16, #tpu.memory_space<vmem>>, vector<256x128xbf16>
    tpu.vector_store %arg10[%c0_77, %c640], %74 {strides = array<i32>} : memref<512x1152xbf16, #tpu.memory_space<vmem>>, vector<256x128xbf16>,
    %c0_78 = arith.constant 0 : index
    %c2_79 = arith.constant 2 : index
    %c0_80 = arith.constant 0 : index
    %c0_81 = arith.constant 0 : index
    %76 = vector.load %arg9[%c0_78, %c2_79, %c0_80, %c0_81] : memref<2x18x18x128xbf16, #tpu.memory_space<vmem>>, vector<1x16x16x128xbf16>
    %77 = vector.shape_cast %76 : vector<1x16x16x128xbf16> to vector<16x16x128xbf16>
    %78 = vector.shape_cast %77 : vector<16x16x128xbf16> to vector<256x128xbf16>
    %c0_82 = arith.constant 0 : index
    %c768 = arith.constant 768 : index
    %79 = vector.load %arg10[%c0_82, %c768] : memref<512x1152xbf16, #tpu.memory_space<vmem>>, vector<256x128xbf16>
    tpu.vector_store %arg10[%c0_82, %c768], %78 {strides = array<i32>} : memref<512x1152xbf16, #tpu.memory_space<vmem>>, vector<256x128xbf16>,
    %c0_83 = arith.constant 0 : index
    %c2_84 = arith.constant 2 : index
    %c1_85 = arith.constant 1 : index
    %c0_86 = arith.constant 0 : index
    %80 = vector.load %arg9[%c0_83, %c2_84, %c1_85, %c0_86] : memref<2x18x18x128xbf16, #tpu.memory_space<vmem>>, vector<1x16x16x128xbf16>
    %81 = vector.shape_cast %80 : vector<1x16x16x128xbf16> to vector<16x16x128xbf16>
    %82 = vector.shape_cast %81 : vector<16x16x128xbf16> to vector<256x128xbf16>
    %c0_87 = arith.constant 0 : index
    %c896 = arith.constant 896 : index
    %83 = vector.load %arg10[%c0_87, %c896] : memref<512x1152xbf16, #tpu.memory_space<vmem>>, vector<256x128xbf16>
    tpu.vector_store %arg10[%c0_87, %c896], %82 {strides = array<i32>} : memref<512x1152xbf16, #tpu.memory_space<vmem>>, vector<256x128xbf16>,
    %c0_88 = arith.constant 0 : index
    %c2_89 = arith.constant 2 : index
    %c2_90 = arith.constant 2 : index
    %c0_91 = arith.constant 0 : index
    %84 = vector.load %arg9[%c0_88, %c2_89, %c2_90, %c0_91] : memref<2x18x18x128xbf16, #tpu.memory_space<vmem>>, vector<1x16x16x128xbf16>
    %85 = vector.shape_cast %84 : vector<1x16x16x128xbf16> to vector<16x16x128xbf16>
    %86 = vector.shape_cast %85 : vector<16x16x128xbf16> to vector<256x128xbf16>
    %c0_92 = arith.constant 0 : index
    %c1024 = arith.constant 1024 : index
    %87 = vector.load %arg10[%c0_92, %c1024] : memref<512x1152xbf16, #tpu.memory_space<vmem>>, vector<256x128xbf16>
    tpu.vector_store %arg10[%c0_92, %c1024], %86 {strides = array<i32>} : memref<512x1152xbf16, #tpu.memory_space<vmem>>, vector<256x128xbf16>,
    %c1_93 = arith.constant 1 : index
    %c0_94 = arith.constant 0 : index
    %c0_95 = arith.constant 0 : index
    %c0_96 = arith.constant 0 : index
    %88 = vector.load %arg9[%c1_93, %c0_94, %c0_95, %c0_96] : memref<2x18x18x128xbf16, #tpu.memory_space<vmem>>, vector<1x16x16x128xbf16>
    %89 = vector.shape_cast %88 : vector<1x16x16x128xbf16> to vector<16x16x128xbf16>
    %90 = vector.shape_cast %89 : vector<16x16x128xbf16> to vector<256x128xbf16>
    %c256_97 = arith.constant 256 : index
    %c0_98 = arith.constant 0 : index
    %91 = vector.load %arg10[%c256_97, %c0_98] : memref<512x1152xbf16, #tpu.memory_space<vmem>>, vector<256x128xbf16>
    tpu.vector_store %arg10[%c256_97, %c0_98], %90 {strides = array<i32>} : memref<512x1152xbf16, #tpu.memory_space<vmem>>, vector<256x128xbf16>,
    %c1_99 = arith.constant 1 : index
    %c0_100 = arith.constant 0 : index
    %c1_101 = arith.constant 1 : index
    %c0_102 = arith.constant 0 : index
    %92 = vector.load %arg9[%c1_99, %c0_100, %c1_101, %c0_102] : memref<2x18x18x128xbf16, #tpu.memory_space<vmem>>, vector<1x16x16x128xbf16>
    %93 = vector.shape_cast %92 : vector<1x16x16x128xbf16> to vector<16x16x128xbf16>
    %94 = vector.shape_cast %93 : vector<16x16x128xbf16> to vector<256x128xbf16>
    %c256_103 = arith.constant 256 : index
    %c128_104 = arith.constant 128 : index
    %95 = vector.load %arg10[%c256_103, %c128_104] : memref<512x1152xbf16, #tpu.memory_space<vmem>>, vector<256x128xbf16>
    tpu.vector_store %arg10[%c256_103, %c128_104], %94 {strides = array<i32>} : memref<512x1152xbf16, #tpu.memory_space<vmem>>, vector<256x128xbf16>,
    %c1_105 = arith.constant 1 : index
    %c0_106 = arith.constant 0 : index
    %c2_107 = arith.constant 2 : index
    %c0_108 = arith.constant 0 : index
    %96 = vector.load %arg9[%c1_105, %c0_106, %c2_107, %c0_108] : memref<2x18x18x128xbf16, #tpu.memory_space<vmem>>, vector<1x16x16x128xbf16>
    %97 = vector.shape_cast %96 : vector<1x16x16x128xbf16> to vector<16x16x128xbf16>
    %98 = vector.shape_cast %97 : vector<16x16x128xbf16> to vector<256x128xbf16>
    %c256_109 = arith.constant 256 : index
    %c256_110 = arith.constant 256 : index
    %99 = vector.load %arg10[%c256_109, %c256_110] : memref<512x1152xbf16, #tpu.memory_space<vmem>>, vector<256x128xbf16>
    tpu.vector_store %arg10[%c256_109, %c256_110], %98 {strides = array<i32>} : memref<512x1152xbf16, #tpu.memory_space<vmem>>, vector<256x128xbf16>,
    %c1_111 = arith.constant 1 : index
    %c1_112 = arith.constant 1 : index
    %c0_113 = arith.constant 0 : index
    %c0_114 = arith.constant 0 : index
    %100 = vector.load %arg9[%c1_111, %c1_112, %c0_113, %c0_114] : memref<2x18x18x128xbf16, #tpu.memory_space<vmem>>, vector<1x16x16x128xbf16>
    %101 = vector.shape_cast %100 : vector<1x16x16x128xbf16> to vector<16x16x128xbf16>
    %102 = vector.shape_cast %101 : vector<16x16x128xbf16> to vector<256x128xbf16>
    %c256_115 = arith.constant 256 : index
    %c384_116 = arith.constant 384 : index
    %103 = vector.load %arg10[%c256_115, %c384_116] : memref<512x1152xbf16, #tpu.memory_space<vmem>>, vector<256x128xbf16>
    tpu.vector_store %arg10[%c256_115, %c384_116], %102 {strides = array<i32>} : memref<512x1152xbf16, #tpu.memory_space<vmem>>, vector<256x128xbf16>,
    %c1_117 = arith.constant 1 : index
    %c1_118 = arith.constant 1 : index
    %c1_119 = arith.constant 1 : index
    %c0_120 = arith.constant 0 : index
    %104 = vector.load %arg9[%c1_117, %c1_118, %c1_119, %c0_120] : memref<2x18x18x128xbf16, #tpu.memory_space<vmem>>, vector<1x16x16x128xbf16>
    %105 = vector.shape_cast %104 : vector<1x16x16x128xbf16> to vector<16x16x128xbf16>
    %106 = vector.shape_cast %105 : vector<16x16x128xbf16> to vector<256x128xbf16>
    %c256_121 = arith.constant 256 : index
    %c512_122 = arith.constant 512 : index
    %107 = vector.load %arg10[%c256_121, %c512_122] : memref<512x1152xbf16, #tpu.memory_space<vmem>>, vector<256x128xbf16>
    tpu.vector_store %arg10[%c256_121, %c512_122], %106 {strides = array<i32>} : memref<512x1152xbf16, #tpu.memory_space<vmem>>, vector<256x128xbf16>,
    %c1_123 = arith.constant 1 : index
    %c1_124 = arith.constant 1 : index
    %c2_125 = arith.constant 2 : index
    %c0_126 = arith.constant 0 : index
    %108 = vector.load %arg9[%c1_123, %c1_124, %c2_125, %c0_126] : memref<2x18x18x128xbf16, #tpu.memory_space<vmem>>, vector<1x16x16x128xbf16>
    %109 = vector.shape_cast %108 : vector<1x16x16x128xbf16> to vector<16x16x128xbf16>
    %110 = vector.shape_cast %109 : vector<16x16x128xbf16> to vector<256x128xbf16>
    %c256_127 = arith.constant 256 : index
    %c640_128 = arith.constant 640 : index
    %111 = vector.load %arg10[%c256_127, %c640_128] : memref<512x1152xbf16, #tpu.memory_space<vmem>>, vector<256x128xbf16>
    tpu.vector_store %arg10[%c256_127, %c640_128], %110 {strides = array<i32>} : memref<512x1152xbf16, #tpu.memory_space<vmem>>, vector<256x128xbf16>,
    %c1_129 = arith.constant 1 : index
    %c2_130 = arith.constant 2 : index
    %c0_131 = arith.constant 0 : index
    %c0_132 = arith.constant 0 : index
    %112 = vector.load %arg9[%c1_129, %c2_130, %c0_131, %c0_132] : memref<2x18x18x128xbf16, #tpu.memory_space<vmem>>, vector<1x16x16x128xbf16>
    %113 = vector.shape_cast %112 : vector<1x16x16x128xbf16> to vector<16x16x128xbf16>
    %114 = vector.shape_cast %113 : vector<16x16x128xbf16> to vector<256x128xbf16>
    %c256_133 = arith.constant 256 : index
    %c768_134 = arith.constant 768 : index
    %115 = vector.load %arg10[%c256_133, %c768_134] : memref<512x1152xbf16, #tpu.memory_space<vmem>>, vector<256x128xbf16>
    tpu.vector_store %arg10[%c256_133, %c768_134], %114 {strides = array<i32>} : memref<512x1152xbf16, #tpu.memory_space<vmem>>, vector<256x128xbf16>,
    %c1_135 = arith.constant 1 : index
    %c2_136 = arith.constant 2 : index
    %c1_137 = arith.constant 1 : index
    %c0_138 = arith.constant 0 : index
    %116 = vector.load %arg9[%c1_135, %c2_136, %c1_137, %c0_138] : memref<2x18x18x128xbf16, #tpu.memory_space<vmem>>, vector<1x16x16x128xbf16>
    %117 = vector.shape_cast %116 : vector<1x16x16x128xbf16> to vector<16x16x128xbf16>
    %118 = vector.shape_cast %117 : vector<16x16x128xbf16> to vector<256x128xbf16>
    %c256_139 = arith.constant 256 : index
    %c896_140 = arith.constant 896 : index
    %119 = vector.load %arg10[%c256_139, %c896_140] : memref<512x1152xbf16, #tpu.memory_space<vmem>>, vector<256x128xbf16>
    tpu.vector_store %arg10[%c256_139, %c896_140], %118 {strides = array<i32>} : memref<512x1152xbf16, #tpu.memory_space<vmem>>, vector<256x128xbf16>,
    %c1_141 = arith.constant 1 : index
    %c2_142 = arith.constant 2 : index
    %c2_143 = arith.constant 2 : index
    %c0_144 = arith.constant 0 : index
    %120 = vector.load %arg9[%c1_141, %c2_142, %c2_143, %c0_144] : memref<2x18x18x128xbf16, #tpu.memory_space<vmem>>, vector<1x16x16x128xbf16>
    %121 = vector.shape_cast %120 : vector<1x16x16x128xbf16> to vector<16x16x128xbf16>
    %122 = vector.shape_cast %121 : vector<16x16x128xbf16> to vector<256x128xbf16>
    %c256_145 = arith.constant 256 : index
    %c1024_146 = arith.constant 1024 : index
    %123 = vector.load %arg10[%c256_145, %c1024_146] : memref<512x1152xbf16, #tpu.memory_space<vmem>>, vector<256x128xbf16>
    tpu.vector_store %arg10[%c256_145, %c1024_146], %122 {strides = array<i32>} : memref<512x1152xbf16, #tpu.memory_space<vmem>>, vector<256x128xbf16>,
    %c0_147 = arith.constant 0 : index
    %c0_148 = arith.constant 0 : index
    %124 = vector.load %arg10[%c0_147, %c0_148] : memref<512x1152xbf16, #tpu.memory_space<vmem>>, vector<512x1152xbf16>
    %c0_149 = arith.constant 0 : index
    %c0_150 = arith.constant 0 : index
    %125 = vector.load %arg5[%c0_149, %c0_150] : memref<1152x128xbf16, #tpu.memory_space<vmem>>, vector<1152x128xbf16>
    %cst_151 = arith.constant dense<0.000000e+00> : vector<512x128xf32>
    %126 = tpu.matmul %124, %125, %cst_151 {dimension_numbers = #tpu.dot_dimension_numbers<[1], [0], [0], [1], [0, 0, 1, 1], [], []>} : vector<512x1152xbf16>, vector<1152x128xbf16>, vector<512x128xf32> -> vector<512x128xf32>
    %c0_152 = arith.constant 0 : index
    %c0_153 = arith.constant 0 : index
    %127 = vector.load %arg2[%c0_152, %c0_153] : memref<512x4xbf16, #tpu.memory_space<vmem>>, vector<512x4xbf16>
    %c0_154 = arith.constant 0 : index
    %c0_155 = arith.constant 0 : index
    %128 = vector.load %arg6[%c0_154, %c0_155] : memref<4x128xbf16, #tpu.memory_space<vmem>>, vector<4x128xbf16>
    %cst_156 = arith.constant dense<0.000000e+00> : vector<512x128xf32>
    %129 = tpu.matmul %127, %128, %cst_156 {dimension_numbers = #tpu.dot_dimension_numbers<[1], [0], [0], [1], [0, 0, 1, 1], [], []>} : vector<512x4xbf16>, vector<4x128xbf16>, vector<512x128xf32> -> vector<512x128xf32>
    %130 = arith.addf %126, %129 : vector<512x128xf32>
    %c0_157 = arith.constant 0 : index
    %c0_158 = arith.constant 0 : index
    %131 = vector.load %arg7[%c0_157, %c0_158] : memref<1x128xf32, #tpu.memory_space<vmem>>, vector<1x128xf32>
    %132 = vector.broadcast %131 : vector<1x128xf32> to vector<512x128xf32>
    %133 = arith.addf %130, %132 : vector<512x128xf32>
    %cst_159 = arith.constant 0.000000e+00 : f32
    %134 = vector.broadcast %cst_159 : f32 to vector<512x128xf32>
    %135 = arith.cmpf ogt, %133, %134 : vector<512x128xf32>
    %cst_160 = arith.constant 0.000000e+00 : f32
    %136 = vector.broadcast %cst_160 : f32 to vector<512x128xf32>
    %137 = arith.minimumf %133, %136 : vector<512x128xf32>
    %138 = math.exp %137 : vector<512x128xf32>
    %cst_161 = arith.constant 1.000000e+00 : f32
    %139 = vector.broadcast %cst_161 : f32 to vector<512x128xf32>
    %140 = arith.subf %138, %139 : vector<512x128xf32>
    %141 = arith.select %135, %133, %140 : vector<512x128xi1>, vector<512x128xf32>
    %142 = arith.truncf %141 : vector<512x128xf32> to vector<512x128xbf16>
    %c0_162 = arith.constant 0 : index
    %c0_163 = arith.constant 0 : index
    %143 = vector.load %arg8[%c0_162, %c0_163] : memref<512x128xbf16, #tpu.memory_space<vmem>>, vector<512x128xbf16>
    tpu.vector_store %arg8[%c0_162, %c0_163], %142 {strides = array<i32>} : memref<512x128xbf16, #tpu.memory_space<vmem>>, vector<512x128xbf16>,
    return
  }
  func.func @transform_0(%arg0: i32) -> (i32, i32) {
    %c0_i32 = arith.constant 0 : i32
    %c0_i32_0 = arith.constant 0 : i32
    return %arg0, %c0_i32 : i32, i32
  }
  func.func @transform_1(%arg0: i32) -> (i32, i32) {
    %c0_i32 = arith.constant 0 : i32
    %c0_i32_0 = arith.constant 0 : i32
    return %arg0, %c0_i32 : i32, i32
  }
  func.func @transform_2(%arg0: i32) -> (i32, i32) {
    %c0_i32 = arith.constant 0 : i32
    %c0_i32_0 = arith.constant 0 : i32
    %c0_i32_1 = arith.constant 0 : i32
    return %c0_i32, %c0_i32_0 : i32, i32
  }
  func.func @transform_3(%arg0: i32) -> (i32, i32) {
    %c0_i32 = arith.constant 0 : i32
    %c0_i32_0 = arith.constant 0 : i32
    %c0_i32_1 = arith.constant 0 : i32
    return %c0_i32, %c0_i32_0 : i32, i32
  }
  func.func @transform_4(%arg0: i32) -> (i32, i32) {
    %c0_i32 = arith.constant 0 : i32
    %c0_i32_0 = arith.constant 0 : i32
    %c0_i32_1 = arith.constant 0 : i32
    return %c0_i32, %c0_i32_0 : i32, i32
  }
  func.func @transform_5(%arg0: i32) -> (i32, i32) {
    %c0_i32 = arith.constant 0 : i32
    %c0_i32_0 = arith.constant 0 : i32
    %c0_i32_1 = arith.constant 0 : i32
    return %c0_i32, %c0_i32_0 : i32, i32
  }
  func.func @transform_6(%arg0: i32) -> (i32, i32) {
    %c0_i32 = arith.constant 0 : i32
    %c0_i32_0 = arith.constant 0 : i32
    %c0_i32_1 = arith.constant 0 : i32
    return %c0_i32, %c0_i32_0 : i32, i32
  }
  func.func @transform_7(%arg0: i32) -> (i32, i32) {
    %c0_i32 = arith.constant 0 : i32
    %c0_i32_0 = arith.constant 0 : i32
    return %arg0, %c0_i32 : i32, i32
  }
}

</mosaic_0001>

<llo_original>
// kernel: _lambda_.1
$region0: #{_lambda_.1}
  #allocation0 [shape = 'u32[]', space=smem, size = 0x4, offset = 0x4, fixed_abs, tag = 'smem constant byte address 0x4 - core index']
  #allocation1 [shape = 'u32[144,128]{1,0:T(1,128)}', space=vmem, size = 0x12000, scoped, tag = 'internal scratch']
  #allocation2 [shape = 'bf16[2,18,18,128]{3,2,1,0:T(8,128)(2,1)}', space=vmem, size = 0x36000, scoped, tag = 'scratch operand']
  #allocation3 [shape = 'bf16[512,1152]{1,0:T(16,128)(2,1)}', space=vmem, size = 0x120000, scoped, tag = 'scratch operand']
  %s0 = inlined_call_operand.vmem [shape: bf16[512,36], index: 0, kind: input, shape index: {}]
  %s1 = inlined_call_operand.vmem [shape: bf16[512,4], index: 1, kind: input, shape index: {}]
  %s2 = inlined_call_operand.vmem [shape: bf16[36,128], index: 2, kind: input, shape index: {}]
  %s3 = inlined_call_operand.vmem [shape: f32[1,128], index: 3, kind: input, shape index: {}]
  %s4 = inlined_call_operand.vmem [shape: bf16[1152,128], index: 4, kind: input, shape index: {}]
  %s5 = inlined_call_operand.vmem [shape: bf16[4,128], index: 5, kind: input, shape index: {}]
  %s6 = inlined_call_operand.vmem [shape: f32[1,128], index: 6, kind: input, shape index: {}]
  %s7 = inlined_call_operand.vmem [shape: bf16[512,128], index: 7, kind: output, shape index: {}]
  %s8 = sld [smem:[#allocation0]]
  $region38: #{_lambda_.1} parent=0
    _
  %s10 = ssub.s32 1, %s8
  %s11 = scalar_select 0, %s10, %s8
  // Predicated region
  $region2: #{_lambda_.1} parent=0 // pred_check
    _
  $region3: #{_lambda_.1} parent=0 // pred_check_branch
    %13 = sbr.rel (0) target = $region5
  $region4: #{_lambda_.1} parent=0 // pred_region
    _
  $region5: #{_lambda_.1} parent=0 // pred_fallthru
    _
  // Predicated region
  $region6: #{_lambda_.1} parent=0 // pred_check
    _
  $region7: #{_lambda_.1} parent=0 // pred_check_branch
    %15 = sbr.rel (0) target = $region9
  $region8: #{_lambda_.1} parent=0 // pred_region
    _
  $region9: #{_lambda_.1} parent=0 // pred_fallthru
    _
  // Predicated region
  $region10: #{_lambda_.1} parent=0 // pred_check
    _
  $region11: #{_lambda_.1} parent=0 // pred_check_branch
    %17 = sbr.rel (0) target = $region13
  $region12: #{_lambda_.1} parent=0 // pred_region
    _
  $region13: #{_lambda_.1} parent=0 // pred_fallthru
    _
  // Predicated region
  $region14: #{_lambda_.1} parent=0 // pred_check
    _
  $region15: #{_lambda_.1} parent=0 // pred_check_branch
    %19 = sbr.rel (0) target = $region17
  $region16: #{_lambda_.1} parent=0 // pred_region
    _
  $region17: #{_lambda_.1} parent=0 // pred_fallthru
    _
  // Predicated region
  $region18: #{_lambda_.1} parent=0 // pred_check
    _
  $region19: #{_lambda_.1} parent=0 // pred_check_branch
    %21 = sbr.rel (0) target = $region21
  $region20: #{_lambda_.1} parent=0 // pred_region
    _
  $region21: #{_lambda_.1} parent=0 // pred_fallthru
    _
  // Predicated region
  $region22: #{_lambda_.1} parent=0 // pred_check
    _
  $region23: #{_lambda_.1} parent=0 // pred_check_branch
    %23 = sbr.rel (0) target = $region25
  $region24: #{_lambda_.1} parent=0 // pred_region
    _
  $region25: #{_lambda_.1} parent=0 // pred_fallthru
    _
  // Predicated region
  $region26: #{_lambda_.1} parent=0 // pred_check
    _
  $region27: #{_lambda_.1} parent=0 // pred_check_branch
    %25 = sbr.rel (0) target = $region29
  $region28: #{_lambda_.1} parent=0 // pred_region
    _
  $region29: #{_lambda_.1} parent=0 // pred_fallthru
    _
  %v27 = vld [vmem:[%s0] sm:$0xf]
  %v28 = vld [vmem:[%s0 + $0x4] sm:$0xf]
  %v29 = vld [vmem:[%s0 + $0x8] sm:$0xf]
  %v30 = vld [vmem:[%s0 + $0xc] sm:$0xf]
  %v31 = vld [vmem:[%s0 + $0x10] sm:$0xf]
  %v32 = vld [vmem:[%s0 + $0x14] sm:$0xf]
  %v33 = vld [vmem:[%s0 + $0x18] sm:$0xf]
  %v34 = vld [vmem:[%s0 + $0x1c] sm:$0xf]
  %v35 = vld [vmem:[%s0 + $0x20] sm:$0xf]
  %v36 = vld [vmem:[%s0 + $0x24] sm:$0xf]
  %v37 = vld [vmem:[%s0 + $0x28] sm:$0xf]
  %v38 = vld [vmem:[%s0 + $0x2c] sm:$0xf]
  %v39 = vld [vmem:[%s0 + $0x30] sm:$0xf]
  %v40 = vld [vmem:[%s0 + $0x34] sm:$0xf]
  %v41 = vld [vmem:[%s0 + $0x38] sm:$0xf]
  %v42 = vld [vmem:[%s0 + $0x3c] sm:$0xf]
  %v43 = vld [vmem:[%s0 + $0x40] sm:$0xf]
  %v44 = vld [vmem:[%s0 + $0x44] sm:$0xf]
  %v45 = vld [vmem:[%s0 + $0x48] sm:$0xf]
  %v46 = vld [vmem:[%s0 + $0x4c] sm:$0xf]
  %v47 = vld [vmem:[%s0 + $0x50] sm:$0xf]
  %v48 = vld [vmem:[%s0 + $0x54] sm:$0xf]
  %v49 = vld [vmem:[%s0 + $0x58] sm:$0xf]
  %v50 = vld [vmem:[%s0 + $0x5c] sm:$0xf]
  %v51 = vld [vmem:[%s0 + $0x60] sm:$0xf]
  %v52 = vld [vmem:[%s0 + $0x64] sm:$0xf]
  %v53 = vld [vmem:[%s0 + $0x68] sm:$0xf]
  %v54 = vld [vmem:[%s0 + $0x6c] sm:$0xf]
  %v55 = vld [vmem:[%s0 + $0x70] sm:$0xf]
  %v56 = vld [vmem:[%s0 + $0x74] sm:$0xf]
  %v57 = vld [vmem:[%s0 + $0x78] sm:$0xf]
  %v58 = vld [vmem:[%s0 + $0x7c] sm:$0xf]
  %v59 = vld [vmem:[%s0 + $0x80] sm:$0xf]
  %v60 = vld [vmem:[%s0 + $0x84] sm:$0xf]
  %v61 = vld [vmem:[%s0 + $0x88] sm:$0xf]
  %v62 = vld [vmem:[%s0 + $0x8c] sm:$0xf]
  %v63 = vld [vmem:[%s0 + $0x90] sm:$0xf]
  %v64 = vld [vmem:[%s0 + $0x94] sm:$0xf]
  %v65 = vld [vmem:[%s0 + $0x98] sm:$0xf]
  %v66 = vld [vmem:[%s0 + $0x9c] sm:$0xf]
  %v67 = vld [vmem:[%s0 + $0xa0] sm:$0xf]
  %v68 = vld [vmem:[%s0 + $0xa4] sm:$0xf]
  %v69 = vld [vmem:[%s0 + $0xa8] sm:$0xf]
  %v70 = vld [vmem:[%s0 + $0xac] sm:$0xf]
  %v71 = vld [vmem:[%s0 + $0xb0] sm:$0xf]
  %v72 = vld [vmem:[%s0 + $0xb4] sm:$0xf]
  %v73 = vld [vmem:[%s0 + $0xb8] sm:$0xf]
  %v74 = vld [vmem:[%s0 + $0xbc] sm:$0xf]
  %v75 = vld [vmem:[%s0 + $0xc0] sm:$0xf]
  %v76 = vld [vmem:[%s0 + $0xc4] sm:$0xf]
  %v77 = vld [vmem:[%s0 + $0xc8] sm:$0xf]
  %v78 = vld [vmem:[%s0 + $0xcc] sm:$0xf]
  %v79 = vld [vmem:[%s0 + $0xd0] sm:$0xf]
  %v80 = vld [vmem:[%s0 + $0xd4] sm:$0xf]
  %v81 = vld [vmem:[%s0 + $0xd8] sm:$0xf]
  %v82 = vld [vmem:[%s0 + $0xdc] sm:$0xf]
  %v83 = vld [vmem:[%s0 + $0xe0] sm:$0xf]
  %v84 = vld [vmem:[%s0 + $0xe4] sm:$0xf]
  %v85 = vld [vmem:[%s0 + $0xe8] sm:$0xf]
  %v86 = vld [vmem:[%s0 + $0xec] sm:$0xf]
  %v87 = vld [vmem:[%s0 + $0xf0] sm:$0xf]
  %v88 = vld [vmem:[%s0 + $0xf4] sm:$0xf]
  %v89 = vld [vmem:[%s0 + $0xf8] sm:$0xf]
  %v90 = vld [vmem:[%s0 + $0xfc] sm:$0xf]
  %v91 = vld [vmem:[%s2] sm:$0xf]
  %v92 = vld [vmem:[%s2 + $0x4] sm:$0xf]
  %v93 = vld [vmem:[%s2 + $0x8] sm:$0xf]
  %v94 = vld [vmem:[%s2 + $0xc] sm:$0xf]
  %v95 = vld [vmem:[%s2 + $0x10] sm:$0x3]
  %v96 = vld [vmem:[%s3] sm:$0x1]
  %v98 = vlaneseq
  %v99 = vshrl.u32 %v98, 7
  %v100 = vsub.s32 0, %v99
  %v101 = vrot.slane %v96, %v100
  %v167 = vunpack.c.l.b16 %v27
  %v168 = vunpack.c.l.b16 %v28
  %v169 = vunpack.c.l.b16 %v29
  %v170 = vunpack.c.l.b16 %v30
  %v171 = vunpack.c.l.b16 %v31
  %v172 = vunpack.c.l.b16 %v32
  %v173 = vunpack.c.l.b16 %v33
  %v174 = vunpack.c.l.b16 %v34
  %v175 = vunpack.c.l.b16 %v35
  %v176 = vunpack.c.l.b16 %v36
  %v177 = vunpack.c.l.b16 %v37
  %v178 = vunpack.c.l.b16 %v38
  %v179 = vunpack.c.l.b16 %v39
  %v180 = vunpack.c.l.b16 %v40
  %v181 = vunpack.c.l.b16 %v41
  %v182 = vunpack.c.l.b16 %v42
  %v183 = vunpack.c.l.b16 %v43
  %v184 = vunpack.c.l.b16 %v44
  %v185 = vunpack.c.l.b16 %v45
  %v186 = vunpack.c.l.b16 %v46
  %v187 = vunpack.c.l.b16 %v47
  %v188 = vunpack.c.l.b16 %v48
  %v189 = vunpack.c.l.b16 %v49
  %v190 = vunpack.c.l.b16 %v50
  %v191 = vunpack.c.l.b16 %v51
  %v192 = vunpack.c.l.b16 %v52
  %v193 = vunpack.c.l.b16 %v53
  %v194 = vunpack.c.l.b16 %v54
  %v195 = vunpack.c.l.b16 %v55
  %v196 = vunpack.c.l.b16 %v56
  %v197 = vunpack.c.l.b16 %v57
  %v198 = vunpack.c.l.b16 %v58
  %v199 = vunpack.c.l.b16 %v59
  %v200 = vunpack.c.l.b16 %v60
  %v201 = vunpack.c.l.b16 %v61
  %v202 = vunpack.c.l.b16 %v62
  %v203 = vunpack.c.l.b16 %v63
  %v204 = vunpack.c.l.b16 %v64
  %v205 = vunpack.c.l.b16 %v65
  %v206 = vunpack.c.l.b16 %v66
  %v207 = vunpack.c.l.b16 %v67
  %v208 = vunpack.c.l.b16 %v68
  %v209 = vunpack.c.l.b16 %v69
  %v210 = vunpack.c.l.b16 %v70
  %v211 = vunpack.c.l.b16 %v71
  %v212 = vunpack.c.l.b16 %v72
  %v213 = vunpack.c.l.b16 %v73
  %v214 = vunpack.c.l.b16 %v74
  %v215 = vunpack.c.l.b16 %v75
  %v216 = vunpack.c.l.b16 %v76
  %v217 = vunpack.c.l.b16 %v77
  %v218 = vunpack.c.l.b16 %v78
  %v219 = vunpack.c.l.b16 %v79
  %v220 = vunpack.c.l.b16 %v80
  %v221 = vunpack.c.l.b16 %v81
  %v222 = vunpack.c.l.b16 %v82
  %v223 = vunpack.c.l.b16 %v83
  %v224 = vunpack.c.l.b16 %v84
  %v225 = vunpack.c.l.b16 %v85
  %v226 = vunpack.c.l.b16 %v86
  %v227 = vunpack.c.l.b16 %v87
  %v228 = vunpack.c.l.b16 %v88
  %v229 = vunpack.c.l.b16 %v89
  %v230 = vunpack.c.l.b16 %v90
  %v231 = vpack.c.b16 %v168, %v167
  %v232 = vpack.c.b16 %v170, %v169
  %v233 = vpack.c.b16 %v172, %v171
  %v234 = vpack.c.b16 %v174, %v173
  %v235 = vpack.c.b16 %v176, %v175
  %v236 = vpack.c.b16 %v178, %v177
  %v237 = vpack.c.b16 %v180, %v179
  %v238 = vpack.c.b16 %v182, %v181
  %v239 = vpack.c.b16 %v184, %v183
  %v240 = vpack.c.b16 %v186, %v185
  %v241 = vpack.c.b16 %v188, %v187
  %v242 = vpack.c.b16 %v190, %v189
  %v243 = vpack.c.b16 %v192, %v191
  %v244 = vpack.c.b16 %v194, %v193
  %v245 = vpack.c.b16 %v196, %v195
  %v246 = vpack.c.b16 %v198, %v197
  %v247 = vpack.c.b16 %v200, %v199
  %v248 = vpack.c.b16 %v202, %v201
  %v249 = vpack.c.b16 %v204, %v203
  %v250 = vpack.c.b16 %v206, %v205
  %v251 = vpack.c.b16 %v208, %v207
  %v252 = vpack.c.b16 %v210, %v209
  %v253 = vpack.c.b16 %v212, %v211
  %v254 = vpack.c.b16 %v214, %v213
  %v255 = vpack.c.b16 %v216, %v215
  %v256 = vpack.c.b16 %v218, %v217
  %v257 = vpack.c.b16 %v220, %v219
  %v258 = vpack.c.b16 %v222, %v221
  %v259 = vpack.c.b16 %v224, %v223
  %v260 = vpack.c.b16 %v226, %v225
  %v261 = vpack.c.b16 %v228, %v227
  %v262 = vpack.c.b16 %v230, %v229
  %v268 = vunpack.c.l.b16 %v91
  %v269 = vunpack.c.l.b16 %v92
  %v270 = vunpack.c.l.b16 %v93
  %v271 = vunpack.c.l.b16 %v94
  %v272 = vunpack.c.l.b16 %v95
  %v273 = vpack.c.b16 %v269, %v268
  %v274 = vpack.c.b16 %v271, %v270
  %v275 = vpack.c.b16 %v272, %v272
  %vm278 = vcmask 293888
  %v280 = vsel %vm278, %v231, 0
  %v283 = vsel %vm278, %v232, 0
  %v286 = vsel %vm278, %v233, 0
  %v289 = vsel %vm278, %v234, 0
  %v292 = vsel %vm278, %v235, 0
  %v295 = vsel %vm278, %v236, 0
  %v298 = vsel %vm278, %v237, 0
  %v301 = vsel %vm278, %v238, 0
  %v304 = vsel %vm278, %v239, 0
  %v307 = vsel %vm278, %v240, 0
  %v310 = vsel %vm278, %v241, 0
  %v313 = vsel %vm278, %v242, 0
  %v316 = vsel %vm278, %v243, 0
  %v319 = vsel %vm278, %v244, 0
  %v322 = vsel %vm278, %v245, 0
  %v325 = vsel %vm278, %v246, 0
  %v328 = vsel %vm278, %v247, 0
  %v331 = vsel %vm278, %v248, 0
  %v334 = vsel %vm278, %v249, 0
  %v337 = vsel %vm278, %v250, 0
  %v340 = vsel %vm278, %v251, 0
  %v343 = vsel %vm278, %v252, 0
  %v346 = vsel %vm278, %v253, 0
  %v349 = vsel %vm278, %v254, 0
  %v352 = vsel %vm278, %v255, 0
  %v355 = vsel %vm278, %v256, 0
  %v358 = vsel %vm278, %v257, 0
  %v361 = vsel %vm278, %v258, 0
  %v364 = vsel %vm278, %v259, 0
  %v367 = vsel %vm278, %v260, 0
  %v370 = vsel %vm278, %v261, 0
  %v373 = vsel %vm278, %v262, 0
  %vm375 = vcmask 1041408
  %v377 = vsel %vm375, %v275, 0
  %379 = vmatprep.subr.bf16.mxu0 0
  %380 = vmatpush1.bf16.msra.mxu0 %v273
  %381 = vmatprep.subr.bf16.mxu0 0
  %382 = vmatpush1.bf16.msra.mxu0 %v274
  %383 = vmatprep.subr.bf16.mxu0 0
  %384 = vmatpush1.bf16.msra.mxu0 %v377
  %385 = vmatprep.subr.bf16.mxu0 0
  %386 = vmatpush1.bf16.msra.mxu0 0
  %387 = vmatprep.subr.bf16.mxu0 0
  %388 = vmatpush1.bf16.msra.mxu0 0
  %389 = vmatprep.subr.bf16.mxu0 0
  %390 = vmatpush1.bf16.msra.mxu0 0
  %391 = vmatprep.subr.bf16.mxu0 0
  %392 = vmatpush1.bf16.msra.mxu0 0
  %393 = vmatprep.subr.bf16.mxu0 0
  %394 = vmatpush1.bf16.msra.mxu0 0
  %395 = vmatprep.subr.bf16.mxu0 0
  %396 = vmatpush1.bf16.msra.mxu0 0
  %397 = vmatprep.subr.bf16.mxu0 0
  %398 = vmatpush1.bf16.msra.mxu0 0
  %399 = vmatprep.subr.bf16.mxu0 0
  %400 = vmatpush1.bf16.msra.mxu0 0
  %401 = vmatprep.subr.bf16.mxu0 0
  %402 = vmatpush1.bf16.msra.mxu0 0
  %403 = vmatprep.subr.bf16.mxu0 0
  %404 = vmatpush1.bf16.msra.mxu0 0
  %405 = vmatprep.subr.bf16.mxu0 0
  %406 = vmatpush1.bf16.msra.mxu0 0
  %407 = vmatprep.subr.bf16.mxu0 0
  %408 = vmatpush1.bf16.msra.mxu0 0
  %409 = vmatprep.subr.bf16.mxu0 0
  %410 = vmatpush1.bf16.msra.mxu0 0
  %411 = vmatprep.mubr.bf16.mxu0 0
  %412 = vmatmul.mubr.bf16.gmra.mrb[0].mxu0 %v280
  %v413 = vpop.f32.mrb[0].mxu0
  %v414 = vadd.f32 %v101, %v413
  %v415 = vpop.f32.mrb[0].mxu0
  %v416 = vpop.f32.mrb[0].mxu0
  %v417 = vadd.f32 %v101, %v416
  %v418 = vpop.f32.mrb[0].mxu0
  %419 = vmatprep.mubr.bf16.mxu0 0
  %420 = vmatmul.mubr.bf16.gmra.mrb[0].mxu0 %v283
  %v421 = vpop.f32.mrb[0].mxu0
  %v422 = vadd.f32 %v101, %v421
  %v423 = vpop.f32.mrb[0].mxu0
  %v424 = vpop.f32.mrb[0].mxu0
  %v425 = vadd.f32 %v101, %v424
  %v426 = vpop.f32.mrb[0].mxu0
  %427 = vmatprep.mubr.bf16.mxu0 0
  %428 = vmatmul.mubr.bf16.gmra.mrb[0].mxu0 %v286
  %v429 = vpop.f32.mrb[0].mxu0
  %v430 = vadd.f32 %v101, %v429
  %v431 = vpop.f32.mrb[0].mxu0
  %v432 = vpop.f32.mrb[0].mxu0
  %v433 = vadd.f32 %v101, %v432
  %v434 = vpop.f32.mrb[0].mxu0
  %435 = vmatprep.mubr.bf16.mxu0 0
  %436 = vmatmul.mubr.bf16.gmra.mrb[0].mxu0 %v289
  %v437 = vpop.f32.mrb[0].mxu0
  %v438 = vadd.f32 %v101, %v437
  %v439 = vpop.f32.mrb[0].mxu0
  %v440 = vpop.f32.mrb[0].mxu0
  %v441 = vadd.f32 %v101, %v440
  %v442 = vpop.f32.mrb[0].mxu0
  %443 = vmatprep.mubr.bf16.mxu0 0
  %444 = vmatmul.mubr.bf16.gmra.mrb[0].mxu0 %v292
  %v445 = vpop.f32.mrb[0].mxu0
  %v446 = vadd.f32 %v101, %v445
  %v447 = vpop.f32.mrb[0].mxu0
  %v448 = vpop.f32.mrb[0].mxu0
  %v449 = vadd.f32 %v101, %v448
  %v450 = vpop.f32.mrb[0].mxu0
  %451 = vmatprep.mubr.bf16.mxu0 0
  %452 = vmatmul.mubr.bf16.gmra.mrb[0].mxu0 %v295
  %v453 = vpop.f32.mrb[0].mxu0
  %v454 = vadd.f32 %v101, %v453
  %v455 = vpop.f32.mrb[0].mxu0
  %v456 = vpop.f32.mrb[0].mxu0
  %v457 = vadd.f32 %v101, %v456
  %v458 = vpop.f32.mrb[0].mxu0
  %459 = vmatprep.mubr.bf16.mxu0 0
  %460 = vmatmul.mubr.bf16.gmra.mrb[0].mxu0 %v298
  %v461 = vpop.f32.mrb[0].mxu0
  %v462 = vadd.f32 %v101, %v461
  %v463 = vpop.f32.mrb[0].mxu0
  %v464 = vpop.f32.mrb[0].mxu0
  %v465 = vadd.f32 %v101, %v464
  %v466 = vpop.f32.mrb[0].mxu0
  %467 = vmatprep.mubr.bf16.mxu0 0
  %468 = vmatmul.mubr.bf16.gmra.mrb[0].mxu0 %v301
  %v469 = vpop.f32.mrb[0].mxu0
  %v470 = vadd.f32 %v101, %v469
  %v471 = vpop.f32.mrb[0].mxu0
  %v472 = vpop.f32.mrb[0].mxu0
  %v473 = vadd.f32 %v101, %v472
  %v474 = vpop.f32.mrb[0].mxu0
  %475 = vmatprep.mubr.bf16.mxu0 0
  %476 = vmatmul.mubr.bf16.gmra.mrb[0].mxu0 %v304
  %v477 = vpop.f32.mrb[0].mxu0
  %v478 = vadd.f32 %v101, %v477
  %v479 = vpop.f32.mrb[0].mxu0
  %v480 = vpop.f32.mrb[0].mxu0
  %v481 = vadd.f32 %v101, %v480
  %v482 = vpop.f32.mrb[0].mxu0
  %483 = vmatprep.mubr.bf16.mxu0 0
  %484 = vmatmul.mubr.bf16.gmra.mrb[0].mxu0 %v307
  %v485 = vpop.f32.mrb[0].mxu0
  %v486 = vadd.f32 %v101, %v485
  %v487 = vpop.f32.mrb[0].mxu0
  %v488 = vpop.f32.mrb[0].mxu0
  %v489 = vadd.f32 %v101, %v488
  %v490 = vpop.f32.mrb[0].mxu0
  %491 = vmatprep.mubr.bf16.mxu0 0
  %492 = vmatmul.mubr.bf16.gmra.mrb[0].mxu0 %v310
  %v493 = vpop.f32.mrb[0].mxu0
  %v494 = vadd.f32 %v101, %v493
  %v495 = vpop.f32.mrb[0].mxu0
  %v496 = vpop.f32.mrb[0].mxu0
  %v497 = vadd.f32 %v101, %v496
  %v498 = vpop.f32.mrb[0].mxu0
  %499 = vmatprep.mubr.bf16.mxu0 0
  %500 = vmatmul.mubr.bf16.gmra.mrb[0].mxu0 %v313
  %v501 = vpop.f32.mrb[0].mxu0
  %v502 = vadd.f32 %v101, %v501
  %v503 = vpop.f32.mrb[0].mxu0
  %v504 = vpop.f32.mrb[0].mxu0
  %v505 = vadd.f32 %v101, %v504
  %v506 = vpop.f32.mrb[0].mxu0
  %507 = vmatprep.mubr.bf16.mxu0 0
  %508 = vmatmul.mubr.bf16.gmra.mrb[0].mxu0 %v316
  %v509 = vpop.f32.mrb[0].mxu0
  %v510 = vadd.f32 %v101, %v509
  %v511 = vpop.f32.mrb[0].mxu0
  %v512 = vpop.f32.mrb[0].mxu0
  %v513 = vadd.f32 %v101, %v512
  %v514 = vpop.f32.mrb[0].mxu0
  %515 = vmatprep.mubr.bf16.mxu0 0
  %516 = vmatmul.mubr.bf16.gmra.mrb[0].mxu0 %v319
  %v517 = vpop.f32.mrb[0].mxu0
  %v518 = vadd.f32 %v101, %v517
  %v519 = vpop.f32.mrb[0].mxu0
  %v520 = vpop.f32.mrb[0].mxu0
  %v521 = vadd.f32 %v101, %v520
  %v522 = vpop.f32.mrb[0].mxu0
  %523 = vmatprep.mubr.bf16.mxu0 0
  %524 = vmatmul.mubr.bf16.gmra.mrb[0].mxu0 %v322
  %v525 = vpop.f32.mrb[0].mxu0
  %v526 = vadd.f32 %v101, %v525
  %v527 = vpop.f32.mrb[0].mxu0
  %v528 = vpop.f32.mrb[0].mxu0
  %v529 = vadd.f32 %v101, %v528
  %v530 = vpop.f32.mrb[0].mxu0
  %531 = vmatprep.mubr.bf16.mxu0 0
  %532 = vmatmul.mubr.bf16.gmra.mrb[0].mxu0 %v325
  %v533 = vpop.f32.mrb[0].mxu0
  %v534 = vadd.f32 %v101, %v533
  %v535 = vpop.f32.mrb[0].mxu0
  %v536 = vpop.f32.mrb[0].mxu0
  %v537 = vadd.f32 %v101, %v536
  %v538 = vpop.f32.mrb[0].mxu0
  %539 = vmatprep.mubr.bf16.mxu0 0
  %540 = vmatmul.mubr.bf16.gmra.mrb[0].mxu0 %v328
  %v541 = vpop.f32.mrb[0].mxu0
  %v542 = vadd.f32 %v101, %v541
  %v543 = vpop.f32.mrb[0].mxu0
  %v544 = vpop.f32.mrb[0].mxu0
  %v545 = vadd.f32 %v101, %v544
  %v546 = vpop.f32.mrb[0].mxu0
  %547 = vmatprep.mubr.bf16.mxu0 0
  %548 = vmatmul.mubr.bf16.gmra.mrb[0].mxu0 %v331
  %v549 = vpop.f32.mrb[0].mxu0
  %v550 = vadd.f32 %v101, %v549
  %v551 = vpop.f32.mrb[0].mxu0
  %v552 = vpop.f32.mrb[0].mxu0
  %v553 = vadd.f32 %v101, %v552
  %v554 = vpop.f32.mrb[0].mxu0
  %555 = vmatprep.mubr.bf16.mxu0 0
  %556 = vmatmul.mubr.bf16.gmra.mrb[0].mxu0 %v334
  %v557 = vpop.f32.mrb[0].mxu0
  %v558 = vadd.f32 %v101, %v557
  %v559 = vpop.f32.mrb[0].mxu0
  %v560 = vpop.f32.mrb[0].mxu0
  %v561 = vadd.f32 %v101, %v560
  %v562 = vpop.f32.mrb[0].mxu0
  %563 = vmatprep.mubr.bf16.mxu0 0
  %564 = vmatmul.mubr.bf16.gmra.mrb[0].mxu0 %v337
  %v565 = vpop.f32.mrb[0].mxu0
  %v566 = vadd.f32 %v101, %v565
  %v567 = vpop.f32.mrb[0].mxu0
  %v568 = vpop.f32.mrb[0].mxu0
  %v569 = vadd.f32 %v101, %v568
  %v570 = vpop.f32.mrb[0].mxu0
  %571 = vmatprep.mubr.bf16.mxu0 0
  %572 = vmatmul.mubr.bf16.gmra.mrb[0].mxu0 %v340
  %v573 = vpop.f32.mrb[0].mxu0
  %v574 = vadd.f32 %v101, %v573
  %v575 = vpop.f32.mrb[0].mxu0
  %v576 = vpop.f32.mrb[0].mxu0
  %v577 = vadd.f32 %v101, %v576
  %v578 = vpop.f32.mrb[0].mxu0
  %579 = vmatprep.mubr.bf16.mxu0 0
  %580 = vmatmul.mubr.bf16.gmra.mrb[0].mxu0 %v343
  %v581 = vpop.f32.mrb[0].mxu0
  %v582 = vadd.f32 %v101, %v581
  %v583 = vpop.f32.mrb[0].mxu0
  %v584 = vpop.f32.mrb[0].mxu0
  %v585 = vadd.f32 %v101, %v584
  %v586 = vpop.f32.mrb[0].mxu0
  %587 = vmatprep.mubr.bf16.mxu0 0
  %588 = vmatmul.mubr.bf16.gmra.mrb[0].mxu0 %v346
  %v589 = vpop.f32.mrb[0].mxu0
  %v590 = vadd.f32 %v101, %v589
  %v591 = vpop.f32.mrb[0].mxu0
  %v592 = vpop.f32.mrb[0].mxu0
  %v593 = vadd.f32 %v101, %v592
  %v594 = vpop.f32.mrb[0].mxu0
  %595 = vmatprep.mubr.bf16.mxu0 0
  %596 = vmatmul.mubr.bf16.gmra.mrb[0].mxu0 %v349
  %v597 = vpop.f32.mrb[0].mxu0
  %v598 = vadd.f32 %v101, %v597
  %v599 = vpop.f32.mrb[0].mxu0
  %v600 = vpop.f32.mrb[0].mxu0
  %v601 = vadd.f32 %v101, %v600
  %v602 = vpop.f32.mrb[0].mxu0
  %603 = vmatprep.mubr.bf16.mxu0 0
  %604 = vmatmul.mubr.bf16.gmra.mrb[0].mxu0 %v352
  %v605 = vpop.f32.mrb[0].mxu0
  %v606 = vadd.f32 %v101, %v605
  %v607 = vpop.f32.mrb[0].mxu0
  %v608 = vpop.f32.mrb[0].mxu0
  %v609 = vadd.f32 %v101, %v608
  %v610 = vpop.f32.mrb[0].mxu0
  %611 = vmatprep.mubr.bf16.mxu0 0
  %612 = vmatmul.mubr.bf16.gmra.mrb[0].mxu0 %v355
  %v613 = vpop.f32.mrb[0].mxu0
  %v614 = vadd.f32 %v101, %v613
  %v615 = vpop.f32.mrb[0].mxu0
  %v616 = vpop.f32.mrb[0].mxu0
  %v617 = vadd.f32 %v101, %v616
  %v618 = vpop.f32.mrb[0].mxu0
  %619 = vmatprep.mubr.bf16.mxu0 0
  %620 = vmatmul.mubr.bf16.gmra.mrb[0].mxu0 %v358
  %v621 = vpop.f32.mrb[0].mxu0
  %v622 = vadd.f32 %v101, %v621
  %v623 = vpop.f32.mrb[0].mxu0
  %v624 = vpop.f32.mrb[0].mxu0
  %v625 = vadd.f32 %v101, %v624
  %v626 = vpop.f32.mrb[0].mxu0
  %627 = vmatprep.mubr.bf16.mxu0 0
  %628 = vmatmul.mubr.bf16.gmra.mrb[0].mxu0 %v361
  %v629 = vpop.f32.mrb[0].mxu0
  %v630 = vadd.f32 %v101, %v629
  %v631 = vpop.f32.mrb[0].mxu0
  %v632 = vpop.f32.mrb[0].mxu0
  %v633 = vadd.f32 %v101, %v632
  %v634 = vpop.f32.mrb[0].mxu0
  %635 = vmatprep.mubr.bf16.mxu0 0
  %636 = vmatmul.mubr.bf16.gmra.mrb[0].mxu0 %v364
  %v637 = vpop.f32.mrb[0].mxu0
  %v638 = vadd.f32 %v101, %v637
  %v639 = vpop.f32.mrb[0].mxu0
  %v640 = vpop.f32.mrb[0].mxu0
  %v641 = vadd.f32 %v101, %v640
  %v642 = vpop.f32.mrb[0].mxu0
  %643 = vmatprep.mubr.bf16.mxu0 0
  %644 = vmatmul.mubr.bf16.gmra.mrb[0].mxu0 %v367
  %v645 = vpop.f32.mrb[0].mxu0
  %v646 = vadd.f32 %v101, %v645
  %v647 = vpop.f32.mrb[0].mxu0
  %v648 = vpop.f32.mrb[0].mxu0
  %v649 = vadd.f32 %v101, %v648
  %v650 = vpop.f32.mrb[0].mxu0
  %651 = vmatprep.mubr.bf16.mxu0 0
  %652 = vmatmul.mubr.bf16.gmra.mrb[0].mxu0 %v370
  %v653 = vpop.f32.mrb[0].mxu0
  %v654 = vadd.f32 %v101, %v653
  %v655 = vpop.f32.mrb[0].mxu0
  %v656 = vpop.f32.mrb[0].mxu0
  %v657 = vadd.f32 %v101, %v656
  %v658 = vpop.f32.mrb[0].mxu0
  %659 = vmatprep.mubr.bf16.mxu0 0
  %660 = vmatmul.mubr.bf16.gmra.mrb[0].mxu0 %v373
  %v661 = vpop.f32.mrb[0].mxu0
  %v662 = vadd.f32 %v101, %v661
  %v663 = vpop.f32.mrb[0].mxu0
  %v664 = vpop.f32.mrb[0].mxu0
  %v665 = vadd.f32 %v101, %v664
  %v666 = vpop.f32.mrb[0].mxu0
  %667 = vdwg.mxu0
  %vm668 = vcmp.gt.f32.partialorder %v414, 0.0
  %vm669 = vcmp.gt.f32.partialorder %v417, 0.0
  %vm670 = vcmp.gt.f32.partialorder %v422, 0.0
  %vm671 = vcmp.gt.f32.partialorder %v425, 0.0
  %vm672 = vcmp.gt.f32.partialorder %v430, 0.0
  %vm673 = vcmp.gt.f32.partialorder %v433, 0.0
  %vm674 = vcmp.gt.f32.partialorder %v438, 0.0
  %vm675 = vcmp.gt.f32.partialorder %v441, 0.0
  %vm676 = vcmp.gt.f32.partialorder %v446, 0.0
  %vm677 = vcmp.gt.f32.partialorder %v449, 0.0
  %vm678 = vcmp.gt.f32.partialorder %v454, 0.0
  %vm679 = vcmp.gt.f32.partialorder %v457, 0.0
  %vm680 = vcmp.gt.f32.partialorder %v462, 0.0
  %vm681 = vcmp.gt.f32.partialorder %v465, 0.0
  %vm682 = vcmp.gt.f32.partialorder %v470, 0.0
  %vm683 = vcmp.gt.f32.partialorder %v473, 0.0
  %vm684 = vcmp.gt.f32.partialorder %v478, 0.0
  %vm685 = vcmp.gt.f32.partialorder %v481, 0.0
  %vm686 = vcmp.gt.f32.partialorder %v486, 0.0
  %vm687 = vcmp.gt.f32.partialorder %v489, 0.0
  %vm688 = vcmp.gt.f32.partialorder %v494, 0.0
  %vm689 = vcmp.gt.f32.partialorder %v497, 0.0
  %vm690 = vcmp.gt.f32.partialorder %v502, 0.0
  %vm691 = vcmp.gt.f32.partialorder %v505, 0.0
  %vm692 = vcmp.gt.f32.partialorder %v510, 0.0
  %vm693 = vcmp.gt.f32.partialorder %v513, 0.0
  %vm694 = vcmp.gt.f32.partialorder %v518, 0.0
  %vm695 = vcmp.gt.f32.partialorder %v521, 0.0
  %vm696 = vcmp.gt.f32.partialorder %v526, 0.0
  %vm697 = vcmp.gt.f32.partialorder %v529, 0.0
  %vm698 = vcmp.gt.f32.partialorder %v534, 0.0
  %vm699 = vcmp.gt.f32.partialorder %v537, 0.0
  %vm700 = vcmp.gt.f32.partialorder %v542, 0.0
  %vm701 = vcmp.gt.f32.partialorder %v545, 0.0
  %vm702 = vcmp.gt.f32.partialorder %v550, 0.0
  %vm703 = vcmp.gt.f32.partialorder %v553, 0.0
  %vm704 = vcmp.gt.f32.partialorder %v558, 0.0
  %vm705 = vcmp.gt.f32.partialorder %v561, 0.0
  %vm706 = vcmp.gt.f32.partialorder %v566, 0.0
  %vm707 = vcmp.gt.f32.partialorder %v569, 0.0
  %vm708 = vcmp.gt.f32.partialorder %v574, 0.0
  %vm709 = vcmp.gt.f32.partialorder %v577, 0.0
  %vm710 = vcmp.gt.f32.partialorder %v582, 0.0
  %vm711 = vcmp.gt.f32.partialorder %v585, 0.0
  %vm712 = vcmp.gt.f32.partialorder %v590, 0.0
  %vm713 = vcmp.gt.f32.partialorder %v593, 0.0
  %vm714 = vcmp.gt.f32.partialorder %v598, 0.0
  %vm715 = vcmp.gt.f32.partialorder %v601, 0.0
  %vm716 = vcmp.gt.f32.partialorder %v606, 0.0
  %vm717 = vcmp.gt.f32.partialorder %v609, 0.0
  %vm718 = vcmp.gt.f32.partialorder %v614, 0.0
  %vm719 = vcmp.gt.f32.partialorder %v617, 0.0
  %vm720 = vcmp.gt.f32.partialorder %v622, 0.0
  %vm721 = vcmp.gt.f32.partialorder %v625, 0.0
  %vm722 = vcmp.gt.f32.partialorder %v630, 0.0
  %vm723 = vcmp.gt.f32.partialorder %v633, 0.0
  %vm724 = vcmp.gt.f32.partialorder %v638, 0.0
  %vm725 = vcmp.gt.f32.partialorder %v641, 0.0
  %vm726 = vcmp.gt.f32.partialorder %v646, 0.0
  %vm727 = vcmp.gt.f32.partialorder %v649, 0.0
  %vm728 = vcmp.gt.f32.partialorder %v654, 0.0
  %vm729 = vcmp.gt.f32.partialorder %v657, 0.0
  %vm730 = vcmp.gt.f32.partialorder %v662, 0.0
  %vm731 = vcmp.gt.f32.partialorder %v665, 0.0
  %v732 = vmin.f32 %v414, 0.0
  %v733 = vmin.f32 %v417, 0.0
  %v734 = vmin.f32 %v422, 0.0
  %v735 = vmin.f32 %v425, 0.0
  %v736 = vmin.f32 %v430, 0.0
  %v737 = vmin.f32 %v433, 0.0
  %v738 = vmin.f32 %v438, 0.0
  %v739 = vmin.f32 %v441, 0.0
  %v740 = vmin.f32 %v446, 0.0
  %v741 = vmin.f32 %v449, 0.0
  %v742 = vmin.f32 %v454, 0.0
  %v743 = vmin.f32 %v457, 0.0
  %v744 = vmin.f32 %v462, 0.0
  %v745 = vmin.f32 %v465, 0.0
  %v746 = vmin.f32 %v470, 0.0
  %v747 = vmin.f32 %v473, 0.0
  %v748 = vmin.f32 %v478, 0.0
  %v749 = vmin.f32 %v481, 0.0
  %v750 = vmin.f32 %v486, 0.0
  %v751 = vmin.f32 %v489, 0.0
  %v752 = vmin.f32 %v494, 0.0
  %v753 = vmin.f32 %v497, 0.0
  %v754 = vmin.f32 %v502, 0.0
  %v755 = vmin.f32 %v505, 0.0
  %v756 = vmin.f32 %v510, 0.0
  %v757 = vmin.f32 %v513, 0.0
  %v758 = vmin.f32 %v518, 0.0
  %v759 = vmin.f32 %v521, 0.0
  %v760 = vmin.f32 %v526, 0.0
  %v761 = vmin.f32 %v529, 0.0
  %v762 = vmin.f32 %v534, 0.0
  %v763 = vmin.f32 %v537, 0.0
  %v764 = vmin.f32 %v542, 0.0
  %v765 = vmin.f32 %v545, 0.0
  %v766 = vmin.f32 %v550, 0.0
  %v767 = vmin.f32 %v553, 0.0
  %v768 = vmin.f32 %v558, 0.0
  %v769 = vmin.f32 %v561, 0.0
  %v770 = vmin.f32 %v566, 0.0
  %v771 = vmin.f32 %v569, 0.0
  %v772 = vmin.f32 %v574, 0.0
  %v773 = vmin.f32 %v577, 0.0
  %v774 = vmin.f32 %v582, 0.0
  %v775 = vmin.f32 %v585, 0.0
  %v776 = vmin.f32 %v590, 0.0
  %v777 = vmin.f32 %v593, 0.0
  %v778 = vmin.f32 %v598, 0.0
  %v779 = vmin.f32 %v601, 0.0
  %v780 = vmin.f32 %v606, 0.0
  %v781 = vmin.f32 %v609, 0.0
  %v782 = vmin.f32 %v614, 0.0
  %v783 = vmin.f32 %v617, 0.0
  %v784 = vmin.f32 %v622, 0.0
  %v785 = vmin.f32 %v625, 0.0
  %v786 = vmin.f32 %v630, 0.0
  %v787 = vmin.f32 %v633, 0.0
  %v788 = vmin.f32 %v638, 0.0
  %v789 = vmin.f32 %v641, 0.0
  %v790 = vmin.f32 %v646, 0.0
  %v791 = vmin.f32 %v649, 0.0
  %v792 = vmin.f32 %v654, 0.0
  %v793 = vmin.f32 %v657, 0.0
  %v794 = vmin.f32 %v662, 0.0
  %v795 = vmin.f32 %v665, 0.0
  %v796 = vmul.f32 %v732, 1.442695
  %v797 = vpow.pop %v796
  %v798 = vmul.f32 %v733, 1.442695
  %v799 = vpow.pop %v798
  %v800 = vmul.f32 %v734, 1.442695
  %v801 = vpow.pop %v800
  %v802 = vmul.f32 %v735, 1.442695
  %v803 = vpow.pop %v802
  %v804 = vmul.f32 %v736, 1.442695
  %v805 = vpow.pop %v804
  %v806 = vmul.f32 %v737, 1.442695
  %v807 = vpow.pop %v806
  %v808 = vmul.f32 %v738, 1.442695
  %v809 = vpow.pop %v808
  %v810 = vmul.f32 %v739, 1.442695
  %v811 = vpow.pop %v810
  %v812 = vmul.f32 %v740, 1.442695
  %v813 = vpow.pop %v812
  %v814 = vmul.f32 %v741, 1.442695
  %v815 = vpow.pop %v814
  %v816 = vmul.f32 %v742, 1.442695
  %v817 = vpow.pop %v816
  %v818 = vmul.f32 %v743, 1.442695
  %v819 = vpow.pop %v818
  %v820 = vmul.f32 %v744, 1.442695
  %v821 = vpow.pop %v820
  %v822 = vmul.f32 %v745, 1.442695
  %v823 = vpow.pop %v822
  %v824 = vmul.f32 %v746, 1.442695
  %v825 = vpow.pop %v824
  %v826 = vmul.f32 %v747, 1.442695
  %v827 = vpow.pop %v826
  %v828 = vmul.f32 %v748, 1.442695
  %v829 = vpow.pop %v828
  %v830 = vmul.f32 %v749, 1.442695
  %v831 = vpow.pop %v830
  %v832 = vmul.f32 %v750, 1.442695
  %v833 = vpow.pop %v832
  %v834 = vmul.f32 %v751, 1.442695
  %v835 = vpow.pop %v834
  %v836 = vmul.f32 %v752, 1.442695
  %v837 = vpow.pop %v836
  %v838 = vmul.f32 %v753, 1.442695
  %v839 = vpow.pop %v838
  %v840 = vmul.f32 %v754, 1.442695
  %v841 = vpow.pop %v840
  %v842 = vmul.f32 %v755, 1.442695
  %v843 = vpow.pop %v842
  %v844 = vmul.f32 %v756, 1.442695
  %v845 = vpow.pop %v844
  %v846 = vmul.f32 %v757, 1.442695
  %v847 = vpow.pop %v846
  %v848 = vmul.f32 %v758, 1.442695
  %v849 = vpow.pop %v848
  %v850 = vmul.f32 %v759, 1.442695
  %v851 = vpow.pop %v850
  %v852 = vmul.f32 %v760, 1.442695
  %v853 = vpow.pop %v852
  %v854 = vmul.f32 %v761, 1.442695
  %v855 = vpow.pop %v854
  %v856 = vmul.f32 %v762, 1.442695
  %v857 = vpow.pop %v856
  %v858 = vmul.f32 %v763, 1.442695
  %v859 = vpow.pop %v858
  %v860 = vmul.f32 %v764, 1.442695
  %v861 = vpow.pop %v860
  %v862 = vmul.f32 %v765, 1.442695
  %v863 = vpow.pop %v862
  %v864 = vmul.f32 %v766, 1.442695
  %v865 = vpow.pop %v864
  %v866 = vmul.f32 %v767, 1.442695
  %v867 = vpow.pop %v866
  %v868 = vmul.f32 %v768, 1.442695
  %v869 = vpow.pop %v868
  %v870 = vmul.f32 %v769, 1.442695
  %v871 = vpow.pop %v870
  %v872 = vmul.f32 %v770, 1.442695
  %v873 = vpow.pop %v872
  %v874 = vmul.f32 %v771, 1.442695
  %v875 = vpow.pop %v874
  %v876 = vmul.f32 %v772, 1.442695
  %v877 = vpow.pop %v876
  %v878 = vmul.f32 %v773, 1.442695
  %v879 = vpow.pop %v878
  %v880 = vmul.f32 %v774, 1.442695
  %v881 = vpow.pop %v880
  %v882 = vmul.f32 %v775, 1.442695
  %v883 = vpow.pop %v882
  %v884 = vmul.f32 %v776, 1.442695
  %v885 = vpow.pop %v884
  %v886 = vmul.f32 %v777, 1.442695
  %v887 = vpow.pop %v886
  %v888 = vmul.f32 %v778, 1.442695
  %v889 = vpow.pop %v888
  %v890 = vmul.f32 %v779, 1.442695
  %v891 = vpow.pop %v890
  %v892 = vmul.f32 %v780, 1.442695
  %v893 = vpow.pop %v892
  %v894 = vmul.f32 %v781, 1.442695
  %v895 = vpow.pop %v894
  %v896 = vmul.f32 %v782, 1.442695
  %v897 = vpow.pop %v896
  %v898 = vmul.f32 %v783, 1.442695
  %v899 = vpow.pop %v898
  %v900 = vmul.f32 %v784, 1.442695
  %v901 = vpow.pop %v900
  %v902 = vmul.f32 %v785, 1.442695
  %v903 = vpow.pop %v902
  %v904 = vmul.f32 %v786, 1.442695
  %v905 = vpow.pop %v904
  %v906 = vmul.f32 %v787, 1.442695
  %v907 = vpow.pop %v906
  %v908 = vmul.f32 %v788, 1.442695
  %v909 = vpow.pop %v908
  %v910 = vmul.f32 %v789, 1.442695
  %v911 = vpow.pop %v910
  %v912 = vmul.f32 %v790, 1.442695
  %v913 = vpow.pop %v912
  %v914 = vmul.f32 %v791, 1.442695
  %v915 = vpow.pop %v914
  %v916 = vmul.f32 %v792, 1.442695
  %v917 = vpow.pop %v916
  %v918 = vmul.f32 %v793, 1.442695
  %v919 = vpow.pop %v918
  %v920 = vmul.f32 %v794, 1.442695
  %v921 = vpow.pop %v920
  %v922 = vmul.f32 %v795, 1.442695
  %v923 = vpow.pop %v922
  %v924 = vsub.f32 %v797, 1.0
  %v925 = vsub.f32 %v799, 1.0
  %v926 = vsub.f32 %v801, 1.0
  %v927 = vsub.f32 %v803, 1.0
  %v928 = vsub.f32 %v805, 1.0
  %v929 = vsub.f32 %v807, 1.0
  %v930 = vsub.f32 %v809, 1.0
  %v931 = vsub.f32 %v811, 1.0
  %v932 = vsub.f32 %v813, 1.0
  %v933 = vsub.f32 %v815, 1.0
  %v934 = vsub.f32 %v817, 1.0
  %v935 = vsub.f32 %v819, 1.0
  %v936 = vsub.f32 %v821, 1.0
  %v937 = vsub.f32 %v823, 1.0
  %v938 = vsub.f32 %v825, 1.0
  %v939 = vsub.f32 %v827, 1.0
  %v940 = vsub.f32 %v829, 1.0
  %v941 = vsub.f32 %v831, 1.0
  %v942 = vsub.f32 %v833, 1.0
  %v943 = vsub.f32 %v835, 1.0
  %v944 = vsub.f32 %v837, 1.0
  %v945 = vsub.f32 %v839, 1.0
  %v946 = vsub.f32 %v841, 1.0
  %v947 = vsub.f32 %v843, 1.0
  %v948 = vsub.f32 %v845, 1.0
  %v949 = vsub.f32 %v847, 1.0
  %v950 = vsub.f32 %v849, 1.0
  %v951 = vsub.f32 %v851, 1.0
  %v952 = vsub.f32 %v853, 1.0
  %v953 = vsub.f32 %v855, 1.0
  %v954 = vsub.f32 %v857, 1.0
  %v955 = vsub.f32 %v859, 1.0
  %v956 = vsub.f32 %v861, 1.0
  %v957 = vsub.f32 %v863, 1.0
  %v958 = vsub.f32 %v865, 1.0
  %v959 = vsub.f32 %v867, 1.0
  %v960 = vsub.f32 %v869, 1.0
  %v961 = vsub.f32 %v871, 1.0
  %v962 = vsub.f32 %v873, 1.0
  %v963 = vsub.f32 %v875, 1.0
  %v964 = vsub.f32 %v877, 1.0
  %v965 = vsub.f32 %v879, 1.0
  %v966 = vsub.f32 %v881, 1.0
  %v967 = vsub.f32 %v883, 1.0
  %v968 = vsub.f32 %v885, 1.0
  %v969 = vsub.f32 %v887, 1.0
  %v970 = vsub.f32 %v889, 1.0
  %v971 = vsub.f32 %v891, 1.0
  %v972 = vsub.f32 %v893, 1.0
  %v973 = vsub.f32 %v895, 1.0
  %v974 = vsub.f32 %v897, 1.0
  %v975 = vsub.f32 %v899, 1.0
  %v976 = vsub.f32 %v901, 1.0
  %v977 = vsub.f32 %v903, 1.0
  %v978 = vsub.f32 %v905, 1.0
  %v979 = vsub.f32 %v907, 1.0
  %v980 = vsub.f32 %v909, 1.0
  %v981 = vsub.f32 %v911, 1.0
  %v982 = vsub.f32 %v913, 1.0
  %v983 = vsub.f32 %v915, 1.0
  %v984 = vsub.f32 %v917, 1.0
  %v985 = vsub.f32 %v919, 1.0
  %v986 = vsub.f32 %v921, 1.0
  %v987 = vsub.f32 %v923, 1.0
  %v988 = vsel %vm668, %v414, %v924
  %v989 = vsel %vm669, %v417, %v925
  %v990 = vsel %vm670, %v422, %v926
  %v991 = vsel %vm671, %v425, %v927
  %v992 = vsel %vm672, %v430, %v928
  %v993 = vsel %vm673, %v433, %v929
  %v994 = vsel %vm674, %v438, %v930
  %v995 = vsel %vm675, %v441, %v931
  %v996 = vsel %vm676, %v446, %v932
  %v997 = vsel %vm677, %v449, %v933
  %v998 = vsel %vm678, %v454, %v934
  %v999 = vsel %vm679, %v457, %v935
  %v1000 = vsel %vm680, %v462, %v936
  %v1001 = vsel %vm681, %v465, %v937
  %v1002 = vsel %vm682, %v470, %v938
  %v1003 = vsel %vm683, %v473, %v939
  %v1004 = vsel %vm684, %v478, %v940
  %v1005 = vsel %vm685, %v481, %v941
  %v1006 = vsel %vm686, %v486, %v942
  %v1007 = vsel %vm687, %v489, %v943
  %v1008 = vsel %vm688, %v494, %v944
  %v1009 = vsel %vm689, %v497, %v945
  %v1010 = vsel %vm690, %v502, %v946
  %v1011 = vsel %vm691, %v505, %v947
  %v1012 = vsel %vm692, %v510, %v948
  %v1013 = vsel %vm693, %v513, %v949
  %v1014 = vsel %vm694, %v518, %v950
  %v1015 = vsel %vm695, %v521, %v951
  %v1016 = vsel %vm696, %v526, %v952
  %v1017 = vsel %vm697, %v529, %v953
  %v1018 = vsel %vm698, %v534, %v954
  %v1019 = vsel %vm699, %v537, %v955
  %v1020 = vsel %vm700, %v542, %v956
  %v1021 = vsel %vm701, %v545, %v957
  %v1022 = vsel %vm702, %v550, %v958
  %v1023 = vsel %vm703, %v553, %v959
  %v1024 = vsel %vm704, %v558, %v960
  %v1025 = vsel %vm705, %v561, %v961
  %v1026 = vsel %vm706, %v566, %v962
  %v1027 = vsel %vm707, %v569, %v963
  %v1028 = vsel %vm708, %v574, %v964
  %v1029 = vsel %vm709, %v577, %v965
  %v1030 = vsel %vm710, %v582, %v966
  %v1031 = vsel %vm711, %v585, %v967
  %v1032 = vsel %vm712, %v590, %v968
  %v1033 = vsel %vm713, %v593, %v969
  %v1034 = vsel %vm714, %v598, %v970
  %v1035 = vsel %vm715, %v601, %v971
  %v1036 = vsel %vm716, %v606, %v972
  %v1037 = vsel %vm717, %v609, %v973
  %v1038 = vsel %vm718, %v614, %v974
  %v1039 = vsel %vm719, %v617, %v975
  %v1040 = vsel %vm720, %v622, %v976
  %v1041 = vsel %vm721, %v625, %v977
  %v1042 = vsel %vm722, %v630, %v978
  %v1043 = vsel %vm723, %v633, %v979
  %v1044 = vsel %vm724, %v638, %v980
  %v1045 = vsel %vm725, %v641, %v981
  %v1046 = vsel %vm726, %v646, %v982
  %v1047 = vsel %vm727, %v649, %v983
  %v1048 = vsel %vm728, %v654, %v984
  %v1049 = vsel %vm729, %v657, %v985
  %v1050 = vsel %vm730, %v662, %v986
  %v1051 = vsel %vm731, %v665, %v987
  %v1052 = vpack.c.bf16 %v989, %v988
  %v1053 = vpack.c.bf16 %v991, %v990
  %v1054 = vpack.c.bf16 %v993, %v992
  %v1055 = vpack.c.bf16 %v995, %v994
  %v1056 = vpack.c.bf16 %v997, %v996
  %v1057 = vpack.c.bf16 %v999, %v998
  %v1058 = vpack.c.bf16 %v1001, %v1000
  %v1059 = vpack.c.bf16 %v1003, %v1002
  %v1060 = vpack.c.bf16 %v1005, %v1004
  %v1061 = vpack.c.bf16 %v1007, %v1006
  %v1062 = vpack.c.bf16 %v1009, %v1008
  %v1063 = vpack.c.bf16 %v1011, %v1010
  %v1064 = vpack.c.bf16 %v1013, %v1012
  %v1065 = vpack.c.bf16 %v1015, %v1014
  %v1066 = vpack.c.bf16 %v1017, %v1016
  %v1067 = vpack.c.bf16 %v1019, %v1018
  %v1068 = vpack.c.bf16 %v1021, %v1020
  %v1069 = vpack.c.bf16 %v1023, %v1022
  %v1070 = vpack.c.bf16 %v1025, %v1024
  %v1071 = vpack.c.bf16 %v1027, %v1026
  %v1072 = vpack.c.bf16 %v1029, %v1028
  %v1073 = vpack.c.bf16 %v1031, %v1030
  %v1074 = vpack.c.bf16 %v1033, %v1032
  %v1075 = vpack.c.bf16 %v1035, %v1034
  %v1076 = vpack.c.bf16 %v1037, %v1036
  %v1077 = vpack.c.bf16 %v1039, %v1038
  %v1078 = vpack.c.bf16 %v1041, %v1040
  %v1079 = vpack.c.bf16 %v1043, %v1042
  %v1080 = vpack.c.bf16 %v1045, %v1044
  %v1081 = vpack.c.bf16 %v1047, %v1046
  %v1082 = vpack.c.bf16 %v1049, %v1048
  %v1083 = vpack.c.bf16 %v1051, %v1050
  %1084 = vst [vmem:[#allocation2] sm:$0xf] 0
  %1085 = vst [vmem:[#allocation2 + $0x4] sm:$0xf] 0
  %1086 = vst [vmem:[#allocation2 + $0x8] sm:$0x1] 0
  %s1087 = scalar_lea.vmem [#allocation2], 204
  %1088 = vst [vmem:[%s1087] sm:$0xf] 0
  %1089 = vst [vmem:[%s1087 + $0x4] sm:$0xf] 0
  %1090 = vst [vmem:[%s1087 + $0x8] sm:$0x1] 0
  %vm1091 = vcmask 1040384
  %vm1092 = vsmask.f32 256
  %vm1093 = vmand %vm1091, %vm1092
  %v1094 = vld [vmem:[#allocation2] sm:$0x1]
  %v1095 = vsel %vm1093, 0, %v1094
  %1096 = vst [vmem:[#allocation2] sm:$0x1] %v1095
  %v1097 = vld [vmem:[#allocation2 + $0xc] sm:$0x1]
  %v1098 = vsel %vm1093, 0, %v1097
  %1099 = vst [vmem:[#allocation2 + $0xc] sm:$0x1] %v1098
  %v1100 = vld [vmem:[#allocation2 + $0x18] sm:$0x1]
  %v1101 = vsel %vm1093, 0, %v1100
  %1102 = vst [vmem:[#allocation2 + $0x18] sm:$0x1] %v1101
  %v1103 = vld [vmem:[#allocation2 + $0x24] sm:$0x1]
  %v1104 = vsel %vm1093, 0, %v1103
  %1105 = vst [vmem:[#allocation2 + $0x24] sm:$0x1] %v1104
  %v1106 = vld [vmem:[#allocation2 + $0x30] sm:$0x1]
  %v1107 = vsel %vm1093, 0, %v1106
  %1108 = vst [vmem:[#allocation2 + $0x30] sm:$0x1] %v1107
  %v1109 = vld [vmem:[#allocation2 + $0x3c] sm:$0x1]
  %v1110 = vsel %vm1093, 0, %v1109
  %1111 = vst [vmem:[#allocation2 + $0x3c] sm:$0x1] %v1110
  %v1112 = vld [vmem:[#allocation2 + $0x48] sm:$0x1]
  %v1113 = vsel %vm1093, 0, %v1112
  %1114 = vst [vmem:[#allocation2 + $0x48] sm:$0x1] %v1113
  %v1115 = vld [vmem:[#allocation2 + $0x54] sm:$0x1]
  %v1116 = vsel %vm1093, 0, %v1115
  %1117 = vst [vmem:[#allocation2 + $0x54] sm:$0x1] %v1116
  %v1118 = vld [vmem:[#allocation2 + $0x60] sm:$0x1]
  %v1119 = vsel %vm1093, 0, %v1118
  %1120 = vst [vmem:[#allocation2 + $0x60] sm:$0x1] %v1119
  %v1121 = vld [vmem:[#allocation2 + $0x6c] sm:$0x1]
  %v1122 = vsel %vm1093, 0, %v1121
  %1123 = vst [vmem:[#allocation2 + $0x6c] sm:$0x1] %v1122
  %v1124 = vld [vmem:[#allocation2 + $0x78] sm:$0x1]
  %v1125 = vsel %vm1093, 0, %v1124
  %1126 = vst [vmem:[#allocation2 + $0x78] sm:$0x1] %v1125
  %v1127 = vld [vmem:[#allocation2 + $0x84] sm:$0x1]
  %v1128 = vsel %vm1093, 0, %v1127
  %1129 = vst [vmem:[#allocation2 + $0x84] sm:$0x1] %v1128
  %v1130 = vld [vmem:[#allocation2 + $0x90] sm:$0x1]
  %v1131 = vsel %vm1093, 0, %v1130
  %1132 = vst [vmem:[#allocation2 + $0x90] sm:$0x1] %v1131
  %v1133 = vld [vmem:[#allocation2 + $0x9c] sm:$0x1]
  %v1134 = vsel %vm1093, 0, %v1133
  %1135 = vst [vmem:[#allocation2 + $0x9c] sm:$0x1] %v1134
  %v1136 = vld [vmem:[#allocation2 + $0xa8] sm:$0x1]
  %v1137 = vsel %vm1093, 0, %v1136
  %1138 = vst [vmem:[#allocation2 + $0xa8] sm:$0x1] %v1137
  %v1139 = vld [vmem:[#allocation2 + $0xb4] sm:$0x1]
  %v1140 = vsel %vm1093, 0, %v1139
  %1141 = vst [vmem:[#allocation2 + $0xb4] sm:$0x1] %v1140
  %v1142 = vld [vmem:[#allocation2 + $0xc0] sm:$0x1]
  %v1143 = vsel %vm1093, 0, %v1142
  %1144 = vst [vmem:[#allocation2 + $0xc0] sm:$0x1] %v1143
  %v1145 = vld [vmem:[#allocation2 + $0xcc] sm:$0x1]
  %v1146 = vsel %vm1093, 0, %v1145
  %1147 = vst [vmem:[#allocation2 + $0xcc] sm:$0x1] %v1146
  %vm1148 = vsmask.f32 7938
  %vm1149 = vmand %vm1091, %vm1148
  %v1150 = vld [vmem:[#allocation2 + $0x8] sm:$0x1]
  %v1151 = vsel %vm1149, 0, %v1150
  %1152 = vst [vmem:[#allocation2 + $0x8] sm:$0x1] %v1151
  %v1153 = vld [vmem:[#allocation2 + $0x14] sm:$0x1]
  %v1154 = vsel %vm1149, 0, %v1153
  %1155 = vst [vmem:[#allocation2 + $0x14] sm:$0x1] %v1154
  %v1156 = vld [vmem:[#allocation2 + $0x20] sm:$0x1]
  %v1157 = vsel %vm1149, 0, %v1156
  %1158 = vst [vmem:[#allocation2 + $0x20] sm:$0x1] %v1157
  %v1159 = vld [vmem:[#allocation2 + $0x2c] sm:$0x1]
  %v1160 = vsel %vm1149, 0, %v1159
  %1161 = vst [vmem:[#allocation2 + $0x2c] sm:$0x1] %v1160
  %v1162 = vld [vmem:[#allocation2 + $0x38] sm:$0x1]
  %v1163 = vsel %vm1149, 0, %v1162
  %1164 = vst [vmem:[#allocation2 + $0x38] sm:$0x1] %v1163
  %v1165 = vld [vmem:[#allocation2 + $0x44] sm:$0x1]
  %v1166 = vsel %vm1149, 0, %v1165
  %1167 = vst [vmem:[#allocation2 + $0x44] sm:$0x1] %v1166
  %v1168 = vld [vmem:[#allocation2 + $0x50] sm:$0x1]
  %v1169 = vsel %vm1149, 0, %v1168
  %1170 = vst [vmem:[#allocation2 + $0x50] sm:$0x1] %v1169
  %v1171 = vld [vmem:[#allocation2 + $0x5c] sm:$0x1]
  %v1172 = vsel %vm1149, 0, %v1171
  %1173 = vst [vmem:[#allocation2 + $0x5c] sm:$0x1] %v1172
  %v1174 = vld [vmem:[#allocation2 + $0x68] sm:$0x1]
  %v1175 = vsel %vm1149, 0, %v1174
  %1176 = vst [vmem:[#allocation2 + $0x68] sm:$0x1] %v1175
  %v1177 = vld [vmem:[#allocation2 + $0x74] sm:$0x1]
  %v1178 = vsel %vm1149, 0, %v1177
  %1179 = vst [vmem:[#allocation2 + $0x74] sm:$0x1] %v1178
  %v1180 = vld [vmem:[#allocation2 + $0x80] sm:$0x1]
  %v1181 = vsel %vm1149, 0, %v1180
  %1182 = vst [vmem:[#allocation2 + $0x80] sm:$0x1] %v1181
  %v1183 = vld [vmem:[#allocation2 + $0x8c] sm:$0x1]
  %v1184 = vsel %vm1149, 0, %v1183
  %1185 = vst [vmem:[#allocation2 + $0x8c] sm:$0x1] %v1184
  %v1186 = vld [vmem:[#allocation2 + $0x98] sm:$0x1]
  %v1187 = vsel %vm1149, 0, %v1186
  %1188 = vst [vmem:[#allocation2 + $0x98] sm:$0x1] %v1187
  %v1189 = vld [vmem:[#allocation2 + $0xa4] sm:$0x1]
  %v1190 = vsel %vm1149, 0, %v1189
  %1191 = vst [vmem:[#allocation2 + $0xa4] sm:$0x1] %v1190
  %v1192 = vld [vmem:[#allocation2 + $0xb0] sm:$0x1]
  %v1193 = vsel %vm1149, 0, %v1192
  %1194 = vst [vmem:[#allocation2 + $0xb0] sm:$0x1] %v1193
  %v1195 = vld [vmem:[#allocation2 + $0xbc] sm:$0x1]
  %v1196 = vsel %vm1149, 0, %v1195
  %1197 = vst [vmem:[#allocation2 + $0xbc] sm:$0x1] %v1196
  %v1198 = vld [vmem:[#allocation2 + $0xc8] sm:$0x1]
  %v1199 = vsel %vm1149, 0, %v1198
  %1200 = vst [vmem:[#allocation2 + $0xc8] sm:$0x1] %v1199
  %v1201 = vld [vmem:[#allocation2 + $0xd4] sm:$0x1]
  %v1202 = vsel %vm1149, 0, %v1201
  %1203 = vst [vmem:[#allocation2 + $0xd4] sm:$0x1] %v1202
  %v1220 = vunpack.c.l.b16 %v1052
  %v1221 = vunpack.c.h.b16 %v1052
  %v1222 = vunpack.c.l.b16 %v1053
  %v1223 = vunpack.c.h.b16 %v1053
  %v1224 = vunpack.c.l.b16 %v1054
  %v1225 = vunpack.c.h.b16 %v1054
  %v1226 = vunpack.c.l.b16 %v1055
  %v1227 = vunpack.c.h.b16 %v1055
  %v1228 = vunpack.c.l.b16 %v1056
  %v1229 = vunpack.c.h.b16 %v1056
  %v1230 = vunpack.c.l.b16 %v1057
  %v1231 = vunpack.c.h.b16 %v1057
  %v1232 = vunpack.c.l.b16 %v1058
  %v1233 = vunpack.c.h.b16 %v1058
  %v1234 = vunpack.c.l.b16 %v1059
  %v1235 = vunpack.c.h.b16 %v1059
  %v1236 = vunpack.c.l.b16 %v1060
  %v1237 = vunpack.c.h.b16 %v1060
  %v1238 = vunpack.c.l.b16 %v1061
  %v1239 = vunpack.c.h.b16 %v1061
  %v1240 = vunpack.c.l.b16 %v1062
  %v1241 = vunpack.c.h.b16 %v1062
  %v1242 = vunpack.c.l.b16 %v1063
  %v1243 = vunpack.c.h.b16 %v1063
  %v1244 = vunpack.c.l.b16 %v1064
  %v1245 = vunpack.c.h.b16 %v1064
  %v1246 = vunpack.c.l.b16 %v1065
  %v1247 = vunpack.c.h.b16 %v1065
  %v1248 = vunpack.c.l.b16 %v1066
  %v1249 = vunpack.c.h.b16 %v1066
  %v1250 = vunpack.c.l.b16 %v1067
  %v1251 = vunpack.c.h.b16 %v1067
  %v1252 = vpack.c.b16 %v1220, %v1220
  %v1253 = vpack.c.b16 %v1221, %v1221
  %v1254 = vpack.c.b16 %v1222, %v1222
  %v1255 = vpack.c.b16 %v1223, %v1223
  %v1256 = vpack.c.b16 %v1224, %v1224
  %v1257 = vpack.c.b16 %v1225, %v1225
  %v1258 = vpack.c.b16 %v1226, %v1226
  %v1259 = vpack.c.b16 %v1227, %v1227
  %v1260 = vpack.c.b16 %v1228, %v1228
  %v1261 = vpack.c.b16 %v1229, %v1229
  %v1262 = vpack.c.b16 %v1230, %v1230
  %v1263 = vpack.c.b16 %v1231, %v1231
  %v1264 = vpack.c.b16 %v1232, %v1232
  %v1265 = vpack.c.b16 %v1233, %v1233
  %v1266 = vpack.c.b16 %v1234, %v1234
  %v1267 = vpack.c.b16 %v1235, %v1235
  %v1268 = vpack.c.b16 %v1236, %v1236
  %v1269 = vpack.c.b16 %v1237, %v1237
  %v1270 = vpack.c.b16 %v1238, %v1238
  %v1271 = vpack.c.b16 %v1239, %v1239
  %v1272 = vpack.c.b16 %v1240, %v1240
  %v1273 = vpack.c.b16 %v1241, %v1241
  %v1274 = vpack.c.b16 %v1242, %v1242
  %v1275 = vpack.c.b16 %v1243, %v1243
  %v1276 = vpack.c.b16 %v1244, %v1244
  %v1277 = vpack.c.b16 %v1245, %v1245
  %v1278 = vpack.c.b16 %v1246, %v1246
  %v1279 = vpack.c.b16 %v1247, %v1247
  %v1280 = vpack.c.b16 %v1248, %v1248
  %v1281 = vpack.c.b16 %v1249, %v1249
  %v1282 = vpack.c.b16 %v1250, %v1250
  %v1283 = vpack.c.b16 %v1251, %v1251
  %vm1284 = vsmask.f32 4368
  %vm1285 = vmor %vm1092, %vm1284
  %v1287 = vshrl.u32 %v1252, 16
  %v1289 = vrot.slane %v1287, 7
  %v1290 = vshll.u32 %v1252, 16
  %v1292 = vor.u32 %v1289, %v1290
  %v1293 = vrot.slane %v1289, 4
  %v1295 = vshrl.u32 %v1253, 16
  %v1297 = vrot.slane %v1295, 7
  %v1298 = vshll.u32 %v1253, 16
  %v1300 = vor.u32 %v1297, %v1298
  %v1301 = vsel %vm1285, %v1293, %v1300
  %v1302 = vrot.slane %v1297, 4
  %v1304 = vshrl.u32 %v1254, 16
  %v1306 = vrot.slane %v1304, 7
  %v1307 = vshll.u32 %v1254, 16
  %v1309 = vor.u32 %v1306, %v1307
  %v1310 = vrot.slane %v1306, 4
  %v1312 = vshrl.u32 %v1255, 16
  %v1314 = vrot.slane %v1312, 7
  %v1315 = vshll.u32 %v1255, 16
  %v1317 = vor.u32 %v1314, %v1315
  %v1318 = vsel %vm1285, %v1310, %v1317
  %v1319 = vrot.slane %v1314, 4
  %v1321 = vshrl.u32 %v1256, 16
  %v1323 = vrot.slane %v1321, 7
  %v1324 = vshll.u32 %v1256, 16
  %v1326 = vor.u32 %v1323, %v1324
  %v1327 = vrot.slane %v1323, 4
  %v1329 = vshrl.u32 %v1257, 16
  %v1331 = vrot.slane %v1329, 7
  %v1332 = vshll.u32 %v1257, 16
  %v1334 = vor.u32 %v1331, %v1332
  %v1335 = vsel %vm1285, %v1327, %v1334
  %v1336 = vrot.slane %v1331, 4
  %v1338 = vshrl.u32 %v1258, 16
  %v1340 = vrot.slane %v1338, 7
  %v1341 = vshll.u32 %v1258, 16
  %v1343 = vor.u32 %v1340, %v1341
  %v1344 = vrot.slane %v1340, 4
  %v1346 = vshrl.u32 %v1259, 16
  %v1348 = vrot.slane %v1346, 7
  %v1349 = vshll.u32 %v1259, 16
  %v1351 = vor.u32 %v1348, %v1349
  %v1352 = vsel %vm1285, %v1344, %v1351
  %v1353 = vrot.slane %v1348, 4
  %v1355 = vshrl.u32 %v1260, 16
  %v1357 = vrot.slane %v1355, 7
  %v1358 = vshll.u32 %v1260, 16
  %v1360 = vor.u32 %v1357, %v1358
  %v1361 = vrot.slane %v1357, 4
  %v1363 = vshrl.u32 %v1261, 16
  %v1365 = vrot.slane %v1363, 7
  %v1366 = vshll.u32 %v1261, 16
  %v1368 = vor.u32 %v1365, %v1366
  %v1369 = vsel %vm1285, %v1361, %v1368
  %v1370 = vrot.slane %v1365, 4
  %v1372 = vshrl.u32 %v1262, 16
  %v1374 = vrot.slane %v1372, 7
  %v1375 = vshll.u32 %v1262, 16
  %v1377 = vor.u32 %v1374, %v1375
  %v1378 = vrot.slane %v1374, 4
  %v1380 = vshrl.u32 %v1263, 16
  %v1382 = vrot.slane %v1380, 7
  %v1383 = vshll.u32 %v1263, 16
  %v1385 = vor.u32 %v1382, %v1383
  %v1386 = vsel %vm1285, %v1378, %v1385
  %v1387 = vrot.slane %v1382, 4
  %v1389 = vshrl.u32 %v1264, 16
  %v1391 = vrot.slane %v1389, 7
  %v1392 = vshll.u32 %v1264, 16
  %v1394 = vor.u32 %v1391, %v1392
  %v1395 = vrot.slane %v1391, 4
  %v1397 = vshrl.u32 %v1265, 16
  %v1399 = vrot.slane %v1397, 7
  %v1400 = vshll.u32 %v1265, 16
  %v1402 = vor.u32 %v1399, %v1400
  %v1403 = vsel %vm1285, %v1395, %v1402
  %v1404 = vrot.slane %v1399, 4
  %v1406 = vshrl.u32 %v1266, 16
  %v1408 = vrot.slane %v1406, 7
  %v1409 = vshll.u32 %v1266, 16
  %v1411 = vor.u32 %v1408, %v1409
  %v1412 = vrot.slane %v1408, 4
  %v1414 = vshrl.u32 %v1267, 16
  %v1416 = vrot.slane %v1414, 7
  %v1417 = vshll.u32 %v1267, 16
  %v1419 = vor.u32 %v1416, %v1417
  %v1420 = vsel %vm1285, %v1412, %v1419
  %v1421 = vrot.slane %v1416, 4
  %v1423 = vshrl.u32 %v1268, 16
  %v1425 = vrot.slane %v1423, 7
  %v1426 = vshll.u32 %v1268, 16
  %v1428 = vor.u32 %v1425, %v1426
  %v1429 = vrot.slane %v1425, 4
  %v1431 = vshrl.u32 %v1269, 16
  %v1433 = vrot.slane %v1431, 7
  %v1434 = vshll.u32 %v1269, 16
  %v1436 = vor.u32 %v1433, %v1434
  %v1437 = vsel %vm1285, %v1429, %v1436
  %v1438 = vrot.slane %v1433, 4
  %v1440 = vshrl.u32 %v1270, 16
  %v1442 = vrot.slane %v1440, 7
  %v1443 = vshll.u32 %v1270, 16
  %v1445 = vor.u32 %v1442, %v1443
  %v1446 = vrot.slane %v1442, 4
  %v1448 = vshrl.u32 %v1271, 16
  %v1450 = vrot.slane %v1448, 7
  %v1451 = vshll.u32 %v1271, 16
  %v1453 = vor.u32 %v1450, %v1451
  %v1454 = vsel %vm1285, %v1446, %v1453
  %v1455 = vrot.slane %v1450, 4
  %v1457 = vshrl.u32 %v1272, 16
  %v1459 = vrot.slane %v1457, 7
  %v1460 = vshll.u32 %v1272, 16
  %v1462 = vor.u32 %v1459, %v1460
  %v1463 = vrot.slane %v1459, 4
  %v1465 = vshrl.u32 %v1273, 16
  %v1467 = vrot.slane %v1465, 7
  %v1468 = vshll.u32 %v1273, 16
  %v1470 = vor.u32 %v1467, %v1468
  %v1471 = vsel %vm1285, %v1463, %v1470
  %v1472 = vrot.slane %v1467, 4
  %v1474 = vshrl.u32 %v1274, 16
  %v1476 = vrot.slane %v1474, 7
  %v1477 = vshll.u32 %v1274, 16
  %v1479 = vor.u32 %v1476, %v1477
  %v1480 = vrot.slane %v1476, 4
  %v1482 = vshrl.u32 %v1275, 16
  %v1484 = vrot.slane %v1482, 7
  %v1485 = vshll.u32 %v1275, 16
  %v1487 = vor.u32 %v1484, %v1485
  %v1488 = vsel %vm1285, %v1480, %v1487
  %v1489 = vrot.slane %v1484, 4
  %v1491 = vshrl.u32 %v1276, 16
  %v1493 = vrot.slane %v1491, 7
  %v1494 = vshll.u32 %v1276, 16
  %v1496 = vor.u32 %v1493, %v1494
  %v1497 = vrot.slane %v1493, 4
  %v1499 = vshrl.u32 %v1277, 16
  %v1501 = vrot.slane %v1499, 7
  %v1502 = vshll.u32 %v1277, 16
  %v1504 = vor.u32 %v1501, %v1502
  %v1505 = vsel %vm1285, %v1497, %v1504
  %v1506 = vrot.slane %v1501, 4
  %v1508 = vshrl.u32 %v1278, 16
  %v1510 = vrot.slane %v1508, 7
  %v1511 = vshll.u32 %v1278, 16
  %v1513 = vor.u32 %v1510, %v1511
  %v1514 = vrot.slane %v1510, 4
  %v1516 = vshrl.u32 %v1279, 16
  %v1518 = vrot.slane %v1516, 7
  %v1519 = vshll.u32 %v1279, 16
  %v1521 = vor.u32 %v1518, %v1519
  %v1522 = vsel %vm1285, %v1514, %v1521
  %v1523 = vrot.slane %v1518, 4
  %v1525 = vshrl.u32 %v1280, 16
  %v1527 = vrot.slane %v1525, 7
  %v1528 = vshll.u32 %v1280, 16
  %v1530 = vor.u32 %v1527, %v1528
  %v1531 = vrot.slane %v1527, 4
  %v1533 = vshrl.u32 %v1281, 16
  %v1535 = vrot.slane %v1533, 7
  %v1536 = vshll.u32 %v1281, 16
  %v1538 = vor.u32 %v1535, %v1536
  %v1539 = vsel %vm1285, %v1531, %v1538
  %v1540 = vrot.slane %v1535, 4
  %v1542 = vshrl.u32 %v1282, 16
  %v1544 = vrot.slane %v1542, 7
  %v1545 = vshll.u32 %v1282, 16
  %v1547 = vor.u32 %v1544, %v1545
  %v1548 = vrot.slane %v1544, 4
  %v1550 = vshrl.u32 %v1283, 16
  %v1552 = vrot.slane %v1550, 7
  %v1553 = vshll.u32 %v1283, 16
  %v1555 = vor.u32 %v1552, %v1553
  %v1556 = vsel %vm1285, %v1548, %v1555
  %v1557 = vrot.slane %v1552, 4
  %s1606 = scalar_lea.vmem [#allocation2], 12
  %vm1607 = vcmask 1043456
  %vm1608 = vmand %vm1607, %vm1148
  %v1609 = vld [vmem:[%s1606] sm:$0xf]
  %v1610 = vsel %vm1608, %v1292, %v1609
  %1611 = vst [vmem:[%s1606] sm:$0xf] %v1610
  %1612 = vst [vmem:[%s1606 + $0x4] sm:$0xf] %v1301
  %v1613 = vld [vmem:[%s1606 + $0x8] sm:$0x1]
  %v1614 = vsel %vm1093, %v1302, %v1613
  %1615 = vst [vmem:[%s1606 + $0x8] sm:$0x1] %v1614
  %v1616 = vld [vmem:[%s1606 + $0xc] sm:$0xf]
  %v1617 = vsel %vm1608, %v1309, %v1616
  %1618 = vst [vmem:[%s1606 + $0xc] sm:$0xf] %v1617
  %1619 = vst [vmem:[%s1606 + $0x10] sm:$0xf] %v1318
  %v1620 = vld [vmem:[%s1606 + $0x14] sm:$0x1]
  %v1621 = vsel %vm1093, %v1319, %v1620
  %1622 = vst [vmem:[%s1606 + $0x14] sm:$0x1] %v1621
  %v1623 = vld [vmem:[%s1606 + $0x18] sm:$0xf]
  %v1624 = vsel %vm1608, %v1326, %v1623
  %1625 = vst [vmem:[%s1606 + $0x18] sm:$0xf] %v1624
  %1626 = vst [vmem:[%s1606 + $0x1c] sm:$0xf] %v1335
  %v1627 = vld [vmem:[%s1606 + $0x20] sm:$0x1]
  %v1628 = vsel %vm1093, %v1336, %v1627
  %1629 = vst [vmem:[%s1606 + $0x20] sm:$0x1] %v1628
  %v1630 = vld [vmem:[%s1606 + $0x24] sm:$0xf]
  %v1631 = vsel %vm1608, %v1343, %v1630
  %1632 = vst [vmem:[%s1606 + $0x24] sm:$0xf] %v1631
  %1633 = vst [vmem:[%s1606 + $0x28] sm:$0xf] %v1352
  %v1634 = vld [vmem:[%s1606 + $0x2c] sm:$0x1]
  %v1635 = vsel %vm1093, %v1353, %v1634
  %1636 = vst [vmem:[%s1606 + $0x2c] sm:$0x1] %v1635
  %v1637 = vld [vmem:[%s1606 + $0x30] sm:$0xf]
  %v1638 = vsel %vm1608, %v1360, %v1637
  %1639 = vst [vmem:[%s1606 + $0x30] sm:$0xf] %v1638
  %1640 = vst [vmem:[%s1606 + $0x34] sm:$0xf] %v1369
  %v1641 = vld [vmem:[%s1606 + $0x38] sm:$0x1]
  %v1642 = vsel %vm1093, %v1370, %v1641
  %1643 = vst [vmem:[%s1606 + $0x38] sm:$0x1] %v1642
  %v1644 = vld [vmem:[%s1606 + $0x3c] sm:$0xf]
  %v1645 = vsel %vm1608, %v1377, %v1644
  %1646 = vst [vmem:[%s1606 + $0x3c] sm:$0xf] %v1645
  %1647 = vst [vmem:[%s1606 + $0x40] sm:$0xf] %v1386
  %v1648 = vld [vmem:[%s1606 + $0x44] sm:$0x1]
  %v1649 = vsel %vm1093, %v1387, %v1648
  %1650 = vst [vmem:[%s1606 + $0x44] sm:$0x1] %v1649
  %v1651 = vld [vmem:[%s1606 + $0x48] sm:$0xf]
  %v1652 = vsel %vm1608, %v1394, %v1651
  %1653 = vst [vmem:[%s1606 + $0x48] sm:$0xf] %v1652
  %1654 = vst [vmem:[%s1606 + $0x4c] sm:$0xf] %v1403
  %v1655 = vld [vmem:[%s1606 + $0x50] sm:$0x1]
  %v1656 = vsel %vm1093, %v1404, %v1655
  %1657 = vst [vmem:[%s1606 + $0x50] sm:$0x1] %v1656
  %v1658 = vld [vmem:[%s1606 + $0x54] sm:$0xf]
  %v1659 = vsel %vm1608, %v1411, %v1658
  %1660 = vst [vmem:[%s1606 + $0x54] sm:$0xf] %v1659
  %1661 = vst [vmem:[%s1606 + $0x58] sm:$0xf] %v1420
  %v1662 = vld [vmem:[%s1606 + $0x5c] sm:$0x1]
  %v1663 = vsel %vm1093, %v1421, %v1662
  %1664 = vst [vmem:[%s1606 + $0x5c] sm:$0x1] %v1663
  %v1665 = vld [vmem:[%s1606 + $0x60] sm:$0xf]
  %v1666 = vsel %vm1608, %v1428, %v1665
  %1667 = vst [vmem:[%s1606 + $0x60] sm:$0xf] %v1666
  %1668 = vst [vmem:[%s1606 + $0x64] sm:$0xf] %v1437
  %v1669 = vld [vmem:[%s1606 + $0x68] sm:$0x1]
  %v1670 = vsel %vm1093, %v1438, %v1669
  %1671 = vst [vmem:[%s1606 + $0x68] sm:$0x1] %v1670
  %v1672 = vld [vmem:[%s1606 + $0x6c] sm:$0xf]
  %v1673 = vsel %vm1608, %v1445, %v1672
  %1674 = vst [vmem:[%s1606 + $0x6c] sm:$0xf] %v1673
  %1675 = vst [vmem:[%s1606 + $0x70] sm:$0xf] %v1454
  %v1676 = vld [vmem:[%s1606 + $0x74] sm:$0x1]
  %v1677 = vsel %vm1093, %v1455, %v1676
  %1678 = vst [vmem:[%s1606 + $0x74] sm:$0x1] %v1677
  %v1679 = vld [vmem:[%s1606 + $0x78] sm:$0xf]
  %v1680 = vsel %vm1608, %v1462, %v1679
  %1681 = vst [vmem:[%s1606 + $0x78] sm:$0xf] %v1680
  %1682 = vst [vmem:[%s1606 + $0x7c] sm:$0xf] %v1471
  %v1683 = vld [vmem:[%s1606 + $0x80] sm:$0x1]
  %v1684 = vsel %vm1093, %v1472, %v1683
  %1685 = vst [vmem:[%s1606 + $0x80] sm:$0x1] %v1684
  %v1686 = vld [vmem:[%s1606 + $0x84] sm:$0xf]
  %v1687 = vsel %vm1608, %v1479, %v1686
  %1688 = vst [vmem:[%s1606 + $0x84] sm:$0xf] %v1687
  %1689 = vst [vmem:[%s1606 + $0x88] sm:$0xf] %v1488
  %v1690 = vld [vmem:[%s1606 + $0x8c] sm:$0x1]
  %v1691 = vsel %vm1093, %v1489, %v1690
  %1692 = vst [vmem:[%s1606 + $0x8c] sm:$0x1] %v1691
  %v1693 = vld [vmem:[%s1606 + $0x90] sm:$0xf]
  %v1694 = vsel %vm1608, %v1496, %v1693
  %1695 = vst [vmem:[%s1606 + $0x90] sm:$0xf] %v1694
  %1696 = vst [vmem:[%s1606 + $0x94] sm:$0xf] %v1505
  %v1697 = vld [vmem:[%s1606 + $0x98] sm:$0x1]
  %v1698 = vsel %vm1093, %v1506, %v1697
  %1699 = vst [vmem:[%s1606 + $0x98] sm:$0x1] %v1698
  %v1700 = vld [vmem:[%s1606 + $0x9c] sm:$0xf]
  %v1701 = vsel %vm1608, %v1513, %v1700
  %1702 = vst [vmem:[%s1606 + $0x9c] sm:$0xf] %v1701
  %1703 = vst [vmem:[%s1606 + $0xa0] sm:$0xf] %v1522
  %v1704 = vld [vmem:[%s1606 + $0xa4] sm:$0x1]
  %v1705 = vsel %vm1093, %v1523, %v1704
  %1706 = vst [vmem:[%s1606 + $0xa4] sm:$0x1] %v1705
  %v1707 = vld [vmem:[%s1606 + $0xa8] sm:$0xf]
  %v1708 = vsel %vm1608, %v1530, %v1707
  %1709 = vst [vmem:[%s1606 + $0xa8] sm:$0xf] %v1708
  %1710 = vst [vmem:[%s1606 + $0xac] sm:$0xf] %v1539
  %v1711 = vld [vmem:[%s1606 + $0xb0] sm:$0x1]
  %v1712 = vsel %vm1093, %v1540, %v1711
  %1713 = vst [vmem:[%s1606 + $0xb0] sm:$0x1] %v1712
  %v1714 = vld [vmem:[%s1606 + $0xb4] sm:$0xf]
  %v1715 = vsel %vm1608, %v1547, %v1714
  %1716 = vst [vmem:[%s1606 + $0xb4] sm:$0xf] %v1715
  %1717 = vst [vmem:[%s1606 + $0xb8] sm:$0xf] %v1556
  %v1718 = vld [vmem:[%s1606 + $0xbc] sm:$0x1]
  %v1719 = vsel %vm1093, %v1557, %v1718
  %1720 = vst [vmem:[%s1606 + $0xbc] sm:$0x1] %v1719
  %s1721 = scalar_lea.vmem [#allocation2], 216
  %1722 = vst [vmem:[%s1721] sm:$0xf] 0
  %1723 = vst [vmem:[%s1721 + $0x4] sm:$0xf] 0
  %1724 = vst [vmem:[%s1721 + $0x8] sm:$0x1] 0
  %s1725 = scalar_lea.vmem [#allocation2], 420
  %1726 = vst [vmem:[%s1725] sm:$0xf] 0
  %1727 = vst [vmem:[%s1725 + $0x4] sm:$0xf] 0
  %1728 = vst [vmem:[%s1725 + $0x8] sm:$0x1] 0
  %v1729 = vld [vmem:[%s1721] sm:$0x1]
  %v1730 = vsel %vm1093, 0, %v1729
  %1731 = vst [vmem:[%s1721] sm:$0x1] %v1730
  %v1732 = vld [vmem:[%s1721 + $0xc] sm:$0x1]
  %v1733 = vsel %vm1093, 0, %v1732
  %1734 = vst [vmem:[%s1721 + $0xc] sm:$0x1] %v1733
  %v1735 = vld [vmem:[%s1721 + $0x18] sm:$0x1]
  %v1736 = vsel %vm1093, 0, %v1735
  %1737 = vst [vmem:[%s1721 + $0x18] sm:$0x1] %v1736
  %v1738 = vld [vmem:[%s1721 + $0x24] sm:$0x1]
  %v1739 = vsel %vm1093, 0, %v1738
  %1740 = vst [vmem:[%s1721 + $0x24] sm:$0x1] %v1739
  %v1741 = vld [vmem:[%s1721 + $0x30] sm:$0x1]
  %v1742 = vsel %vm1093, 0, %v1741
  %1743 = vst [vmem:[%s1721 + $0x30] sm:$0x1] %v1742
  %v1744 = vld [vmem:[%s1721 + $0x3c] sm:$0x1]
  %v1745 = vsel %vm1093, 0, %v1744
  %1746 = vst [vmem:[%s1721 + $0x3c] sm:$0x1] %v1745
  %v1747 = vld [vmem:[%s1721 + $0x48] sm:$0x1]
  %v1748 = vsel %vm1093, 0, %v1747
  %1749 = vst [vmem:[%s1721 + $0x48] sm:$0x1] %v1748
  %v1750 = vld [vmem:[%s1721 + $0x54] sm:$0x1]
  %v1751 = vsel %vm1093, 0, %v1750
  %1752 = vst [vmem:[%s1721 + $0x54] sm:$0x1] %v1751
  %v1753 = vld [vmem:[%s1721 + $0x60] sm:$0x1]
  %v1754 = vsel %vm1093, 0, %v1753
  %1755 = vst [vmem:[%s1721 + $0x60] sm:$0x1] %v1754
  %v1756 = vld [vmem:[%s1721 + $0x6c] sm:$0x1]
  %v1757 = vsel %vm1093, 0, %v1756
  %1758 = vst [vmem:[%s1721 + $0x6c] sm:$0x1] %v1757
  %v1759 = vld [vmem:[%s1721 + $0x78] sm:$0x1]
  %v1760 = vsel %vm1093, 0, %v1759
  %1761 = vst [vmem:[%s1721 + $0x78] sm:$0x1] %v1760
  %v1762 = vld [vmem:[%s1721 + $0x84] sm:$0x1]
  %v1763 = vsel %vm1093, 0, %v1762
  %1764 = vst [vmem:[%s1721 + $0x84] sm:$0x1] %v1763
  %v1765 = vld [vmem:[%s1721 + $0x90] sm:$0x1]
  %v1766 = vsel %vm1093, 0, %v1765
  %1767 = vst [vmem:[%s1721 + $0x90] sm:$0x1] %v1766
  %v1768 = vld [vmem:[%s1721 + $0x9c] sm:$0x1]
  %v1769 = vsel %vm1093, 0, %v1768
  %1770 = vst [vmem:[%s1721 + $0x9c] sm:$0x1] %v1769
  %v1771 = vld [vmem:[%s1721 + $0xa8] sm:$0x1]
  %v1772 = vsel %vm1093, 0, %v1771
  %1773 = vst [vmem:[%s1721 + $0xa8] sm:$0x1] %v1772
  %v1774 = vld [vmem:[%s1721 + $0xb4] sm:$0x1]
  %v1775 = vsel %vm1093, 0, %v1774
  %1776 = vst [vmem:[%s1721 + $0xb4] sm:$0x1] %v1775
  %v1777 = vld [vmem:[%s1721 + $0xc0] sm:$0x1]
  %v1778 = vsel %vm1093, 0, %v1777
  %1779 = vst [vmem:[%s1721 + $0xc0] sm:$0x1] %v1778
  %v1780 = vld [vmem:[%s1721 + $0xcc] sm:$0x1]
  %v1781 = vsel %vm1093, 0, %v1780
  %1782 = vst [vmem:[%s1721 + $0xcc] sm:$0x1] %v1781
  %v1783 = vld [vmem:[%s1721 + $0x8] sm:$0x1]
  %v1784 = vsel %vm1149, 0, %v1783
  %1785 = vst [vmem:[%s1721 + $0x8] sm:$0x1] %v1784
  %v1786 = vld [vmem:[%s1721 + $0x14] sm:$0x1]
  %v1787 = vsel %vm1149, 0, %v1786
  %1788 = vst [vmem:[%s1721 + $0x14] sm:$0x1] %v1787
  %v1789 = vld [vmem:[%s1721 + $0x20] sm:$0x1]
  %v1790 = vsel %vm1149, 0, %v1789
  %1791 = vst [vmem:[%s1721 + $0x20] sm:$0x1] %v1790
  %v1792 = vld [vmem:[%s1721 + $0x2c] sm:$0x1]
  %v1793 = vsel %vm1149, 0, %v1792
  %1794 = vst [vmem:[%s1721 + $0x2c] sm:$0x1] %v1793
  %v1795 = vld [vmem:[%s1721 + $0x38] sm:$0x1]
  %v1796 = vsel %vm1149, 0, %v1795
  %1797 = vst [vmem:[%s1721 + $0x38] sm:$0x1] %v1796
  %v1798 = vld [vmem:[%s1721 + $0x44] sm:$0x1]
  %v1799 = vsel %vm1149, 0, %v1798
  %1800 = vst [vmem:[%s1721 + $0x44] sm:$0x1] %v1799
  %v1801 = vld [vmem:[%s1721 + $0x50] sm:$0x1]
  %v1802 = vsel %vm1149, 0, %v1801
  %1803 = vst [vmem:[%s1721 + $0x50] sm:$0x1] %v1802
  %v1804 = vld [vmem:[%s1721 + $0x5c] sm:$0x1]
  %v1805 = vsel %vm1149, 0, %v1804
  %1806 = vst [vmem:[%s1721 + $0x5c] sm:$0x1] %v1805
  %v1807 = vld [vmem:[%s1721 + $0x68] sm:$0x1]
  %v1808 = vsel %vm1149, 0, %v1807
  %1809 = vst [vmem:[%s1721 + $0x68] sm:$0x1] %v1808
  %v1810 = vld [vmem:[%s1721 + $0x74] sm:$0x1]
  %v1811 = vsel %vm1149, 0, %v1810
  %1812 = vst [vmem:[%s1721 + $0x74] sm:$0x1] %v1811
  %v1813 = vld [vmem:[%s1721 + $0x80] sm:$0x1]
  %v1814 = vsel %vm1149, 0, %v1813
  %1815 = vst [vmem:[%s1721 + $0x80] sm:$0x1] %v1814
  %v1816 = vld [vmem:[%s1721 + $0x8c] sm:$0x1]
  %v1817 = vsel %vm1149, 0, %v1816
  %1818 = vst [vmem:[%s1721 + $0x8c] sm:$0x1] %v1817
  %v1819 = vld [vmem:[%s1721 + $0x98] sm:$0x1]
  %v1820 = vsel %vm1149, 0, %v1819
  %1821 = vst [vmem:[%s1721 + $0x98] sm:$0x1] %v1820
  %v1822 = vld [vmem:[%s1721 + $0xa4] sm:$0x1]
  %v1823 = vsel %vm1149, 0, %v1822
  %1824 = vst [vmem:[%s1721 + $0xa4] sm:$0x1] %v1823
  %v1825 = vld [vmem:[%s1721 + $0xb0] sm:$0x1]
  %v1826 = vsel %vm1149, 0, %v1825
  %1827 = vst [vmem:[%s1721 + $0xb0] sm:$0x1] %v1826
  %v1828 = vld [vmem:[%s1721 + $0xbc] sm:$0x1]
  %v1829 = vsel %vm1149, 0, %v1828
  %1830 = vst [vmem:[%s1721 + $0xbc] sm:$0x1] %v1829
  %v1831 = vld [vmem:[%s1721 + $0xc8] sm:$0x1]
  %v1832 = vsel %vm1149, 0, %v1831
  %1833 = vst [vmem:[%s1721 + $0xc8] sm:$0x1] %v1832
  %v1834 = vld [vmem:[%s1721 + $0xd4] sm:$0x1]
  %v1835 = vsel %vm1149, 0, %v1834
  %1836 = vst [vmem:[%s1721 + $0xd4] sm:$0x1] %v1835
  %v1853 = vunpack.c.l.b16 %v1068
  %v1854 = vunpack.c.h.b16 %v1068
  %v1855 = vunpack.c.l.b16 %v1069
  %v1856 = vunpack.c.h.b16 %v1069
  %v1857 = vunpack.c.l.b16 %v1070
  %v1858 = vunpack.c.h.b16 %v1070
  %v1859 = vunpack.c.l.b16 %v1071
  %v1860 = vunpack.c.h.b16 %v1071
  %v1861 = vunpack.c.l.b16 %v1072
  %v1862 = vunpack.c.h.b16 %v1072
  %v1863 = vunpack.c.l.b16 %v1073
  %v1864 = vunpack.c.h.b16 %v1073
  %v1865 = vunpack.c.l.b16 %v1074
  %v1866 = vunpack.c.h.b16 %v1074
  %v1867 = vunpack.c.l.b16 %v1075
  %v1868 = vunpack.c.h.b16 %v1075
  %v1869 = vunpack.c.l.b16 %v1076
  %v1870 = vunpack.c.h.b16 %v1076
  %v1871 = vunpack.c.l.b16 %v1077
  %v1872 = vunpack.c.h.b16 %v1077
  %v1873 = vunpack.c.l.b16 %v1078
  %v1874 = vunpack.c.h.b16 %v1078
  %v1875 = vunpack.c.l.b16 %v1079
  %v1876 = vunpack.c.h.b16 %v1079
  %v1877 = vunpack.c.l.b16 %v1080
  %v1878 = vunpack.c.h.b16 %v1080
  %v1879 = vunpack.c.l.b16 %v1081
  %v1880 = vunpack.c.h.b16 %v1081
  %v1881 = vunpack.c.l.b16 %v1082
  %v1882 = vunpack.c.h.b16 %v1082
  %v1883 = vunpack.c.l.b16 %v1083
  %v1884 = vunpack.c.h.b16 %v1083
  %v1885 = vpack.c.b16 %v1853, %v1853
  %v1886 = vpack.c.b16 %v1854, %v1854
  %v1887 = vpack.c.b16 %v1855, %v1855
  %v1888 = vpack.c.b16 %v1856, %v1856
  %v1889 = vpack.c.b16 %v1857, %v1857
  %v1890 = vpack.c.b16 %v1858, %v1858
  %v1891 = vpack.c.b16 %v1859, %v1859
  %v1892 = vpack.c.b16 %v1860, %v1860
  %v1893 = vpack.c.b16 %v1861, %v1861
  %v1894 = vpack.c.b16 %v1862, %v1862
  %v1895 = vpack.c.b16 %v1863, %v1863
  %v1896 = vpack.c.b16 %v1864, %v1864
  %v1897 = vpack.c.b16 %v1865, %v1865
  %v1898 = vpack.c.b16 %v1866, %v1866
  %v1899 = vpack.c.b16 %v1867, %v1867
  %v1900 = vpack.c.b16 %v1868, %v1868
  %v1901 = vpack.c.b16 %v1869, %v1869
  %v1902 = vpack.c.b16 %v1870, %v1870
  %v1903 = vpack.c.b16 %v1871, %v1871
  %v1904 = vpack.c.b16 %v1872, %v1872
  %v1905 = vpack.c.b16 %v1873, %v1873
  %v1906 = vpack.c.b16 %v1874, %v1874
  %v1907 = vpack.c.b16 %v1875, %v1875
  %v1908 = vpack.c.b16 %v1876, %v1876
  %v1909 = vpack.c.b16 %v1877, %v1877
  %v1910 = vpack.c.b16 %v1878, %v1878
  %v1911 = vpack.c.b16 %v1879, %v1879
  %v1912 = vpack.c.b16 %v1880, %v1880
  %v1913 = vpack.c.b16 %v1881, %v1881
  %v1914 = vpack.c.b16 %v1882, %v1882
  %v1915 = vpack.c.b16 %v1883, %v1883
  %v1916 = vpack.c.b16 %v1884, %v1884
  %v1918 = vshrl.u32 %v1885, 16
  %v1920 = vrot.slane %v1918, 7
  %v1921 = vshll.u32 %v1885, 16
  %v1923 = vor.u32 %v1920, %v1921
  %v1924 = vrot.slane %v1920, 4
  %v1926 = vshrl.u32 %v1886, 16
  %v1928 = vrot.slane %v1926, 7
  %v1929 = vshll.u32 %v1886, 16
  %v1931 = vor.u32 %v1928, %v1929
  %v1932 = vsel %vm1285, %v1924, %v1931
  %v1933 = vrot.slane %v1928, 4
  %v1935 = vshrl.u32 %v1887, 16
  %v1937 = vrot.slane %v1935, 7
  %v1938 = vshll.u32 %v1887, 16
  %v1940 = vor.u32 %v1937, %v1938
  %v1941 = vrot.slane %v1937, 4
  %v1943 = vshrl.u32 %v1888, 16
  %v1945 = vrot.slane %v1943, 7
  %v1946 = vshll.u32 %v1888, 16
  %v1948 = vor.u32 %v1945, %v1946
  %v1949 = vsel %vm1285, %v1941, %v1948
  %v1950 = vrot.slane %v1945, 4
  %v1952 = vshrl.u32 %v1889, 16
  %v1954 = vrot.slane %v1952, 7
  %v1955 = vshll.u32 %v1889, 16
  %v1957 = vor.u32 %v1954, %v1955
  %v1958 = vrot.slane %v1954, 4
  %v1960 = vshrl.u32 %v1890, 16
  %v1962 = vrot.slane %v1960, 7
  %v1963 = vshll.u32 %v1890, 16
  %v1965 = vor.u32 %v1962, %v1963
  %v1966 = vsel %vm1285, %v1958, %v1965
  %v1967 = vrot.slane %v1962, 4
  %v1969 = vshrl.u32 %v1891, 16
  %v1971 = vrot.slane %v1969, 7
  %v1972 = vshll.u32 %v1891, 16
  %v1974 = vor.u32 %v1971, %v1972
  %v1975 = vrot.slane %v1971, 4
  %v1977 = vshrl.u32 %v1892, 16
  %v1979 = vrot.slane %v1977, 7
  %v1980 = vshll.u32 %v1892, 16
  %v1982 = vor.u32 %v1979, %v1980
  %v1983 = vsel %vm1285, %v1975, %v1982
  %v1984 = vrot.slane %v1979, 4
  %v1986 = vshrl.u32 %v1893, 16
  %v1988 = vrot.slane %v1986, 7
  %v1989 = vshll.u32 %v1893, 16
  %v1991 = vor.u32 %v1988, %v1989
  %v1992 = vrot.slane %v1988, 4
  %v1994 = vshrl.u32 %v1894, 16
  %v1996 = vrot.slane %v1994, 7
  %v1997 = vshll.u32 %v1894, 16
  %v1999 = vor.u32 %v1996, %v1997
  %v2000 = vsel %vm1285, %v1992, %v1999
  %v2001 = vrot.slane %v1996, 4
  %v2003 = vshrl.u32 %v1895, 16
  %v2005 = vrot.slane %v2003, 7
  %v2006 = vshll.u32 %v1895, 16
  %v2008 = vor.u32 %v2005, %v2006
  %v2009 = vrot.slane %v2005, 4
  %v2011 = vshrl.u32 %v1896, 16
  %v2013 = vrot.slane %v2011, 7
  %v2014 = vshll.u32 %v1896, 16
  %v2016 = vor.u32 %v2013, %v2014
  %v2017 = vsel %vm1285, %v2009, %v2016
  %v2018 = vrot.slane %v2013, 4
  %v2020 = vshrl.u32 %v1897, 16
  %v2022 = vrot.slane %v2020, 7
  %v2023 = vshll.u32 %v1897, 16
  %v2025 = vor.u32 %v2022, %v2023
  %v2026 = vrot.slane %v2022, 4
  %v2028 = vshrl.u32 %v1898, 16
  %v2030 = vrot.slane %v2028, 7
  %v2031 = vshll.u32 %v1898, 16
  %v2033 = vor.u32 %v2030, %v2031
  %v2034 = vsel %vm1285, %v2026, %v2033
  %v2035 = vrot.slane %v2030, 4
  %v2037 = vshrl.u32 %v1899, 16
  %v2039 = vrot.slane %v2037, 7
  %v2040 = vshll.u32 %v1899, 16
  %v2042 = vor.u32 %v2039, %v2040
  %v2043 = vrot.slane %v2039, 4
  %v2045 = vshrl.u32 %v1900, 16
  %v2047 = vrot.slane %v2045, 7
  %v2048 = vshll.u32 %v1900, 16
  %v2050 = vor.u32 %v2047, %v2048
  %v2051 = vsel %vm1285, %v2043, %v2050
  %v2052 = vrot.slane %v2047, 4
  %v2054 = vshrl.u32 %v1901, 16
  %v2056 = vrot.slane %v2054, 7
  %v2057 = vshll.u32 %v1901, 16
  %v2059 = vor.u32 %v2056, %v2057
  %v2060 = vrot.slane %v2056, 4
  %v2062 = vshrl.u32 %v1902, 16
  %v2064 = vrot.slane %v2062, 7
  %v2065 = vshll.u32 %v1902, 16
  %v2067 = vor.u32 %v2064, %v2065
  %v2068 = vsel %vm1285, %v2060, %v2067
  %v2069 = vrot.slane %v2064, 4
  %v2071 = vshrl.u32 %v1903, 16
  %v2073 = vrot.slane %v2071, 7
  %v2074 = vshll.u32 %v1903, 16
  %v2076 = vor.u32 %v2073, %v2074
  %v2077 = vrot.slane %v2073, 4
  %v2079 = vshrl.u32 %v1904, 16
  %v2081 = vrot.slane %v2079, 7
  %v2082 = vshll.u32 %v1904, 16
  %v2084 = vor.u32 %v2081, %v2082
  %v2085 = vsel %vm1285, %v2077, %v2084
  %v2086 = vrot.slane %v2081, 4
  %v2088 = vshrl.u32 %v1905, 16
  %v2090 = vrot.slane %v2088, 7
  %v2091 = vshll.u32 %v1905, 16
  %v2093 = vor.u32 %v2090, %v2091
  %v2094 = vrot.slane %v2090, 4
  %v2096 = vshrl.u32 %v1906, 16
  %v2098 = vrot.slane %v2096, 7
  %v2099 = vshll.u32 %v1906, 16
  %v2101 = vor.u32 %v2098, %v2099
  %v2102 = vsel %vm1285, %v2094, %v2101
  %v2103 = vrot.slane %v2098, 4
  %v2105 = vshrl.u32 %v1907, 16
  %v2107 = vrot.slane %v2105, 7
  %v2108 = vshll.u32 %v1907, 16
  %v2110 = vor.u32 %v2107, %v2108
  %v2111 = vrot.slane %v2107, 4
  %v2113 = vshrl.u32 %v1908, 16
  %v2115 = vrot.slane %v2113, 7
  %v2116 = vshll.u32 %v1908, 16
  %v2118 = vor.u32 %v2115, %v2116
  %v2119 = vsel %vm1285, %v2111, %v2118
  %v2120 = vrot.slane %v2115, 4
  %v2122 = vshrl.u32 %v1909, 16
  %v2124 = vrot.slane %v2122, 7
  %v2125 = vshll.u32 %v1909, 16
  %v2127 = vor.u32 %v2124, %v2125
  %v2128 = vrot.slane %v2124, 4
  %v2130 = vshrl.u32 %v1910, 16
  %v2132 = vrot.slane %v2130, 7
  %v2133 = vshll.u32 %v1910, 16
  %v2135 = vor.u32 %v2132, %v2133
  %v2136 = vsel %vm1285, %v2128, %v2135
  %v2137 = vrot.slane %v2132, 4
  %v2139 = vshrl.u32 %v1911, 16
  %v2141 = vrot.slane %v2139, 7
  %v2142 = vshll.u32 %v1911, 16
  %v2144 = vor.u32 %v2141, %v2142
  %v2145 = vrot.slane %v2141, 4
  %v2147 = vshrl.u32 %v1912, 16
  %v2149 = vrot.slane %v2147, 7
  %v2150 = vshll.u32 %v1912, 16
  %v2152 = vor.u32 %v2149, %v2150
  %v2153 = vsel %vm1285, %v2145, %v2152
  %v2154 = vrot.slane %v2149, 4
  %v2156 = vshrl.u32 %v1913, 16
  %v2158 = vrot.slane %v2156, 7
  %v2159 = vshll.u32 %v1913, 16
  %v2161 = vor.u32 %v2158, %v2159
  %v2162 = vrot.slane %v2158, 4
  %v2164 = vshrl.u32 %v1914, 16
  %v2166 = vrot.slane %v2164, 7
  %v2167 = vshll.u32 %v1914, 16
  %v2169 = vor.u32 %v2166, %v2167
  %v2170 = vsel %vm1285, %v2162, %v2169
  %v2171 = vrot.slane %v2166, 4
  %v2173 = vshrl.u32 %v1915, 16
  %v2175 = vrot.slane %v2173, 7
  %v2176 = vshll.u32 %v1915, 16
  %v2178 = vor.u32 %v2175, %v2176
  %v2179 = vrot.slane %v2175, 4
  %v2181 = vshrl.u32 %v1916, 16
  %v2183 = vrot.slane %v2181, 7
  %v2184 = vshll.u32 %v1916, 16
  %v2186 = vor.u32 %v2183, %v2184
  %v2187 = vsel %vm1285, %v2179, %v2186
  %v2188 = vrot.slane %v2183, 4
  %s2237 = scalar_lea.vmem [#allocation2], 228
  %v2238 = vld [vmem:[%s2237] sm:$0xf]
  %v2239 = vsel %vm1608, %v1923, %v2238
  %2240 = vst [vmem:[%s2237] sm:$0xf] %v2239
  %2241 = vst [vmem:[%s2237 + $0x4] sm:$0xf] %v1932
  %v2242 = vld [vmem:[%s2237 + $0x8] sm:$0x1]
  %v2243 = vsel %vm1093, %v1933, %v2242
  %2244 = vst [vmem:[%s2237 + $0x8] sm:$0x1] %v2243
  %v2245 = vld [vmem:[%s2237 + $0xc] sm:$0xf]
  %v2246 = vsel %vm1608, %v1940, %v2245
  %2247 = vst [vmem:[%s2237 + $0xc] sm:$0xf] %v2246
  %2248 = vst [vmem:[%s2237 + $0x10] sm:$0xf] %v1949
  %v2249 = vld [vmem:[%s2237 + $0x14] sm:$0x1]
  %v2250 = vsel %vm1093, %v1950, %v2249
  %2251 = vst [vmem:[%s2237 + $0x14] sm:$0x1] %v2250
  %v2252 = vld [vmem:[%s2237 + $0x18] sm:$0xf]
  %v2253 = vsel %vm1608, %v1957, %v2252
  %2254 = vst [vmem:[%s2237 + $0x18] sm:$0xf] %v2253
  %2255 = vst [vmem:[%s2237 + $0x1c] sm:$0xf] %v1966
  %v2256 = vld [vmem:[%s2237 + $0x20] sm:$0x1]
  %v2257 = vsel %vm1093, %v1967, %v2256
  %2258 = vst [vmem:[%s2237 + $0x20] sm:$0x1] %v2257
  %v2259 = vld [vmem:[%s2237 + $0x24] sm:$0xf]
  %v2260 = vsel %vm1608, %v1974, %v2259
  %2261 = vst [vmem:[%s2237 + $0x24] sm:$0xf] %v2260
  %2262 = vst [vmem:[%s2237 + $0x28] sm:$0xf] %v1983
  %v2263 = vld [vmem:[%s2237 + $0x2c] sm:$0x1]
  %v2264 = vsel %vm1093, %v1984, %v2263
  %2265 = vst [vmem:[%s2237 + $0x2c] sm:$0x1] %v2264
  %v2266 = vld [vmem:[%s2237 + $0x30] sm:$0xf]
  %v2267 = vsel %vm1608, %v1991, %v2266
  %2268 = vst [vmem:[%s2237 + $0x30] sm:$0xf] %v2267
  %2269 = vst [vmem:[%s2237 + $0x34] sm:$0xf] %v2000
  %v2270 = vld [vmem:[%s2237 + $0x38] sm:$0x1]
  %v2271 = vsel %vm1093, %v2001, %v2270
  %2272 = vst [vmem:[%s2237 + $0x38] sm:$0x1] %v2271
  %v2273 = vld [vmem:[%s2237 + $0x3c] sm:$0xf]
  %v2274 = vsel %vm1608, %v2008, %v2273
  %2275 = vst [vmem:[%s2237 + $0x3c] sm:$0xf] %v2274
  %2276 = vst [vmem:[%s2237 + $0x40] sm:$0xf] %v2017
  %v2277 = vld [vmem:[%s2237 + $0x44] sm:$0x1]
  %v2278 = vsel %vm1093, %v2018, %v2277
  %2279 = vst [vmem:[%s2237 + $0x44] sm:$0x1] %v2278
  %v2280 = vld [vmem:[%s2237 + $0x48] sm:$0xf]
  %v2281 = vsel %vm1608, %v2025, %v2280
  %2282 = vst [vmem:[%s2237 + $0x48] sm:$0xf] %v2281
  %2283 = vst [vmem:[%s2237 + $0x4c] sm:$0xf] %v2034
  %v2284 = vld [vmem:[%s2237 + $0x50] sm:$0x1]
  %v2285 = vsel %vm1093, %v2035, %v2284
  %2286 = vst [vmem:[%s2237 + $0x50] sm:$0x1] %v2285
  %v2287 = vld [vmem:[%s2237 + $0x54] sm:$0xf]
  %v2288 = vsel %vm1608, %v2042, %v2287
  %2289 = vst [vmem:[%s2237 + $0x54] sm:$0xf] %v2288
  %2290 = vst [vmem:[%s2237 + $0x58] sm:$0xf] %v2051
  %v2291 = vld [vmem:[%s2237 + $0x5c] sm:$0x1]
  %v2292 = vsel %vm1093, %v2052, %v2291
  %2293 = vst [vmem:[%s2237 + $0x5c] sm:$0x1] %v2292
  %v2294 = vld [vmem:[%s2237 + $0x60] sm:$0xf]
  %v2295 = vsel %vm1608, %v2059, %v2294
  %2296 = vst [vmem:[%s2237 + $0x60] sm:$0xf] %v2295
  %2297 = vst [vmem:[%s2237 + $0x64] sm:$0xf] %v2068
  %v2298 = vld [vmem:[%s2237 + $0x68] sm:$0x1]
  %v2299 = vsel %vm1093, %v2069, %v2298
  %2300 = vst [vmem:[%s2237 + $0x68] sm:$0x1] %v2299
  %v2301 = vld [vmem:[%s2237 + $0x6c] sm:$0xf]
  %v2302 = vsel %vm1608, %v2076, %v2301
  %2303 = vst [vmem:[%s2237 + $0x6c] sm:$0xf] %v2302
  %2304 = vst [vmem:[%s2237 + $0x70] sm:$0xf] %v2085
  %v2305 = vld [vmem:[%s2237 + $0x74] sm:$0x1]
  %v2306 = vsel %vm1093, %v2086, %v2305
  %2307 = vst [vmem:[%s2237 + $0x74] sm:$0x1] %v2306
  %v2308 = vld [vmem:[%s2237 + $0x78] sm:$0xf]
  %v2309 = vsel %vm1608, %v2093, %v2308
  %2310 = vst [vmem:[%s2237 + $0x78] sm:$0xf] %v2309
  %2311 = vst [vmem:[%s2237 + $0x7c] sm:$0xf] %v2102
  %v2312 = vld [vmem:[%s2237 + $0x80] sm:$0x1]
  %v2313 = vsel %vm1093, %v2103, %v2312
  %2314 = vst [vmem:[%s2237 + $0x80] sm:$0x1] %v2313
  %v2315 = vld [vmem:[%s2237 + $0x84] sm:$0xf]
  %v2316 = vsel %vm1608, %v2110, %v2315
  %2317 = vst [vmem:[%s2237 + $0x84] sm:$0xf] %v2316
  %2318 = vst [vmem:[%s2237 + $0x88] sm:$0xf] %v2119
  %v2319 = vld [vmem:[%s2237 + $0x8c] sm:$0x1]
  %v2320 = vsel %vm1093, %v2120, %v2319
  %2321 = vst [vmem:[%s2237 + $0x8c] sm:$0x1] %v2320
  %v2322 = vld [vmem:[%s2237 + $0x90] sm:$0xf]
  %v2323 = vsel %vm1608, %v2127, %v2322
  %2324 = vst [vmem:[%s2237 + $0x90] sm:$0xf] %v2323
  %2325 = vst [vmem:[%s2237 + $0x94] sm:$0xf] %v2136
  %v2326 = vld [vmem:[%s2237 + $0x98] sm:$0x1]
  %v2327 = vsel %vm1093, %v2137, %v2326
  %2328 = vst [vmem:[%s2237 + $0x98] sm:$0x1] %v2327
  %v2329 = vld [vmem:[%s2237 + $0x9c] sm:$0xf]
  %v2330 = vsel %vm1608, %v2144, %v2329
  %2331 = vst [vmem:[%s2237 + $0x9c] sm:$0xf] %v2330
  %2332 = vst [vmem:[%s2237 + $0xa0] sm:$0xf] %v2153
  %v2333 = vld [vmem:[%s2237 + $0xa4] sm:$0x1]
  %v2334 = vsel %vm1093, %v2154, %v2333
  %2335 = vst [vmem:[%s2237 + $0xa4] sm:$0x1] %v2334
  %v2336 = vld [vmem:[%s2237 + $0xa8] sm:$0xf]
  %v2337 = vsel %vm1608, %v2161, %v2336
  %2338 = vst [vmem:[%s2237 + $0xa8] sm:$0xf] %v2337
  %2339 = vst [vmem:[%s2237 + $0xac] sm:$0xf] %v2170
  %v2340 = vld [vmem:[%s2237 + $0xb0] sm:$0x1]
  %v2341 = vsel %vm1093, %v2171, %v2340
  %2342 = vst [vmem:[%s2237 + $0xb0] sm:$0x1] %v2341
  %v2343 = vld [vmem:[%s2237 + $0xb4] sm:$0xf]
  %v2344 = vsel %vm1608, %v2178, %v2343
  %2345 = vst [vmem:[%s2237 + $0xb4] sm:$0xf] %v2344
  %2346 = vst [vmem:[%s2237 + $0xb8] sm:$0xf] %v2187
  %v2347 = vld [vmem:[%s2237 + $0xbc] sm:$0x1]
  %v2348 = vsel %vm1093, %v2188, %v2347
  %2349 = vst [vmem:[%s2237 + $0xbc] sm:$0x1] %v2348
  %v2350 = vld [vmem:[#allocation2] sm:$0xf]
  %v2351 = vld [vmem:[#allocation2 + $0x4] sm:$0xf]
  %v2352 = vld [vmem:[#allocation2 + $0xc] sm:$0xf]
  %v2353 = vld [vmem:[#allocation2 + $0x10] sm:$0xf]
  %v2354 = vld [vmem:[#allocation2 + $0x18] sm:$0xf]
  %v2355 = vld [vmem:[#allocation2 + $0x1c] sm:$0xf]
  %v2356 = vld [vmem:[#allocation2 + $0x24] sm:$0xf]
  %v2357 = vld [vmem:[#allocation2 + $0x28] sm:$0xf]
  %v2358 = vld [vmem:[#allocation2 + $0x30] sm:$0xf]
  %v2359 = vld [vmem:[#allocation2 + $0x34] sm:$0xf]
  %v2360 = vld [vmem:[#allocation2 + $0x3c] sm:$0xf]
  %v2361 = vld [vmem:[#allocation2 + $0x40] sm:$0xf]
  %v2362 = vld [vmem:[#allocation2 + $0x48] sm:$0xf]
  %v2363 = vld [vmem:[#allocation2 + $0x4c] sm:$0xf]
  %v2364 = vld [vmem:[#allocation2 + $0x54] sm:$0xf]
  %v2365 = vld [vmem:[#allocation2 + $0x58] sm:$0xf]
  %v2366 = vld [vmem:[#allocation2 + $0x60] sm:$0xf]
  %v2367 = vld [vmem:[#allocation2 + $0x64] sm:$0xf]
  %v2368 = vld [vmem:[#allocation2 + $0x6c] sm:$0xf]
  %v2369 = vld [vmem:[#allocation2 + $0x70] sm:$0xf]
  %v2370 = vld [vmem:[#allocation2 + $0x78] sm:$0xf]
  %v2371 = vld [vmem:[#allocation2 + $0x7c] sm:$0xf]
  %v2372 = vld [vmem:[#allocation2 + $0x84] sm:$0xf]
  %v2373 = vld [vmem:[#allocation2 + $0x88] sm:$0xf]
  %v2374 = vld [vmem:[#allocation2 + $0x90] sm:$0xf]
  %v2375 = vld [vmem:[#allocation2 + $0x94] sm:$0xf]
  %v2376 = vld [vmem:[#allocation2 + $0x9c] sm:$0xf]
  %v2377 = vld [vmem:[#allocation2 + $0xa0] sm:$0xf]
  %v2378 = vld [vmem:[#allocation2 + $0xa8] sm:$0xf]
  %v2379 = vld [vmem:[#allocation2 + $0xac] sm:$0xf]
  %v2380 = vld [vmem:[#allocation2 + $0xb4] sm:$0xf]
  %v2381 = vld [vmem:[#allocation2 + $0xb8] sm:$0xf]
  %v2414 = vunpack.c.l.b16 %v2350
  %v2415 = vunpack.c.l.b16 %v2351
  %v2416 = vunpack.c.l.b16 %v2352
  %v2417 = vunpack.c.l.b16 %v2353
  %v2418 = vunpack.c.l.b16 %v2354
  %v2419 = vunpack.c.l.b16 %v2355
  %v2420 = vunpack.c.l.b16 %v2356
  %v2421 = vunpack.c.l.b16 %v2357
  %v2422 = vunpack.c.l.b16 %v2358
  %v2423 = vunpack.c.l.b16 %v2359
  %v2424 = vunpack.c.l.b16 %v2360
  %v2425 = vunpack.c.l.b16 %v2361
  %v2426 = vunpack.c.l.b16 %v2362
  %v2427 = vunpack.c.l.b16 %v2363
  %v2428 = vunpack.c.l.b16 %v2364
  %v2429 = vunpack.c.l.b16 %v2365
  %v2430 = vunpack.c.l.b16 %v2366
  %v2431 = vunpack.c.l.b16 %v2367
  %v2432 = vunpack.c.l.b16 %v2368
  %v2433 = vunpack.c.l.b16 %v2369
  %v2434 = vunpack.c.l.b16 %v2370
  %v2435 = vunpack.c.l.b16 %v2371
  %v2436 = vunpack.c.l.b16 %v2372
  %v2437 = vunpack.c.l.b16 %v2373
  %v2438 = vunpack.c.l.b16 %v2374
  %v2439 = vunpack.c.l.b16 %v2375
  %v2440 = vunpack.c.l.b16 %v2376
  %v2441 = vunpack.c.l.b16 %v2377
  %v2442 = vunpack.c.l.b16 %v2378
  %v2443 = vunpack.c.l.b16 %v2379
  %v2444 = vunpack.c.l.b16 %v2380
  %v2445 = vunpack.c.l.b16 %v2381
  %v2446 = vpack.c.b16 %v2415, %v2414
  %v2447 = vpack.c.b16 %v2417, %v2416
  %v2448 = vpack.c.b16 %v2419, %v2418
  %v2449 = vpack.c.b16 %v2421, %v2420
  %v2450 = vpack.c.b16 %v2423, %v2422
  %v2451 = vpack.c.b16 %v2425, %v2424
  %v2452 = vpack.c.b16 %v2427, %v2426
  %v2453 = vpack.c.b16 %v2429, %v2428
  %v2454 = vpack.c.b16 %v2431, %v2430
  %v2455 = vpack.c.b16 %v2433, %v2432
  %v2456 = vpack.c.b16 %v2435, %v2434
  %v2457 = vpack.c.b16 %v2437, %v2436
  %v2458 = vpack.c.b16 %v2439, %v2438
  %v2459 = vpack.c.b16 %v2441, %v2440
  %v2460 = vpack.c.b16 %v2443, %v2442
  %v2461 = vpack.c.b16 %v2445, %v2444
  %2478 = vst [vmem:[#allocation3] sm:$0xff] %v2446
  %2479 = vst [vmem:[#allocation3 + $0x48] sm:$0xff] %v2447
  %2480 = vst [vmem:[#allocation3 + $0x90] sm:$0xff] %v2448
  %2481 = vst [vmem:[#allocation3 + $0xd8] sm:$0xff] %v2449
  %2482 = vst [vmem:[#allocation3 + $0x120] sm:$0xff] %v2450
  %2483 = vst [vmem:[#allocation3 + $0x168] sm:$0xff] %v2451
  %2484 = vst [vmem:[#allocation3 + $0x1b0] sm:$0xff] %v2452
  %2485 = vst [vmem:[#allocation3 + $0x1f8] sm:$0xff] %v2453
  %2486 = vst [vmem:[#allocation3 + $0x240] sm:$0xff] %v2454
  %2487 = vst [vmem:[#allocation3 + $0x288] sm:$0xff] %v2455
  %2488 = vst [vmem:[#allocation3 + $0x2d0] sm:$0xff] %v2456
  %2489 = vst [vmem:[#allocation3 + $0x318] sm:$0xff] %v2457
  %2490 = vst [vmem:[#allocation3 + $0x360] sm:$0xff] %v2458
  %2491 = vst [vmem:[#allocation3 + $0x3a8] sm:$0xff] %v2459
  %2492 = vst [vmem:[#allocation3 + $0x3f0] sm:$0xff] %v2460
  %2493 = vst [vmem:[#allocation3 + $0x438] sm:$0xff] %v2461
  %v2494 = vld [vmem:[#allocation2] sm:$0xf]
  %v2495 = vld [vmem:[#allocation2 + $0x4] sm:$0xf]
  %v2496 = vld [vmem:[#allocation2 + $0x8] sm:$0x1]
  %v2497 = vld [vmem:[#allocation2 + $0xc] sm:$0xf]
  %v2498 = vld [vmem:[#allocation2 + $0x10] sm:$0xf]
  %v2499 = vld [vmem:[#allocation2 + $0x14] sm:$0x1]
  %v2500 = vld [vmem:[#allocation2 + $0x18] sm:$0xf]
  %v2501 = vld [vmem:[#allocation2 + $0x1c] sm:$0xf]
  %v2502 = vld [vmem:[#allocation2 + $0x20] sm:$0x1]
  %v2503 = vld [vmem:[#allocation2 + $0x24] sm:$0xf]
  %v2504 = vld [vmem:[#allocation2 + $0x28] sm:$0xf]
  %v2505 = vld [vmem:[#allocation2 + $0x2c] sm:$0x1]
  %v2506 = vld [vmem:[#allocation2 + $0x30] sm:$0xf]
  %v2507 = vld [vmem:[#allocation2 + $0x34] sm:$0xf]
  %v2508 = vld [vmem:[#allocation2 + $0x38] sm:$0x1]
  %v2509 = vld [vmem:[#allocation2 + $0x3c] sm:$0xf]
  %v2510 = vld [vmem:[#allocation2 + $0x40] sm:$0xf]
  %v2511 = vld [vmem:[#allocation2 + $0x44] sm:$0x1]
  %v2512 = vld [vmem:[#allocation2 + $0x48] sm:$0xf]
  %v2513 = vld [vmem:[#allocation2 + $0x4c] sm:$0xf]
  %v2514 = vld [vmem:[#allocation2 + $0x50] sm:$0x1]
  %v2515 = vld [vmem:[#allocation2 + $0x54] sm:$0xf]
  %v2516 = vld [vmem:[#allocation2 + $0x58] sm:$0xf]
  %v2517 = vld [vmem:[#allocation2 + $0x5c] sm:$0x1]
  %v2518 = vld [vmem:[#allocation2 + $0x60] sm:$0xf]
  %v2519 = vld [vmem:[#allocation2 + $0x64] sm:$0xf]
  %v2520 = vld [vmem:[#allocation2 + $0x68] sm:$0x1]
  %v2521 = vld [vmem:[#allocation2 + $0x6c] sm:$0xf]
  %v2522 = vld [vmem:[#allocation2 + $0x70] sm:$0xf]
  %v2523 = vld [vmem:[#allocation2 + $0x74] sm:$0x1]
  %v2524 = vld [vmem:[#allocation2 + $0x78] sm:$0xf]
  %v2525 = vld [vmem:[#allocation2 + $0x7c] sm:$0xf]
  %v2526 = vld [vmem:[#allocation2 + $0x80] sm:$0x1]
  %v2527 = vld [vmem:[#allocation2 + $0x84] sm:$0xf]
  %v2528 = vld [vmem:[#allocation2 + $0x88] sm:$0xf]
  %v2529 = vld [vmem:[#allocation2 + $0x8c] sm:$0x1]
  %v2530 = vld [vmem:[#allocation2 + $0x90] sm:$0xf]
  %v2531 = vld [vmem:[#allocation2 + $0x94] sm:$0xf]
  %v2532 = vld [vmem:[#allocation2 + $0x98] sm:$0x1]
  %v2533 = vld [vmem:[#allocation2 + $0x9c] sm:$0xf]
  %v2534 = vld [vmem:[#allocation2 + $0xa0] sm:$0xf]
  %v2535 = vld [vmem:[#allocation2 + $0xa4] sm:$0x1]
  %v2536 = vld [vmem:[#allocation2 + $0xa8] sm:$0xf]
  %v2537 = vld [vmem:[#allocation2 + $0xac] sm:$0xf]
  %v2538 = vld [vmem:[#allocation2 + $0xb0] sm:$0x1]
  %v2539 = vld [vmem:[#allocation2 + $0xb4] sm:$0xf]
  %v2540 = vld [vmem:[#allocation2 + $0xb8] sm:$0xf]
  %v2541 = vld [vmem:[#allocation2 + $0xbc] sm:$0x1]
  %vm2542 = vsmask.f32 3328
  %vm2543 = vsmask.f32 7440
  %vm2544 = vmor %vm2542, %vm2543
  %v2546 = vshrl.u32 %v2494, 16
  %v2548 = vrot.slane %v2546, 4
  %v2549 = vshll.u32 %v2494, 16
  %v2551 = vrot.slane %v2549, 5
  %v2552 = vor.u32 %v2548, %v2551
  %v2553 = vrot.slane %v2552, 4
  %v2555 = vshll.u32 %v2495, 16
  %v2557 = vrot.slane %v2555, 5
  %v2558 = vsel %vm2544, %v2553, %v2557
  %v2559 = vshrl.u32 %v2495, 16
  %v2561 = vrot.slane %v2559, 4
  %v2562 = vor.u32 %v2561, %v2557
  %v2563 = vrot.slane %v2562, 4
  %v2565 = vshll.u32 %v2496, 16
  %v2567 = vrot.slane %v2565, 5
  %v2568 = vsel %vm2544, %v2563, %v2567
  %v2570 = vshrl.u32 %v2497, 16
  %v2572 = vrot.slane %v2570, 4
  %v2573 = vshll.u32 %v2497, 16
  %v2575 = vrot.slane %v2573, 5
  %v2576 = vor.u32 %v2572, %v2575
  %v2577 = vrot.slane %v2576, 4
  %v2579 = vshll.u32 %v2498, 16
  %v2581 = vrot.slane %v2579, 5
  %v2582 = vsel %vm2544, %v2577, %v2581
  %v2583 = vshrl.u32 %v2498, 16
  %v2585 = vrot.slane %v2583, 4
  %v2586 = vor.u32 %v2585, %v2581
  %v2587 = vrot.slane %v2586, 4
  %v2589 = vshll.u32 %v2499, 16
  %v2591 = vrot.slane %v2589, 5
  %v2592 = vsel %vm2544, %v2587, %v2591
  %v2594 = vshrl.u32 %v2500, 16
  %v2596 = vrot.slane %v2594, 4
  %v2597 = vshll.u32 %v2500, 16
  %v2599 = vrot.slane %v2597, 5
  %v2600 = vor.u32 %v2596, %v2599
  %v2601 = vrot.slane %v2600, 4
  %v2603 = vshll.u32 %v2501, 16
  %v2605 = vrot.slane %v2603, 5
  %v2606 = vsel %vm2544, %v2601, %v2605
  %v2607 = vshrl.u32 %v2501, 16
  %v2609 = vrot.slane %v2607, 4
  %v2610 = vor.u32 %v2609, %v2605
  %v2611 = vrot.slane %v2610, 4
  %v2613 = vshll.u32 %v2502, 16
  %v2615 = vrot.slane %v2613, 5
  %v2616 = vsel %vm2544, %v2611, %v2615
  %v2618 = vshrl.u32 %v2503, 16
  %v2620 = vrot.slane %v2618, 4
  %v2621 = vshll.u32 %v2503, 16
  %v2623 = vrot.slane %v2621, 5
  %v2624 = vor.u32 %v2620, %v2623
  %v2625 = vrot.slane %v2624, 4
  %v2627 = vshll.u32 %v2504, 16
  %v2629 = vrot.slane %v2627, 5
  %v2630 = vsel %vm2544, %v2625, %v2629
  %v2631 = vshrl.u32 %v2504, 16
  %v2633 = vrot.slane %v2631, 4
  %v2634 = vor.u32 %v2633, %v2629
  %v2635 = vrot.slane %v2634, 4
  %v2637 = vshll.u32 %v2505, 16
  %v2639 = vrot.slane %v2637, 5
  %v2640 = vsel %vm2544, %v2635, %v2639
  %v2642 = vshrl.u32 %v2506, 16
  %v2644 = vrot.slane %v2642, 4
  %v2645 = vshll.u32 %v2506, 16
  %v2647 = vrot.slane %v2645, 5
  %v2648 = vor.u32 %v2644, %v2647
  %v2649 = vrot.slane %v2648, 4
  %v2651 = vshll.u32 %v2507, 16
  %v2653 = vrot.slane %v2651, 5
  %v2654 = vsel %vm2544, %v2649, %v2653
  %v2655 = vshrl.u32 %v2507, 16
  %v2657 = vrot.slane %v2655, 4
  %v2658 = vor.u32 %v2657, %v2653
  %v2659 = vrot.slane %v2658, 4
  %v2661 = vshll.u32 %v2508, 16
  %v2663 = vrot.slane %v2661, 5
  %v2664 = vsel %vm2544, %v2659, %v2663
  %v2666 = vshrl.u32 %v2509, 16
  %v2668 = vrot.slane %v2666, 4
  %v2669 = vshll.u32 %v2509, 16
  %v2671 = vrot.slane %v2669, 5
  %v2672 = vor.u32 %v2668, %v2671
  %v2673 = vrot.slane %v2672, 4
  %v2675 = vshll.u32 %v2510, 16
  %v2677 = vrot.slane %v2675, 5
  %v2678 = vsel %vm2544, %v2673, %v2677
  %v2679 = vshrl.u32 %v2510, 16
  %v2681 = vrot.slane %v2679, 4
  %v2682 = vor.u32 %v2681, %v2677
  %v2683 = vrot.slane %v2682, 4
  %v2685 = vshll.u32 %v2511, 16
  %v2687 = vrot.slane %v2685, 5
  %v2688 = vsel %vm2544, %v2683, %v2687
  %v2690 = vshrl.u32 %v2512, 16
  %v2692 = vrot.slane %v2690, 4
  %v2693 = vshll.u32 %v2512, 16
  %v2695 = vrot.slane %v2693, 5
  %v2696 = vor.u32 %v2692, %v2695
  %v2697 = vrot.slane %v2696, 4
  %v2699 = vshll.u32 %v2513, 16
  %v2701 = vrot.slane %v2699, 5
  %v2702 = vsel %vm2544, %v2697, %v2701
  %v2703 = vshrl.u32 %v2513, 16
  %v2705 = vrot.slane %v2703, 4
  %v2706 = vor.u32 %v2705, %v2701
  %v2707 = vrot.slane %v2706, 4
  %v2709 = vshll.u32 %v2514, 16
  %v2711 = vrot.slane %v2709, 5
  %v2712 = vsel %vm2544, %v2707, %v2711
  %v2714 = vshrl.u32 %v2515, 16
  %v2716 = vrot.slane %v2714, 4
  %v2717 = vshll.u32 %v2515, 16
  %v2719 = vrot.slane %v2717, 5
  %v2720 = vor.u32 %v2716, %v2719
  %v2721 = vrot.slane %v2720, 4
  %v2723 = vshll.u32 %v2516, 16
  %v2725 = vrot.slane %v2723, 5
  %v2726 = vsel %vm2544, %v2721, %v2725
  %v2727 = vshrl.u32 %v2516, 16
  %v2729 = vrot.slane %v2727, 4
  %v2730 = vor.u32 %v2729, %v2725
  %v2731 = vrot.slane %v2730, 4
  %v2733 = vshll.u32 %v2517, 16
  %v2735 = vrot.slane %v2733, 5
  %v2736 = vsel %vm2544, %v2731, %v2735
  %v2738 = vshrl.u32 %v2518, 16
  %v2740 = vrot.slane %v2738, 4
  %v2741 = vshll.u32 %v2518, 16
  %v2743 = vrot.slane %v2741, 5
  %v2744 = vor.u32 %v2740, %v2743
  %v2745 = vrot.slane %v2744, 4
  %v2747 = vshll.u32 %v2519, 16
  %v2749 = vrot.slane %v2747, 5
  %v2750 = vsel %vm2544, %v2745, %v2749
  %v2751 = vshrl.u32 %v2519, 16
  %v2753 = vrot.slane %v2751, 4
  %v2754 = vor.u32 %v2753, %v2749
  %v2755 = vrot.slane %v2754, 4
  %v2757 = vshll.u32 %v2520, 16
  %v2759 = vrot.slane %v2757, 5
  %v2760 = vsel %vm2544, %v2755, %v2759
  %v2762 = vshrl.u32 %v2521, 16
  %v2764 = vrot.slane %v2762, 4
  %v2765 = vshll.u32 %v2521, 16
  %v2767 = vrot.slane %v2765, 5
  %v2768 = vor.u32 %v2764, %v2767
  %v2769 = vrot.slane %v2768, 4
  %v2771 = vshll.u32 %v2522, 16
  %v2773 = vrot.slane %v2771, 5
  %v2774 = vsel %vm2544, %v2769, %v2773
  %v2775 = vshrl.u32 %v2522, 16
  %v2777 = vrot.slane %v2775, 4
  %v2778 = vor.u32 %v2777, %v2773
  %v2779 = vrot.slane %v2778, 4
  %v2781 = vshll.u32 %v2523, 16
  %v2783 = vrot.slane %v2781, 5
  %v2784 = vsel %vm2544, %v2779, %v2783
  %v2786 = vshrl.u32 %v2524, 16
  %v2788 = vrot.slane %v2786, 4
  %v2789 = vshll.u32 %v2524, 16
  %v2791 = vrot.slane %v2789, 5
  %v2792 = vor.u32 %v2788, %v2791
  %v2793 = vrot.slane %v2792, 4
  %v2795 = vshll.u32 %v2525, 16
  %v2797 = vrot.slane %v2795, 5
  %v2798 = vsel %vm2544, %v2793, %v2797
  %v2799 = vshrl.u32 %v2525, 16
  %v2801 = vrot.slane %v2799, 4
  %v2802 = vor.u32 %v2801, %v2797
  %v2803 = vrot.slane %v2802, 4
  %v2805 = vshll.u32 %v2526, 16
  %v2807 = vrot.slane %v2805, 5
  %v2808 = vsel %vm2544, %v2803, %v2807
  %v2810 = vshrl.u32 %v2527, 16
  %v2812 = vrot.slane %v2810, 4
  %v2813 = vshll.u32 %v2527, 16
  %v2815 = vrot.slane %v2813, 5
  %v2816 = vor.u32 %v2812, %v2815
  %v2817 = vrot.slane %v2816, 4
  %v2819 = vshll.u32 %v2528, 16
  %v2821 = vrot.slane %v2819, 5
  %v2822 = vsel %vm2544, %v2817, %v2821
  %v2823 = vshrl.u32 %v2528, 16
  %v2825 = vrot.slane %v2823, 4
  %v2826 = vor.u32 %v2825, %v2821
  %v2827 = vrot.slane %v2826, 4
  %v2829 = vshll.u32 %v2529, 16
  %v2831 = vrot.slane %v2829, 5
  %v2832 = vsel %vm2544, %v2827, %v2831
  %v2834 = vshrl.u32 %v2530, 16
  %v2836 = vrot.slane %v2834, 4
  %v2837 = vshll.u32 %v2530, 16
  %v2839 = vrot.slane %v2837, 5
  %v2840 = vor.u32 %v2836, %v2839
  %v2841 = vrot.slane %v2840, 4
  %v2843 = vshll.u32 %v2531, 16
  %v2845 = vrot.slane %v2843, 5
  %v2846 = vsel %vm2544, %v2841, %v2845
  %v2847 = vshrl.u32 %v2531, 16
  %v2849 = vrot.slane %v2847, 4
  %v2850 = vor.u32 %v2849, %v2845
  %v2851 = vrot.slane %v2850, 4
  %v2853 = vshll.u32 %v2532, 16
  %v2855 = vrot.slane %v2853, 5
  %v2856 = vsel %vm2544, %v2851, %v2855
  %v2858 = vshrl.u32 %v2533, 16
  %v2860 = vrot.slane %v2858, 4
  %v2861 = vshll.u32 %v2533, 16
  %v2863 = vrot.slane %v2861, 5
  %v2864 = vor.u32 %v2860, %v2863
  %v2865 = vrot.slane %v2864, 4
  %v2867 = vshll.u32 %v2534, 16
  %v2869 = vrot.slane %v2867, 5
  %v2870 = vsel %vm2544, %v2865, %v2869
  %v2871 = vshrl.u32 %v2534, 16
  %v2873 = vrot.slane %v2871, 4
  %v2874 = vor.u32 %v2873, %v2869
  %v2875 = vrot.slane %v2874, 4
  %v2877 = vshll.u32 %v2535, 16
  %v2879 = vrot.slane %v2877, 5
  %v2880 = vsel %vm2544, %v2875, %v2879
  %v2882 = vshrl.u32 %v2536, 16
  %v2884 = vrot.slane %v2882, 4
  %v2885 = vshll.u32 %v2536, 16
  %v2887 = vrot.slane %v2885, 5
  %v2888 = vor.u32 %v2884, %v2887
  %v2889 = vrot.slane %v2888, 4
  %v2891 = vshll.u32 %v2537, 16
  %v2893 = vrot.slane %v2891, 5
  %v2894 = vsel %vm2544, %v2889, %v2893
  %v2895 = vshrl.u32 %v2537, 16
  %v2897 = vrot.slane %v2895, 4
  %v2898 = vor.u32 %v2897, %v2893
  %v2899 = vrot.slane %v2898, 4
  %v2901 = vshll.u32 %v2538, 16
  %v2903 = vrot.slane %v2901, 5
  %v2904 = vsel %vm2544, %v2899, %v2903
  %v2906 = vshrl.u32 %v2539, 16
  %v2908 = vrot.slane %v2906, 4
  %v2909 = vshll.u32 %v2539, 16
  %v2911 = vrot.slane %v2909, 5
  %v2912 = vor.u32 %v2908, %v2911
  %v2913 = vrot.slane %v2912, 4
  %v2915 = vshll.u32 %v2540, 16
  %v2917 = vrot.slane %v2915, 5
  %v2918 = vsel %vm2544, %v2913, %v2917
  %v2919 = vshrl.u32 %v2540, 16
  %v2921 = vrot.slane %v2919, 4
  %v2922 = vor.u32 %v2921, %v2917
  %v2923 = vrot.slane %v2922, 4
  %v2925 = vshll.u32 %v2541, 16
  %v2927 = vrot.slane %v2925, 5
  %v2928 = vsel %vm2544, %v2923, %v2927
  %v2929 = vunpack.c.l.b16 %v2558
  %v2930 = vunpack.c.l.b16 %v2568
  %v2931 = vunpack.c.l.b16 %v2582
  %v2932 = vunpack.c.l.b16 %v2592
  %v2933 = vunpack.c.l.b16 %v2606
  %v2934 = vunpack.c.l.b16 %v2616
  %v2935 = vunpack.c.l.b16 %v2630
  %v2936 = vunpack.c.l.b16 %v2640
  %v2937 = vunpack.c.l.b16 %v2654
  %v2938 = vunpack.c.l.b16 %v2664
  %v2939 = vunpack.c.l.b16 %v2678
  %v2940 = vunpack.c.l.b16 %v2688
  %v2941 = vunpack.c.l.b16 %v2702
  %v2942 = vunpack.c.l.b16 %v2712
  %v2943 = vunpack.c.l.b16 %v2726
  %v2944 = vunpack.c.l.b16 %v2736
  %v2945 = vunpack.c.l.b16 %v2750
  %v2946 = vunpack.c.l.b16 %v2760
  %v2947 = vunpack.c.l.b16 %v2774
  %v2948 = vunpack.c.l.b16 %v2784
  %v2949 = vunpack.c.l.b16 %v2798
  %v2950 = vunpack.c.l.b16 %v2808
  %v2951 = vunpack.c.l.b16 %v2822
  %v2952 = vunpack.c.l.b16 %v2832
  %v2953 = vunpack.c.l.b16 %v2846
  %v2954 = vunpack.c.l.b16 %v2856
  %v2955 = vunpack.c.l.b16 %v2870
  %v2956 = vunpack.c.l.b16 %v2880
  %v2957 = vunpack.c.l.b16 %v2894
  %v2958 = vunpack.c.l.b16 %v2904
  %v2959 = vunpack.c.l.b16 %v2918
  %v2960 = vunpack.c.l.b16 %v2928
  %v2961 = vpack.c.b16 %v2930, %v2929
  %v2962 = vpack.c.b16 %v2932, %v2931
  %v2963 = vpack.c.b16 %v2934, %v2933
  %v2964 = vpack.c.b16 %v2936, %v2935
  %v2965 = vpack.c.b16 %v2938, %v2937
  %v2966 = vpack.c.b16 %v2940, %v2939
  %v2967 = vpack.c.b16 %v2942, %v2941
  %v2968 = vpack.c.b16 %v2944, %v2943
  %v2969 = vpack.c.b16 %v2946, %v2945
  %v2970 = vpack.c.b16 %v2948, %v2947
  %v2971 = vpack.c.b16 %v2950, %v2949
  %v2972 = vpack.c.b16 %v2952, %v2951
  %v2973 = vpack.c.b16 %v2954, %v2953
  %v2974 = vpack.c.b16 %v2956, %v2955
  %v2975 = vpack.c.b16 %v2958, %v2957
  %v2976 = vpack.c.b16 %v2960, %v2959
  %2993 = vst [vmem:[#allocation3 + $0x8] sm:$0xff] %v2961
  %2994 = vst [vmem:[#allocation3 + $0x50] sm:$0xff] %v2962
  %2995 = vst [vmem:[#allocation3 + $0x98] sm:$0xff] %v2963
  %2996 = vst [vmem:[#allocation3 + $0xe0] sm:$0xff] %v2964
  %2997 = vst [vmem:[#allocation3 + $0x128] sm:$0xff] %v2965
  %2998 = vst [vmem:[#allocation3 + $0x170] sm:$0xff] %v2966
  %2999 = vst [vmem:[#allocation3 + $0x1b8] sm:$0xff] %v2967
  %3000 = vst [vmem:[#allocation3 + $0x200] sm:$0xff] %v2968
  %3001 = vst [vmem:[#allocation3 + $0x248] sm:$0xff] %v2969
  %3002 = vst [vmem:[#allocation3 + $0x290] sm:$0xff] %v2970
  %3003 = vst [vmem:[#allocation3 + $0x2d8] sm:$0xff] %v2971
  %3004 = vst [vmem:[#allocation3 + $0x320] sm:$0xff] %v2972
  %3005 = vst [vmem:[#allocation3 + $0x368] sm:$0xff] %v2973
  %3006 = vst [vmem:[#allocation3 + $0x3b0] sm:$0xff] %v2974
  %3007 = vst [vmem:[#allocation3 + $0x3f8] sm:$0xff] %v2975
  %3008 = vst [vmem:[#allocation3 + $0x440] sm:$0xff] %v2976
  %v3009 = vld [vmem:[#allocation2] sm:$0xe]
  %v3010 = vld [vmem:[#allocation2 + $0x4] sm:$0xf]
  %v3011 = vld [vmem:[#allocation2 + $0x8] sm:$0x1]
  %v3012 = vld [vmem:[#allocation2 + $0xc] sm:$0xe]
  %v3013 = vld [vmem:[#allocation2 + $0x10] sm:$0xf]
  %v3014 = vld [vmem:[#allocation2 + $0x14] sm:$0x1]
  %v3015 = vld [vmem:[#allocation2 + $0x18] sm:$0xe]
  %v3016 = vld [vmem:[#allocation2 + $0x1c] sm:$0xf]
  %v3017 = vld [vmem:[#allocation2 + $0x20] sm:$0x1]
  %v3018 = vld [vmem:[#allocation2 + $0x24] sm:$0xe]
  %v3019 = vld [vmem:[#allocation2 + $0x28] sm:$0xf]
  %v3020 = vld [vmem:[#allocation2 + $0x2c] sm:$0x1]
  %v3021 = vld [vmem:[#allocation2 + $0x30] sm:$0xe]
  %v3022 = vld [vmem:[#allocation2 + $0x34] sm:$0xf]
  %v3023 = vld [vmem:[#allocation2 + $0x38] sm:$0x1]
  %v3024 = vld [vmem:[#allocation2 + $0x3c] sm:$0xe]
  %v3025 = vld [vmem:[#allocation2 + $0x40] sm:$0xf]
  %v3026 = vld [vmem:[#allocation2 + $0x44] sm:$0x1]
  %v3027 = vld [vmem:[#allocation2 + $0x48] sm:$0xe]
  %v3028 = vld [vmem:[#allocation2 + $0x4c] sm:$0xf]
  %v3029 = vld [vmem:[#allocation2 + $0x50] sm:$0x1]
  %v3030 = vld [vmem:[#allocation2 + $0x54] sm:$0xe]
  %v3031 = vld [vmem:[#allocation2 + $0x58] sm:$0xf]
  %v3032 = vld [vmem:[#allocation2 + $0x5c] sm:$0x1]
  %v3033 = vld [vmem:[#allocation2 + $0x60] sm:$0xe]
  %v3034 = vld [vmem:[#allocation2 + $0x64] sm:$0xf]
  %v3035 = vld [vmem:[#allocation2 + $0x68] sm:$0x1]
  %v3036 = vld [vmem:[#allocation2 + $0x6c] sm:$0xe]
  %v3037 = vld [vmem:[#allocation2 + $0x70] sm:$0xf]
  %v3038 = vld [vmem:[#allocation2 + $0x74] sm:$0x1]
  %v3039 = vld [vmem:[#allocation2 + $0x78] sm:$0xe]
  %v3040 = vld [vmem:[#allocation2 + $0x7c] sm:$0xf]
  %v3041 = vld [vmem:[#allocation2 + $0x80] sm:$0x1]
  %v3042 = vld [vmem:[#allocation2 + $0x84] sm:$0xe]
  %v3043 = vld [vmem:[#allocation2 + $0x88] sm:$0xf]
  %v3044 = vld [vmem:[#allocation2 + $0x8c] sm:$0x1]
  %v3045 = vld [vmem:[#allocation2 + $0x90] sm:$0xe]
  %v3046 = vld [vmem:[#allocation2 + $0x94] sm:$0xf]
  %v3047 = vld [vmem:[#allocation2 + $0x98] sm:$0x1]
  %v3048 = vld [vmem:[#allocation2 + $0x9c] sm:$0xe]
  %v3049 = vld [vmem:[#allocation2 + $0xa0] sm:$0xf]
  %v3050 = vld [vmem:[#allocation2 + $0xa4] sm:$0x1]
  %v3051 = vld [vmem:[#allocation2 + $0xa8] sm:$0xe]
  %v3052 = vld [vmem:[#allocation2 + $0xac] sm:$0xf]
  %v3053 = vld [vmem:[#allocation2 + $0xb0] sm:$0x1]
  %v3054 = vld [vmem:[#allocation2 + $0xb4] sm:$0xe]
  %v3055 = vld [vmem:[#allocation2 + $0xb8] sm:$0xf]
  %v3056 = vld [vmem:[#allocation2 + $0xbc] sm:$0x1]
  %vm3105 = vcmask 1042432
  %vm3106 = vcmask 1046532
  %vm3107 = vmor %vm3105, %vm3106
  %v3108 = vrot.slane %v3009, 5
  %v3109 = vrot.slane %v3108, 4
  %v3110 = vrot.slane %v3010, 5
  %v3111 = vsel %vm3107, %v3109, %v3110
  %v3112 = vrot.slane %v3110, 4
  %v3113 = vrot.slane %v3011, 5
  %v3114 = vsel %vm3107, %v3112, %v3113
  %v3115 = vrot.slane %v3012, 5
  %v3116 = vrot.slane %v3115, 4
  %v3117 = vrot.slane %v3013, 5
  %v3118 = vsel %vm3107, %v3116, %v3117
  %v3119 = vrot.slane %v3117, 4
  %v3120 = vrot.slane %v3014, 5
  %v3121 = vsel %vm3107, %v3119, %v3120
  %v3122 = vrot.slane %v3015, 5
  %v3123 = vrot.slane %v3122, 4
  %v3124 = vrot.slane %v3016, 5
  %v3125 = vsel %vm3107, %v3123, %v3124
  %v3126 = vrot.slane %v3124, 4
  %v3127 = vrot.slane %v3017, 5
  %v3128 = vsel %vm3107, %v3126, %v3127
  %v3129 = vrot.slane %v3018, 5
  %v3130 = vrot.slane %v3129, 4
  %v3131 = vrot.slane %v3019, 5
  %v3132 = vsel %vm3107, %v3130, %v3131
  %v3133 = vrot.slane %v3131, 4
  %v3134 = vrot.slane %v3020, 5
  %v3135 = vsel %vm3107, %v3133, %v3134
  %v3136 = vrot.slane %v3021, 5
  %v3137 = vrot.slane %v3136, 4
  %v3138 = vrot.slane %v3022, 5
  %v3139 = vsel %vm3107, %v3137, %v3138
  %v3140 = vrot.slane %v3138, 4
  %v3141 = vrot.slane %v3023, 5
  %v3142 = vsel %vm3107, %v3140, %v3141
  %v3143 = vrot.slane %v3024, 5
  %v3144 = vrot.slane %v3143, 4
  %v3145 = vrot.slane %v3025, 5
  %v3146 = vsel %vm3107, %v3144, %v3145
  %v3147 = vrot.slane %v3145, 4
  %v3148 = vrot.slane %v3026, 5
  %v3149 = vsel %vm3107, %v3147, %v3148
  %v3150 = vrot.slane %v3027, 5
  %v3151 = vrot.slane %v3150, 4
  %v3152 = vrot.slane %v3028, 5
  %v3153 = vsel %vm3107, %v3151, %v3152
  %v3154 = vrot.slane %v3152, 4
  %v3155 = vrot.slane %v3029, 5
  %v3156 = vsel %vm3107, %v3154, %v3155
  %v3157 = vrot.slane %v3030, 5
  %v3158 = vrot.slane %v3157, 4
  %v3159 = vrot.slane %v3031, 5
  %v3160 = vsel %vm3107, %v3158, %v3159
  %v3161 = vrot.slane %v3159, 4
  %v3162 = vrot.slane %v3032, 5
  %v3163 = vsel %vm3107, %v3161, %v3162
  %v3164 = vrot.slane %v3033, 5
  %v3165 = vrot.slane %v3164, 4
  %v3166 = vrot.slane %v3034, 5
  %v3167 = vsel %vm3107, %v3165, %v3166
  %v3168 = vrot.slane %v3166, 4
  %v3169 = vrot.slane %v3035, 5
  %v3170 = vsel %vm3107, %v3168, %v3169
  %v3171 = vrot.slane %v3036, 5
  %v3172 = vrot.slane %v3171, 4
  %v3173 = vrot.slane %v3037, 5
  %v3174 = vsel %vm3107, %v3172, %v3173
  %v3175 = vrot.slane %v3173, 4
  %v3176 = vrot.slane %v3038, 5
  %v3177 = vsel %vm3107, %v3175, %v3176
  %v3178 = vrot.slane %v3039, 5
  %v3179 = vrot.slane %v3178, 4
  %v3180 = vrot.slane %v3040, 5
  %v3181 = vsel %vm3107, %v3179, %v3180
  %v3182 = vrot.slane %v3180, 4
  %v3183 = vrot.slane %v3041, 5
  %v3184 = vsel %vm3107, %v3182, %v3183
  %v3185 = vrot.slane %v3042, 5
  %v3186 = vrot.slane %v3185, 4
  %v3187 = vrot.slane %v3043, 5
  %v3188 = vsel %vm3107, %v3186, %v3187
  %v3189 = vrot.slane %v3187, 4
  %v3190 = vrot.slane %v3044, 5
  %v3191 = vsel %vm3107, %v3189, %v3190
  %v3192 = vrot.slane %v3045, 5
  %v3193 = vrot.slane %v3192, 4
  %v3194 = vrot.slane %v3046, 5
  %v3195 = vsel %vm3107, %v3193, %v3194
  %v3196 = vrot.slane %v3194, 4
  %v3197 = vrot.slane %v3047, 5
  %v3198 = vsel %vm3107, %v3196, %v3197
  %v3199 = vrot.slane %v3048, 5
  %v3200 = vrot.slane %v3199, 4
  %v3201 = vrot.slane %v3049, 5
  %v3202 = vsel %vm3107, %v3200, %v3201
  %v3203 = vrot.slane %v3201, 4
  %v3204 = vrot.slane %v3050, 5
  %v3205 = vsel %vm3107, %v3203, %v3204
  %v3206 = vrot.slane %v3051, 5
  %v3207 = vrot.slane %v3206, 4
  %v3208 = vrot.slane %v3052, 5
  %v3209 = vsel %vm3107, %v3207, %v3208
  %v3210 = vrot.slane %v3208, 4
  %v3211 = vrot.slane %v3053, 5
  %v3212 = vsel %vm3107, %v3210, %v3211
  %v3213 = vrot.slane %v3054, 5
  %v3214 = vrot.slane %v3213, 4
  %v3215 = vrot.slane %v3055, 5
  %v3216 = vsel %vm3107, %v3214, %v3215
  %v3217 = vrot.slane %v3215, 4
  %v3218 = vrot.slane %v3056, 5
  %v3219 = vsel %vm3107, %v3217, %v3218
  %v3220 = vunpack.c.l.b16 %v3111
  %v3221 = vunpack.c.l.b16 %v3114
  %v3222 = vunpack.c.l.b16 %v3118
  %v3223 = vunpack.c.l.b16 %v3121
  %v3224 = vunpack.c.l.b16 %v3125
  %v3225 = vunpack.c.l.b16 %v3128
  %v3226 = vunpack.c.l.b16 %v3132
  %v3227 = vunpack.c.l.b16 %v3135
  %v3228 = vunpack.c.l.b16 %v3139
  %v3229 = vunpack.c.l.b16 %v3142
  %v3230 = vunpack.c.l.b16 %v3146
  %v3231 = vunpack.c.l.b16 %v3149
  %v3232 = vunpack.c.l.b16 %v3153
  %v3233 = vunpack.c.l.b16 %v3156
  %v3234 = vunpack.c.l.b16 %v3160
  %v3235 = vunpack.c.l.b16 %v3163
  %v3236 = vunpack.c.l.b16 %v3167
  %v3237 = vunpack.c.l.b16 %v3170
  %v3238 = vunpack.c.l.b16 %v3174
  %v3239 = vunpack.c.l.b16 %v3177
  %v3240 = vunpack.c.l.b16 %v3181
  %v3241 = vunpack.c.l.b16 %v3184
  %v3242 = vunpack.c.l.b16 %v3188
  %v3243 = vunpack.c.l.b16 %v3191
  %v3244 = vunpack.c.l.b16 %v3195
  %v3245 = vunpack.c.l.b16 %v3198
  %v3246 = vunpack.c.l.b16 %v3202
  %v3247 = vunpack.c.l.b16 %v3205
  %v3248 = vunpack.c.l.b16 %v3209
  %v3249 = vunpack.c.l.b16 %v3212
  %v3250 = vunpack.c.l.b16 %v3216
  %v3251 = vunpack.c.l.b16 %v3219
  %v3252 = vpack.c.b16 %v3221, %v3220
  %v3253 = vpack.c.b16 %v3223, %v3222
  %v3254 = vpack.c.b16 %v3225, %v3224
  %v3255 = vpack.c.b16 %v3227, %v3226
  %v3256 = vpack.c.b16 %v3229, %v3228
  %v3257 = vpack.c.b16 %v3231, %v3230
  %v3258 = vpack.c.b16 %v3233, %v3232
  %v3259 = vpack.c.b16 %v3235, %v3234
  %v3260 = vpack.c.b16 %v3237, %v3236
  %v3261 = vpack.c.b16 %v3239, %v3238
  %v3262 = vpack.c.b16 %v3241, %v3240
  %v3263 = vpack.c.b16 %v3243, %v3242
  %v3264 = vpack.c.b16 %v3245, %v3244
  %v3265 = vpack.c.b16 %v3247, %v3246
  %v3266 = vpack.c.b16 %v3249, %v3248
  %v3267 = vpack.c.b16 %v3251, %v3250
  %3284 = vst [vmem:[#allocation3 + $0x10] sm:$0xff] %v3252
  %3285 = vst [vmem:[#allocation3 + $0x58] sm:$0xff] %v3253
  %3286 = vst [vmem:[#allocation3 + $0xa0] sm:$0xff] %v3254
  %3287 = vst [vmem:[#allocation3 + $0xe8] sm:$0xff] %v3255
  %3288 = vst [vmem:[#allocation3 + $0x130] sm:$0xff] %v3256
  %3289 = vst [vmem:[#allocation3 + $0x178] sm:$0xff] %v3257
  %3290 = vst [vmem:[#allocation3 + $0x1c0] sm:$0xff] %v3258
  %3291 = vst [vmem:[#allocation3 + $0x208] sm:$0xff] %v3259
  %3292 = vst [vmem:[#allocation3 + $0x250] sm:$0xff] %v3260
  %3293 = vst [vmem:[#allocation3 + $0x298] sm:$0xff] %v3261
  %3294 = vst [vmem:[#allocation3 + $0x2e0] sm:$0xff] %v3262
  %3295 = vst [vmem:[#allocation3 + $0x328] sm:$0xff] %v3263
  %3296 = vst [vmem:[#allocation3 + $0x370] sm:$0xff] %v3264
  %3297 = vst [vmem:[#allocation3 + $0x3b8] sm:$0xff] %v3265
  %3298 = vst [vmem:[#allocation3 + $0x400] sm:$0xff] %v3266
  %3299 = vst [vmem:[#allocation3 + $0x448] sm:$0xff] %v3267
  %v3300 = vld [vmem:[%s1606] sm:$0xf]
  %v3301 = vld [vmem:[%s1606 + $0x4] sm:$0xf]
  %v3302 = vld [vmem:[%s1606 + $0xc] sm:$0xf]
  %v3303 = vld [vmem:[%s1606 + $0x10] sm:$0xf]
  %v3304 = vld [vmem:[%s1606 + $0x18] sm:$0xf]
  %v3305 = vld [vmem:[%s1606 + $0x1c] sm:$0xf]
  %v3306 = vld [vmem:[%s1606 + $0x24] sm:$0xf]
  %v3307 = vld [vmem:[%s1606 + $0x28] sm:$0xf]
  %v3308 = vld [vmem:[%s1606 + $0x30] sm:$0xf]
  %v3309 = vld [vmem:[%s1606 + $0x34] sm:$0xf]
  %v3310 = vld [vmem:[%s1606 + $0x3c] sm:$0xf]
  %v3311 = vld [vmem:[%s1606 + $0x40] sm:$0xf]
  %v3312 = vld [vmem:[%s1606 + $0x48] sm:$0xf]
  %v3313 = vld [vmem:[%s1606 + $0x4c] sm:$0xf]
  %v3314 = vld [vmem:[%s1606 + $0x54] sm:$0xf]
  %v3315 = vld [vmem:[%s1606 + $0x58] sm:$0xf]
  %v3316 = vld [vmem:[%s1606 + $0x60] sm:$0xf]
  %v3317 = vld [vmem:[%s1606 + $0x64] sm:$0xf]
  %v3318 = vld [vmem:[%s1606 + $0x6c] sm:$0xf]
  %v3319 = vld [vmem:[%s1606 + $0x70] sm:$0xf]
  %v3320 = vld [vmem:[%s1606 + $0x78] sm:$0xf]
  %v3321 = vld [vmem:[%s1606 + $0x7c] sm:$0xf]
  %v3322 = vld [vmem:[%s1606 + $0x84] sm:$0xf]
  %v3323 = vld [vmem:[%s1606 + $0x88] sm:$0xf]
  %v3324 = vld [vmem:[%s1606 + $0x90] sm:$0xf]
  %v3325 = vld [vmem:[%s1606 + $0x94] sm:$0xf]
  %v3326 = vld [vmem:[%s1606 + $0x9c] sm:$0xf]
  %v3327 = vld [vmem:[%s1606 + $0xa0] sm:$0xf]
  %v3328 = vld [vmem:[%s1606 + $0xa8] sm:$0xf]
  %v3329 = vld [vmem:[%s1606 + $0xac] sm:$0xf]
  %v3330 = vld [vmem:[%s1606 + $0xb4] sm:$0xf]
  %v3331 = vld [vmem:[%s1606 + $0xb8] sm:$0xf]
  %v3364 = vunpack.c.l.b16 %v3300
  %v3365 = vunpack.c.l.b16 %v3301
  %v3366 = vunpack.c.l.b16 %v3302
  %v3367 = vunpack.c.l.b16 %v3303
  %v3368 = vunpack.c.l.b16 %v3304
  %v3369 = vunpack.c.l.b16 %v3305
  %v3370 = vunpack.c.l.b16 %v3306
  %v3371 = vunpack.c.l.b16 %v3307
  %v3372 = vunpack.c.l.b16 %v3308
  %v3373 = vunpack.c.l.b16 %v3309
  %v3374 = vunpack.c.l.b16 %v3310
  %v3375 = vunpack.c.l.b16 %v3311
  %v3376 = vunpack.c.l.b16 %v3312
  %v3377 = vunpack.c.l.b16 %v3313
  %v3378 = vunpack.c.l.b16 %v3314
  %v3379 = vunpack.c.l.b16 %v3315
  %v3380 = vunpack.c.l.b16 %v3316
  %v3381 = vunpack.c.l.b16 %v3317
  %v3382 = vunpack.c.l.b16 %v3318
  %v3383 = vunpack.c.l.b16 %v3319
  %v3384 = vunpack.c.l.b16 %v3320
  %v3385 = vunpack.c.l.b16 %v3321
  %v3386 = vunpack.c.l.b16 %v3322
  %v3387 = vunpack.c.l.b16 %v3323
  %v3388 = vunpack.c.l.b16 %v3324
  %v3389 = vunpack.c.l.b16 %v3325
  %v3390 = vunpack.c.l.b16 %v3326
  %v3391 = vunpack.c.l.b16 %v3327
  %v3392 = vunpack.c.l.b16 %v3328
  %v3393 = vunpack.c.l.b16 %v3329
  %v3394 = vunpack.c.l.b16 %v3330
  %v3395 = vunpack.c.l.b16 %v3331
  %v3396 = vpack.c.b16 %v3365, %v3364
  %v3397 = vpack.c.b16 %v3367, %v3366
  %v3398 = vpack.c.b16 %v3369, %v3368
  %v3399 = vpack.c.b16 %v3371, %v3370
  %v3400 = vpack.c.b16 %v3373, %v3372
  %v3401 = vpack.c.b16 %v3375, %v3374
  %v3402 = vpack.c.b16 %v3377, %v3376
  %v3403 = vpack.c.b16 %v3379, %v3378
  %v3404 = vpack.c.b16 %v3381, %v3380
  %v3405 = vpack.c.b16 %v3383, %v3382
  %v3406 = vpack.c.b16 %v3385, %v3384
  %v3407 = vpack.c.b16 %v3387, %v3386
  %v3408 = vpack.c.b16 %v3389, %v3388
  %v3409 = vpack.c.b16 %v3391, %v3390
  %v3410 = vpack.c.b16 %v3393, %v3392
  %v3411 = vpack.c.b16 %v3395, %v3394
  %3428 = vst [vmem:[#allocation3 + $0x18] sm:$0xff] %v3396
  %3429 = vst [vmem:[#allocation3 + $0x60] sm:$0xff] %v3397
  %3430 = vst [vmem:[#allocation3 + $0xa8] sm:$0xff] %v3398
  %3431 = vst [vmem:[#allocation3 + $0xf0] sm:$0xff] %v3399
  %3432 = vst [vmem:[#allocation3 + $0x138] sm:$0xff] %v3400
  %3433 = vst [vmem:[#allocation3 + $0x180] sm:$0xff] %v3401
  %3434 = vst [vmem:[#allocation3 + $0x1c8] sm:$0xff] %v3402
  %3435 = vst [vmem:[#allocation3 + $0x210] sm:$0xff] %v3403
  %3436 = vst [vmem:[#allocation3 + $0x258] sm:$0xff] %v3404
  %3437 = vst [vmem:[#allocation3 + $0x2a0] sm:$0xff] %v3405
  %3438 = vst [vmem:[#allocation3 + $0x2e8] sm:$0xff] %v3406
  %3439 = vst [vmem:[#allocation3 + $0x330] sm:$0xff] %v3407
  %3440 = vst [vmem:[#allocation3 + $0x378] sm:$0xff] %v3408
  %3441 = vst [vmem:[#allocation3 + $0x3c0] sm:$0xff] %v3409
  %3442 = vst [vmem:[#allocation3 + $0x408] sm:$0xff] %v3410
  %3443 = vst [vmem:[#allocation3 + $0x450] sm:$0xff] %v3411
  %v3444 = vld [vmem:[%s1606] sm:$0xf]
  %v3445 = vld [vmem:[%s1606 + $0x4] sm:$0xf]
  %v3446 = vld [vmem:[%s1606 + $0x8] sm:$0x1]
  %v3447 = vld [vmem:[%s1606 + $0xc] sm:$0xf]
  %v3448 = vld [vmem:[%s1606 + $0x10] sm:$0xf]
  %v3449 = vld [vmem:[%s1606 + $0x14] sm:$0x1]
  %v3450 = vld [vmem:[%s1606 + $0x18] sm:$0xf]
  %v3451 = vld [vmem:[%s1606 + $0x1c] sm:$0xf]
  %v3452 = vld [vmem:[%s1606 + $0x20] sm:$0x1]
  %v3453 = vld [vmem:[%s1606 + $0x24] sm:$0xf]
  %v3454 = vld [vmem:[%s1606 + $0x28] sm:$0xf]
  %v3455 = vld [vmem:[%s1606 + $0x2c] sm:$0x1]
  %v3456 = vld [vmem:[%s1606 + $0x30] sm:$0xf]
  %v3457 = vld [vmem:[%s1606 + $0x34] sm:$0xf]
  %v3458 = vld [vmem:[%s1606 + $0x38] sm:$0x1]
  %v3459 = vld [vmem:[%s1606 + $0x3c] sm:$0xf]
  %v3460 = vld [vmem:[%s1606 + $0x40] sm:$0xf]
  %v3461 = vld [vmem:[%s1606 + $0x44] sm:$0x1]
  %v3462 = vld [vmem:[%s1606 + $0x48] sm:$0xf]
  %v3463 = vld [vmem:[%s1606 + $0x4c] sm:$0xf]
  %v3464 = vld [vmem:[%s1606 + $0x50] sm:$0x1]
  %v3465 = vld [vmem:[%s1606 + $0x54] sm:$0xf]
  %v3466 = vld [vmem:[%s1606 + $0x58] sm:$0xf]
  %v3467 = vld [vmem:[%s1606 + $0x5c] sm:$0x1]
  %v3468 = vld [vmem:[%s1606 + $0x60] sm:$0xf]
  %v3469 = vld [vmem:[%s1606 + $0x64] sm:$0xf]
  %v3470 = vld [vmem:[%s1606 + $0x68] sm:$0x1]
  %v3471 = vld [vmem:[%s1606 + $0x6c] sm:$0xf]
  %v3472 = vld [vmem:[%s1606 + $0x70] sm:$0xf]
  %v3473 = vld [vmem:[%s1606 + $0x74] sm:$0x1]
  %v3474 = vld [vmem:[%s1606 + $0x78] sm:$0xf]
  %v3475 = vld [vmem:[%s1606 + $0x7c] sm:$0xf]
  %v3476 = vld [vmem:[%s1606 + $0x80] sm:$0x1]
  %v3477 = vld [vmem:[%s1606 + $0x84] sm:$0xf]
  %v3478 = vld [vmem:[%s1606 + $0x88] sm:$0xf]
  %v3479 = vld [vmem:[%s1606 + $0x8c] sm:$0x1]
  %v3480 = vld [vmem:[%s1606 + $0x90] sm:$0xf]
  %v3481 = vld [vmem:[%s1606 + $0x94] sm:$0xf]
  %v3482 = vld [vmem:[%s1606 + $0x98] sm:$0x1]
  %v3483 = vld [vmem:[%s1606 + $0x9c] sm:$0xf]
  %v3484 = vld [vmem:[%s1606 + $0xa0] sm:$0xf]
  %v3485 = vld [vmem:[%s1606 + $0xa4] sm:$0x1]
  %v3486 = vld [vmem:[%s1606 + $0xa8] sm:$0xf]
  %v3487 = vld [vmem:[%s1606 + $0xac] sm:$0xf]
  %v3488 = vld [vmem:[%s1606 + $0xb0] sm:$0x1]
  %v3489 = vld [vmem:[%s1606 + $0xb4] sm:$0xf]
  %v3490 = vld [vmem:[%s1606 + $0xb8] sm:$0xf]
  %v3491 = vld [vmem:[%s1606 + $0xbc] sm:$0x1]
  %v3493 = vshrl.u32 %v3444, 16
  %v3495 = vrot.slane %v3493, 4
  %v3496 = vshll.u32 %v3444, 16
  %v3498 = vrot.slane %v3496, 5
  %v3499 = vor.u32 %v3495, %v3498
  %v3500 = vrot.slane %v3499, 4
  %v3502 = vshll.u32 %v3445, 16
  %v3504 = vrot.slane %v3502, 5
  %v3505 = vsel %vm2544, %v3500, %v3504
  %v3506 = vshrl.u32 %v3445, 16
  %v3508 = vrot.slane %v3506, 4
  %v3509 = vor.u32 %v3508, %v3504
  %v3510 = vrot.slane %v3509, 4
  %v3512 = vshll.u32 %v3446, 16
  %v3514 = vrot.slane %v3512, 5
  %v3515 = vsel %vm2544, %v3510, %v3514
  %v3517 = vshrl.u32 %v3447, 16
  %v3519 = vrot.slane %v3517, 4
  %v3520 = vshll.u32 %v3447, 16
  %v3522 = vrot.slane %v3520, 5
  %v3523 = vor.u32 %v3519, %v3522
  %v3524 = vrot.slane %v3523, 4
  %v3526 = vshll.u32 %v3448, 16
  %v3528 = vrot.slane %v3526, 5
  %v3529 = vsel %vm2544, %v3524, %v3528
  %v3530 = vshrl.u32 %v3448, 16
  %v3532 = vrot.slane %v3530, 4
  %v3533 = vor.u32 %v3532, %v3528
  %v3534 = vrot.slane %v3533, 4
  %v3536 = vshll.u32 %v3449, 16
  %v3538 = vrot.slane %v3536, 5
  %v3539 = vsel %vm2544, %v3534, %v3538
  %v3541 = vshrl.u32 %v3450, 16
  %v3543 = vrot.slane %v3541, 4
  %v3544 = vshll.u32 %v3450, 16
  %v3546 = vrot.slane %v3544, 5
  %v3547 = vor.u32 %v3543, %v3546
  %v3548 = vrot.slane %v3547, 4
  %v3550 = vshll.u32 %v3451, 16
  %v3552 = vrot.slane %v3550, 5
  %v3553 = vsel %vm2544, %v3548, %v3552
  %v3554 = vshrl.u32 %v3451, 16
  %v3556 = vrot.slane %v3554, 4
  %v3557 = vor.u32 %v3556, %v3552
  %v3558 = vrot.slane %v3557, 4
  %v3560 = vshll.u32 %v3452, 16
  %v3562 = vrot.slane %v3560, 5
  %v3563 = vsel %vm2544, %v3558, %v3562
  %v3565 = vshrl.u32 %v3453, 16
  %v3567 = vrot.slane %v3565, 4
  %v3568 = vshll.u32 %v3453, 16
  %v3570 = vrot.slane %v3568, 5
  %v3571 = vor.u32 %v3567, %v3570
  %v3572 = vrot.slane %v3571, 4
  %v3574 = vshll.u32 %v3454, 16
  %v3576 = vrot.slane %v3574, 5
  %v3577 = vsel %vm2544, %v3572, %v3576
  %v3578 = vshrl.u32 %v3454, 16
  %v3580 = vrot.slane %v3578, 4
  %v3581 = vor.u32 %v3580, %v3576
  %v3582 = vrot.slane %v3581, 4
  %v3584 = vshll.u32 %v3455, 16
  %v3586 = vrot.slane %v3584, 5
  %v3587 = vsel %vm2544, %v3582, %v3586
  %v3589 = vshrl.u32 %v3456, 16
  %v3591 = vrot.slane %v3589, 4
  %v3592 = vshll.u32 %v3456, 16
  %v3594 = vrot.slane %v3592, 5
  %v3595 = vor.u32 %v3591, %v3594
  %v3596 = vrot.slane %v3595, 4
  %v3598 = vshll.u32 %v3457, 16
  %v3600 = vrot.slane %v3598, 5
  %v3601 = vsel %vm2544, %v3596, %v3600
  %v3602 = vshrl.u32 %v3457, 16
  %v3604 = vrot.slane %v3602, 4
  %v3605 = vor.u32 %v3604, %v3600
  %v3606 = vrot.slane %v3605, 4
  %v3608 = vshll.u32 %v3458, 16
  %v3610 = vrot.slane %v3608, 5
  %v3611 = vsel %vm2544, %v3606, %v3610
  %v3613 = vshrl.u32 %v3459, 16
  %v3615 = vrot.slane %v3613, 4
  %v3616 = vshll.u32 %v3459, 16
  %v3618 = vrot.slane %v3616, 5
  %v3619 = vor.u32 %v3615, %v3618
  %v3620 = vrot.slane %v3619, 4
  %v3622 = vshll.u32 %v3460, 16
  %v3624 = vrot.slane %v3622, 5
  %v3625 = vsel %vm2544, %v3620, %v3624
  %v3626 = vshrl.u32 %v3460, 16
  %v3628 = vrot.slane %v3626, 4
  %v3629 = vor.u32 %v3628, %v3624
  %v3630 = vrot.slane %v3629, 4
  %v3632 = vshll.u32 %v3461, 16
  %v3634 = vrot.slane %v3632, 5
  %v3635 = vsel %vm2544, %v3630, %v3634
  %v3637 = vshrl.u32 %v3462, 16
  %v3639 = vrot.slane %v3637, 4
  %v3640 = vshll.u32 %v3462, 16
  %v3642 = vrot.slane %v3640, 5
  %v3643 = vor.u32 %v3639, %v3642
  %v3644 = vrot.slane %v3643, 4
  %v3646 = vshll.u32 %v3463, 16
  %v3648 = vrot.slane %v3646, 5
  %v3649 = vsel %vm2544, %v3644, %v3648
  %v3650 = vshrl.u32 %v3463, 16
  %v3652 = vrot.slane %v3650, 4
  %v3653 = vor.u32 %v3652, %v3648
  %v3654 = vrot.slane %v3653, 4
  %v3656 = vshll.u32 %v3464, 16
  %v3658 = vrot.slane %v3656, 5
  %v3659 = vsel %vm2544, %v3654, %v3658
  %v3661 = vshrl.u32 %v3465, 16
  %v3663 = vrot.slane %v3661, 4
  %v3664 = vshll.u32 %v3465, 16
  %v3666 = vrot.slane %v3664, 5
  %v3667 = vor.u32 %v3663, %v3666
  %v3668 = vrot.slane %v3667, 4
  %v3670 = vshll.u32 %v3466, 16
  %v3672 = vrot.slane %v3670, 5
  %v3673 = vsel %vm2544, %v3668, %v3672
  %v3674 = vshrl.u32 %v3466, 16
  %v3676 = vrot.slane %v3674, 4
  %v3677 = vor.u32 %v3676, %v3672
  %v3678 = vrot.slane %v3677, 4
  %v3680 = vshll.u32 %v3467, 16
  %v3682 = vrot.slane %v3680, 5
  %v3683 = vsel %vm2544, %v3678, %v3682
  %v3685 = vshrl.u32 %v3468, 16
  %v3687 = vrot.slane %v3685, 4
  %v3688 = vshll.u32 %v3468, 16
  %v3690 = vrot.slane %v3688, 5
  %v3691 = vor.u32 %v3687, %v3690
  %v3692 = vrot.slane %v3691, 4
  %v3694 = vshll.u32 %v3469, 16
  %v3696 = vrot.slane %v3694, 5
  %v3697 = vsel %vm2544, %v3692, %v3696
  %v3698 = vshrl.u32 %v3469, 16
  %v3700 = vrot.slane %v3698, 4
  %v3701 = vor.u32 %v3700, %v3696
  %v3702 = vrot.slane %v3701, 4
  %v3704 = vshll.u32 %v3470, 16
  %v3706 = vrot.slane %v3704, 5
  %v3707 = vsel %vm2544, %v3702, %v3706
  %v3709 = vshrl.u32 %v3471, 16
  %v3711 = vrot.slane %v3709, 4
  %v3712 = vshll.u32 %v3471, 16
  %v3714 = vrot.slane %v3712, 5
  %v3715 = vor.u32 %v3711, %v3714
  %v3716 = vrot.slane %v3715, 4
  %v3718 = vshll.u32 %v3472, 16
  %v3720 = vrot.slane %v3718, 5
  %v3721 = vsel %vm2544, %v3716, %v3720
  %v3722 = vshrl.u32 %v3472, 16
  %v3724 = vrot.slane %v3722, 4
  %v3725 = vor.u32 %v3724, %v3720
  %v3726 = vrot.slane %v3725, 4
  %v3728 = vshll.u32 %v3473, 16
  %v3730 = vrot.slane %v3728, 5
  %v3731 = vsel %vm2544, %v3726, %v3730
  %v3733 = vshrl.u32 %v3474, 16
  %v3735 = vrot.slane %v3733, 4
  %v3736 = vshll.u32 %v3474, 16
  %v3738 = vrot.slane %v3736, 5
  %v3739 = vor.u32 %v3735, %v3738
  %v3740 = vrot.slane %v3739, 4
  %v3742 = vshll.u32 %v3475, 16
  %v3744 = vrot.slane %v3742, 5
  %v3745 = vsel %vm2544, %v3740, %v3744
  %v3746 = vshrl.u32 %v3475, 16
  %v3748 = vrot.slane %v3746, 4
  %v3749 = vor.u32 %v3748, %v3744
  %v3750 = vrot.slane %v3749, 4
  %v3752 = vshll.u32 %v3476, 16
  %v3754 = vrot.slane %v3752, 5
  %v3755 = vsel %vm2544, %v3750, %v3754
  %v3757 = vshrl.u32 %v3477, 16
  %v3759 = vrot.slane %v3757, 4
  %v3760 = vshll.u32 %v3477, 16
  %v3762 = vrot.slane %v3760, 5
  %v3763 = vor.u32 %v3759, %v3762
  %v3764 = vrot.slane %v3763, 4
  %v3766 = vshll.u32 %v3478, 16
  %v3768 = vrot.slane %v3766, 5
  %v3769 = vsel %vm2544, %v3764, %v3768
  %v3770 = vshrl.u32 %v3478, 16
  %v3772 = vrot.slane %v3770, 4
  %v3773 = vor.u32 %v3772, %v3768
  %v3774 = vrot.slane %v3773, 4
  %v3776 = vshll.u32 %v3479, 16
  %v3778 = vrot.slane %v3776, 5
  %v3779 = vsel %vm2544, %v3774, %v3778
  %v3781 = vshrl.u32 %v3480, 16
  %v3783 = vrot.slane %v3781, 4
  %v3784 = vshll.u32 %v3480, 16
  %v3786 = vrot.slane %v3784, 5
  %v3787 = vor.u32 %v3783, %v3786
  %v3788 = vrot.slane %v3787, 4
  %v3790 = vshll.u32 %v3481, 16
  %v3792 = vrot.slane %v3790, 5
  %v3793 = vsel %vm2544, %v3788, %v3792
  %v3794 = vshrl.u32 %v3481, 16
  %v3796 = vrot.slane %v3794, 4
  %v3797 = vor.u32 %v3796, %v3792
  %v3798 = vrot.slane %v3797, 4
  %v3800 = vshll.u32 %v3482, 16
  %v3802 = vrot.slane %v3800, 5
  %v3803 = vsel %vm2544, %v3798, %v3802
  %v3805 = vshrl.u32 %v3483, 16
  %v3807 = vrot.slane %v3805, 4
  %v3808 = vshll.u32 %v3483, 16
  %v3810 = vrot.slane %v3808, 5
  %v3811 = vor.u32 %v3807, %v3810
  %v3812 = vrot.slane %v3811, 4
  %v3814 = vshll.u32 %v3484, 16
  %v3816 = vrot.slane %v3814, 5
  %v3817 = vsel %vm2544, %v3812, %v3816
  %v3818 = vshrl.u32 %v3484, 16
  %v3820 = vrot.slane %v3818, 4
  %v3821 = vor.u32 %v3820, %v3816
  %v3822 = vrot.slane %v3821, 4
  %v3824 = vshll.u32 %v3485, 16
  %v3826 = vrot.slane %v3824, 5
  %v3827 = vsel %vm2544, %v3822, %v3826
  %v3829 = vshrl.u32 %v3486, 16
  %v3831 = vrot.slane %v3829, 4
  %v3832 = vshll.u32 %v3486, 16
  %v3834 = vrot.slane %v3832, 5
  %v3835 = vor.u32 %v3831, %v3834
  %v3836 = vrot.slane %v3835, 4
  %v3838 = vshll.u32 %v3487, 16
  %v3840 = vrot.slane %v3838, 5
  %v3841 = vsel %vm2544, %v3836, %v3840
  %v3842 = vshrl.u32 %v3487, 16
  %v3844 = vrot.slane %v3842, 4
  %v3845 = vor.u32 %v3844, %v3840
  %v3846 = vrot.slane %v3845, 4
  %v3848 = vshll.u32 %v3488, 16
  %v3850 = vrot.slane %v3848, 5
  %v3851 = vsel %vm2544, %v3846, %v3850
  %v3853 = vshrl.u32 %v3489, 16
  %v3855 = vrot.slane %v3853, 4
  %v3856 = vshll.u32 %v3489, 16
  %v3858 = vrot.slane %v3856, 5
  %v3859 = vor.u32 %v3855, %v3858
  %v3860 = vrot.slane %v3859, 4
  %v3862 = vshll.u32 %v3490, 16
  %v3864 = vrot.slane %v3862, 5
  %v3865 = vsel %vm2544, %v3860, %v3864
  %v3866 = vshrl.u32 %v3490, 16
  %v3868 = vrot.slane %v3866, 4
  %v3869 = vor.u32 %v3868, %v3864
  %v3870 = vrot.slane %v3869, 4
  %v3872 = vshll.u32 %v3491, 16
  %v3874 = vrot.slane %v3872, 5
  %v3875 = vsel %vm2544, %v3870, %v3874
  %v3876 = vunpack.c.l.b16 %v3505
  %v3877 = vunpack.c.l.b16 %v3515
  %v3878 = vunpack.c.l.b16 %v3529
  %v3879 = vunpack.c.l.b16 %v3539
  %v3880 = vunpack.c.l.b16 %v3553
  %v3881 = vunpack.c.l.b16 %v3563
  %v3882 = vunpack.c.l.b16 %v3577
  %v3883 = vunpack.c.l.b16 %v3587
  %v3884 = vunpack.c.l.b16 %v3601
  %v3885 = vunpack.c.l.b16 %v3611
  %v3886 = vunpack.c.l.b16 %v3625
  %v3887 = vunpack.c.l.b16 %v3635
  %v3888 = vunpack.c.l.b16 %v3649
  %v3889 = vunpack.c.l.b16 %v3659
  %v3890 = vunpack.c.l.b16 %v3673
  %v3891 = vunpack.c.l.b16 %v3683
  %v3892 = vunpack.c.l.b16 %v3697
  %v3893 = vunpack.c.l.b16 %v3707
  %v3894 = vunpack.c.l.b16 %v3721
  %v3895 = vunpack.c.l.b16 %v3731
  %v3896 = vunpack.c.l.b16 %v3745
  %v3897 = vunpack.c.l.b16 %v3755
  %v3898 = vunpack.c.l.b16 %v3769
  %v3899 = vunpack.c.l.b16 %v3779
  %v3900 = vunpack.c.l.b16 %v3793
  %v3901 = vunpack.c.l.b16 %v3803
  %v3902 = vunpack.c.l.b16 %v3817
  %v3903 = vunpack.c.l.b16 %v3827
  %v3904 = vunpack.c.l.b16 %v3841
  %v3905 = vunpack.c.l.b16 %v3851
  %v3906 = vunpack.c.l.b16 %v3865
  %v3907 = vunpack.c.l.b16 %v3875
  %v3908 = vpack.c.b16 %v3877, %v3876
  %v3909 = vpack.c.b16 %v3879, %v3878
  %v3910 = vpack.c.b16 %v3881, %v3880
  %v3911 = vpack.c.b16 %v3883, %v3882
  %v3912 = vpack.c.b16 %v3885, %v3884
  %v3913 = vpack.c.b16 %v3887, %v3886
  %v3914 = vpack.c.b16 %v3889, %v3888
  %v3915 = vpack.c.b16 %v3891, %v3890
  %v3916 = vpack.c.b16 %v3893, %v3892
  %v3917 = vpack.c.b16 %v3895, %v3894
  %v3918 = vpack.c.b16 %v3897, %v3896
  %v3919 = vpack.c.b16 %v3899, %v3898
  %v3920 = vpack.c.b16 %v3901, %v3900
  %v3921 = vpack.c.b16 %v3903, %v3902
  %v3922 = vpack.c.b16 %v3905, %v3904
  %v3923 = vpack.c.b16 %v3907, %v3906
  %3940 = vst [vmem:[#allocation3 + $0x20] sm:$0xff] %v3908
  %3941 = vst [vmem:[#allocation3 + $0x68] sm:$0xff] %v3909
  %3942 = vst [vmem:[#allocation3 + $0xb0] sm:$0xff] %v3910
  %3943 = vst [vmem:[#allocation3 + $0xf8] sm:$0xff] %v3911
  %3944 = vst [vmem:[#allocation3 + $0x140] sm:$0xff] %v3912
  %3945 = vst [vmem:[#allocation3 + $0x188] sm:$0xff] %v3913
  %3946 = vst [vmem:[#allocation3 + $0x1d0] sm:$0xff] %v3914
  %3947 = vst [vmem:[#allocation3 + $0x218] sm:$0xff] %v3915
  %3948 = vst [vmem:[#allocation3 + $0x260] sm:$0xff] %v3916
  %3949 = vst [vmem:[#allocation3 + $0x2a8] sm:$0xff] %v3917
  %3950 = vst [vmem:[#allocation3 + $0x2f0] sm:$0xff] %v3918
  %3951 = vst [vmem:[#allocation3 + $0x338] sm:$0xff] %v3919
  %3952 = vst [vmem:[#allocation3 + $0x380] sm:$0xff] %v3920
  %3953 = vst [vmem:[#allocation3 + $0x3c8] sm:$0xff] %v3921
  %3954 = vst [vmem:[#allocation3 + $0x410] sm:$0xff] %v3922
  %3955 = vst [vmem:[#allocation3 + $0x458] sm:$0xff] %v3923
  %v3956 = vld [vmem:[%s1606] sm:$0xe]
  %v3957 = vld [vmem:[%s1606 + $0x4] sm:$0xf]
  %v3958 = vld [vmem:[%s1606 + $0x8] sm:$0x1]
  %v3959 = vld [vmem:[%s1606 + $0xc] sm:$0xe]
  %v3960 = vld [vmem:[%s1606 + $0x10] sm:$0xf]
  %v3961 = vld [vmem:[%s1606 + $0x14] sm:$0x1]
  %v3962 = vld [vmem:[%s1606 + $0x18] sm:$0xe]
  %v3963 = vld [vmem:[%s1606 + $0x1c] sm:$0xf]
  %v3964 = vld [vmem:[%s1606 + $0x20] sm:$0x1]
  %v3965 = vld [vmem:[%s1606 + $0x24] sm:$0xe]
  %v3966 = vld [vmem:[%s1606 + $0x28] sm:$0xf]
  %v3967 = vld [vmem:[%s1606 + $0x2c] sm:$0x1]
  %v3968 = vld [vmem:[%s1606 + $0x30] sm:$0xe]
  %v3969 = vld [vmem:[%s1606 + $0x34] sm:$0xf]
  %v3970 = vld [vmem:[%s1606 + $0x38] sm:$0x1]
  %v3971 = vld [vmem:[%s1606 + $0x3c] sm:$0xe]
  %v3972 = vld [vmem:[%s1606 + $0x40] sm:$0xf]
  %v3973 = vld [vmem:[%s1606 + $0x44] sm:$0x1]
  %v3974 = vld [vmem:[%s1606 + $0x48] sm:$0xe]
  %v3975 = vld [vmem:[%s1606 + $0x4c] sm:$0xf]
  %v3976 = vld [vmem:[%s1606 + $0x50] sm:$0x1]
  %v3977 = vld [vmem:[%s1606 + $0x54] sm:$0xe]
  %v3978 = vld [vmem:[%s1606 + $0x58] sm:$0xf]
  %v3979 = vld [vmem:[%s1606 + $0x5c] sm:$0x1]
  %v3980 = vld [vmem:[%s1606 + $0x60] sm:$0xe]
  %v3981 = vld [vmem:[%s1606 + $0x64] sm:$0xf]
  %v3982 = vld [vmem:[%s1606 + $0x68] sm:$0x1]
  %v3983 = vld [vmem:[%s1606 + $0x6c] sm:$0xe]
  %v3984 = vld [vmem:[%s1606 + $0x70] sm:$0xf]
  %v3985 = vld [vmem:[%s1606 + $0x74] sm:$0x1]
  %v3986 = vld [vmem:[%s1606 + $0x78] sm:$0xe]
  %v3987 = vld [vmem:[%s1606 + $0x7c] sm:$0xf]
  %v3988 = vld [vmem:[%s1606 + $0x80] sm:$0x1]
  %v3989 = vld [vmem:[%s1606 + $0x84] sm:$0xe]
  %v3990 = vld [vmem:[%s1606 + $0x88] sm:$0xf]
  %v3991 = vld [vmem:[%s1606 + $0x8c] sm:$0x1]
  %v3992 = vld [vmem:[%s1606 + $0x90] sm:$0xe]
  %v3993 = vld [vmem:[%s1606 + $0x94] sm:$0xf]
  %v3994 = vld [vmem:[%s1606 + $0x98] sm:$0x1]
  %v3995 = vld [vmem:[%s1606 + $0x9c] sm:$0xe]
  %v3996 = vld [vmem:[%s1606 + $0xa0] sm:$0xf]
  %v3997 = vld [vmem:[%s1606 + $0xa4] sm:$0x1]
  %v3998 = vld [vmem:[%s1606 + $0xa8] sm:$0xe]
  %v3999 = vld [vmem:[%s1606 + $0xac] sm:$0xf]
  %v4000 = vld [vmem:[%s1606 + $0xb0] sm:$0x1]
  %v4001 = vld [vmem:[%s1606 + $0xb4] sm:$0xe]
  %v4002 = vld [vmem:[%s1606 + $0xb8] sm:$0xf]
  %v4003 = vld [vmem:[%s1606 + $0xbc] sm:$0x1]
  %v4052 = vrot.slane %v3956, 5
  %v4053 = vrot.slane %v4052, 4
  %v4054 = vrot.slane %v3957, 5
  %v4055 = vsel %vm3107, %v4053, %v4054
  %v4056 = vrot.slane %v4054, 4
  %v4057 = vrot.slane %v3958, 5
  %v4058 = vsel %vm3107, %v4056, %v4057
  %v4059 = vrot.slane %v3959, 5
  %v4060 = vrot.slane %v4059, 4
  %v4061 = vrot.slane %v3960, 5
  %v4062 = vsel %vm3107, %v4060, %v4061
  %v4063 = vrot.slane %v4061, 4
  %v4064 = vrot.slane %v3961, 5
  %v4065 = vsel %vm3107, %v4063, %v4064
  %v4066 = vrot.slane %v3962, 5
  %v4067 = vrot.slane %v4066, 4
  %v4068 = vrot.slane %v3963, 5
  %v4069 = vsel %vm3107, %v4067, %v4068
  %v4070 = vrot.slane %v4068, 4
  %v4071 = vrot.slane %v3964, 5
  %v4072 = vsel %vm3107, %v4070, %v4071
  %v4073 = vrot.slane %v3965, 5
  %v4074 = vrot.slane %v4073, 4
  %v4075 = vrot.slane %v3966, 5
  %v4076 = vsel %vm3107, %v4074, %v4075
  %v4077 = vrot.slane %v4075, 4
  %v4078 = vrot.slane %v3967, 5
  %v4079 = vsel %vm3107, %v4077, %v4078
  %v4080 = vrot.slane %v3968, 5
  %v4081 = vrot.slane %v4080, 4
  %v4082 = vrot.slane %v3969, 5
  %v4083 = vsel %vm3107, %v4081, %v4082
  %v4084 = vrot.slane %v4082, 4
  %v4085 = vrot.slane %v3970, 5
  %v4086 = vsel %vm3107, %v4084, %v4085
  %v4087 = vrot.slane %v3971, 5
  %v4088 = vrot.slane %v4087, 4
  %v4089 = vrot.slane %v3972, 5
  %v4090 = vsel %vm3107, %v4088, %v4089
  %v4091 = vrot.slane %v4089, 4
  %v4092 = vrot.slane %v3973, 5
  %v4093 = vsel %vm3107, %v4091, %v4092
  %v4094 = vrot.slane %v3974, 5
  %v4095 = vrot.slane %v4094, 4
  %v4096 = vrot.slane %v3975, 5
  %v4097 = vsel %vm3107, %v4095, %v4096
  %v4098 = vrot.slane %v4096, 4
  %v4099 = vrot.slane %v3976, 5
  %v4100 = vsel %vm3107, %v4098, %v4099
  %v4101 = vrot.slane %v3977, 5
  %v4102 = vrot.slane %v4101, 4
  %v4103 = vrot.slane %v3978, 5
  %v4104 = vsel %vm3107, %v4102, %v4103
  %v4105 = vrot.slane %v4103, 4
  %v4106 = vrot.slane %v3979, 5
  %v4107 = vsel %vm3107, %v4105, %v4106
  %v4108 = vrot.slane %v3980, 5
  %v4109 = vrot.slane %v4108, 4
  %v4110 = vrot.slane %v3981, 5
  %v4111 = vsel %vm3107, %v4109, %v4110
  %v4112 = vrot.slane %v4110, 4
  %v4113 = vrot.slane %v3982, 5
  %v4114 = vsel %vm3107, %v4112, %v4113
  %v4115 = vrot.slane %v3983, 5
  %v4116 = vrot.slane %v4115, 4
  %v4117 = vrot.slane %v3984, 5
  %v4118 = vsel %vm3107, %v4116, %v4117
  %v4119 = vrot.slane %v4117, 4
  %v4120 = vrot.slane %v3985, 5
  %v4121 = vsel %vm3107, %v4119, %v4120
  %v4122 = vrot.slane %v3986, 5
  %v4123 = vrot.slane %v4122, 4
  %v4124 = vrot.slane %v3987, 5
  %v4125 = vsel %vm3107, %v4123, %v4124
  %v4126 = vrot.slane %v4124, 4
  %v4127 = vrot.slane %v3988, 5
  %v4128 = vsel %vm3107, %v4126, %v4127
  %v4129 = vrot.slane %v3989, 5
  %v4130 = vrot.slane %v4129, 4
  %v4131 = vrot.slane %v3990, 5
  %v4132 = vsel %vm3107, %v4130, %v4131
  %v4133 = vrot.slane %v4131, 4
  %v4134 = vrot.slane %v3991, 5
  %v4135 = vsel %vm3107, %v4133, %v4134
  %v4136 = vrot.slane %v3992, 5
  %v4137 = vrot.slane %v4136, 4
  %v4138 = vrot.slane %v3993, 5
  %v4139 = vsel %vm3107, %v4137, %v4138
  %v4140 = vrot.slane %v4138, 4
  %v4141 = vrot.slane %v3994, 5
  %v4142 = vsel %vm3107, %v4140, %v4141
  %v4143 = vrot.slane %v3995, 5
  %v4144 = vrot.slane %v4143, 4
  %v4145 = vrot.slane %v3996, 5
  %v4146 = vsel %vm3107, %v4144, %v4145
  %v4147 = vrot.slane %v4145, 4
  %v4148 = vrot.slane %v3997, 5
  %v4149 = vsel %vm3107, %v4147, %v4148
  %v4150 = vrot.slane %v3998, 5
  %v4151 = vrot.slane %v4150, 4
  %v4152 = vrot.slane %v3999, 5
  %v4153 = vsel %vm3107, %v4151, %v4152
  %v4154 = vrot.slane %v4152, 4
  %v4155 = vrot.slane %v4000, 5
  %v4156 = vsel %vm3107, %v4154, %v4155
  %v4157 = vrot.slane %v4001, 5
  %v4158 = vrot.slane %v4157, 4
  %v4159 = vrot.slane %v4002, 5
  %v4160 = vsel %vm3107, %v4158, %v4159
  %v4161 = vrot.slane %v4159, 4
  %v4162 = vrot.slane %v4003, 5
  %v4163 = vsel %vm3107, %v4161, %v4162
  %v4164 = vunpack.c.l.b16 %v4055
  %v4165 = vunpack.c.l.b16 %v4058
  %v4166 = vunpack.c.l.b16 %v4062
  %v4167 = vunpack.c.l.b16 %v4065
  %v4168 = vunpack.c.l.b16 %v4069
  %v4169 = vunpack.c.l.b16 %v4072
  %v4170 = vunpack.c.l.b16 %v4076
  %v4171 = vunpack.c.l.b16 %v4079
  %v4172 = vunpack.c.l.b16 %v4083
  %v4173 = vunpack.c.l.b16 %v4086
  %v4174 = vunpack.c.l.b16 %v4090
  %v4175 = vunpack.c.l.b16 %v4093
  %v4176 = vunpack.c.l.b16 %v4097
  %v4177 = vunpack.c.l.b16 %v4100
  %v4178 = vunpack.c.l.b16 %v4104
  %v4179 = vunpack.c.l.b16 %v4107
  %v4180 = vunpack.c.l.b16 %v4111
  %v4181 = vunpack.c.l.b16 %v4114
  %v4182 = vunpack.c.l.b16 %v4118
  %v4183 = vunpack.c.l.b16 %v4121
  %v4184 = vunpack.c.l.b16 %v4125
  %v4185 = vunpack.c.l.b16 %v4128
  %v4186 = vunpack.c.l.b16 %v4132
  %v4187 = vunpack.c.l.b16 %v4135
  %v4188 = vunpack.c.l.b16 %v4139
  %v4189 = vunpack.c.l.b16 %v4142
  %v4190 = vunpack.c.l.b16 %v4146
  %v4191 = vunpack.c.l.b16 %v4149
  %v4192 = vunpack.c.l.b16 %v4153
  %v4193 = vunpack.c.l.b16 %v4156
  %v4194 = vunpack.c.l.b16 %v4160
  %v4195 = vunpack.c.l.b16 %v4163
  %v4196 = vpack.c.b16 %v4165, %v4164
  %v4197 = vpack.c.b16 %v4167, %v4166
  %v4198 = vpack.c.b16 %v4169, %v4168
  %v4199 = vpack.c.b16 %v4171, %v4170
  %v4200 = vpack.c.b16 %v4173, %v4172
  %v4201 = vpack.c.b16 %v4175, %v4174
  %v4202 = vpack.c.b16 %v4177, %v4176
  %v4203 = vpack.c.b16 %v4179, %v4178
  %v4204 = vpack.c.b16 %v4181, %v4180
  %v4205 = vpack.c.b16 %v4183, %v4182
  %v4206 = vpack.c.b16 %v4185, %v4184
  %v4207 = vpack.c.b16 %v4187, %v4186
  %v4208 = vpack.c.b16 %v4189, %v4188
  %v4209 = vpack.c.b16 %v4191, %v4190
  %v4210 = vpack.c.b16 %v4193, %v4192
  %v4211 = vpack.c.b16 %v4195, %v4194
  %4228 = vst [vmem:[#allocation3 + $0x28] sm:$0xff] %v4196
  %4229 = vst [vmem:[#allocation3 + $0x70] sm:$0xff] %v4197
  %4230 = vst [vmem:[#allocation3 + $0xb8] sm:$0xff] %v4198
  %4231 = vst [vmem:[#allocation3 + $0x100] sm:$0xff] %v4199
  %4232 = vst [vmem:[#allocation3 + $0x148] sm:$0xff] %v4200
  %4233 = vst [vmem:[#allocation3 + $0x190] sm:$0xff] %v4201
  %4234 = vst [vmem:[#allocation3 + $0x1d8] sm:$0xff] %v4202
  %4235 = vst [vmem:[#allocation3 + $0x220] sm:$0xff] %v4203
  %4236 = vst [vmem:[#allocation3 + $0x268] sm:$0xff] %v4204
  %4237 = vst [vmem:[#allocation3 + $0x2b0] sm:$0xff] %v4205
  %4238 = vst [vmem:[#allocation3 + $0x2f8] sm:$0xff] %v4206
  %4239 = vst [vmem:[#allocation3 + $0x340] sm:$0xff] %v4207
  %4240 = vst [vmem:[#allocation3 + $0x388] sm:$0xff] %v4208
  %4241 = vst [vmem:[#allocation3 + $0x3d0] sm:$0xff] %v4209
  %4242 = vst [vmem:[#allocation3 + $0x418] sm:$0xff] %v4210
  %4243 = vst [vmem:[#allocation3 + $0x460] sm:$0xff] %v4211
  %s4244 = scalar_lea.vmem [#allocation2], 24
  %v4245 = vld [vmem:[%s4244] sm:$0xf]
  %v4246 = vld [vmem:[%s4244 + $0x4] sm:$0xf]
  %v4247 = vld [vmem:[%s4244 + $0xc] sm:$0xf]
  %v4248 = vld [vmem:[%s4244 + $0x10] sm:$0xf]
  %v4249 = vld [vmem:[%s4244 + $0x18] sm:$0xf]
  %v4250 = vld [vmem:[%s4244 + $0x1c] sm:$0xf]
  %v4251 = vld [vmem:[%s4244 + $0x24] sm:$0xf]
  %v4252 = vld [vmem:[%s4244 + $0x28] sm:$0xf]
  %v4253 = vld [vmem:[%s4244 + $0x30] sm:$0xf]
  %v4254 = vld [vmem:[%s4244 + $0x34] sm:$0xf]
  %v4255 = vld [vmem:[%s4244 + $0x3c] sm:$0xf]
  %v4256 = vld [vmem:[%s4244 + $0x40] sm:$0xf]
  %v4257 = vld [vmem:[%s4244 + $0x48] sm:$0xf]
  %v4258 = vld [vmem:[%s4244 + $0x4c] sm:$0xf]
  %v4259 = vld [vmem:[%s4244 + $0x54] sm:$0xf]
  %v4260 = vld [vmem:[%s4244 + $0x58] sm:$0xf]
  %v4261 = vld [vmem:[%s4244 + $0x60] sm:$0xf]
  %v4262 = vld [vmem:[%s4244 + $0x64] sm:$0xf]
  %v4263 = vld [vmem:[%s4244 + $0x6c] sm:$0xf]
  %v4264 = vld [vmem:[%s4244 + $0x70] sm:$0xf]
  %v4265 = vld [vmem:[%s4244 + $0x78] sm:$0xf]
  %v4266 = vld [vmem:[%s4244 + $0x7c] sm:$0xf]
  %v4267 = vld [vmem:[%s4244 + $0x84] sm:$0xf]
  %v4268 = vld [vmem:[%s4244 + $0x88] sm:$0xf]
  %v4269 = vld [vmem:[%s4244 + $0x90] sm:$0xf]
  %v4270 = vld [vmem:[%s4244 + $0x94] sm:$0xf]
  %v4271 = vld [vmem:[%s4244 + $0x9c] sm:$0xf]
  %v4272 = vld [vmem:[%s4244 + $0xa0] sm:$0xf]
  %v4273 = vld [vmem:[%s4244 + $0xa8] sm:$0xf]
  %v4274 = vld [vmem:[%s4244 + $0xac] sm:$0xf]
  %v4275 = vld [vmem:[%s4244 + $0xb4] sm:$0xf]
  %v4276 = vld [vmem:[%s4244 + $0xb8] sm:$0xf]
  %v4309 = vunpack.c.l.b16 %v4245
  %v4310 = vunpack.c.l.b16 %v4246
  %v4311 = vunpack.c.l.b16 %v4247
  %v4312 = vunpack.c.l.b16 %v4248
  %v4313 = vunpack.c.l.b16 %v4249
  %v4314 = vunpack.c.l.b16 %v4250
  %v4315 = vunpack.c.l.b16 %v4251
  %v4316 = vunpack.c.l.b16 %v4252
  %v4317 = vunpack.c.l.b16 %v4253
  %v4318 = vunpack.c.l.b16 %v4254
  %v4319 = vunpack.c.l.b16 %v4255
  %v4320 = vunpack.c.l.b16 %v4256
  %v4321 = vunpack.c.l.b16 %v4257
  %v4322 = vunpack.c.l.b16 %v4258
  %v4323 = vunpack.c.l.b16 %v4259
  %v4324 = vunpack.c.l.b16 %v4260
  %v4325 = vunpack.c.l.b16 %v4261
  %v4326 = vunpack.c.l.b16 %v4262
  %v4327 = vunpack.c.l.b16 %v4263
  %v4328 = vunpack.c.l.b16 %v4264
  %v4329 = vunpack.c.l.b16 %v4265
  %v4330 = vunpack.c.l.b16 %v4266
  %v4331 = vunpack.c.l.b16 %v4267
  %v4332 = vunpack.c.l.b16 %v4268
  %v4333 = vunpack.c.l.b16 %v4269
  %v4334 = vunpack.c.l.b16 %v4270
  %v4335 = vunpack.c.l.b16 %v4271
  %v4336 = vunpack.c.l.b16 %v4272
  %v4337 = vunpack.c.l.b16 %v4273
  %v4338 = vunpack.c.l.b16 %v4274
  %v4339 = vunpack.c.l.b16 %v4275
  %v4340 = vunpack.c.l.b16 %v4276
  %v4341 = vpack.c.b16 %v4310, %v4309
  %v4342 = vpack.c.b16 %v4312, %v4311
  %v4343 = vpack.c.b16 %v4314, %v4313
  %v4344 = vpack.c.b16 %v4316, %v4315
  %v4345 = vpack.c.b16 %v4318, %v4317
  %v4346 = vpack.c.b16 %v4320, %v4319
  %v4347 = vpack.c.b16 %v4322, %v4321
  %v4348 = vpack.c.b16 %v4324, %v4323
  %v4349 = vpack.c.b16 %v4326, %v4325
  %v4350 = vpack.c.b16 %v4328, %v4327
  %v4351 = vpack.c.b16 %v4330, %v4329
  %v4352 = vpack.c.b16 %v4332, %v4331
  %v4353 = vpack.c.b16 %v4334, %v4333
  %v4354 = vpack.c.b16 %v4336, %v4335
  %v4355 = vpack.c.b16 %v4338, %v4337
  %v4356 = vpack.c.b16 %v4340, %v4339
  %4373 = vst [vmem:[#allocation3 + $0x30] sm:$0xff] %v4341
  %4374 = vst [vmem:[#allocation3 + $0x78] sm:$0xff] %v4342
  %4375 = vst [vmem:[#allocation3 + $0xc0] sm:$0xff] %v4343
  %4376 = vst [vmem:[#allocation3 + $0x108] sm:$0xff] %v4344
  %4377 = vst [vmem:[#allocation3 + $0x150] sm:$0xff] %v4345
  %4378 = vst [vmem:[#allocation3 + $0x198] sm:$0xff] %v4346
  %4379 = vst [vmem:[#allocation3 + $0x1e0] sm:$0xff] %v4347
  %4380 = vst [vmem:[#allocation3 + $0x228] sm:$0xff] %v4348
  %4381 = vst [vmem:[#allocation3 + $0x270] sm:$0xff] %v4349
  %4382 = vst [vmem:[#allocation3 + $0x2b8] sm:$0xff] %v4350
  %4383 = vst [vmem:[#allocation3 + $0x300] sm:$0xff] %v4351
  %4384 = vst [vmem:[#allocation3 + $0x348] sm:$0xff] %v4352
  %4385 = vst [vmem:[#allocation3 + $0x390] sm:$0xff] %v4353
  %4386 = vst [vmem:[#allocation3 + $0x3d8] sm:$0xff] %v4354
  %4387 = vst [vmem:[#allocation3 + $0x420] sm:$0xff] %v4355
  %4388 = vst [vmem:[#allocation3 + $0x468] sm:$0xff] %v4356
  %v4389 = vld [vmem:[%s4244] sm:$0xf]
  %v4390 = vld [vmem:[%s4244 + $0x4] sm:$0xf]
  %v4391 = vld [vmem:[%s4244 + $0x8] sm:$0x1]
  %v4392 = vld [vmem:[%s4244 + $0xc] sm:$0xf]
  %v4393 = vld [vmem:[%s4244 + $0x10] sm:$0xf]
  %v4394 = vld [vmem:[%s4244 + $0x14] sm:$0x1]
  %v4395 = vld [vmem:[%s4244 + $0x18] sm:$0xf]
  %v4396 = vld [vmem:[%s4244 + $0x1c] sm:$0xf]
  %v4397 = vld [vmem:[%s4244 + $0x20] sm:$0x1]
  %v4398 = vld [vmem:[%s4244 + $0x24] sm:$0xf]
  %v4399 = vld [vmem:[%s4244 + $0x28] sm:$0xf]
  %v4400 = vld [vmem:[%s4244 + $0x2c] sm:$0x1]
  %v4401 = vld [vmem:[%s4244 + $0x30] sm:$0xf]
  %v4402 = vld [vmem:[%s4244 + $0x34] sm:$0xf]
  %v4403 = vld [vmem:[%s4244 + $0x38] sm:$0x1]
  %v4404 = vld [vmem:[%s4244 + $0x3c] sm:$0xf]
  %v4405 = vld [vmem:[%s4244 + $0x40] sm:$0xf]
  %v4406 = vld [vmem:[%s4244 + $0x44] sm:$0x1]
  %v4407 = vld [vmem:[%s4244 + $0x48] sm:$0xf]
  %v4408 = vld [vmem:[%s4244 + $0x4c] sm:$0xf]
  %v4409 = vld [vmem:[%s4244 + $0x50] sm:$0x1]
  %v4410 = vld [vmem:[%s4244 + $0x54] sm:$0xf]
  %v4411 = vld [vmem:[%s4244 + $0x58] sm:$0xf]
  %v4412 = vld [vmem:[%s4244 + $0x5c] sm:$0x1]
  %v4413 = vld [vmem:[%s4244 + $0x60] sm:$0xf]
  %v4414 = vld [vmem:[%s4244 + $0x64] sm:$0xf]
  %v4415 = vld [vmem:[%s4244 + $0x68] sm:$0x1]
  %v4416 = vld [vmem:[%s4244 + $0x6c] sm:$0xf]
  %v4417 = vld [vmem:[%s4244 + $0x70] sm:$0xf]
  %v4418 = vld [vmem:[%s4244 + $0x74] sm:$0x1]
  %v4419 = vld [vmem:[%s4244 + $0x78] sm:$0xf]
  %v4420 = vld [vmem:[%s4244 + $0x7c] sm:$0xf]
  %v4421 = vld [vmem:[%s4244 + $0x80] sm:$0x1]
  %v4422 = vld [vmem:[%s4244 + $0x84] sm:$0xf]
  %v4423 = vld [vmem:[%s4244 + $0x88] sm:$0xf]
  %v4424 = vld [vmem:[%s4244 + $0x8c] sm:$0x1]
  %v4425 = vld [vmem:[%s4244 + $0x90] sm:$0xf]
  %v4426 = vld [vmem:[%s4244 + $0x94] sm:$0xf]
  %v4427 = vld [vmem:[%s4244 + $0x98] sm:$0x1]
  %v4428 = vld [vmem:[%s4244 + $0x9c] sm:$0xf]
  %v4429 = vld [vmem:[%s4244 + $0xa0] sm:$0xf]
  %v4430 = vld [vmem:[%s4244 + $0xa4] sm:$0x1]
  %v4431 = vld [vmem:[%s4244 + $0xa8] sm:$0xf]
  %v4432 = vld [vmem:[%s4244 + $0xac] sm:$0xf]
  %v4433 = vld [vmem:[%s4244 + $0xb0] sm:$0x1]
  %v4434 = vld [vmem:[%s4244 + $0xb4] sm:$0xf]
  %v4435 = vld [vmem:[%s4244 + $0xb8] sm:$0xf]
  %v4436 = vld [vmem:[%s4244 + $0xbc] sm:$0x1]
  %v4438 = vshrl.u32 %v4389, 16
  %v4440 = vrot.slane %v4438, 4
  %v4441 = vshll.u32 %v4389, 16
  %v4443 = vrot.slane %v4441, 5
  %v4444 = vor.u32 %v4440, %v4443
  %v4445 = vrot.slane %v4444, 4
  %v4447 = vshll.u32 %v4390, 16
  %v4449 = vrot.slane %v4447, 5
  %v4450 = vsel %vm2544, %v4445, %v4449
  %v4451 = vshrl.u32 %v4390, 16
  %v4453 = vrot.slane %v4451, 4
  %v4454 = vor.u32 %v4453, %v4449
  %v4455 = vrot.slane %v4454, 4
  %v4457 = vshll.u32 %v4391, 16
  %v4459 = vrot.slane %v4457, 5
  %v4460 = vsel %vm2544, %v4455, %v4459
  %v4462 = vshrl.u32 %v4392, 16
  %v4464 = vrot.slane %v4462, 4
  %v4465 = vshll.u32 %v4392, 16
  %v4467 = vrot.slane %v4465, 5
  %v4468 = vor.u32 %v4464, %v4467
  %v4469 = vrot.slane %v4468, 4
  %v4471 = vshll.u32 %v4393, 16
  %v4473 = vrot.slane %v4471, 5
  %v4474 = vsel %vm2544, %v4469, %v4473
  %v4475 = vshrl.u32 %v4393, 16
  %v4477 = vrot.slane %v4475, 4
  %v4478 = vor.u32 %v4477, %v4473
  %v4479 = vrot.slane %v4478, 4
  %v4481 = vshll.u32 %v4394, 16
  %v4483 = vrot.slane %v4481, 5
  %v4484 = vsel %vm2544, %v4479, %v4483
  %v4486 = vshrl.u32 %v4395, 16
  %v4488 = vrot.slane %v4486, 4
  %v4489 = vshll.u32 %v4395, 16
  %v4491 = vrot.slane %v4489, 5
  %v4492 = vor.u32 %v4488, %v4491
  %v4493 = vrot.slane %v4492, 4
  %v4495 = vshll.u32 %v4396, 16
  %v4497 = vrot.slane %v4495, 5
  %v4498 = vsel %vm2544, %v4493, %v4497
  %v4499 = vshrl.u32 %v4396, 16
  %v4501 = vrot.slane %v4499, 4
  %v4502 = vor.u32 %v4501, %v4497
  %v4503 = vrot.slane %v4502, 4
  %v4505 = vshll.u32 %v4397, 16
  %v4507 = vrot.slane %v4505, 5
  %v4508 = vsel %vm2544, %v4503, %v4507
  %v4510 = vshrl.u32 %v4398, 16
  %v4512 = vrot.slane %v4510, 4
  %v4513 = vshll.u32 %v4398, 16
  %v4515 = vrot.slane %v4513, 5
  %v4516 = vor.u32 %v4512, %v4515
  %v4517 = vrot.slane %v4516, 4
  %v4519 = vshll.u32 %v4399, 16
  %v4521 = vrot.slane %v4519, 5
  %v4522 = vsel %vm2544, %v4517, %v4521
  %v4523 = vshrl.u32 %v4399, 16
  %v4525 = vrot.slane %v4523, 4
  %v4526 = vor.u32 %v4525, %v4521
  %v4527 = vrot.slane %v4526, 4
  %v4529 = vshll.u32 %v4400, 16
  %v4531 = vrot.slane %v4529, 5
  %v4532 = vsel %vm2544, %v4527, %v4531
  %v4534 = vshrl.u32 %v4401, 16
  %v4536 = vrot.slane %v4534, 4
  %v4537 = vshll.u32 %v4401, 16
  %v4539 = vrot.slane %v4537, 5
  %v4540 = vor.u32 %v4536, %v4539
  %v4541 = vrot.slane %v4540, 4
  %v4543 = vshll.u32 %v4402, 16
  %v4545 = vrot.slane %v4543, 5
  %v4546 = vsel %vm2544, %v4541, %v4545
  %v4547 = vshrl.u32 %v4402, 16
  %v4549 = vrot.slane %v4547, 4
  %v4550 = vor.u32 %v4549, %v4545
  %v4551 = vrot.slane %v4550, 4
  %v4553 = vshll.u32 %v4403, 16
  %v4555 = vrot.slane %v4553, 5
  %v4556 = vsel %vm2544, %v4551, %v4555
  %v4558 = vshrl.u32 %v4404, 16
  %v4560 = vrot.slane %v4558, 4
  %v4561 = vshll.u32 %v4404, 16
  %v4563 = vrot.slane %v4561, 5
  %v4564 = vor.u32 %v4560, %v4563
  %v4565 = vrot.slane %v4564, 4
  %v4567 = vshll.u32 %v4405, 16
  %v4569 = vrot.slane %v4567, 5
  %v4570 = vsel %vm2544, %v4565, %v4569
  %v4571 = vshrl.u32 %v4405, 16
  %v4573 = vrot.slane %v4571, 4
  %v4574 = vor.u32 %v4573, %v4569
  %v4575 = vrot.slane %v4574, 4
  %v4577 = vshll.u32 %v4406, 16
  %v4579 = vrot.slane %v4577, 5
  %v4580 = vsel %vm2544, %v4575, %v4579
  %v4582 = vshrl.u32 %v4407, 16
  %v4584 = vrot.slane %v4582, 4
  %v4585 = vshll.u32 %v4407, 16
  %v4587 = vrot.slane %v4585, 5
  %v4588 = vor.u32 %v4584, %v4587
  %v4589 = vrot.slane %v4588, 4
  %v4591 = vshll.u32 %v4408, 16
  %v4593 = vrot.slane %v4591, 5
  %v4594 = vsel %vm2544, %v4589, %v4593
  %v4595 = vshrl.u32 %v4408, 16
  %v4597 = vrot.slane %v4595, 4
  %v4598 = vor.u32 %v4597, %v4593
  %v4599 = vrot.slane %v4598, 4
  %v4601 = vshll.u32 %v4409, 16
  %v4603 = vrot.slane %v4601, 5
  %v4604 = vsel %vm2544, %v4599, %v4603
  %v4606 = vshrl.u32 %v4410, 16
  %v4608 = vrot.slane %v4606, 4
  %v4609 = vshll.u32 %v4410, 16
  %v4611 = vrot.slane %v4609, 5
  %v4612 = vor.u32 %v4608, %v4611
  %v4613 = vrot.slane %v4612, 4
  %v4615 = vshll.u32 %v4411, 16
  %v4617 = vrot.slane %v4615, 5
  %v4618 = vsel %vm2544, %v4613, %v4617
  %v4619 = vshrl.u32 %v4411, 16
  %v4621 = vrot.slane %v4619, 4
  %v4622 = vor.u32 %v4621, %v4617
  %v4623 = vrot.slane %v4622, 4
  %v4625 = vshll.u32 %v4412, 16
  %v4627 = vrot.slane %v4625, 5
  %v4628 = vsel %vm2544, %v4623, %v4627
  %v4630 = vshrl.u32 %v4413, 16
  %v4632 = vrot.slane %v4630, 4
  %v4633 = vshll.u32 %v4413, 16
  %v4635 = vrot.slane %v4633, 5
  %v4636 = vor.u32 %v4632, %v4635
  %v4637 = vrot.slane %v4636, 4
  %v4639 = vshll.u32 %v4414, 16
  %v4641 = vrot.slane %v4639, 5
  %v4642 = vsel %vm2544, %v4637, %v4641
  %v4643 = vshrl.u32 %v4414, 16
  %v4645 = vrot.slane %v4643, 4
  %v4646 = vor.u32 %v4645, %v4641
  %v4647 = vrot.slane %v4646, 4
  %v4649 = vshll.u32 %v4415, 16
  %v4651 = vrot.slane %v4649, 5
  %v4652 = vsel %vm2544, %v4647, %v4651
  %v4654 = vshrl.u32 %v4416, 16
  %v4656 = vrot.slane %v4654, 4
  %v4657 = vshll.u32 %v4416, 16
  %v4659 = vrot.slane %v4657, 5
  %v4660 = vor.u32 %v4656, %v4659
  %v4661 = vrot.slane %v4660, 4
  %v4663 = vshll.u32 %v4417, 16
  %v4665 = vrot.slane %v4663, 5
  %v4666 = vsel %vm2544, %v4661, %v4665
  %v4667 = vshrl.u32 %v4417, 16
  %v4669 = vrot.slane %v4667, 4
  %v4670 = vor.u32 %v4669, %v4665
  %v4671 = vrot.slane %v4670, 4
  %v4673 = vshll.u32 %v4418, 16
  %v4675 = vrot.slane %v4673, 5
  %v4676 = vsel %vm2544, %v4671, %v4675
  %v4678 = vshrl.u32 %v4419, 16
  %v4680 = vrot.slane %v4678, 4
  %v4681 = vshll.u32 %v4419, 16
  %v4683 = vrot.slane %v4681, 5
  %v4684 = vor.u32 %v4680, %v4683
  %v4685 = vrot.slane %v4684, 4
  %v4687 = vshll.u32 %v4420, 16
  %v4689 = vrot.slane %v4687, 5
  %v4690 = vsel %vm2544, %v4685, %v4689
  %v4691 = vshrl.u32 %v4420, 16
  %v4693 = vrot.slane %v4691, 4
  %v4694 = vor.u32 %v4693, %v4689
  %v4695 = vrot.slane %v4694, 4
  %v4697 = vshll.u32 %v4421, 16
  %v4699 = vrot.slane %v4697, 5
  %v4700 = vsel %vm2544, %v4695, %v4699
  %v4702 = vshrl.u32 %v4422, 16
  %v4704 = vrot.slane %v4702, 4
  %v4705 = vshll.u32 %v4422, 16
  %v4707 = vrot.slane %v4705, 5
  %v4708 = vor.u32 %v4704, %v4707
  %v4709 = vrot.slane %v4708, 4
  %v4711 = vshll.u32 %v4423, 16
  %v4713 = vrot.slane %v4711, 5
  %v4714 = vsel %vm2544, %v4709, %v4713
  %v4715 = vshrl.u32 %v4423, 16
  %v4717 = vrot.slane %v4715, 4
  %v4718 = vor.u32 %v4717, %v4713
  %v4719 = vrot.slane %v4718, 4
  %v4721 = vshll.u32 %v4424, 16
  %v4723 = vrot.slane %v4721, 5
  %v4724 = vsel %vm2544, %v4719, %v4723
  %v4726 = vshrl.u32 %v4425, 16
  %v4728 = vrot.slane %v4726, 4
  %v4729 = vshll.u32 %v4425, 16
  %v4731 = vrot.slane %v4729, 5
  %v4732 = vor.u32 %v4728, %v4731
  %v4733 = vrot.slane %v4732, 4
  %v4735 = vshll.u32 %v4426, 16
  %v4737 = vrot.slane %v4735, 5
  %v4738 = vsel %vm2544, %v4733, %v4737
  %v4739 = vshrl.u32 %v4426, 16
  %v4741 = vrot.slane %v4739, 4
  %v4742 = vor.u32 %v4741, %v4737
  %v4743 = vrot.slane %v4742, 4
  %v4745 = vshll.u32 %v4427, 16
  %v4747 = vrot.slane %v4745, 5
  %v4748 = vsel %vm2544, %v4743, %v4747
  %v4750 = vshrl.u32 %v4428, 16
  %v4752 = vrot.slane %v4750, 4
  %v4753 = vshll.u32 %v4428, 16
  %v4755 = vrot.slane %v4753, 5
  %v4756 = vor.u32 %v4752, %v4755
  %v4757 = vrot.slane %v4756, 4
  %v4759 = vshll.u32 %v4429, 16
  %v4761 = vrot.slane %v4759, 5
  %v4762 = vsel %vm2544, %v4757, %v4761
  %v4763 = vshrl.u32 %v4429, 16
  %v4765 = vrot.slane %v4763, 4
  %v4766 = vor.u32 %v4765, %v4761
  %v4767 = vrot.slane %v4766, 4
  %v4769 = vshll.u32 %v4430, 16
  %v4771 = vrot.slane %v4769, 5
  %v4772 = vsel %vm2544, %v4767, %v4771
  %v4774 = vshrl.u32 %v4431, 16
  %v4776 = vrot.slane %v4774, 4
  %v4777 = vshll.u32 %v4431, 16
  %v4779 = vrot.slane %v4777, 5
  %v4780 = vor.u32 %v4776, %v4779
  %v4781 = vrot.slane %v4780, 4
  %v4783 = vshll.u32 %v4432, 16
  %v4785 = vrot.slane %v4783, 5
  %v4786 = vsel %vm2544, %v4781, %v4785
  %v4787 = vshrl.u32 %v4432, 16
  %v4789 = vrot.slane %v4787, 4
  %v4790 = vor.u32 %v4789, %v4785
  %v4791 = vrot.slane %v4790, 4
  %v4793 = vshll.u32 %v4433, 16
  %v4795 = vrot.slane %v4793, 5
  %v4796 = vsel %vm2544, %v4791, %v4795
  %v4798 = vshrl.u32 %v4434, 16
  %v4800 = vrot.slane %v4798, 4
  %v4801 = vshll.u32 %v4434, 16
  %v4803 = vrot.slane %v4801, 5
  %v4804 = vor.u32 %v4800, %v4803
  %v4805 = vrot.slane %v4804, 4
  %v4807 = vshll.u32 %v4435, 16
  %v4809 = vrot.slane %v4807, 5
  %v4810 = vsel %vm2544, %v4805, %v4809
  %v4811 = vshrl.u32 %v4435, 16
  %v4813 = vrot.slane %v4811, 4
  %v4814 = vor.u32 %v4813, %v4809
  %v4815 = vrot.slane %v4814, 4
  %v4817 = vshll.u32 %v4436, 16
  %v4819 = vrot.slane %v4817, 5
  %v4820 = vsel %vm2544, %v4815, %v4819
  %v4821 = vunpack.c.l.b16 %v4450
  %v4822 = vunpack.c.l.b16 %v4460
  %v4823 = vunpack.c.l.b16 %v4474
  %v4824 = vunpack.c.l.b16 %v4484
  %v4825 = vunpack.c.l.b16 %v4498
  %v4826 = vunpack.c.l.b16 %v4508
  %v4827 = vunpack.c.l.b16 %v4522
  %v4828 = vunpack.c.l.b16 %v4532
  %v4829 = vunpack.c.l.b16 %v4546
  %v4830 = vunpack.c.l.b16 %v4556
  %v4831 = vunpack.c.l.b16 %v4570
  %v4832 = vunpack.c.l.b16 %v4580
  %v4833 = vunpack.c.l.b16 %v4594
  %v4834 = vunpack.c.l.b16 %v4604
  %v4835 = vunpack.c.l.b16 %v4618
  %v4836 = vunpack.c.l.b16 %v4628
  %v4837 = vunpack.c.l.b16 %v4642
  %v4838 = vunpack.c.l.b16 %v4652
  %v4839 = vunpack.c.l.b16 %v4666
  %v4840 = vunpack.c.l.b16 %v4676
  %v4841 = vunpack.c.l.b16 %v4690
  %v4842 = vunpack.c.l.b16 %v4700
  %v4843 = vunpack.c.l.b16 %v4714
  %v4844 = vunpack.c.l.b16 %v4724
  %v4845 = vunpack.c.l.b16 %v4738
  %v4846 = vunpack.c.l.b16 %v4748
  %v4847 = vunpack.c.l.b16 %v4762
  %v4848 = vunpack.c.l.b16 %v4772
  %v4849 = vunpack.c.l.b16 %v4786
  %v4850 = vunpack.c.l.b16 %v4796
  %v4851 = vunpack.c.l.b16 %v4810
  %v4852 = vunpack.c.l.b16 %v4820
  %v4853 = vpack.c.b16 %v4822, %v4821
  %v4854 = vpack.c.b16 %v4824, %v4823
  %v4855 = vpack.c.b16 %v4826, %v4825
  %v4856 = vpack.c.b16 %v4828, %v4827
  %v4857 = vpack.c.b16 %v4830, %v4829
  %v4858 = vpack.c.b16 %v4832, %v4831
  %v4859 = vpack.c.b16 %v4834, %v4833
  %v4860 = vpack.c.b16 %v4836, %v4835
  %v4861 = vpack.c.b16 %v4838, %v4837
  %v4862 = vpack.c.b16 %v4840, %v4839
  %v4863 = vpack.c.b16 %v4842, %v4841
  %v4864 = vpack.c.b16 %v4844, %v4843
  %v4865 = vpack.c.b16 %v4846, %v4845
  %v4866 = vpack.c.b16 %v4848, %v4847
  %v4867 = vpack.c.b16 %v4850, %v4849
  %v4868 = vpack.c.b16 %v4852, %v4851
  %4885 = vst [vmem:[#allocation3 + $0x38] sm:$0xff] %v4853
  %4886 = vst [vmem:[#allocation3 + $0x80] sm:$0xff] %v4854
  %4887 = vst [vmem:[#allocation3 + $0xc8] sm:$0xff] %v4855
  %4888 = vst [vmem:[#allocation3 + $0x110] sm:$0xff] %v4856
  %4889 = vst [vmem:[#allocation3 + $0x158] sm:$0xff] %v4857
  %4890 = vst [vmem:[#allocation3 + $0x1a0] sm:$0xff] %v4858
  %4891 = vst [vmem:[#allocation3 + $0x1e8] sm:$0xff] %v4859
  %4892 = vst [vmem:[#allocation3 + $0x230] sm:$0xff] %v4860
  %4893 = vst [vmem:[#allocation3 + $0x278] sm:$0xff] %v4861
  %4894 = vst [vmem:[#allocation3 + $0x2c0] sm:$0xff] %v4862
  %4895 = vst [vmem:[#allocation3 + $0x308] sm:$0xff] %v4863
  %4896 = vst [vmem:[#allocation3 + $0x350] sm:$0xff] %v4864
  %4897 = vst [vmem:[#allocation3 + $0x398] sm:$0xff] %v4865
  %4898 = vst [vmem:[#allocation3 + $0x3e0] sm:$0xff] %v4866
  %4899 = vst [vmem:[#allocation3 + $0x428] sm:$0xff] %v4867
  %4900 = vst [vmem:[#allocation3 + $0x470] sm:$0xff] %v4868
  %v4901 = vld [vmem:[%s4244] sm:$0xe]
  %v4902 = vld [vmem:[%s4244 + $0x4] sm:$0xf]
  %v4903 = vld [vmem:[%s4244 + $0x8] sm:$0x1]
  %v4904 = vld [vmem:[%s4244 + $0xc] sm:$0xe]
  %v4905 = vld [vmem:[%s4244 + $0x10] sm:$0xf]
  %v4906 = vld [vmem:[%s4244 + $0x14] sm:$0x1]
  %v4907 = vld [vmem:[%s4244 + $0x18] sm:$0xe]
  %v4908 = vld [vmem:[%s4244 + $0x1c] sm:$0xf]
  %v4909 = vld [vmem:[%s4244 + $0x20] sm:$0x1]
  %v4910 = vld [vmem:[%s4244 + $0x24] sm:$0xe]
  %v4911 = vld [vmem:[%s4244 + $0x28] sm:$0xf]
  %v4912 = vld [vmem:[%s4244 + $0x2c] sm:$0x1]
  %v4913 = vld [vmem:[%s4244 + $0x30] sm:$0xe]
  %v4914 = vld [vmem:[%s4244 + $0x34] sm:$0xf]
  %v4915 = vld [vmem:[%s4244 + $0x38] sm:$0x1]
  %v4916 = vld [vmem:[%s4244 + $0x3c] sm:$0xe]
  %v4917 = vld [vmem:[%s4244 + $0x40] sm:$0xf]
  %v4918 = vld [vmem:[%s4244 + $0x44] sm:$0x1]
  %v4919 = vld [vmem:[%s4244 + $0x48] sm:$0xe]
  %v4920 = vld [vmem:[%s4244 + $0x4c] sm:$0xf]
  %v4921 = vld [vmem:[%s4244 + $0x50] sm:$0x1]
  %v4922 = vld [vmem:[%s4244 + $0x54] sm:$0xe]
  %v4923 = vld [vmem:[%s4244 + $0x58] sm:$0xf]
  %v4924 = vld [vmem:[%s4244 + $0x5c] sm:$0x1]
  %v4925 = vld [vmem:[%s4244 + $0x60] sm:$0xe]
  %v4926 = vld [vmem:[%s4244 + $0x64] sm:$0xf]
  %v4927 = vld [vmem:[%s4244 + $0x68] sm:$0x1]
  %v4928 = vld [vmem:[%s4244 + $0x6c] sm:$0xe]
  %v4929 = vld [vmem:[%s4244 + $0x70] sm:$0xf]
  %v4930 = vld [vmem:[%s4244 + $0x74] sm:$0x1]
  %v4931 = vld [vmem:[%s4244 + $0x78] sm:$0xe]
  %v4932 = vld [vmem:[%s4244 + $0x7c] sm:$0xf]
  %v4933 = vld [vmem:[%s4244 + $0x80] sm:$0x1]
  %v4934 = vld [vmem:[%s4244 + $0x84] sm:$0xe]
  %v4935 = vld [vmem:[%s4244 + $0x88] sm:$0xf]
  %v4936 = vld [vmem:[%s4244 + $0x8c] sm:$0x1]
  %v4937 = vld [vmem:[%s4244 + $0x90] sm:$0xe]
  %v4938 = vld [vmem:[%s4244 + $0x94] sm:$0xf]
  %v4939 = vld [vmem:[%s4244 + $0x98] sm:$0x1]
  %v4940 = vld [vmem:[%s4244 + $0x9c] sm:$0xe]
  %v4941 = vld [vmem:[%s4244 + $0xa0] sm:$0xf]
  %v4942 = vld [vmem:[%s4244 + $0xa4] sm:$0x1]
  %v4943 = vld [vmem:[%s4244 + $0xa8] sm:$0xe]
  %v4944 = vld [vmem:[%s4244 + $0xac] sm:$0xf]
  %v4945 = vld [vmem:[%s4244 + $0xb0] sm:$0x1]
  %v4946 = vld [vmem:[%s4244 + $0xb4] sm:$0xe]
  %v4947 = vld [vmem:[%s4244 + $0xb8] sm:$0xf]
  %v4948 = vld [vmem:[%s4244 + $0xbc] sm:$0x1]
  %v4997 = vrot.slane %v4901, 5
  %v4998 = vrot.slane %v4997, 4
  %v4999 = vrot.slane %v4902, 5
  %v5000 = vsel %vm3107, %v4998, %v4999
  %v5001 = vrot.slane %v4999, 4
  %v5002 = vrot.slane %v4903, 5
  %v5003 = vsel %vm3107, %v5001, %v5002
  %v5004 = vrot.slane %v4904, 5
  %v5005 = vrot.slane %v5004, 4
  %v5006 = vrot.slane %v4905, 5
  %v5007 = vsel %vm3107, %v5005, %v5006
  %v5008 = vrot.slane %v5006, 4
  %v5009 = vrot.slane %v4906, 5
  %v5010 = vsel %vm3107, %v5008, %v5009
  %v5011 = vrot.slane %v4907, 5
  %v5012 = vrot.slane %v5011, 4
  %v5013 = vrot.slane %v4908, 5
  %v5014 = vsel %vm3107, %v5012, %v5013
  %v5015 = vrot.slane %v5013, 4
  %v5016 = vrot.slane %v4909, 5
  %v5017 = vsel %vm3107, %v5015, %v5016
  %v5018 = vrot.slane %v4910, 5
  %v5019 = vrot.slane %v5018, 4
  %v5020 = vrot.slane %v4911, 5
  %v5021 = vsel %vm3107, %v5019, %v5020
  %v5022 = vrot.slane %v5020, 4
  %v5023 = vrot.slane %v4912, 5
  %v5024 = vsel %vm3107, %v5022, %v5023
  %v5025 = vrot.slane %v4913, 5
  %v5026 = vrot.slane %v5025, 4
  %v5027 = vrot.slane %v4914, 5
  %v5028 = vsel %vm3107, %v5026, %v5027
  %v5029 = vrot.slane %v5027, 4
  %v5030 = vrot.slane %v4915, 5
  %v5031 = vsel %vm3107, %v5029, %v5030
  %v5032 = vrot.slane %v4916, 5
  %v5033 = vrot.slane %v5032, 4
  %v5034 = vrot.slane %v4917, 5
  %v5035 = vsel %vm3107, %v5033, %v5034
  %v5036 = vrot.slane %v5034, 4
  %v5037 = vrot.slane %v4918, 5
  %v5038 = vsel %vm3107, %v5036, %v5037
  %v5039 = vrot.slane %v4919, 5
  %v5040 = vrot.slane %v5039, 4
  %v5041 = vrot.slane %v4920, 5
  %v5042 = vsel %vm3107, %v5040, %v5041
  %v5043 = vrot.slane %v5041, 4
  %v5044 = vrot.slane %v4921, 5
  %v5045 = vsel %vm3107, %v5043, %v5044
  %v5046 = vrot.slane %v4922, 5
  %v5047 = vrot.slane %v5046, 4
  %v5048 = vrot.slane %v4923, 5
  %v5049 = vsel %vm3107, %v5047, %v5048
  %v5050 = vrot.slane %v5048, 4
  %v5051 = vrot.slane %v4924, 5
  %v5052 = vsel %vm3107, %v5050, %v5051
  %v5053 = vrot.slane %v4925, 5
  %v5054 = vrot.slane %v5053, 4
  %v5055 = vrot.slane %v4926, 5
  %v5056 = vsel %vm3107, %v5054, %v5055
  %v5057 = vrot.slane %v5055, 4
  %v5058 = vrot.slane %v4927, 5
  %v5059 = vsel %vm3107, %v5057, %v5058
  %v5060 = vrot.slane %v4928, 5
  %v5061 = vrot.slane %v5060, 4
  %v5062 = vrot.slane %v4929, 5
  %v5063 = vsel %vm3107, %v5061, %v5062
  %v5064 = vrot.slane %v5062, 4
  %v5065 = vrot.slane %v4930, 5
  %v5066 = vsel %vm3107, %v5064, %v5065
  %v5067 = vrot.slane %v4931, 5
  %v5068 = vrot.slane %v5067, 4
  %v5069 = vrot.slane %v4932, 5
  %v5070 = vsel %vm3107, %v5068, %v5069
  %v5071 = vrot.slane %v5069, 4
  %v5072 = vrot.slane %v4933, 5
  %v5073 = vsel %vm3107, %v5071, %v5072
  %v5074 = vrot.slane %v4934, 5
  %v5075 = vrot.slane %v5074, 4
  %v5076 = vrot.slane %v4935, 5
  %v5077 = vsel %vm3107, %v5075, %v5076
  %v5078 = vrot.slane %v5076, 4
  %v5079 = vrot.slane %v4936, 5
  %v5080 = vsel %vm3107, %v5078, %v5079
  %v5081 = vrot.slane %v4937, 5
  %v5082 = vrot.slane %v5081, 4
  %v5083 = vrot.slane %v4938, 5
  %v5084 = vsel %vm3107, %v5082, %v5083
  %v5085 = vrot.slane %v5083, 4
  %v5086 = vrot.slane %v4939, 5
  %v5087 = vsel %vm3107, %v5085, %v5086
  %v5088 = vrot.slane %v4940, 5
  %v5089 = vrot.slane %v5088, 4
  %v5090 = vrot.slane %v4941, 5
  %v5091 = vsel %vm3107, %v5089, %v5090
  %v5092 = vrot.slane %v5090, 4
  %v5093 = vrot.slane %v4942, 5
  %v5094 = vsel %vm3107, %v5092, %v5093
  %v5095 = vrot.slane %v4943, 5
  %v5096 = vrot.slane %v5095, 4
  %v5097 = vrot.slane %v4944, 5
  %v5098 = vsel %vm3107, %v5096, %v5097
  %v5099 = vrot.slane %v5097, 4
  %v5100 = vrot.slane %v4945, 5
  %v5101 = vsel %vm3107, %v5099, %v5100
  %v5102 = vrot.slane %v4946, 5
  %v5103 = vrot.slane %v5102, 4
  %v5104 = vrot.slane %v4947, 5
  %v5105 = vsel %vm3107, %v5103, %v5104
  %v5106 = vrot.slane %v5104, 4
  %v5107 = vrot.slane %v4948, 5
  %v5108 = vsel %vm3107, %v5106, %v5107
  %v5109 = vunpack.c.l.b16 %v5000
  %v5110 = vunpack.c.l.b16 %v5003
  %v5111 = vunpack.c.l.b16 %v5007
  %v5112 = vunpack.c.l.b16 %v5010
  %v5113 = vunpack.c.l.b16 %v5014
  %v5114 = vunpack.c.l.b16 %v5017
  %v5115 = vunpack.c.l.b16 %v5021
  %v5116 = vunpack.c.l.b16 %v5024
  %v5117 = vunpack.c.l.b16 %v5028
  %v5118 = vunpack.c.l.b16 %v5031
  %v5119 = vunpack.c.l.b16 %v5035
  %v5120 = vunpack.c.l.b16 %v5038
  %v5121 = vunpack.c.l.b16 %v5042
  %v5122 = vunpack.c.l.b16 %v5045
  %v5123 = vunpack.c.l.b16 %v5049
  %v5124 = vunpack.c.l.b16 %v5052
  %v5125 = vunpack.c.l.b16 %v5056
  %v5126 = vunpack.c.l.b16 %v5059
  %v5127 = vunpack.c.l.b16 %v5063
  %v5128 = vunpack.c.l.b16 %v5066
  %v5129 = vunpack.c.l.b16 %v5070
  %v5130 = vunpack.c.l.b16 %v5073
  %v5131 = vunpack.c.l.b16 %v5077
  %v5132 = vunpack.c.l.b16 %v5080
  %v5133 = vunpack.c.l.b16 %v5084
  %v5134 = vunpack.c.l.b16 %v5087
  %v5135 = vunpack.c.l.b16 %v5091
  %v5136 = vunpack.c.l.b16 %v5094
  %v5137 = vunpack.c.l.b16 %v5098
  %v5138 = vunpack.c.l.b16 %v5101
  %v5139 = vunpack.c.l.b16 %v5105
  %v5140 = vunpack.c.l.b16 %v5108
  %v5141 = vpack.c.b16 %v5110, %v5109
  %v5142 = vpack.c.b16 %v5112, %v5111
  %v5143 = vpack.c.b16 %v5114, %v5113
  %v5144 = vpack.c.b16 %v5116, %v5115
  %v5145 = vpack.c.b16 %v5118, %v5117
  %v5146 = vpack.c.b16 %v5120, %v5119
  %v5147 = vpack.c.b16 %v5122, %v5121
  %v5148 = vpack.c.b16 %v5124, %v5123
  %v5149 = vpack.c.b16 %v5126, %v5125
  %v5150 = vpack.c.b16 %v5128, %v5127
  %v5151 = vpack.c.b16 %v5130, %v5129
  %v5152 = vpack.c.b16 %v5132, %v5131
  %v5153 = vpack.c.b16 %v5134, %v5133
  %v5154 = vpack.c.b16 %v5136, %v5135
  %v5155 = vpack.c.b16 %v5138, %v5137
  %v5156 = vpack.c.b16 %v5140, %v5139
  %5173 = vst [vmem:[#allocation3 + $0x40] sm:$0xff] %v5141
  %5174 = vst [vmem:[#allocation3 + $0x88] sm:$0xff] %v5142
  %5175 = vst [vmem:[#allocation3 + $0xd0] sm:$0xff] %v5143
  %5176 = vst [vmem:[#allocation3 + $0x118] sm:$0xff] %v5144
  %5177 = vst [vmem:[#allocation3 + $0x160] sm:$0xff] %v5145
  %5178 = vst [vmem:[#allocation3 + $0x1a8] sm:$0xff] %v5146
  %5179 = vst [vmem:[#allocation3 + $0x1f0] sm:$0xff] %v5147
  %5180 = vst [vmem:[#allocation3 + $0x238] sm:$0xff] %v5148
  %5181 = vst [vmem:[#allocation3 + $0x280] sm:$0xff] %v5149
  %5182 = vst [vmem:[#allocation3 + $0x2c8] sm:$0xff] %v5150
  %5183 = vst [vmem:[#allocation3 + $0x310] sm:$0xff] %v5151
  %5184 = vst [vmem:[#allocation3 + $0x358] sm:$0xff] %v5152
  %5185 = vst [vmem:[#allocation3 + $0x3a0] sm:$0xff] %v5153
  %5186 = vst [vmem:[#allocation3 + $0x3e8] sm:$0xff] %v5154
  %5187 = vst [vmem:[#allocation3 + $0x430] sm:$0xff] %v5155
  %5188 = vst [vmem:[#allocation3 + $0x478] sm:$0xff] %v5156
  %v5189 = vld [vmem:[%s1721] sm:$0xf]
  %v5190 = vld [vmem:[%s1721 + $0x4] sm:$0xf]
  %v5191 = vld [vmem:[%s1721 + $0xc] sm:$0xf]
  %v5192 = vld [vmem:[%s1721 + $0x10] sm:$0xf]
  %v5193 = vld [vmem:[%s1721 + $0x18] sm:$0xf]
  %v5194 = vld [vmem:[%s1721 + $0x1c] sm:$0xf]
  %v5195 = vld [vmem:[%s1721 + $0x24] sm:$0xf]
  %v5196 = vld [vmem:[%s1721 + $0x28] sm:$0xf]
  %v5197 = vld [vmem:[%s1721 + $0x30] sm:$0xf]
  %v5198 = vld [vmem:[%s1721 + $0x34] sm:$0xf]
  %v5199 = vld [vmem:[%s1721 + $0x3c] sm:$0xf]
  %v5200 = vld [vmem:[%s1721 + $0x40] sm:$0xf]
  %v5201 = vld [vmem:[%s1721 + $0x48] sm:$0xf]
  %v5202 = vld [vmem:[%s1721 + $0x4c] sm:$0xf]
  %v5203 = vld [vmem:[%s1721 + $0x54] sm:$0xf]
  %v5204 = vld [vmem:[%s1721 + $0x58] sm:$0xf]
  %v5205 = vld [vmem:[%s1721 + $0x60] sm:$0xf]
  %v5206 = vld [vmem:[%s1721 + $0x64] sm:$0xf]
  %v5207 = vld [vmem:[%s1721 + $0x6c] sm:$0xf]
  %v5208 = vld [vmem:[%s1721 + $0x70] sm:$0xf]
  %v5209 = vld [vmem:[%s1721 + $0x78] sm:$0xf]
  %v5210 = vld [vmem:[%s1721 + $0x7c] sm:$0xf]
  %v5211 = vld [vmem:[%s1721 + $0x84] sm:$0xf]
  %v5212 = vld [vmem:[%s1721 + $0x88] sm:$0xf]
  %v5213 = vld [vmem:[%s1721 + $0x90] sm:$0xf]
  %v5214 = vld [vmem:[%s1721 + $0x94] sm:$0xf]
  %v5215 = vld [vmem:[%s1721 + $0x9c] sm:$0xf]
  %v5216 = vld [vmem:[%s1721 + $0xa0] sm:$0xf]
  %v5217 = vld [vmem:[%s1721 + $0xa8] sm:$0xf]
  %v5218 = vld [vmem:[%s1721 + $0xac] sm:$0xf]
  %v5219 = vld [vmem:[%s1721 + $0xb4] sm:$0xf]
  %v5220 = vld [vmem:[%s1721 + $0xb8] sm:$0xf]
  %v5253 = vunpack.c.l.b16 %v5189
  %v5254 = vunpack.c.l.b16 %v5190
  %v5255 = vunpack.c.l.b16 %v5191
  %v5256 = vunpack.c.l.b16 %v5192
  %v5257 = vunpack.c.l.b16 %v5193
  %v5258 = vunpack.c.l.b16 %v5194
  %v5259 = vunpack.c.l.b16 %v5195
  %v5260 = vunpack.c.l.b16 %v5196
  %v5261 = vunpack.c.l.b16 %v5197
  %v5262 = vunpack.c.l.b16 %v5198
  %v5263 = vunpack.c.l.b16 %v5199
  %v5264 = vunpack.c.l.b16 %v5200
  %v5265 = vunpack.c.l.b16 %v5201
  %v5266 = vunpack.c.l.b16 %v5202
  %v5267 = vunpack.c.l.b16 %v5203
  %v5268 = vunpack.c.l.b16 %v5204
  %v5269 = vunpack.c.l.b16 %v5205
  %v5270 = vunpack.c.l.b16 %v5206
  %v5271 = vunpack.c.l.b16 %v5207
  %v5272 = vunpack.c.l.b16 %v5208
  %v5273 = vunpack.c.l.b16 %v5209
  %v5274 = vunpack.c.l.b16 %v5210
  %v5275 = vunpack.c.l.b16 %v5211
  %v5276 = vunpack.c.l.b16 %v5212
  %v5277 = vunpack.c.l.b16 %v5213
  %v5278 = vunpack.c.l.b16 %v5214
  %v5279 = vunpack.c.l.b16 %v5215
  %v5280 = vunpack.c.l.b16 %v5216
  %v5281 = vunpack.c.l.b16 %v5217
  %v5282 = vunpack.c.l.b16 %v5218
  %v5283 = vunpack.c.l.b16 %v5219
  %v5284 = vunpack.c.l.b16 %v5220
  %v5285 = vpack.c.b16 %v5254, %v5253
  %v5286 = vpack.c.b16 %v5256, %v5255
  %v5287 = vpack.c.b16 %v5258, %v5257
  %v5288 = vpack.c.b16 %v5260, %v5259
  %v5289 = vpack.c.b16 %v5262, %v5261
  %v5290 = vpack.c.b16 %v5264, %v5263
  %v5291 = vpack.c.b16 %v5266, %v5265
  %v5292 = vpack.c.b16 %v5268, %v5267
  %v5293 = vpack.c.b16 %v5270, %v5269
  %v5294 = vpack.c.b16 %v5272, %v5271
  %v5295 = vpack.c.b16 %v5274, %v5273
  %v5296 = vpack.c.b16 %v5276, %v5275
  %v5297 = vpack.c.b16 %v5278, %v5277
  %v5298 = vpack.c.b16 %v5280, %v5279
  %v5299 = vpack.c.b16 %v5282, %v5281
  %v5300 = vpack.c.b16 %v5284, %v5283
  %5317 = vst [vmem:[#allocation3 + $0x480] sm:$0xff] %v5285
  %5318 = vst [vmem:[#allocation3 + $0x4c8] sm:$0xff] %v5286
  %5319 = vst [vmem:[#allocation3 + $0x510] sm:$0xff] %v5287
  %5320 = vst [vmem:[#allocation3 + $0x558] sm:$0xff] %v5288
  %5321 = vst [vmem:[#allocation3 + $0x5a0] sm:$0xff] %v5289
  %5322 = vst [vmem:[#allocation3 + $0x5e8] sm:$0xff] %v5290
  %5323 = vst [vmem:[#allocation3 + $0x630] sm:$0xff] %v5291
  %5324 = vst [vmem:[#allocation3 + $0x678] sm:$0xff] %v5292
  %5325 = vst [vmem:[#allocation3 + $0x6c0] sm:$0xff] %v5293
  %5326 = vst [vmem:[#allocation3 + $0x708] sm:$0xff] %v5294
  %5327 = vst [vmem:[#allocation3 + $0x750] sm:$0xff] %v5295
  %5328 = vst [vmem:[#allocation3 + $0x798] sm:$0xff] %v5296
  %5329 = vst [vmem:[#allocation3 + $0x7e0] sm:$0xff] %v5297
  %5330 = vst [vmem:[#allocation3 + $0x828] sm:$0xff] %v5298
  %5331 = vst [vmem:[#allocation3 + $0x870] sm:$0xff] %v5299
  %5332 = vst [vmem:[#allocation3 + $0x8b8] sm:$0xff] %v5300
  %v5333 = vld [vmem:[%s1721] sm:$0xf]
  %v5334 = vld [vmem:[%s1721 + $0x4] sm:$0xf]
  %v5335 = vld [vmem:[%s1721 + $0x8] sm:$0x1]
  %v5336 = vld [vmem:[%s1721 + $0xc] sm:$0xf]
  %v5337 = vld [vmem:[%s1721 + $0x10] sm:$0xf]
  %v5338 = vld [vmem:[%s1721 + $0x14] sm:$0x1]
  %v5339 = vld [vmem:[%s1721 + $0x18] sm:$0xf]
  %v5340 = vld [vmem:[%s1721 + $0x1c] sm:$0xf]
  %v5341 = vld [vmem:[%s1721 + $0x20] sm:$0x1]
  %v5342 = vld [vmem:[%s1721 + $0x24] sm:$0xf]
  %v5343 = vld [vmem:[%s1721 + $0x28] sm:$0xf]
  %v5344 = vld [vmem:[%s1721 + $0x2c] sm:$0x1]
  %v5345 = vld [vmem:[%s1721 + $0x30] sm:$0xf]
  %v5346 = vld [vmem:[%s1721 + $0x34] sm:$0xf]
  %v5347 = vld [vmem:[%s1721 + $0x38] sm:$0x1]
  %v5348 = vld [vmem:[%s1721 + $0x3c] sm:$0xf]
  %v5349 = vld [vmem:[%s1721 + $0x40] sm:$0xf]
  %v5350 = vld [vmem:[%s1721 + $0x44] sm:$0x1]
  %v5351 = vld [vmem:[%s1721 + $0x48] sm:$0xf]
  %v5352 = vld [vmem:[%s1721 + $0x4c] sm:$0xf]
  %v5353 = vld [vmem:[%s1721 + $0x50] sm:$0x1]
  %v5354 = vld [vmem:[%s1721 + $0x54] sm:$0xf]
  %v5355 = vld [vmem:[%s1721 + $0x58] sm:$0xf]
  %v5356 = vld [vmem:[%s1721 + $0x5c] sm:$0x1]
  %v5357 = vld [vmem:[%s1721 + $0x60] sm:$0xf]
  %v5358 = vld [vmem:[%s1721 + $0x64] sm:$0xf]
  %v5359 = vld [vmem:[%s1721 + $0x68] sm:$0x1]
  %v5360 = vld [vmem:[%s1721 + $0x6c] sm:$0xf]
  %v5361 = vld [vmem:[%s1721 + $0x70] sm:$0xf]
  %v5362 = vld [vmem:[%s1721 + $0x74] sm:$0x1]
  %v5363 = vld [vmem:[%s1721 + $0x78] sm:$0xf]
  %v5364 = vld [vmem:[%s1721 + $0x7c] sm:$0xf]
  %v5365 = vld [vmem:[%s1721 + $0x80] sm:$0x1]
  %v5366 = vld [vmem:[%s1721 + $0x84] sm:$0xf]
  %v5367 = vld [vmem:[%s1721 + $0x88] sm:$0xf]
  %v5368 = vld [vmem:[%s1721 + $0x8c] sm:$0x1]
  %v5369 = vld [vmem:[%s1721 + $0x90] sm:$0xf]
  %v5370 = vld [vmem:[%s1721 + $0x94] sm:$0xf]
  %v5371 = vld [vmem:[%s1721 + $0x98] sm:$0x1]
  %v5372 = vld [vmem:[%s1721 + $0x9c] sm:$0xf]
  %v5373 = vld [vmem:[%s1721 + $0xa0] sm:$0xf]
  %v5374 = vld [vmem:[%s1721 + $0xa4] sm:$0x1]
  %v5375 = vld [vmem:[%s1721 + $0xa8] sm:$0xf]
  %v5376 = vld [vmem:[%s1721 + $0xac] sm:$0xf]
  %v5377 = vld [vmem:[%s1721 + $0xb0] sm:$0x1]
  %v5378 = vld [vmem:[%s1721 + $0xb4] sm:$0xf]
  %v5379 = vld [vmem:[%s1721 + $0xb8] sm:$0xf]
  %v5380 = vld [vmem:[%s1721 + $0xbc] sm:$0x1]
  %v5382 = vshrl.u32 %v5333, 16
  %v5384 = vrot.slane %v5382, 4
  %v5385 = vshll.u32 %v5333, 16
  %v5387 = vrot.slane %v5385, 5
  %v5388 = vor.u32 %v5384, %v5387
  %v5389 = vrot.slane %v5388, 4
  %v5391 = vshll.u32 %v5334, 16
  %v5393 = vrot.slane %v5391, 5
  %v5394 = vsel %vm2544, %v5389, %v5393
  %v5395 = vshrl.u32 %v5334, 16
  %v5397 = vrot.slane %v5395, 4
  %v5398 = vor.u32 %v5397, %v5393
  %v5399 = vrot.slane %v5398, 4
  %v5401 = vshll.u32 %v5335, 16
  %v5403 = vrot.slane %v5401, 5
  %v5404 = vsel %vm2544, %v5399, %v5403
  %v5406 = vshrl.u32 %v5336, 16
  %v5408 = vrot.slane %v5406, 4
  %v5409 = vshll.u32 %v5336, 16
  %v5411 = vrot.slane %v5409, 5
  %v5412 = vor.u32 %v5408, %v5411
  %v5413 = vrot.slane %v5412, 4
  %v5415 = vshll.u32 %v5337, 16
  %v5417 = vrot.slane %v5415, 5
  %v5418 = vsel %vm2544, %v5413, %v5417
  %v5419 = vshrl.u32 %v5337, 16
  %v5421 = vrot.slane %v5419, 4
  %v5422 = vor.u32 %v5421, %v5417
  %v5423 = vrot.slane %v5422, 4
  %v5425 = vshll.u32 %v5338, 16
  %v5427 = vrot.slane %v5425, 5
  %v5428 = vsel %vm2544, %v5423, %v5427
  %v5430 = vshrl.u32 %v5339, 16
  %v5432 = vrot.slane %v5430, 4
  %v5433 = vshll.u32 %v5339, 16
  %v5435 = vrot.slane %v5433, 5
  %v5436 = vor.u32 %v5432, %v5435
  %v5437 = vrot.slane %v5436, 4
  %v5439 = vshll.u32 %v5340, 16
  %v5441 = vrot.slane %v5439, 5
  %v5442 = vsel %vm2544, %v5437, %v5441
  %v5443 = vshrl.u32 %v5340, 16
  %v5445 = vrot.slane %v5443, 4
  %v5446 = vor.u32 %v5445, %v5441
  %v5447 = vrot.slane %v5446, 4
  %v5449 = vshll.u32 %v5341, 16
  %v5451 = vrot.slane %v5449, 5
  %v5452 = vsel %vm2544, %v5447, %v5451
  %v5454 = vshrl.u32 %v5342, 16
  %v5456 = vrot.slane %v5454, 4
  %v5457 = vshll.u32 %v5342, 16
  %v5459 = vrot.slane %v5457, 5
  %v5460 = vor.u32 %v5456, %v5459
  %v5461 = vrot.slane %v5460, 4
  %v5463 = vshll.u32 %v5343, 16
  %v5465 = vrot.slane %v5463, 5
  %v5466 = vsel %vm2544, %v5461, %v5465
  %v5467 = vshrl.u32 %v5343, 16
  %v5469 = vrot.slane %v5467, 4
  %v5470 = vor.u32 %v5469, %v5465
  %v5471 = vrot.slane %v5470, 4
  %v5473 = vshll.u32 %v5344, 16
  %v5475 = vrot.slane %v5473, 5
  %v5476 = vsel %vm2544, %v5471, %v5475
  %v5478 = vshrl.u32 %v5345, 16
  %v5480 = vrot.slane %v5478, 4
  %v5481 = vshll.u32 %v5345, 16
  %v5483 = vrot.slane %v5481, 5
  %v5484 = vor.u32 %v5480, %v5483
  %v5485 = vrot.slane %v5484, 4
  %v5487 = vshll.u32 %v5346, 16
  %v5489 = vrot.slane %v5487, 5
  %v5490 = vsel %vm2544, %v5485, %v5489
  %v5491 = vshrl.u32 %v5346, 16
  %v5493 = vrot.slane %v5491, 4
  %v5494 = vor.u32 %v5493, %v5489
  %v5495 = vrot.slane %v5494, 4
  %v5497 = vshll.u32 %v5347, 16
  %v5499 = vrot.slane %v5497, 5
  %v5500 = vsel %vm2544, %v5495, %v5499
  %v5502 = vshrl.u32 %v5348, 16
  %v5504 = vrot.slane %v5502, 4
  %v5505 = vshll.u32 %v5348, 16
  %v5507 = vrot.slane %v5505, 5
  %v5508 = vor.u32 %v5504, %v5507
  %v5509 = vrot.slane %v5508, 4
  %v5511 = vshll.u32 %v5349, 16
  %v5513 = vrot.slane %v5511, 5
  %v5514 = vsel %vm2544, %v5509, %v5513
  %v5515 = vshrl.u32 %v5349, 16
  %v5517 = vrot.slane %v5515, 4
  %v5518 = vor.u32 %v5517, %v5513
  %v5519 = vrot.slane %v5518, 4
  %v5521 = vshll.u32 %v5350, 16
  %v5523 = vrot.slane %v5521, 5
  %v5524 = vsel %vm2544, %v5519, %v5523
  %v5526 = vshrl.u32 %v5351, 16
  %v5528 = vrot.slane %v5526, 4
  %v5529 = vshll.u32 %v5351, 16
  %v5531 = vrot.slane %v5529, 5
  %v5532 = vor.u32 %v5528, %v5531
  %v5533 = vrot.slane %v5532, 4
  %v5535 = vshll.u32 %v5352, 16
  %v5537 = vrot.slane %v5535, 5
  %v5538 = vsel %vm2544, %v5533, %v5537
  %v5539 = vshrl.u32 %v5352, 16
  %v5541 = vrot.slane %v5539, 4
  %v5542 = vor.u32 %v5541, %v5537
  %v5543 = vrot.slane %v5542, 4
  %v5545 = vshll.u32 %v5353, 16
  %v5547 = vrot.slane %v5545, 5
  %v5548 = vsel %vm2544, %v5543, %v5547
  %v5550 = vshrl.u32 %v5354, 16
  %v5552 = vrot.slane %v5550, 4
  %v5553 = vshll.u32 %v5354, 16
  %v5555 = vrot.slane %v5553, 5
  %v5556 = vor.u32 %v5552, %v5555
  %v5557 = vrot.slane %v5556, 4
  %v5559 = vshll.u32 %v5355, 16
  %v5561 = vrot.slane %v5559, 5
  %v5562 = vsel %vm2544, %v5557, %v5561
  %v5563 = vshrl.u32 %v5355, 16
  %v5565 = vrot.slane %v5563, 4
  %v5566 = vor.u32 %v5565, %v5561
  %v5567 = vrot.slane %v5566, 4
  %v5569 = vshll.u32 %v5356, 16
  %v5571 = vrot.slane %v5569, 5
  %v5572 = vsel %vm2544, %v5567, %v5571
  %v5574 = vshrl.u32 %v5357, 16
  %v5576 = vrot.slane %v5574, 4
  %v5577 = vshll.u32 %v5357, 16
  %v5579 = vrot.slane %v5577, 5
  %v5580 = vor.u32 %v5576, %v5579
  %v5581 = vrot.slane %v5580, 4
  %v5583 = vshll.u32 %v5358, 16
  %v5585 = vrot.slane %v5583, 5
  %v5586 = vsel %vm2544, %v5581, %v5585
  %v5587 = vshrl.u32 %v5358, 16
  %v5589 = vrot.slane %v5587, 4
  %v5590 = vor.u32 %v5589, %v5585
  %v5591 = vrot.slane %v5590, 4
  %v5593 = vshll.u32 %v5359, 16
  %v5595 = vrot.slane %v5593, 5
  %v5596 = vsel %vm2544, %v5591, %v5595
  %v5598 = vshrl.u32 %v5360, 16
  %v5600 = vrot.slane %v5598, 4
  %v5601 = vshll.u32 %v5360, 16
  %v5603 = vrot.slane %v5601, 5
  %v5604 = vor.u32 %v5600, %v5603
  %v5605 = vrot.slane %v5604, 4
  %v5607 = vshll.u32 %v5361, 16
  %v5609 = vrot.slane %v5607, 5
  %v5610 = vsel %vm2544, %v5605, %v5609
  %v5611 = vshrl.u32 %v5361, 16
  %v5613 = vrot.slane %v5611, 4
  %v5614 = vor.u32 %v5613, %v5609
  %v5615 = vrot.slane %v5614, 4
  %v5617 = vshll.u32 %v5362, 16
  %v5619 = vrot.slane %v5617, 5
  %v5620 = vsel %vm2544, %v5615, %v5619
  %v5622 = vshrl.u32 %v5363, 16
  %v5624 = vrot.slane %v5622, 4
  %v5625 = vshll.u32 %v5363, 16
  %v5627 = vrot.slane %v5625, 5
  %v5628 = vor.u32 %v5624, %v5627
  %v5629 = vrot.slane %v5628, 4
  %v5631 = vshll.u32 %v5364, 16
  %v5633 = vrot.slane %v5631, 5
  %v5634 = vsel %vm2544, %v5629, %v5633
  %v5635 = vshrl.u32 %v5364, 16
  %v5637 = vrot.slane %v5635, 4
  %v5638 = vor.u32 %v5637, %v5633
  %v5639 = vrot.slane %v5638, 4
  %v5641 = vshll.u32 %v5365, 16
  %v5643 = vrot.slane %v5641, 5
  %v5644 = vsel %vm2544, %v5639, %v5643
  %v5646 = vshrl.u32 %v5366, 16
  %v5648 = vrot.slane %v5646, 4
  %v5649 = vshll.u32 %v5366, 16
  %v5651 = vrot.slane %v5649, 5
  %v5652 = vor.u32 %v5648, %v5651
  %v5653 = vrot.slane %v5652, 4
  %v5655 = vshll.u32 %v5367, 16
  %v5657 = vrot.slane %v5655, 5
  %v5658 = vsel %vm2544, %v5653, %v5657
  %v5659 = vshrl.u32 %v5367, 16
  %v5661 = vrot.slane %v5659, 4
  %v5662 = vor.u32 %v5661, %v5657
  %v5663 = vrot.slane %v5662, 4
  %v5665 = vshll.u32 %v5368, 16
  %v5667 = vrot.slane %v5665, 5
  %v5668 = vsel %vm2544, %v5663, %v5667
  %v5670 = vshrl.u32 %v5369, 16
  %v5672 = vrot.slane %v5670, 4
  %v5673 = vshll.u32 %v5369, 16
  %v5675 = vrot.slane %v5673, 5
  %v5676 = vor.u32 %v5672, %v5675
  %v5677 = vrot.slane %v5676, 4
  %v5679 = vshll.u32 %v5370, 16
  %v5681 = vrot.slane %v5679, 5
  %v5682 = vsel %vm2544, %v5677, %v5681
  %v5683 = vshrl.u32 %v5370, 16
  %v5685 = vrot.slane %v5683, 4
  %v5686 = vor.u32 %v5685, %v5681
  %v5687 = vrot.slane %v5686, 4
  %v5689 = vshll.u32 %v5371, 16
  %v5691 = vrot.slane %v5689, 5
  %v5692 = vsel %vm2544, %v5687, %v5691
  %v5694 = vshrl.u32 %v5372, 16
  %v5696 = vrot.slane %v5694, 4
  %v5697 = vshll.u32 %v5372, 16
  %v5699 = vrot.slane %v5697, 5
  %v5700 = vor.u32 %v5696, %v5699
  %v5701 = vrot.slane %v5700, 4
  %v5703 = vshll.u32 %v5373, 16
  %v5705 = vrot.slane %v5703, 5
  %v5706 = vsel %vm2544, %v5701, %v5705
  %v5707 = vshrl.u32 %v5373, 16
  %v5709 = vrot.slane %v5707, 4
  %v5710 = vor.u32 %v5709, %v5705
  %v5711 = vrot.slane %v5710, 4
  %v5713 = vshll.u32 %v5374, 16
  %v5715 = vrot.slane %v5713, 5
  %v5716 = vsel %vm2544, %v5711, %v5715
  %v5718 = vshrl.u32 %v5375, 16
  %v5720 = vrot.slane %v5718, 4
  %v5721 = vshll.u32 %v5375, 16
  %v5723 = vrot.slane %v5721, 5
  %v5724 = vor.u32 %v5720, %v5723
  %v5725 = vrot.slane %v5724, 4
  %v5727 = vshll.u32 %v5376, 16
  %v5729 = vrot.slane %v5727, 5
  %v5730 = vsel %vm2544, %v5725, %v5729
  %v5731 = vshrl.u32 %v5376, 16
  %v5733 = vrot.slane %v5731, 4
  %v5734 = vor.u32 %v5733, %v5729
  %v5735 = vrot.slane %v5734, 4
  %v5737 = vshll.u32 %v5377, 16
  %v5739 = vrot.slane %v5737, 5
  %v5740 = vsel %vm2544, %v5735, %v5739
  %v5742 = vshrl.u32 %v5378, 16
  %v5744 = vrot.slane %v5742, 4
  %v5745 = vshll.u32 %v5378, 16
  %v5747 = vrot.slane %v5745, 5
  %v5748 = vor.u32 %v5744, %v5747
  %v5749 = vrot.slane %v5748, 4
  %v5751 = vshll.u32 %v5379, 16
  %v5753 = vrot.slane %v5751, 5
  %v5754 = vsel %vm2544, %v5749, %v5753
  %v5755 = vshrl.u32 %v5379, 16
  %v5757 = vrot.slane %v5755, 4
  %v5758 = vor.u32 %v5757, %v5753
  %v5759 = vrot.slane %v5758, 4
  %v5761 = vshll.u32 %v5380, 16
  %v5763 = vrot.slane %v5761, 5
  %v5764 = vsel %vm2544, %v5759, %v5763
  %v5765 = vunpack.c.l.b16 %v5394
  %v5766 = vunpack.c.l.b16 %v5404
  %v5767 = vunpack.c.l.b16 %v5418
  %v5768 = vunpack.c.l.b16 %v5428
  %v5769 = vunpack.c.l.b16 %v5442
  %v5770 = vunpack.c.l.b16 %v5452
  %v5771 = vunpack.c.l.b16 %v5466
  %v5772 = vunpack.c.l.b16 %v5476
  %v5773 = vunpack.c.l.b16 %v5490
  %v5774 = vunpack.c.l.b16 %v5500
  %v5775 = vunpack.c.l.b16 %v5514
  %v5776 = vunpack.c.l.b16 %v5524
  %v5777 = vunpack.c.l.b16 %v5538
  %v5778 = vunpack.c.l.b16 %v5548
  %v5779 = vunpack.c.l.b16 %v5562
  %v5780 = vunpack.c.l.b16 %v5572
  %v5781 = vunpack.c.l.b16 %v5586
  %v5782 = vunpack.c.l.b16 %v5596
  %v5783 = vunpack.c.l.b16 %v5610
  %v5784 = vunpack.c.l.b16 %v5620
  %v5785 = vunpack.c.l.b16 %v5634
  %v5786 = vunpack.c.l.b16 %v5644
  %v5787 = vunpack.c.l.b16 %v5658
  %v5788 = vunpack.c.l.b16 %v5668
  %v5789 = vunpack.c.l.b16 %v5682
  %v5790 = vunpack.c.l.b16 %v5692
  %v5791 = vunpack.c.l.b16 %v5706
  %v5792 = vunpack.c.l.b16 %v5716
  %v5793 = vunpack.c.l.b16 %v5730
  %v5794 = vunpack.c.l.b16 %v5740
  %v5795 = vunpack.c.l.b16 %v5754
  %v5796 = vunpack.c.l.b16 %v5764
  %v5797 = vpack.c.b16 %v5766, %v5765
  %v5798 = vpack.c.b16 %v5768, %v5767
  %v5799 = vpack.c.b16 %v5770, %v5769
  %v5800 = vpack.c.b16 %v5772, %v5771
  %v5801 = vpack.c.b16 %v5774, %v5773
  %v5802 = vpack.c.b16 %v5776, %v5775
  %v5803 = vpack.c.b16 %v5778, %v5777
  %v5804 = vpack.c.b16 %v5780, %v5779
  %v5805 = vpack.c.b16 %v5782, %v5781
  %v5806 = vpack.c.b16 %v5784, %v5783
  %v5807 = vpack.c.b16 %v5786, %v5785
  %v5808 = vpack.c.b16 %v5788, %v5787
  %v5809 = vpack.c.b16 %v5790, %v5789
  %v5810 = vpack.c.b16 %v5792, %v5791
  %v5811 = vpack.c.b16 %v5794, %v5793
  %v5812 = vpack.c.b16 %v5796, %v5795
  %5829 = vst [vmem:[#allocation3 + $0x488] sm:$0xff] %v5797
  %5830 = vst [vmem:[#allocation3 + $0x4d0] sm:$0xff] %v5798
  %5831 = vst [vmem:[#allocation3 + $0x518] sm:$0xff] %v5799
  %5832 = vst [vmem:[#allocation3 + $0x560] sm:$0xff] %v5800
  %5833 = vst [vmem:[#allocation3 + $0x5a8] sm:$0xff] %v5801
  %5834 = vst [vmem:[#allocation3 + $0x5f0] sm:$0xff] %v5802
  %5835 = vst [vmem:[#allocation3 + $0x638] sm:$0xff] %v5803
  %5836 = vst [vmem:[#allocation3 + $0x680] sm:$0xff] %v5804
  %5837 = vst [vmem:[#allocation3 + $0x6c8] sm:$0xff] %v5805
  %5838 = vst [vmem:[#allocation3 + $0x710] sm:$0xff] %v5806
  %5839 = vst [vmem:[#allocation3 + $0x758] sm:$0xff] %v5807
  %5840 = vst [vmem:[#allocation3 + $0x7a0] sm:$0xff] %v5808
  %5841 = vst [vmem:[#allocation3 + $0x7e8] sm:$0xff] %v5809
  %5842 = vst [vmem:[#allocation3 + $0x830] sm:$0xff] %v5810
  %5843 = vst [vmem:[#allocation3 + $0x878] sm:$0xff] %v5811
  %5844 = vst [vmem:[#allocation3 + $0x8c0] sm:$0xff] %v5812
  %v5845 = vld [vmem:[%s1721] sm:$0xe]
  %v5846 = vld [vmem:[%s1721 + $0x4] sm:$0xf]
  %v5847 = vld [vmem:[%s1721 + $0x8] sm:$0x1]
  %v5848 = vld [vmem:[%s1721 + $0xc] sm:$0xe]
  %v5849 = vld [vmem:[%s1721 + $0x10] sm:$0xf]
  %v5850 = vld [vmem:[%s1721 + $0x14] sm:$0x1]
  %v5851 = vld [vmem:[%s1721 + $0x18] sm:$0xe]
  %v5852 = vld [vmem:[%s1721 + $0x1c] sm:$0xf]
  %v5853 = vld [vmem:[%s1721 + $0x20] sm:$0x1]
  %v5854 = vld [vmem:[%s1721 + $0x24] sm:$0xe]
  %v5855 = vld [vmem:[%s1721 + $0x28] sm:$0xf]
  %v5856 = vld [vmem:[%s1721 + $0x2c] sm:$0x1]
  %v5857 = vld [vmem:[%s1721 + $0x30] sm:$0xe]
  %v5858 = vld [vmem:[%s1721 + $0x34] sm:$0xf]
  %v5859 = vld [vmem:[%s1721 + $0x38] sm:$0x1]
  %v5860 = vld [vmem:[%s1721 + $0x3c] sm:$0xe]
  %v5861 = vld [vmem:[%s1721 + $0x40] sm:$0xf]
  %v5862 = vld [vmem:[%s1721 + $0x44] sm:$0x1]
  %v5863 = vld [vmem:[%s1721 + $0x48] sm:$0xe]
  %v5864 = vld [vmem:[%s1721 + $0x4c] sm:$0xf]
  %v5865 = vld [vmem:[%s1721 + $0x50] sm:$0x1]
  %v5866 = vld [vmem:[%s1721 + $0x54] sm:$0xe]
  %v5867 = vld [vmem:[%s1721 + $0x58] sm:$0xf]
  %v5868 = vld [vmem:[%s1721 + $0x5c] sm:$0x1]
  %v5869 = vld [vmem:[%s1721 + $0x60] sm:$0xe]
  %v5870 = vld [vmem:[%s1721 + $0x64] sm:$0xf]
  %v5871 = vld [vmem:[%s1721 + $0x68] sm:$0x1]
  %v5872 = vld [vmem:[%s1721 + $0x6c] sm:$0xe]
  %v5873 = vld [vmem:[%s1721 + $0x70] sm:$0xf]
  %v5874 = vld [vmem:[%s1721 + $0x74] sm:$0x1]
  %v5875 = vld [vmem:[%s1721 + $0x78] sm:$0xe]
  %v5876 = vld [vmem:[%s1721 + $0x7c] sm:$0xf]
  %v5877 = vld [vmem:[%s1721 + $0x80] sm:$0x1]
  %v5878 = vld [vmem:[%s1721 + $0x84] sm:$0xe]
  %v5879 = vld [vmem:[%s1721 + $0x88] sm:$0xf]
  %v5880 = vld [vmem:[%s1721 + $0x8c] sm:$0x1]
  %v5881 = vld [vmem:[%s1721 + $0x90] sm:$0xe]
  %v5882 = vld [vmem:[%s1721 + $0x94] sm:$0xf]
  %v5883 = vld [vmem:[%s1721 + $0x98] sm:$0x1]
  %v5884 = vld [vmem:[%s1721 + $0x9c] sm:$0xe]
  %v5885 = vld [vmem:[%s1721 + $0xa0] sm:$0xf]
  %v5886 = vld [vmem:[%s1721 + $0xa4] sm:$0x1]
  %v5887 = vld [vmem:[%s1721 + $0xa8] sm:$0xe]
  %v5888 = vld [vmem:[%s1721 + $0xac] sm:$0xf]
  %v5889 = vld [vmem:[%s1721 + $0xb0] sm:$0x1]
  %v5890 = vld [vmem:[%s1721 + $0xb4] sm:$0xe]
  %v5891 = vld [vmem:[%s1721 + $0xb8] sm:$0xf]
  %v5892 = vld [vmem:[%s1721 + $0xbc] sm:$0x1]
  %v5941 = vrot.slane %v5845, 5
  %v5942 = vrot.slane %v5941, 4
  %v5943 = vrot.slane %v5846, 5
  %v5944 = vsel %vm3107, %v5942, %v5943
  %v5945 = vrot.slane %v5943, 4
  %v5946 = vrot.slane %v5847, 5
  %v5947 = vsel %vm3107, %v5945, %v5946
  %v5948 = vrot.slane %v5848, 5
  %v5949 = vrot.slane %v5948, 4
  %v5950 = vrot.slane %v5849, 5
  %v5951 = vsel %vm3107, %v5949, %v5950
  %v5952 = vrot.slane %v5950, 4
  %v5953 = vrot.slane %v5850, 5
  %v5954 = vsel %vm3107, %v5952, %v5953
  %v5955 = vrot.slane %v5851, 5
  %v5956 = vrot.slane %v5955, 4
  %v5957 = vrot.slane %v5852, 5
  %v5958 = vsel %vm3107, %v5956, %v5957
  %v5959 = vrot.slane %v5957, 4
  %v5960 = vrot.slane %v5853, 5
  %v5961 = vsel %vm3107, %v5959, %v5960
  %v5962 = vrot.slane %v5854, 5
  %v5963 = vrot.slane %v5962, 4
  %v5964 = vrot.slane %v5855, 5
  %v5965 = vsel %vm3107, %v5963, %v5964
  %v5966 = vrot.slane %v5964, 4
  %v5967 = vrot.slane %v5856, 5
  %v5968 = vsel %vm3107, %v5966, %v5967
  %v5969 = vrot.slane %v5857, 5
  %v5970 = vrot.slane %v5969, 4
  %v5971 = vrot.slane %v5858, 5
  %v5972 = vsel %vm3107, %v5970, %v5971
  %v5973 = vrot.slane %v5971, 4
  %v5974 = vrot.slane %v5859, 5
  %v5975 = vsel %vm3107, %v5973, %v5974
  %v5976 = vrot.slane %v5860, 5
  %v5977 = vrot.slane %v5976, 4
  %v5978 = vrot.slane %v5861, 5
  %v5979 = vsel %vm3107, %v5977, %v5978
  %v5980 = vrot.slane %v5978, 4
  %v5981 = vrot.slane %v5862, 5
  %v5982 = vsel %vm3107, %v5980, %v5981
  %v5983 = vrot.slane %v5863, 5
  %v5984 = vrot.slane %v5983, 4
  %v5985 = vrot.slane %v5864, 5
  %v5986 = vsel %vm3107, %v5984, %v5985
  %v5987 = vrot.slane %v5985, 4
  %v5988 = vrot.slane %v5865, 5
  %v5989 = vsel %vm3107, %v5987, %v5988
  %v5990 = vrot.slane %v5866, 5
  %v5991 = vrot.slane %v5990, 4
  %v5992 = vrot.slane %v5867, 5
  %v5993 = vsel %vm3107, %v5991, %v5992
  %v5994 = vrot.slane %v5992, 4
  %v5995 = vrot.slane %v5868, 5
  %v5996 = vsel %vm3107, %v5994, %v5995
  %v5997 = vrot.slane %v5869, 5
  %v5998 = vrot.slane %v5997, 4
  %v5999 = vrot.slane %v5870, 5
  %v6000 = vsel %vm3107, %v5998, %v5999
  %v6001 = vrot.slane %v5999, 4
  %v6002 = vrot.slane %v5871, 5
  %v6003 = vsel %vm3107, %v6001, %v6002
  %v6004 = vrot.slane %v5872, 5
  %v6005 = vrot.slane %v6004, 4
  %v6006 = vrot.slane %v5873, 5
  %v6007 = vsel %vm3107, %v6005, %v6006
  %v6008 = vrot.slane %v6006, 4
  %v6009 = vrot.slane %v5874, 5
  %v6010 = vsel %vm3107, %v6008, %v6009
  %v6011 = vrot.slane %v5875, 5
  %v6012 = vrot.slane %v6011, 4
  %v6013 = vrot.slane %v5876, 5
  %v6014 = vsel %vm3107, %v6012, %v6013
  %v6015 = vrot.slane %v6013, 4
  %v6016 = vrot.slane %v5877, 5
  %v6017 = vsel %vm3107, %v6015, %v6016
  %v6018 = vrot.slane %v5878, 5
  %v6019 = vrot.slane %v6018, 4
  %v6020 = vrot.slane %v5879, 5
  %v6021 = vsel %vm3107, %v6019, %v6020
  %v6022 = vrot.slane %v6020, 4
  %v6023 = vrot.slane %v5880, 5
  %v6024 = vsel %vm3107, %v6022, %v6023
  %v6025 = vrot.slane %v5881, 5
  %v6026 = vrot.slane %v6025, 4
  %v6027 = vrot.slane %v5882, 5
  %v6028 = vsel %vm3107, %v6026, %v6027
  %v6029 = vrot.slane %v6027, 4
  %v6030 = vrot.slane %v5883, 5
  %v6031 = vsel %vm3107, %v6029, %v6030
  %v6032 = vrot.slane %v5884, 5
  %v6033 = vrot.slane %v6032, 4
  %v6034 = vrot.slane %v5885, 5
  %v6035 = vsel %vm3107, %v6033, %v6034
  %v6036 = vrot.slane %v6034, 4
  %v6037 = vrot.slane %v5886, 5
  %v6038 = vsel %vm3107, %v6036, %v6037
  %v6039 = vrot.slane %v5887, 5
  %v6040 = vrot.slane %v6039, 4
  %v6041 = vrot.slane %v5888, 5
  %v6042 = vsel %vm3107, %v6040, %v6041
  %v6043 = vrot.slane %v6041, 4
  %v6044 = vrot.slane %v5889, 5
  %v6045 = vsel %vm3107, %v6043, %v6044
  %v6046 = vrot.slane %v5890, 5
  %v6047 = vrot.slane %v6046, 4
  %v6048 = vrot.slane %v5891, 5
  %v6049 = vsel %vm3107, %v6047, %v6048
  %v6050 = vrot.slane %v6048, 4
  %v6051 = vrot.slane %v5892, 5
  %v6052 = vsel %vm3107, %v6050, %v6051
  %v6053 = vunpack.c.l.b16 %v5944
  %v6054 = vunpack.c.l.b16 %v5947
  %v6055 = vunpack.c.l.b16 %v5951
  %v6056 = vunpack.c.l.b16 %v5954
  %v6057 = vunpack.c.l.b16 %v5958
  %v6058 = vunpack.c.l.b16 %v5961
  %v6059 = vunpack.c.l.b16 %v5965
  %v6060 = vunpack.c.l.b16 %v5968
  %v6061 = vunpack.c.l.b16 %v5972
  %v6062 = vunpack.c.l.b16 %v5975
  %v6063 = vunpack.c.l.b16 %v5979
  %v6064 = vunpack.c.l.b16 %v5982
  %v6065 = vunpack.c.l.b16 %v5986
  %v6066 = vunpack.c.l.b16 %v5989
  %v6067 = vunpack.c.l.b16 %v5993
  %v6068 = vunpack.c.l.b16 %v5996
  %v6069 = vunpack.c.l.b16 %v6000
  %v6070 = vunpack.c.l.b16 %v6003
  %v6071 = vunpack.c.l.b16 %v6007
  %v6072 = vunpack.c.l.b16 %v6010
  %v6073 = vunpack.c.l.b16 %v6014
  %v6074 = vunpack.c.l.b16 %v6017
  %v6075 = vunpack.c.l.b16 %v6021
  %v6076 = vunpack.c.l.b16 %v6024
  %v6077 = vunpack.c.l.b16 %v6028
  %v6078 = vunpack.c.l.b16 %v6031
  %v6079 = vunpack.c.l.b16 %v6035
  %v6080 = vunpack.c.l.b16 %v6038
  %v6081 = vunpack.c.l.b16 %v6042
  %v6082 = vunpack.c.l.b16 %v6045
  %v6083 = vunpack.c.l.b16 %v6049
  %v6084 = vunpack.c.l.b16 %v6052
  %v6085 = vpack.c.b16 %v6054, %v6053
  %v6086 = vpack.c.b16 %v6056, %v6055
  %v6087 = vpack.c.b16 %v6058, %v6057
  %v6088 = vpack.c.b16 %v6060, %v6059
  %v6089 = vpack.c.b16 %v6062, %v6061
  %v6090 = vpack.c.b16 %v6064, %v6063
  %v6091 = vpack.c.b16 %v6066, %v6065
  %v6092 = vpack.c.b16 %v6068, %v6067
  %v6093 = vpack.c.b16 %v6070, %v6069
  %v6094 = vpack.c.b16 %v6072, %v6071
  %v6095 = vpack.c.b16 %v6074, %v6073
  %v6096 = vpack.c.b16 %v6076, %v6075
  %v6097 = vpack.c.b16 %v6078, %v6077
  %v6098 = vpack.c.b16 %v6080, %v6079
  %v6099 = vpack.c.b16 %v6082, %v6081
  %v6100 = vpack.c.b16 %v6084, %v6083
  %6117 = vst [vmem:[#allocation3 + $0x490] sm:$0xff] %v6085
  %6118 = vst [vmem:[#allocation3 + $0x4d8] sm:$0xff] %v6086
  %6119 = vst [vmem:[#allocation3 + $0x520] sm:$0xff] %v6087
  %6120 = vst [vmem:[#allocation3 + $0x568] sm:$0xff] %v6088
  %6121 = vst [vmem:[#allocation3 + $0x5b0] sm:$0xff] %v6089
  %6122 = vst [vmem:[#allocation3 + $0x5f8] sm:$0xff] %v6090
  %6123 = vst [vmem:[#allocation3 + $0x640] sm:$0xff] %v6091
  %6124 = vst [vmem:[#allocation3 + $0x688] sm:$0xff] %v6092
  %6125 = vst [vmem:[#allocation3 + $0x6d0] sm:$0xff] %v6093
  %6126 = vst [vmem:[#allocation3 + $0x718] sm:$0xff] %v6094
  %6127 = vst [vmem:[#allocation3 + $0x760] sm:$0xff] %v6095
  %6128 = vst [vmem:[#allocation3 + $0x7a8] sm:$0xff] %v6096
  %6129 = vst [vmem:[#allocation3 + $0x7f0] sm:$0xff] %v6097
  %6130 = vst [vmem:[#allocation3 + $0x838] sm:$0xff] %v6098
  %6131 = vst [vmem:[#allocation3 + $0x880] sm:$0xff] %v6099
  %6132 = vst [vmem:[#allocation3 + $0x8c8] sm:$0xff] %v6100
  %v6133 = vld [vmem:[%s2237] sm:$0xf]
  %v6134 = vld [vmem:[%s2237 + $0x4] sm:$0xf]
  %v6135 = vld [vmem:[%s2237 + $0xc] sm:$0xf]
  %v6136 = vld [vmem:[%s2237 + $0x10] sm:$0xf]
  %v6137 = vld [vmem:[%s2237 + $0x18] sm:$0xf]
  %v6138 = vld [vmem:[%s2237 + $0x1c] sm:$0xf]
  %v6139 = vld [vmem:[%s2237 + $0x24] sm:$0xf]
  %v6140 = vld [vmem:[%s2237 + $0x28] sm:$0xf]
  %v6141 = vld [vmem:[%s2237 + $0x30] sm:$0xf]
  %v6142 = vld [vmem:[%s2237 + $0x34] sm:$0xf]
  %v6143 = vld [vmem:[%s2237 + $0x3c] sm:$0xf]
  %v6144 = vld [vmem:[%s2237 + $0x40] sm:$0xf]
  %v6145 = vld [vmem:[%s2237 + $0x48] sm:$0xf]
  %v6146 = vld [vmem:[%s2237 + $0x4c] sm:$0xf]
  %v6147 = vld [vmem:[%s2237 + $0x54] sm:$0xf]
  %v6148 = vld [vmem:[%s2237 + $0x58] sm:$0xf]
  %v6149 = vld [vmem:[%s2237 + $0x60] sm:$0xf]
  %v6150 = vld [vmem:[%s2237 + $0x64] sm:$0xf]
  %v6151 = vld [vmem:[%s2237 + $0x6c] sm:$0xf]
  %v6152 = vld [vmem:[%s2237 + $0x70] sm:$0xf]
  %v6153 = vld [vmem:[%s2237 + $0x78] sm:$0xf]
  %v6154 = vld [vmem:[%s2237 + $0x7c] sm:$0xf]
  %v6155 = vld [vmem:[%s2237 + $0x84] sm:$0xf]
  %v6156 = vld [vmem:[%s2237 + $0x88] sm:$0xf]
  %v6157 = vld [vmem:[%s2237 + $0x90] sm:$0xf]
  %v6158 = vld [vmem:[%s2237 + $0x94] sm:$0xf]
  %v6159 = vld [vmem:[%s2237 + $0x9c] sm:$0xf]
  %v6160 = vld [vmem:[%s2237 + $0xa0] sm:$0xf]
  %v6161 = vld [vmem:[%s2237 + $0xa8] sm:$0xf]
  %v6162 = vld [vmem:[%s2237 + $0xac] sm:$0xf]
  %v6163 = vld [vmem:[%s2237 + $0xb4] sm:$0xf]
  %v6164 = vld [vmem:[%s2237 + $0xb8] sm:$0xf]
  %v6197 = vunpack.c.l.b16 %v6133
  %v6198 = vunpack.c.l.b16 %v6134
  %v6199 = vunpack.c.l.b16 %v6135
  %v6200 = vunpack.c.l.b16 %v6136
  %v6201 = vunpack.c.l.b16 %v6137
  %v6202 = vunpack.c.l.b16 %v6138
  %v6203 = vunpack.c.l.b16 %v6139
  %v6204 = vunpack.c.l.b16 %v6140
  %v6205 = vunpack.c.l.b16 %v6141
  %v6206 = vunpack.c.l.b16 %v6142
  %v6207 = vunpack.c.l.b16 %v6143
  %v6208 = vunpack.c.l.b16 %v6144
  %v6209 = vunpack.c.l.b16 %v6145
  %v6210 = vunpack.c.l.b16 %v6146
  %v6211 = vunpack.c.l.b16 %v6147
  %v6212 = vunpack.c.l.b16 %v6148
  %v6213 = vunpack.c.l.b16 %v6149
  %v6214 = vunpack.c.l.b16 %v6150
  %v6215 = vunpack.c.l.b16 %v6151
  %v6216 = vunpack.c.l.b16 %v6152
  %v6217 = vunpack.c.l.b16 %v6153
  %v6218 = vunpack.c.l.b16 %v6154
  %v6219 = vunpack.c.l.b16 %v6155
  %v6220 = vunpack.c.l.b16 %v6156
  %v6221 = vunpack.c.l.b16 %v6157
  %v6222 = vunpack.c.l.b16 %v6158
  %v6223 = vunpack.c.l.b16 %v6159
  %v6224 = vunpack.c.l.b16 %v6160
  %v6225 = vunpack.c.l.b16 %v6161
  %v6226 = vunpack.c.l.b16 %v6162
  %v6227 = vunpack.c.l.b16 %v6163
  %v6228 = vunpack.c.l.b16 %v6164
  %v6229 = vpack.c.b16 %v6198, %v6197
  %v6230 = vpack.c.b16 %v6200, %v6199
  %v6231 = vpack.c.b16 %v6202, %v6201
  %v6232 = vpack.c.b16 %v6204, %v6203
  %v6233 = vpack.c.b16 %v6206, %v6205
  %v6234 = vpack.c.b16 %v6208, %v6207
  %v6235 = vpack.c.b16 %v6210, %v6209
  %v6236 = vpack.c.b16 %v6212, %v6211
  %v6237 = vpack.c.b16 %v6214, %v6213
  %v6238 = vpack.c.b16 %v6216, %v6215
  %v6239 = vpack.c.b16 %v6218, %v6217
  %v6240 = vpack.c.b16 %v6220, %v6219
  %v6241 = vpack.c.b16 %v6222, %v6221
  %v6242 = vpack.c.b16 %v6224, %v6223
  %v6243 = vpack.c.b16 %v6226, %v6225
  %v6244 = vpack.c.b16 %v6228, %v6227
  %6261 = vst [vmem:[#allocation3 + $0x498] sm:$0xff] %v6229
  %6262 = vst [vmem:[#allocation3 + $0x4e0] sm:$0xff] %v6230
  %6263 = vst [vmem:[#allocation3 + $0x528] sm:$0xff] %v6231
  %6264 = vst [vmem:[#allocation3 + $0x570] sm:$0xff] %v6232
  %6265 = vst [vmem:[#allocation3 + $0x5b8] sm:$0xff] %v6233
  %6266 = vst [vmem:[#allocation3 + $0x600] sm:$0xff] %v6234
  %6267 = vst [vmem:[#allocation3 + $0x648] sm:$0xff] %v6235
  %6268 = vst [vmem:[#allocation3 + $0x690] sm:$0xff] %v6236
  %6269 = vst [vmem:[#allocation3 + $0x6d8] sm:$0xff] %v6237
  %6270 = vst [vmem:[#allocation3 + $0x720] sm:$0xff] %v6238
  %6271 = vst [vmem:[#allocation3 + $0x768] sm:$0xff] %v6239
  %6272 = vst [vmem:[#allocation3 + $0x7b0] sm:$0xff] %v6240
  %6273 = vst [vmem:[#allocation3 + $0x7f8] sm:$0xff] %v6241
  %6274 = vst [vmem:[#allocation3 + $0x840] sm:$0xff] %v6242
  %6275 = vst [vmem:[#allocation3 + $0x888] sm:$0xff] %v6243
  %6276 = vst [vmem:[#allocation3 + $0x8d0] sm:$0xff] %v6244
  %v6277 = vld [vmem:[%s2237] sm:$0xf]
  %v6278 = vld [vmem:[%s2237 + $0x4] sm:$0xf]
  %v6279 = vld [vmem:[%s2237 + $0x8] sm:$0x1]
  %v6280 = vld [vmem:[%s2237 + $0xc] sm:$0xf]
  %v6281 = vld [vmem:[%s2237 + $0x10] sm:$0xf]
  %v6282 = vld [vmem:[%s2237 + $0x14] sm:$0x1]
  %v6283 = vld [vmem:[%s2237 + $0x18] sm:$0xf]
  %v6284 = vld [vmem:[%s2237 + $0x1c] sm:$0xf]
  %v6285 = vld [vmem:[%s2237 + $0x20] sm:$0x1]
  %v6286 = vld [vmem:[%s2237 + $0x24] sm:$0xf]
  %v6287 = vld [vmem:[%s2237 + $0x28] sm:$0xf]
  %v6288 = vld [vmem:[%s2237 + $0x2c] sm:$0x1]
  %v6289 = vld [vmem:[%s2237 + $0x30] sm:$0xf]
  %v6290 = vld [vmem:[%s2237 + $0x34] sm:$0xf]
  %v6291 = vld [vmem:[%s2237 + $0x38] sm:$0x1]
  %v6292 = vld [vmem:[%s2237 + $0x3c] sm:$0xf]
  %v6293 = vld [vmem:[%s2237 + $0x40] sm:$0xf]
  %v6294 = vld [vmem:[%s2237 + $0x44] sm:$0x1]
  %v6295 = vld [vmem:[%s2237 + $0x48] sm:$0xf]
  %v6296 = vld [vmem:[%s2237 + $0x4c] sm:$0xf]
  %v6297 = vld [vmem:[%s2237 + $0x50] sm:$0x1]
  %v6298 = vld [vmem:[%s2237 + $0x54] sm:$0xf]
  %v6299 = vld [vmem:[%s2237 + $0x58] sm:$0xf]
  %v6300 = vld [vmem:[%s2237 + $0x5c] sm:$0x1]
  %v6301 = vld [vmem:[%s2237 + $0x60] sm:$0xf]
  %v6302 = vld [vmem:[%s2237 + $0x64] sm:$0xf]
  %v6303 = vld [vmem:[%s2237 + $0x68] sm:$0x1]
  %v6304 = vld [vmem:[%s2237 + $0x6c] sm:$0xf]
  %v6305 = vld [vmem:[%s2237 + $0x70] sm:$0xf]
  %v6306 = vld [vmem:[%s2237 + $0x74] sm:$0x1]
  %v6307 = vld [vmem:[%s2237 + $0x78] sm:$0xf]
  %v6308 = vld [vmem:[%s2237 + $0x7c] sm:$0xf]
  %v6309 = vld [vmem:[%s2237 + $0x80] sm:$0x1]
  %v6310 = vld [vmem:[%s2237 + $0x84] sm:$0xf]
  %v6311 = vld [vmem:[%s2237 + $0x88] sm:$0xf]
  %v6312 = vld [vmem:[%s2237 + $0x8c] sm:$0x1]
  %v6313 = vld [vmem:[%s2237 + $0x90] sm:$0xf]
  %v6314 = vld [vmem:[%s2237 + $0x94] sm:$0xf]
  %v6315 = vld [vmem:[%s2237 + $0x98] sm:$0x1]
  %v6316 = vld [vmem:[%s2237 + $0x9c] sm:$0xf]
  %v6317 = vld [vmem:[%s2237 + $0xa0] sm:$0xf]
  %v6318 = vld [vmem:[%s2237 + $0xa4] sm:$0x1]
  %v6319 = vld [vmem:[%s2237 + $0xa8] sm:$0xf]
  %v6320 = vld [vmem:[%s2237 + $0xac] sm:$0xf]
  %v6321 = vld [vmem:[%s2237 + $0xb0] sm:$0x1]
  %v6322 = vld [vmem:[%s2237 + $0xb4] sm:$0xf]
  %v6323 = vld [vmem:[%s2237 + $0xb8] sm:$0xf]
  %v6324 = vld [vmem:[%s2237 + $0xbc] sm:$0x1]
  %v6326 = vshrl.u32 %v6277, 16
  %v6328 = vrot.slane %v6326, 4
  %v6329 = vshll.u32 %v6277, 16
  %v6331 = vrot.slane %v6329, 5
  %v6332 = vor.u32 %v6328, %v6331
  %v6333 = vrot.slane %v6332, 4
  %v6335 = vshll.u32 %v6278, 16
  %v6337 = vrot.slane %v6335, 5
  %v6338 = vsel %vm2544, %v6333, %v6337
  %v6339 = vshrl.u32 %v6278, 16
  %v6341 = vrot.slane %v6339, 4
  %v6342 = vor.u32 %v6341, %v6337
  %v6343 = vrot.slane %v6342, 4
  %v6345 = vshll.u32 %v6279, 16
  %v6347 = vrot.slane %v6345, 5
  %v6348 = vsel %vm2544, %v6343, %v6347
  %v6350 = vshrl.u32 %v6280, 16
  %v6352 = vrot.slane %v6350, 4
  %v6353 = vshll.u32 %v6280, 16
  %v6355 = vrot.slane %v6353, 5
  %v6356 = vor.u32 %v6352, %v6355
  %v6357 = vrot.slane %v6356, 4
  %v6359 = vshll.u32 %v6281, 16
  %v6361 = vrot.slane %v6359, 5
  %v6362 = vsel %vm2544, %v6357, %v6361
  %v6363 = vshrl.u32 %v6281, 16
  %v6365 = vrot.slane %v6363, 4
  %v6366 = vor.u32 %v6365, %v6361
  %v6367 = vrot.slane %v6366, 4
  %v6369 = vshll.u32 %v6282, 16
  %v6371 = vrot.slane %v6369, 5
  %v6372 = vsel %vm2544, %v6367, %v6371
  %v6374 = vshrl.u32 %v6283, 16
  %v6376 = vrot.slane %v6374, 4
  %v6377 = vshll.u32 %v6283, 16
  %v6379 = vrot.slane %v6377, 5
  %v6380 = vor.u32 %v6376, %v6379
  %v6381 = vrot.slane %v6380, 4
  %v6383 = vshll.u32 %v6284, 16
  %v6385 = vrot.slane %v6383, 5
  %v6386 = vsel %vm2544, %v6381, %v6385
  %v6387 = vshrl.u32 %v6284, 16
  %v6389 = vrot.slane %v6387, 4
  %v6390 = vor.u32 %v6389, %v6385
  %v6391 = vrot.slane %v6390, 4
  %v6393 = vshll.u32 %v6285, 16
  %v6395 = vrot.slane %v6393, 5
  %v6396 = vsel %vm2544, %v6391, %v6395
  %v6398 = vshrl.u32 %v6286, 16
  %v6400 = vrot.slane %v6398, 4
  %v6401 = vshll.u32 %v6286, 16
  %v6403 = vrot.slane %v6401, 5
  %v6404 = vor.u32 %v6400, %v6403
  %v6405 = vrot.slane %v6404, 4
  %v6407 = vshll.u32 %v6287, 16
  %v6409 = vrot.slane %v6407, 5
  %v6410 = vsel %vm2544, %v6405, %v6409
  %v6411 = vshrl.u32 %v6287, 16
  %v6413 = vrot.slane %v6411, 4
  %v6414 = vor.u32 %v6413, %v6409
  %v6415 = vrot.slane %v6414, 4
  %v6417 = vshll.u32 %v6288, 16
  %v6419 = vrot.slane %v6417, 5
  %v6420 = vsel %vm2544, %v6415, %v6419
  %v6422 = vshrl.u32 %v6289, 16
  %v6424 = vrot.slane %v6422, 4
  %v6425 = vshll.u32 %v6289, 16
  %v6427 = vrot.slane %v6425, 5
  %v6428 = vor.u32 %v6424, %v6427
  %v6429 = vrot.slane %v6428, 4
  %v6431 = vshll.u32 %v6290, 16
  %v6433 = vrot.slane %v6431, 5
  %v6434 = vsel %vm2544, %v6429, %v6433
  %v6435 = vshrl.u32 %v6290, 16
  %v6437 = vrot.slane %v6435, 4
  %v6438 = vor.u32 %v6437, %v6433
  %v6439 = vrot.slane %v6438, 4
  %v6441 = vshll.u32 %v6291, 16
  %v6443 = vrot.slane %v6441, 5
  %v6444 = vsel %vm2544, %v6439, %v6443
  %v6446 = vshrl.u32 %v6292, 16
  %v6448 = vrot.slane %v6446, 4
  %v6449 = vshll.u32 %v6292, 16
  %v6451 = vrot.slane %v6449, 5
  %v6452 = vor.u32 %v6448, %v6451
  %v6453 = vrot.slane %v6452, 4
  %v6455 = vshll.u32 %v6293, 16
  %v6457 = vrot.slane %v6455, 5
  %v6458 = vsel %vm2544, %v6453, %v6457
  %v6459 = vshrl.u32 %v6293, 16
  %v6461 = vrot.slane %v6459, 4
  %v6462 = vor.u32 %v6461, %v6457
  %v6463 = vrot.slane %v6462, 4
  %v6465 = vshll.u32 %v6294, 16
  %v6467 = vrot.slane %v6465, 5
  %v6468 = vsel %vm2544, %v6463, %v6467
  %v6470 = vshrl.u32 %v6295, 16
  %v6472 = vrot.slane %v6470, 4
  %v6473 = vshll.u32 %v6295, 16
  %v6475 = vrot.slane %v6473, 5
  %v6476 = vor.u32 %v6472, %v6475
  %v6477 = vrot.slane %v6476, 4
  %v6479 = vshll.u32 %v6296, 16
  %v6481 = vrot.slane %v6479, 5
  %v6482 = vsel %vm2544, %v6477, %v6481
  %v6483 = vshrl.u32 %v6296, 16
  %v6485 = vrot.slane %v6483, 4
  %v6486 = vor.u32 %v6485, %v6481
  %v6487 = vrot.slane %v6486, 4
  %v6489 = vshll.u32 %v6297, 16
  %v6491 = vrot.slane %v6489, 5
  %v6492 = vsel %vm2544, %v6487, %v6491
  %v6494 = vshrl.u32 %v6298, 16
  %v6496 = vrot.slane %v6494, 4
  %v6497 = vshll.u32 %v6298, 16
  %v6499 = vrot.slane %v6497, 5
  %v6500 = vor.u32 %v6496, %v6499
  %v6501 = vrot.slane %v6500, 4
  %v6503 = vshll.u32 %v6299, 16
  %v6505 = vrot.slane %v6503, 5
  %v6506 = vsel %vm2544, %v6501, %v6505
  %v6507 = vshrl.u32 %v6299, 16
  %v6509 = vrot.slane %v6507, 4
  %v6510 = vor.u32 %v6509, %v6505
  %v6511 = vrot.slane %v6510, 4
  %v6513 = vshll.u32 %v6300, 16
  %v6515 = vrot.slane %v6513, 5
  %v6516 = vsel %vm2544, %v6511, %v6515
  %v6518 = vshrl.u32 %v6301, 16
  %v6520 = vrot.slane %v6518, 4
  %v6521 = vshll.u32 %v6301, 16
  %v6523 = vrot.slane %v6521, 5
  %v6524 = vor.u32 %v6520, %v6523
  %v6525 = vrot.slane %v6524, 4
  %v6527 = vshll.u32 %v6302, 16
  %v6529 = vrot.slane %v6527, 5
  %v6530 = vsel %vm2544, %v6525, %v6529
  %v6531 = vshrl.u32 %v6302, 16
  %v6533 = vrot.slane %v6531, 4
  %v6534 = vor.u32 %v6533, %v6529
  %v6535 = vrot.slane %v6534, 4
  %v6537 = vshll.u32 %v6303, 16
  %v6539 = vrot.slane %v6537, 5
  %v6540 = vsel %vm2544, %v6535, %v6539
  %v6542 = vshrl.u32 %v6304, 16
  %v6544 = vrot.slane %v6542, 4
  %v6545 = vshll.u32 %v6304, 16
  %v6547 = vrot.slane %v6545, 5
  %v6548 = vor.u32 %v6544, %v6547
  %v6549 = vrot.slane %v6548, 4
  %v6551 = vshll.u32 %v6305, 16
  %v6553 = vrot.slane %v6551, 5
  %v6554 = vsel %vm2544, %v6549, %v6553
  %v6555 = vshrl.u32 %v6305, 16
  %v6557 = vrot.slane %v6555, 4
  %v6558 = vor.u32 %v6557, %v6553
  %v6559 = vrot.slane %v6558, 4
  %v6561 = vshll.u32 %v6306, 16
  %v6563 = vrot.slane %v6561, 5
  %v6564 = vsel %vm2544, %v6559, %v6563
  %v6566 = vshrl.u32 %v6307, 16
  %v6568 = vrot.slane %v6566, 4
  %v6569 = vshll.u32 %v6307, 16
  %v6571 = vrot.slane %v6569, 5
  %v6572 = vor.u32 %v6568, %v6571
  %v6573 = vrot.slane %v6572, 4
  %v6575 = vshll.u32 %v6308, 16
  %v6577 = vrot.slane %v6575, 5
  %v6578 = vsel %vm2544, %v6573, %v6577
  %v6579 = vshrl.u32 %v6308, 16
  %v6581 = vrot.slane %v6579, 4
  %v6582 = vor.u32 %v6581, %v6577
  %v6583 = vrot.slane %v6582, 4
  %v6585 = vshll.u32 %v6309, 16
  %v6587 = vrot.slane %v6585, 5
  %v6588 = vsel %vm2544, %v6583, %v6587
  %v6590 = vshrl.u32 %v6310, 16
  %v6592 = vrot.slane %v6590, 4
  %v6593 = vshll.u32 %v6310, 16
  %v6595 = vrot.slane %v6593, 5
  %v6596 = vor.u32 %v6592, %v6595
  %v6597 = vrot.slane %v6596, 4
  %v6599 = vshll.u32 %v6311, 16
  %v6601 = vrot.slane %v6599, 5
  %v6602 = vsel %vm2544, %v6597, %v6601
  %v6603 = vshrl.u32 %v6311, 16
  %v6605 = vrot.slane %v6603, 4
  %v6606 = vor.u32 %v6605, %v6601
  %v6607 = vrot.slane %v6606, 4
  %v6609 = vshll.u32 %v6312, 16
  %v6611 = vrot.slane %v6609, 5
  %v6612 = vsel %vm2544, %v6607, %v6611
  %v6614 = vshrl.u32 %v6313, 16
  %v6616 = vrot.slane %v6614, 4
  %v6617 = vshll.u32 %v6313, 16
  %v6619 = vrot.slane %v6617, 5
  %v6620 = vor.u32 %v6616, %v6619
  %v6621 = vrot.slane %v6620, 4
  %v6623 = vshll.u32 %v6314, 16
  %v6625 = vrot.slane %v6623, 5
  %v6626 = vsel %vm2544, %v6621, %v6625
  %v6627 = vshrl.u32 %v6314, 16
  %v6629 = vrot.slane %v6627, 4
  %v6630 = vor.u32 %v6629, %v6625
  %v6631 = vrot.slane %v6630, 4
  %v6633 = vshll.u32 %v6315, 16
  %v6635 = vrot.slane %v6633, 5
  %v6636 = vsel %vm2544, %v6631, %v6635
  %v6638 = vshrl.u32 %v6316, 16
  %v6640 = vrot.slane %v6638, 4
  %v6641 = vshll.u32 %v6316, 16
  %v6643 = vrot.slane %v6641, 5
  %v6644 = vor.u32 %v6640, %v6643
  %v6645 = vrot.slane %v6644, 4
  %v6647 = vshll.u32 %v6317, 16
  %v6649 = vrot.slane %v6647, 5
  %v6650 = vsel %vm2544, %v6645, %v6649
  %v6651 = vshrl.u32 %v6317, 16
  %v6653 = vrot.slane %v6651, 4
  %v6654 = vor.u32 %v6653, %v6649
  %v6655 = vrot.slane %v6654, 4
  %v6657 = vshll.u32 %v6318, 16
  %v6659 = vrot.slane %v6657, 5
  %v6660 = vsel %vm2544, %v6655, %v6659
  %v6662 = vshrl.u32 %v6319, 16
  %v6664 = vrot.slane %v6662, 4
  %v6665 = vshll.u32 %v6319, 16
  %v6667 = vrot.slane %v6665, 5
  %v6668 = vor.u32 %v6664, %v6667
  %v6669 = vrot.slane %v6668, 4
  %v6671 = vshll.u32 %v6320, 16
  %v6673 = vrot.slane %v6671, 5
  %v6674 = vsel %vm2544, %v6669, %v6673
  %v6675 = vshrl.u32 %v6320, 16
  %v6677 = vrot.slane %v6675, 4
  %v6678 = vor.u32 %v6677, %v6673
  %v6679 = vrot.slane %v6678, 4
  %v6681 = vshll.u32 %v6321, 16
  %v6683 = vrot.slane %v6681, 5
  %v6684 = vsel %vm2544, %v6679, %v6683
  %v6686 = vshrl.u32 %v6322, 16
  %v6688 = vrot.slane %v6686, 4
  %v6689 = vshll.u32 %v6322, 16
  %v6691 = vrot.slane %v6689, 5
  %v6692 = vor.u32 %v6688, %v6691
  %v6693 = vrot.slane %v6692, 4
  %v6695 = vshll.u32 %v6323, 16
  %v6697 = vrot.slane %v6695, 5
  %v6698 = vsel %vm2544, %v6693, %v6697
  %v6699 = vshrl.u32 %v6323, 16
  %v6701 = vrot.slane %v6699, 4
  %v6702 = vor.u32 %v6701, %v6697
  %v6703 = vrot.slane %v6702, 4
  %v6705 = vshll.u32 %v6324, 16
  %v6707 = vrot.slane %v6705, 5
  %v6708 = vsel %vm2544, %v6703, %v6707
  %v6709 = vunpack.c.l.b16 %v6338
  %v6710 = vunpack.c.l.b16 %v6348
  %v6711 = vunpack.c.l.b16 %v6362
  %v6712 = vunpack.c.l.b16 %v6372
  %v6713 = vunpack.c.l.b16 %v6386
  %v6714 = vunpack.c.l.b16 %v6396
  %v6715 = vunpack.c.l.b16 %v6410
  %v6716 = vunpack.c.l.b16 %v6420
  %v6717 = vunpack.c.l.b16 %v6434
  %v6718 = vunpack.c.l.b16 %v6444
  %v6719 = vunpack.c.l.b16 %v6458
  %v6720 = vunpack.c.l.b16 %v6468
  %v6721 = vunpack.c.l.b16 %v6482
  %v6722 = vunpack.c.l.b16 %v6492
  %v6723 = vunpack.c.l.b16 %v6506
  %v6724 = vunpack.c.l.b16 %v6516
  %v6725 = vunpack.c.l.b16 %v6530
  %v6726 = vunpack.c.l.b16 %v6540
  %v6727 = vunpack.c.l.b16 %v6554
  %v6728 = vunpack.c.l.b16 %v6564
  %v6729 = vunpack.c.l.b16 %v6578
  %v6730 = vunpack.c.l.b16 %v6588
  %v6731 = vunpack.c.l.b16 %v6602
  %v6732 = vunpack.c.l.b16 %v6612
  %v6733 = vunpack.c.l.b16 %v6626
  %v6734 = vunpack.c.l.b16 %v6636
  %v6735 = vunpack.c.l.b16 %v6650
  %v6736 = vunpack.c.l.b16 %v6660
  %v6737 = vunpack.c.l.b16 %v6674
  %v6738 = vunpack.c.l.b16 %v6684
  %v6739 = vunpack.c.l.b16 %v6698
  %v6740 = vunpack.c.l.b16 %v6708
  %v6741 = vpack.c.b16 %v6710, %v6709
  %v6742 = vpack.c.b16 %v6712, %v6711
  %v6743 = vpack.c.b16 %v6714, %v6713
  %v6744 = vpack.c.b16 %v6716, %v6715
  %v6745 = vpack.c.b16 %v6718, %v6717
  %v6746 = vpack.c.b16 %v6720, %v6719
  %v6747 = vpack.c.b16 %v6722, %v6721
  %v6748 = vpack.c.b16 %v6724, %v6723
  %v6749 = vpack.c.b16 %v6726, %v6725
  %v6750 = vpack.c.b16 %v6728, %v6727
  %v6751 = vpack.c.b16 %v6730, %v6729
  %v6752 = vpack.c.b16 %v6732, %v6731
  %v6753 = vpack.c.b16 %v6734, %v6733
  %v6754 = vpack.c.b16 %v6736, %v6735
  %v6755 = vpack.c.b16 %v6738, %v6737
  %v6756 = vpack.c.b16 %v6740, %v6739
  %6773 = vst [vmem:[#allocation3 + $0x4a0] sm:$0xff] %v6741
  %6774 = vst [vmem:[#allocation3 + $0x4e8] sm:$0xff] %v6742
  %6775 = vst [vmem:[#allocation3 + $0x530] sm:$0xff] %v6743
  %6776 = vst [vmem:[#allocation3 + $0x578] sm:$0xff] %v6744
  %6777 = vst [vmem:[#allocation3 + $0x5c0] sm:$0xff] %v6745
  %6778 = vst [vmem:[#allocation3 + $0x608] sm:$0xff] %v6746
  %6779 = vst [vmem:[#allocation3 + $0x650] sm:$0xff] %v6747
  %6780 = vst [vmem:[#allocation3 + $0x698] sm:$0xff] %v6748
  %6781 = vst [vmem:[#allocation3 + $0x6e0] sm:$0xff] %v6749
  %6782 = vst [vmem:[#allocation3 + $0x728] sm:$0xff] %v6750
  %6783 = vst [vmem:[#allocation3 + $0x770] sm:$0xff] %v6751
  %6784 = vst [vmem:[#allocation3 + $0x7b8] sm:$0xff] %v6752
  %6785 = vst [vmem:[#allocation3 + $0x800] sm:$0xff] %v6753
  %6786 = vst [vmem:[#allocation3 + $0x848] sm:$0xff] %v6754
  %6787 = vst [vmem:[#allocation3 + $0x890] sm:$0xff] %v6755
  %6788 = vst [vmem:[#allocation3 + $0x8d8] sm:$0xff] %v6756
  %v6789 = vld [vmem:[%s2237] sm:$0xe]
  %v6790 = vld [vmem:[%s2237 + $0x4] sm:$0xf]
  %v6791 = vld [vmem:[%s2237 + $0x8] sm:$0x1]
  %v6792 = vld [vmem:[%s2237 + $0xc] sm:$0xe]
  %v6793 = vld [vmem:[%s2237 + $0x10] sm:$0xf]
  %v6794 = vld [vmem:[%s2237 + $0x14] sm:$0x1]
  %v6795 = vld [vmem:[%s2237 + $0x18] sm:$0xe]
  %v6796 = vld [vmem:[%s2237 + $0x1c] sm:$0xf]
  %v6797 = vld [vmem:[%s2237 + $0x20] sm:$0x1]
  %v6798 = vld [vmem:[%s2237 + $0x24] sm:$0xe]
  %v6799 = vld [vmem:[%s2237 + $0x28] sm:$0xf]
  %v6800 = vld [vmem:[%s2237 + $0x2c] sm:$0x1]
  %v6801 = vld [vmem:[%s2237 + $0x30] sm:$0xe]
  %v6802 = vld [vmem:[%s2237 + $0x34] sm:$0xf]
  %v6803 = vld [vmem:[%s2237 + $0x38] sm:$0x1]
  %v6804 = vld [vmem:[%s2237 + $0x3c] sm:$0xe]
  %v6805 = vld [vmem:[%s2237 + $0x40] sm:$0xf]
  %v6806 = vld [vmem:[%s2237 + $0x44] sm:$0x1]
  %v6807 = vld [vmem:[%s2237 + $0x48] sm:$0xe]
  %v6808 = vld [vmem:[%s2237 + $0x4c] sm:$0xf]
  %v6809 = vld [vmem:[%s2237 + $0x50] sm:$0x1]
  %v6810 = vld [vmem:[%s2237 + $0x54] sm:$0xe]
  %v6811 = vld [vmem:[%s2237 + $0x58] sm:$0xf]
  %v6812 = vld [vmem:[%s2237 + $0x5c] sm:$0x1]
  %v6813 = vld [vmem:[%s2237 + $0x60] sm:$0xe]
  %v6814 = vld [vmem:[%s2237 + $0x64] sm:$0xf]
  %v6815 = vld [vmem:[%s2237 + $0x68] sm:$0x1]
  %v6816 = vld [vmem:[%s2237 + $0x6c] sm:$0xe]
  %v6817 = vld [vmem:[%s2237 + $0x70] sm:$0xf]
  %v6818 = vld [vmem:[%s2237 + $0x74] sm:$0x1]
  %v6819 = vld [vmem:[%s2237 + $0x78] sm:$0xe]
  %v6820 = vld [vmem:[%s2237 + $0x7c] sm:$0xf]
  %v6821 = vld [vmem:[%s2237 + $0x80] sm:$0x1]
  %v6822 = vld [vmem:[%s2237 + $0x84] sm:$0xe]
  %v6823 = vld [vmem:[%s2237 + $0x88] sm:$0xf]
  %v6824 = vld [vmem:[%s2237 + $0x8c] sm:$0x1]
  %v6825 = vld [vmem:[%s2237 + $0x90] sm:$0xe]
  %v6826 = vld [vmem:[%s2237 + $0x94] sm:$0xf]
  %v6827 = vld [vmem:[%s2237 + $0x98] sm:$0x1]
  %v6828 = vld [vmem:[%s2237 + $0x9c] sm:$0xe]
  %v6829 = vld [vmem:[%s2237 + $0xa0] sm:$0xf]
  %v6830 = vld [vmem:[%s2237 + $0xa4] sm:$0x1]
  %v6831 = vld [vmem:[%s2237 + $0xa8] sm:$0xe]
  %v6832 = vld [vmem:[%s2237 + $0xac] sm:$0xf]
  %v6833 = vld [vmem:[%s2237 + $0xb0] sm:$0x1]
  %v6834 = vld [vmem:[%s2237 + $0xb4] sm:$0xe]
  %v6835 = vld [vmem:[%s2237 + $0xb8] sm:$0xf]
  %v6836 = vld [vmem:[%s2237 + $0xbc] sm:$0x1]
  %v6885 = vrot.slane %v6789, 5
  %v6886 = vrot.slane %v6885, 4
  %v6887 = vrot.slane %v6790, 5
  %v6888 = vsel %vm3107, %v6886, %v6887
  %v6889 = vrot.slane %v6887, 4
  %v6890 = vrot.slane %v6791, 5
  %v6891 = vsel %vm3107, %v6889, %v6890
  %v6892 = vrot.slane %v6792, 5
  %v6893 = vrot.slane %v6892, 4
  %v6894 = vrot.slane %v6793, 5
  %v6895 = vsel %vm3107, %v6893, %v6894
  %v6896 = vrot.slane %v6894, 4
  %v6897 = vrot.slane %v6794, 5
  %v6898 = vsel %vm3107, %v6896, %v6897
  %v6899 = vrot.slane %v6795, 5
  %v6900 = vrot.slane %v6899, 4
  %v6901 = vrot.slane %v6796, 5
  %v6902 = vsel %vm3107, %v6900, %v6901
  %v6903 = vrot.slane %v6901, 4
  %v6904 = vrot.slane %v6797, 5
  %v6905 = vsel %vm3107, %v6903, %v6904
  %v6906 = vrot.slane %v6798, 5
  %v6907 = vrot.slane %v6906, 4
  %v6908 = vrot.slane %v6799, 5
  %v6909 = vsel %vm3107, %v6907, %v6908
  %v6910 = vrot.slane %v6908, 4
  %v6911 = vrot.slane %v6800, 5
  %v6912 = vsel %vm3107, %v6910, %v6911
  %v6913 = vrot.slane %v6801, 5
  %v6914 = vrot.slane %v6913, 4
  %v6915 = vrot.slane %v6802, 5
  %v6916 = vsel %vm3107, %v6914, %v6915
  %v6917 = vrot.slane %v6915, 4
  %v6918 = vrot.slane %v6803, 5
  %v6919 = vsel %vm3107, %v6917, %v6918
  %v6920 = vrot.slane %v6804, 5
  %v6921 = vrot.slane %v6920, 4
  %v6922 = vrot.slane %v6805, 5
  %v6923 = vsel %vm3107, %v6921, %v6922
  %v6924 = vrot.slane %v6922, 4
  %v6925 = vrot.slane %v6806, 5
  %v6926 = vsel %vm3107, %v6924, %v6925
  %v6927 = vrot.slane %v6807, 5
  %v6928 = vrot.slane %v6927, 4
  %v6929 = vrot.slane %v6808, 5
  %v6930 = vsel %vm3107, %v6928, %v6929
  %v6931 = vrot.slane %v6929, 4
  %v6932 = vrot.slane %v6809, 5
  %v6933 = vsel %vm3107, %v6931, %v6932
  %v6934 = vrot.slane %v6810, 5
  %v6935 = vrot.slane %v6934, 4
  %v6936 = vrot.slane %v6811, 5
  %v6937 = vsel %vm3107, %v6935, %v6936
  %v6938 = vrot.slane %v6936, 4
  %v6939 = vrot.slane %v6812, 5
  %v6940 = vsel %vm3107, %v6938, %v6939
  %v6941 = vrot.slane %v6813, 5
  %v6942 = vrot.slane %v6941, 4
  %v6943 = vrot.slane %v6814, 5
  %v6944 = vsel %vm3107, %v6942, %v6943
  %v6945 = vrot.slane %v6943, 4
  %v6946 = vrot.slane %v6815, 5
  %v6947 = vsel %vm3107, %v6945, %v6946
  %v6948 = vrot.slane %v6816, 5
  %v6949 = vrot.slane %v6948, 4
  %v6950 = vrot.slane %v6817, 5
  %v6951 = vsel %vm3107, %v6949, %v6950
  %v6952 = vrot.slane %v6950, 4
  %v6953 = vrot.slane %v6818, 5
  %v6954 = vsel %vm3107, %v6952, %v6953
  %v6955 = vrot.slane %v6819, 5
  %v6956 = vrot.slane %v6955, 4
  %v6957 = vrot.slane %v6820, 5
  %v6958 = vsel %vm3107, %v6956, %v6957
  %v6959 = vrot.slane %v6957, 4
  %v6960 = vrot.slane %v6821, 5
  %v6961 = vsel %vm3107, %v6959, %v6960
  %v6962 = vrot.slane %v6822, 5
  %v6963 = vrot.slane %v6962, 4
  %v6964 = vrot.slane %v6823, 5
  %v6965 = vsel %vm3107, %v6963, %v6964
  %v6966 = vrot.slane %v6964, 4
  %v6967 = vrot.slane %v6824, 5
  %v6968 = vsel %vm3107, %v6966, %v6967
  %v6969 = vrot.slane %v6825, 5
  %v6970 = vrot.slane %v6969, 4
  %v6971 = vrot.slane %v6826, 5
  %v6972 = vsel %vm3107, %v6970, %v6971
  %v6973 = vrot.slane %v6971, 4
  %v6974 = vrot.slane %v6827, 5
  %v6975 = vsel %vm3107, %v6973, %v6974
  %v6976 = vrot.slane %v6828, 5
  %v6977 = vrot.slane %v6976, 4
  %v6978 = vrot.slane %v6829, 5
  %v6979 = vsel %vm3107, %v6977, %v6978
  %v6980 = vrot.slane %v6978, 4
  %v6981 = vrot.slane %v6830, 5
  %v6982 = vsel %vm3107, %v6980, %v6981
  %v6983 = vrot.slane %v6831, 5
  %v6984 = vrot.slane %v6983, 4
  %v6985 = vrot.slane %v6832, 5
  %v6986 = vsel %vm3107, %v6984, %v6985
  %v6987 = vrot.slane %v6985, 4
  %v6988 = vrot.slane %v6833, 5
  %v6989 = vsel %vm3107, %v6987, %v6988
  %v6990 = vrot.slane %v6834, 5
  %v6991 = vrot.slane %v6990, 4
  %v6992 = vrot.slane %v6835, 5
  %v6993 = vsel %vm3107, %v6991, %v6992
  %v6994 = vrot.slane %v6992, 4
  %v6995 = vrot.slane %v6836, 5
  %v6996 = vsel %vm3107, %v6994, %v6995
  %v6997 = vunpack.c.l.b16 %v6888
  %v6998 = vunpack.c.l.b16 %v6891
  %v6999 = vunpack.c.l.b16 %v6895
  %v7000 = vunpack.c.l.b16 %v6898
  %v7001 = vunpack.c.l.b16 %v6902
  %v7002 = vunpack.c.l.b16 %v6905
  %v7003 = vunpack.c.l.b16 %v6909
  %v7004 = vunpack.c.l.b16 %v6912
  %v7005 = vunpack.c.l.b16 %v6916
  %v7006 = vunpack.c.l.b16 %v6919
  %v7007 = vunpack.c.l.b16 %v6923
  %v7008 = vunpack.c.l.b16 %v6926
  %v7009 = vunpack.c.l.b16 %v6930
  %v7010 = vunpack.c.l.b16 %v6933
  %v7011 = vunpack.c.l.b16 %v6937
  %v7012 = vunpack.c.l.b16 %v6940
  %v7013 = vunpack.c.l.b16 %v6944
  %v7014 = vunpack.c.l.b16 %v6947
  %v7015 = vunpack.c.l.b16 %v6951
  %v7016 = vunpack.c.l.b16 %v6954
  %v7017 = vunpack.c.l.b16 %v6958
  %v7018 = vunpack.c.l.b16 %v6961
  %v7019 = vunpack.c.l.b16 %v6965
  %v7020 = vunpack.c.l.b16 %v6968
  %v7021 = vunpack.c.l.b16 %v6972
  %v7022 = vunpack.c.l.b16 %v6975
  %v7023 = vunpack.c.l.b16 %v6979
  %v7024 = vunpack.c.l.b16 %v6982
  %v7025 = vunpack.c.l.b16 %v6986
  %v7026 = vunpack.c.l.b16 %v6989
  %v7027 = vunpack.c.l.b16 %v6993
  %v7028 = vunpack.c.l.b16 %v6996
  %v7029 = vpack.c.b16 %v6998, %v6997
  %v7030 = vpack.c.b16 %v7000, %v6999
  %v7031 = vpack.c.b16 %v7002, %v7001
  %v7032 = vpack.c.b16 %v7004, %v7003
  %v7033 = vpack.c.b16 %v7006, %v7005
  %v7034 = vpack.c.b16 %v7008, %v7007
  %v7035 = vpack.c.b16 %v7010, %v7009
  %v7036 = vpack.c.b16 %v7012, %v7011
  %v7037 = vpack.c.b16 %v7014, %v7013
  %v7038 = vpack.c.b16 %v7016, %v7015
  %v7039 = vpack.c.b16 %v7018, %v7017
  %v7040 = vpack.c.b16 %v7020, %v7019
  %v7041 = vpack.c.b16 %v7022, %v7021
  %v7042 = vpack.c.b16 %v7024, %v7023
  %v7043 = vpack.c.b16 %v7026, %v7025
  %v7044 = vpack.c.b16 %v7028, %v7027
  %7061 = vst [vmem:[#allocation3 + $0x4a8] sm:$0xff] %v7029
  %7062 = vst [vmem:[#allocation3 + $0x4f0] sm:$0xff] %v7030
  %7063 = vst [vmem:[#allocation3 + $0x538] sm:$0xff] %v7031
  %7064 = vst [vmem:[#allocation3 + $0x580] sm:$0xff] %v7032
  %7065 = vst [vmem:[#allocation3 + $0x5c8] sm:$0xff] %v7033
  %7066 = vst [vmem:[#allocation3 + $0x610] sm:$0xff] %v7034
  %7067 = vst [vmem:[#allocation3 + $0x658] sm:$0xff] %v7035
  %7068 = vst [vmem:[#allocation3 + $0x6a0] sm:$0xff] %v7036
  %7069 = vst [vmem:[#allocation3 + $0x6e8] sm:$0xff] %v7037
  %7070 = vst [vmem:[#allocation3 + $0x730] sm:$0xff] %v7038
  %7071 = vst [vmem:[#allocation3 + $0x778] sm:$0xff] %v7039
  %7072 = vst [vmem:[#allocation3 + $0x7c0] sm:$0xff] %v7040
  %7073 = vst [vmem:[#allocation3 + $0x808] sm:$0xff] %v7041
  %7074 = vst [vmem:[#allocation3 + $0x850] sm:$0xff] %v7042
  %7075 = vst [vmem:[#allocation3 + $0x898] sm:$0xff] %v7043
  %7076 = vst [vmem:[#allocation3 + $0x8e0] sm:$0xff] %v7044
  %s7077 = scalar_lea.vmem [#allocation2], 240
  %v7078 = vld [vmem:[%s7077] sm:$0xf]
  %v7079 = vld [vmem:[%s7077 + $0x4] sm:$0xf]
  %v7080 = vld [vmem:[%s7077 + $0xc] sm:$0xf]
  %v7081 = vld [vmem:[%s7077 + $0x10] sm:$0xf]
  %v7082 = vld [vmem:[%s7077 + $0x18] sm:$0xf]
  %v7083 = vld [vmem:[%s7077 + $0x1c] sm:$0xf]
  %v7084 = vld [vmem:[%s7077 + $0x24] sm:$0xf]
  %v7085 = vld [vmem:[%s7077 + $0x28] sm:$0xf]
  %v7086 = vld [vmem:[%s7077 + $0x30] sm:$0xf]
  %v7087 = vld [vmem:[%s7077 + $0x34] sm:$0xf]
  %v7088 = vld [vmem:[%s7077 + $0x3c] sm:$0xf]
  %v7089 = vld [vmem:[%s7077 + $0x40] sm:$0xf]
  %v7090 = vld [vmem:[%s7077 + $0x48] sm:$0xf]
  %v7091 = vld [vmem:[%s7077 + $0x4c] sm:$0xf]
  %v7092 = vld [vmem:[%s7077 + $0x54] sm:$0xf]
  %v7093 = vld [vmem:[%s7077 + $0x58] sm:$0xf]
  %v7094 = vld [vmem:[%s7077 + $0x60] sm:$0xf]
  %v7095 = vld [vmem:[%s7077 + $0x64] sm:$0xf]
  %v7096 = vld [vmem:[%s7077 + $0x6c] sm:$0xf]
  %v7097 = vld [vmem:[%s7077 + $0x70] sm:$0xf]
  %v7098 = vld [vmem:[%s7077 + $0x78] sm:$0xf]
  %v7099 = vld [vmem:[%s7077 + $0x7c] sm:$0xf]
  %v7100 = vld [vmem:[%s7077 + $0x84] sm:$0xf]
  %v7101 = vld [vmem:[%s7077 + $0x88] sm:$0xf]
  %v7102 = vld [vmem:[%s7077 + $0x90] sm:$0xf]
  %v7103 = vld [vmem:[%s7077 + $0x94] sm:$0xf]
  %v7104 = vld [vmem:[%s7077 + $0x9c] sm:$0xf]
  %v7105 = vld [vmem:[%s7077 + $0xa0] sm:$0xf]
  %v7106 = vld [vmem:[%s7077 + $0xa8] sm:$0xf]
  %v7107 = vld [vmem:[%s7077 + $0xac] sm:$0xf]
  %v7108 = vld [vmem:[%s7077 + $0xb4] sm:$0xf]
  %v7109 = vld [vmem:[%s7077 + $0xb8] sm:$0xf]
  %v7142 = vunpack.c.l.b16 %v7078
  %v7143 = vunpack.c.l.b16 %v7079
  %v7144 = vunpack.c.l.b16 %v7080
  %v7145 = vunpack.c.l.b16 %v7081
  %v7146 = vunpack.c.l.b16 %v7082
  %v7147 = vunpack.c.l.b16 %v7083
  %v7148 = vunpack.c.l.b16 %v7084
  %v7149 = vunpack.c.l.b16 %v7085
  %v7150 = vunpack.c.l.b16 %v7086
  %v7151 = vunpack.c.l.b16 %v7087
  %v7152 = vunpack.c.l.b16 %v7088
  %v7153 = vunpack.c.l.b16 %v7089
  %v7154 = vunpack.c.l.b16 %v7090
  %v7155 = vunpack.c.l.b16 %v7091
  %v7156 = vunpack.c.l.b16 %v7092
  %v7157 = vunpack.c.l.b16 %v7093
  %v7158 = vunpack.c.l.b16 %v7094
  %v7159 = vunpack.c.l.b16 %v7095
  %v7160 = vunpack.c.l.b16 %v7096
  %v7161 = vunpack.c.l.b16 %v7097
  %v7162 = vunpack.c.l.b16 %v7098
  %v7163 = vunpack.c.l.b16 %v7099
  %v7164 = vunpack.c.l.b16 %v7100
  %v7165 = vunpack.c.l.b16 %v7101
  %v7166 = vunpack.c.l.b16 %v7102
  %v7167 = vunpack.c.l.b16 %v7103
  %v7168 = vunpack.c.l.b16 %v7104
  %v7169 = vunpack.c.l.b16 %v7105
  %v7170 = vunpack.c.l.b16 %v7106
  %v7171 = vunpack.c.l.b16 %v7107
  %v7172 = vunpack.c.l.b16 %v7108
  %v7173 = vunpack.c.l.b16 %v7109
  %v7174 = vpack.c.b16 %v7143, %v7142
  %v7175 = vpack.c.b16 %v7145, %v7144
  %v7176 = vpack.c.b16 %v7147, %v7146
  %v7177 = vpack.c.b16 %v7149, %v7148
  %v7178 = vpack.c.b16 %v7151, %v7150
  %v7179 = vpack.c.b16 %v7153, %v7152
  %v7180 = vpack.c.b16 %v7155, %v7154
  %v7181 = vpack.c.b16 %v7157, %v7156
  %v7182 = vpack.c.b16 %v7159, %v7158
  %v7183 = vpack.c.b16 %v7161, %v7160
  %v7184 = vpack.c.b16 %v7163, %v7162
  %v7185 = vpack.c.b16 %v7165, %v7164
  %v7186 = vpack.c.b16 %v7167, %v7166
  %v7187 = vpack.c.b16 %v7169, %v7168
  %v7188 = vpack.c.b16 %v7171, %v7170
  %v7189 = vpack.c.b16 %v7173, %v7172
  %7206 = vst [vmem:[#allocation3 + $0x4b0] sm:$0xff] %v7174
  %7207 = vst [vmem:[#allocation3 + $0x4f8] sm:$0xff] %v7175
  %7208 = vst [vmem:[#allocation3 + $0x540] sm:$0xff] %v7176
  %7209 = vst [vmem:[#allocation3 + $0x588] sm:$0xff] %v7177
  %7210 = vst [vmem:[#allocation3 + $0x5d0] sm:$0xff] %v7178
  %7211 = vst [vmem:[#allocation3 + $0x618] sm:$0xff] %v7179
  %7212 = vst [vmem:[#allocation3 + $0x660] sm:$0xff] %v7180
  %7213 = vst [vmem:[#allocation3 + $0x6a8] sm:$0xff] %v7181
  %7214 = vst [vmem:[#allocation3 + $0x6f0] sm:$0xff] %v7182
  %7215 = vst [vmem:[#allocation3 + $0x738] sm:$0xff] %v7183
  %7216 = vst [vmem:[#allocation3 + $0x780] sm:$0xff] %v7184
  %7217 = vst [vmem:[#allocation3 + $0x7c8] sm:$0xff] %v7185
  %7218 = vst [vmem:[#allocation3 + $0x810] sm:$0xff] %v7186
  %7219 = vst [vmem:[#allocation3 + $0x858] sm:$0xff] %v7187
  %7220 = vst [vmem:[#allocation3 + $0x8a0] sm:$0xff] %v7188
  %7221 = vst [vmem:[#allocation3 + $0x8e8] sm:$0xff] %v7189
  %v7222 = vld [vmem:[%s7077] sm:$0xf]
  %v7223 = vld [vmem:[%s7077 + $0x4] sm:$0xf]
  %v7224 = vld [vmem:[%s7077 + $0x8] sm:$0x1]
  %v7225 = vld [vmem:[%s7077 + $0xc] sm:$0xf]
  %v7226 = vld [vmem:[%s7077 + $0x10] sm:$0xf]
  %v7227 = vld [vmem:[%s7077 + $0x14] sm:$0x1]
  %v7228 = vld [vmem:[%s7077 + $0x18] sm:$0xf]
  %v7229 = vld [vmem:[%s7077 + $0x1c] sm:$0xf]
  %v7230 = vld [vmem:[%s7077 + $0x20] sm:$0x1]
  %v7231 = vld [vmem:[%s7077 + $0x24] sm:$0xf]
  %v7232 = vld [vmem:[%s7077 + $0x28] sm:$0xf]
  %v7233 = vld [vmem:[%s7077 + $0x2c] sm:$0x1]
  %v7234 = vld [vmem:[%s7077 + $0x30] sm:$0xf]
  %v7235 = vld [vmem:[%s7077 + $0x34] sm:$0xf]
  %v7236 = vld [vmem:[%s7077 + $0x38] sm:$0x1]
  %v7237 = vld [vmem:[%s7077 + $0x3c] sm:$0xf]
  %v7238 = vld [vmem:[%s7077 + $0x40] sm:$0xf]
  %v7239 = vld [vmem:[%s7077 + $0x44] sm:$0x1]
  %v7240 = vld [vmem:[%s7077 + $0x48] sm:$0xf]
  %v7241 = vld [vmem:[%s7077 + $0x4c] sm:$0xf]
  %v7242 = vld [vmem:[%s7077 + $0x50] sm:$0x1]
  %v7243 = vld [vmem:[%s7077 + $0x54] sm:$0xf]
  %v7244 = vld [vmem:[%s7077 + $0x58] sm:$0xf]
  %v7245 = vld [vmem:[%s7077 + $0x5c] sm:$0x1]
  %v7246 = vld [vmem:[%s7077 + $0x60] sm:$0xf]
  %v7247 = vld [vmem:[%s7077 + $0x64] sm:$0xf]
  %v7248 = vld [vmem:[%s7077 + $0x68] sm:$0x1]
  %v7249 = vld [vmem:[%s7077 + $0x6c] sm:$0xf]
  %v7250 = vld [vmem:[%s7077 + $0x70] sm:$0xf]
  %v7251 = vld [vmem:[%s7077 + $0x74] sm:$0x1]
  %v7252 = vld [vmem:[%s7077 + $0x78] sm:$0xf]
  %v7253 = vld [vmem:[%s7077 + $0x7c] sm:$0xf]
  %v7254 = vld [vmem:[%s7077 + $0x80] sm:$0x1]
  %v7255 = vld [vmem:[%s7077 + $0x84] sm:$0xf]
  %v7256 = vld [vmem:[%s7077 + $0x88] sm:$0xf]
  %v7257 = vld [vmem:[%s7077 + $0x8c] sm:$0x1]
  %v7258 = vld [vmem:[%s7077 + $0x90] sm:$0xf]
  %v7259 = vld [vmem:[%s7077 + $0x94] sm:$0xf]
  %v7260 = vld [vmem:[%s7077 + $0x98] sm:$0x1]
  %v7261 = vld [vmem:[%s7077 + $0x9c] sm:$0xf]
  %v7262 = vld [vmem:[%s7077 + $0xa0] sm:$0xf]
  %v7263 = vld [vmem:[%s7077 + $0xa4] sm:$0x1]
  %v7264 = vld [vmem:[%s7077 + $0xa8] sm:$0xf]
  %v7265 = vld [vmem:[%s7077 + $0xac] sm:$0xf]
  %v7266 = vld [vmem:[%s7077 + $0xb0] sm:$0x1]
  %v7267 = vld [vmem:[%s7077 + $0xb4] sm:$0xf]
  %v7268 = vld [vmem:[%s7077 + $0xb8] sm:$0xf]
  %v7269 = vld [vmem:[%s7077 + $0xbc] sm:$0x1]
  %v7271 = vshrl.u32 %v7222, 16
  %v7273 = vrot.slane %v7271, 4
  %v7274 = vshll.u32 %v7222, 16
  %v7276 = vrot.slane %v7274, 5
  %v7277 = vor.u32 %v7273, %v7276
  %v7278 = vrot.slane %v7277, 4
  %v7280 = vshll.u32 %v7223, 16
  %v7282 = vrot.slane %v7280, 5
  %v7283 = vsel %vm2544, %v7278, %v7282
  %v7284 = vshrl.u32 %v7223, 16
  %v7286 = vrot.slane %v7284, 4
  %v7287 = vor.u32 %v7286, %v7282
  %v7288 = vrot.slane %v7287, 4
  %v7290 = vshll.u32 %v7224, 16
  %v7292 = vrot.slane %v7290, 5
  %v7293 = vsel %vm2544, %v7288, %v7292
  %v7295 = vshrl.u32 %v7225, 16
  %v7297 = vrot.slane %v7295, 4
  %v7298 = vshll.u32 %v7225, 16
  %v7300 = vrot.slane %v7298, 5
  %v7301 = vor.u32 %v7297, %v7300
  %v7302 = vrot.slane %v7301, 4
  %v7304 = vshll.u32 %v7226, 16
  %v7306 = vrot.slane %v7304, 5
  %v7307 = vsel %vm2544, %v7302, %v7306
  %v7308 = vshrl.u32 %v7226, 16
  %v7310 = vrot.slane %v7308, 4
  %v7311 = vor.u32 %v7310, %v7306
  %v7312 = vrot.slane %v7311, 4
  %v7314 = vshll.u32 %v7227, 16
  %v7316 = vrot.slane %v7314, 5
  %v7317 = vsel %vm2544, %v7312, %v7316
  %v7319 = vshrl.u32 %v7228, 16
  %v7321 = vrot.slane %v7319, 4
  %v7322 = vshll.u32 %v7228, 16
  %v7324 = vrot.slane %v7322, 5
  %v7325 = vor.u32 %v7321, %v7324
  %v7326 = vrot.slane %v7325, 4
  %v7328 = vshll.u32 %v7229, 16
  %v7330 = vrot.slane %v7328, 5
  %v7331 = vsel %vm2544, %v7326, %v7330
  %v7332 = vshrl.u32 %v7229, 16
  %v7334 = vrot.slane %v7332, 4
  %v7335 = vor.u32 %v7334, %v7330
  %v7336 = vrot.slane %v7335, 4
  %v7338 = vshll.u32 %v7230, 16
  %v7340 = vrot.slane %v7338, 5
  %v7341 = vsel %vm2544, %v7336, %v7340
  %v7343 = vshrl.u32 %v7231, 16
  %v7345 = vrot.slane %v7343, 4
  %v7346 = vshll.u32 %v7231, 16
  %v7348 = vrot.slane %v7346, 5
  %v7349 = vor.u32 %v7345, %v7348
  %v7350 = vrot.slane %v7349, 4
  %v7352 = vshll.u32 %v7232, 16
  %v7354 = vrot.slane %v7352, 5
  %v7355 = vsel %vm2544, %v7350, %v7354
  %v7356 = vshrl.u32 %v7232, 16
  %v7358 = vrot.slane %v7356, 4
  %v7359 = vor.u32 %v7358, %v7354
  %v7360 = vrot.slane %v7359, 4
  %v7362 = vshll.u32 %v7233, 16
  %v7364 = vrot.slane %v7362, 5
  %v7365 = vsel %vm2544, %v7360, %v7364
  %v7367 = vshrl.u32 %v7234, 16
  %v7369 = vrot.slane %v7367, 4
  %v7370 = vshll.u32 %v7234, 16
  %v7372 = vrot.slane %v7370, 5
  %v7373 = vor.u32 %v7369, %v7372
  %v7374 = vrot.slane %v7373, 4
  %v7376 = vshll.u32 %v7235, 16
  %v7378 = vrot.slane %v7376, 5
  %v7379 = vsel %vm2544, %v7374, %v7378
  %v7380 = vshrl.u32 %v7235, 16
  %v7382 = vrot.slane %v7380, 4
  %v7383 = vor.u32 %v7382, %v7378
  %v7384 = vrot.slane %v7383, 4
  %v7386 = vshll.u32 %v7236, 16
  %v7388 = vrot.slane %v7386, 5
  %v7389 = vsel %vm2544, %v7384, %v7388
  %v7391 = vshrl.u32 %v7237, 16
  %v7393 = vrot.slane %v7391, 4
  %v7394 = vshll.u32 %v7237, 16
  %v7396 = vrot.slane %v7394, 5
  %v7397 = vor.u32 %v7393, %v7396
  %v7398 = vrot.slane %v7397, 4
  %v7400 = vshll.u32 %v7238, 16
  %v7402 = vrot.slane %v7400, 5
  %v7403 = vsel %vm2544, %v7398, %v7402
  %v7404 = vshrl.u32 %v7238, 16
  %v7406 = vrot.slane %v7404, 4
  %v7407 = vor.u32 %v7406, %v7402
  %v7408 = vrot.slane %v7407, 4
  %v7410 = vshll.u32 %v7239, 16
  %v7412 = vrot.slane %v7410, 5
  %v7413 = vsel %vm2544, %v7408, %v7412
  %v7415 = vshrl.u32 %v7240, 16
  %v7417 = vrot.slane %v7415, 4
  %v7418 = vshll.u32 %v7240, 16
  %v7420 = vrot.slane %v7418, 5
  %v7421 = vor.u32 %v7417, %v7420
  %v7422 = vrot.slane %v7421, 4
  %v7424 = vshll.u32 %v7241, 16
  %v7426 = vrot.slane %v7424, 5
  %v7427 = vsel %vm2544, %v7422, %v7426
  %v7428 = vshrl.u32 %v7241, 16
  %v7430 = vrot.slane %v7428, 4
  %v7431 = vor.u32 %v7430, %v7426
  %v7432 = vrot.slane %v7431, 4
  %v7434 = vshll.u32 %v7242, 16
  %v7436 = vrot.slane %v7434, 5
  %v7437 = vsel %vm2544, %v7432, %v7436
  %v7439 = vshrl.u32 %v7243, 16
  %v7441 = vrot.slane %v7439, 4
  %v7442 = vshll.u32 %v7243, 16
  %v7444 = vrot.slane %v7442, 5
  %v7445 = vor.u32 %v7441, %v7444
  %v7446 = vrot.slane %v7445, 4
  %v7448 = vshll.u32 %v7244, 16
  %v7450 = vrot.slane %v7448, 5
  %v7451 = vsel %vm2544, %v7446, %v7450
  %v7452 = vshrl.u32 %v7244, 16
  %v7454 = vrot.slane %v7452, 4
  %v7455 = vor.u32 %v7454, %v7450
  %v7456 = vrot.slane %v7455, 4
  %v7458 = vshll.u32 %v7245, 16
  %v7460 = vrot.slane %v7458, 5
  %v7461 = vsel %vm2544, %v7456, %v7460
  %v7463 = vshrl.u32 %v7246, 16
  %v7465 = vrot.slane %v7463, 4
  %v7466 = vshll.u32 %v7246, 16
  %v7468 = vrot.slane %v7466, 5
  %v7469 = vor.u32 %v7465, %v7468
  %v7470 = vrot.slane %v7469, 4
  %v7472 = vshll.u32 %v7247, 16
  %v7474 = vrot.slane %v7472, 5
  %v7475 = vsel %vm2544, %v7470, %v7474
  %v7476 = vshrl.u32 %v7247, 16
  %v7478 = vrot.slane %v7476, 4
  %v7479 = vor.u32 %v7478, %v7474
  %v7480 = vrot.slane %v7479, 4
  %v7482 = vshll.u32 %v7248, 16
  %v7484 = vrot.slane %v7482, 5
  %v7485 = vsel %vm2544, %v7480, %v7484
  %v7487 = vshrl.u32 %v7249, 16
  %v7489 = vrot.slane %v7487, 4
  %v7490 = vshll.u32 %v7249, 16
  %v7492 = vrot.slane %v7490, 5
  %v7493 = vor.u32 %v7489, %v7492
  %v7494 = vrot.slane %v7493, 4
  %v7496 = vshll.u32 %v7250, 16
  %v7498 = vrot.slane %v7496, 5
  %v7499 = vsel %vm2544, %v7494, %v7498
  %v7500 = vshrl.u32 %v7250, 16
  %v7502 = vrot.slane %v7500, 4
  %v7503 = vor.u32 %v7502, %v7498
  %v7504 = vrot.slane %v7503, 4
  %v7506 = vshll.u32 %v7251, 16
  %v7508 = vrot.slane %v7506, 5
  %v7509 = vsel %vm2544, %v7504, %v7508
  %v7511 = vshrl.u32 %v7252, 16
  %v7513 = vrot.slane %v7511, 4
  %v7514 = vshll.u32 %v7252, 16
  %v7516 = vrot.slane %v7514, 5
  %v7517 = vor.u32 %v7513, %v7516
  %v7518 = vrot.slane %v7517, 4
  %v7520 = vshll.u32 %v7253, 16
  %v7522 = vrot.slane %v7520, 5
  %v7523 = vsel %vm2544, %v7518, %v7522
  %v7524 = vshrl.u32 %v7253, 16
  %v7526 = vrot.slane %v7524, 4
  %v7527 = vor.u32 %v7526, %v7522
  %v7528 = vrot.slane %v7527, 4
  %v7530 = vshll.u32 %v7254, 16
  %v7532 = vrot.slane %v7530, 5
  %v7533 = vsel %vm2544, %v7528, %v7532
  %v7535 = vshrl.u32 %v7255, 16
  %v7537 = vrot.slane %v7535, 4
  %v7538 = vshll.u32 %v7255, 16
  %v7540 = vrot.slane %v7538, 5
  %v7541 = vor.u32 %v7537, %v7540
  %v7542 = vrot.slane %v7541, 4
  %v7544 = vshll.u32 %v7256, 16
  %v7546 = vrot.slane %v7544, 5
  %v7547 = vsel %vm2544, %v7542, %v7546
  %v7548 = vshrl.u32 %v7256, 16
  %v7550 = vrot.slane %v7548, 4
  %v7551 = vor.u32 %v7550, %v7546
  %v7552 = vrot.slane %v7551, 4
  %v7554 = vshll.u32 %v7257, 16
  %v7556 = vrot.slane %v7554, 5
  %v7557 = vsel %vm2544, %v7552, %v7556
  %v7559 = vshrl.u32 %v7258, 16
  %v7561 = vrot.slane %v7559, 4
  %v7562 = vshll.u32 %v7258, 16
  %v7564 = vrot.slane %v7562, 5
  %v7565 = vor.u32 %v7561, %v7564
  %v7566 = vrot.slane %v7565, 4
  %v7568 = vshll.u32 %v7259, 16
  %v7570 = vrot.slane %v7568, 5
  %v7571 = vsel %vm2544, %v7566, %v7570
  %v7572 = vshrl.u32 %v7259, 16
  %v7574 = vrot.slane %v7572, 4
  %v7575 = vor.u32 %v7574, %v7570
  %v7576 = vrot.slane %v7575, 4
  %v7578 = vshll.u32 %v7260, 16
  %v7580 = vrot.slane %v7578, 5
  %v7581 = vsel %vm2544, %v7576, %v7580
  %v7583 = vshrl.u32 %v7261, 16
  %v7585 = vrot.slane %v7583, 4
  %v7586 = vshll.u32 %v7261, 16
  %v7588 = vrot.slane %v7586, 5
  %v7589 = vor.u32 %v7585, %v7588
  %v7590 = vrot.slane %v7589, 4
  %v7592 = vshll.u32 %v7262, 16
  %v7594 = vrot.slane %v7592, 5
  %v7595 = vsel %vm2544, %v7590, %v7594
  %v7596 = vshrl.u32 %v7262, 16
  %v7598 = vrot.slane %v7596, 4
  %v7599 = vor.u32 %v7598, %v7594
  %v7600 = vrot.slane %v7599, 4
  %v7602 = vshll.u32 %v7263, 16
  %v7604 = vrot.slane %v7602, 5
  %v7605 = vsel %vm2544, %v7600, %v7604
  %v7607 = vshrl.u32 %v7264, 16
  %v7609 = vrot.slane %v7607, 4
  %v7610 = vshll.u32 %v7264, 16
  %v7612 = vrot.slane %v7610, 5
  %v7613 = vor.u32 %v7609, %v7612
  %v7614 = vrot.slane %v7613, 4
  %v7616 = vshll.u32 %v7265, 16
  %v7618 = vrot.slane %v7616, 5
  %v7619 = vsel %vm2544, %v7614, %v7618
  %v7620 = vshrl.u32 %v7265, 16
  %v7622 = vrot.slane %v7620, 4
  %v7623 = vor.u32 %v7622, %v7618
  %v7624 = vrot.slane %v7623, 4
  %v7626 = vshll.u32 %v7266, 16
  %v7628 = vrot.slane %v7626, 5
  %v7629 = vsel %vm2544, %v7624, %v7628
  %v7631 = vshrl.u32 %v7267, 16
  %v7633 = vrot.slane %v7631, 4
  %v7634 = vshll.u32 %v7267, 16
  %v7636 = vrot.slane %v7634, 5
  %v7637 = vor.u32 %v7633, %v7636
  %v7638 = vrot.slane %v7637, 4
  %v7640 = vshll.u32 %v7268, 16
  %v7642 = vrot.slane %v7640, 5
  %v7643 = vsel %vm2544, %v7638, %v7642
  %v7644 = vshrl.u32 %v7268, 16
  %v7646 = vrot.slane %v7644, 4
  %v7647 = vor.u32 %v7646, %v7642
  %v7648 = vrot.slane %v7647, 4
  %v7650 = vshll.u32 %v7269, 16
  %v7652 = vrot.slane %v7650, 5
  %v7653 = vsel %vm2544, %v7648, %v7652
  %v7654 = vunpack.c.l.b16 %v7283
  %v7655 = vunpack.c.l.b16 %v7293
  %v7656 = vunpack.c.l.b16 %v7307
  %v7657 = vunpack.c.l.b16 %v7317
  %v7658 = vunpack.c.l.b16 %v7331
  %v7659 = vunpack.c.l.b16 %v7341
  %v7660 = vunpack.c.l.b16 %v7355
  %v7661 = vunpack.c.l.b16 %v7365
  %v7662 = vunpack.c.l.b16 %v7379
  %v7663 = vunpack.c.l.b16 %v7389
  %v7664 = vunpack.c.l.b16 %v7403
  %v7665 = vunpack.c.l.b16 %v7413
  %v7666 = vunpack.c.l.b16 %v7427
  %v7667 = vunpack.c.l.b16 %v7437
  %v7668 = vunpack.c.l.b16 %v7451
  %v7669 = vunpack.c.l.b16 %v7461
  %v7670 = vunpack.c.l.b16 %v7475
  %v7671 = vunpack.c.l.b16 %v7485
  %v7672 = vunpack.c.l.b16 %v7499
  %v7673 = vunpack.c.l.b16 %v7509
  %v7674 = vunpack.c.l.b16 %v7523
  %v7675 = vunpack.c.l.b16 %v7533
  %v7676 = vunpack.c.l.b16 %v7547
  %v7677 = vunpack.c.l.b16 %v7557
  %v7678 = vunpack.c.l.b16 %v7571
  %v7679 = vunpack.c.l.b16 %v7581
  %v7680 = vunpack.c.l.b16 %v7595
  %v7681 = vunpack.c.l.b16 %v7605
  %v7682 = vunpack.c.l.b16 %v7619
  %v7683 = vunpack.c.l.b16 %v7629
  %v7684 = vunpack.c.l.b16 %v7643
  %v7685 = vunpack.c.l.b16 %v7653
  %v7686 = vpack.c.b16 %v7655, %v7654
  %v7687 = vpack.c.b16 %v7657, %v7656
  %v7688 = vpack.c.b16 %v7659, %v7658
  %v7689 = vpack.c.b16 %v7661, %v7660
  %v7690 = vpack.c.b16 %v7663, %v7662
  %v7691 = vpack.c.b16 %v7665, %v7664
  %v7692 = vpack.c.b16 %v7667, %v7666
  %v7693 = vpack.c.b16 %v7669, %v7668
  %v7694 = vpack.c.b16 %v7671, %v7670
  %v7695 = vpack.c.b16 %v7673, %v7672
  %v7696 = vpack.c.b16 %v7675, %v7674
  %v7697 = vpack.c.b16 %v7677, %v7676
  %v7698 = vpack.c.b16 %v7679, %v7678
  %v7699 = vpack.c.b16 %v7681, %v7680
  %v7700 = vpack.c.b16 %v7683, %v7682
  %v7701 = vpack.c.b16 %v7685, %v7684
  %7718 = vst [vmem:[#allocation3 + $0x4b8] sm:$0xff] %v7686
  %7719 = vst [vmem:[#allocation3 + $0x500] sm:$0xff] %v7687
  %7720 = vst [vmem:[#allocation3 + $0x548] sm:$0xff] %v7688
  %7721 = vst [vmem:[#allocation3 + $0x590] sm:$0xff] %v7689
  %7722 = vst [vmem:[#allocation3 + $0x5d8] sm:$0xff] %v7690
  %7723 = vst [vmem:[#allocation3 + $0x620] sm:$0xff] %v7691
  %7724 = vst [vmem:[#allocation3 + $0x668] sm:$0xff] %v7692
  %7725 = vst [vmem:[#allocation3 + $0x6b0] sm:$0xff] %v7693
  %7726 = vst [vmem:[#allocation3 + $0x6f8] sm:$0xff] %v7694
  %7727 = vst [vmem:[#allocation3 + $0x740] sm:$0xff] %v7695
  %7728 = vst [vmem:[#allocation3 + $0x788] sm:$0xff] %v7696
  %7729 = vst [vmem:[#allocation3 + $0x7d0] sm:$0xff] %v7697
  %7730 = vst [vmem:[#allocation3 + $0x818] sm:$0xff] %v7698
  %7731 = vst [vmem:[#allocation3 + $0x860] sm:$0xff] %v7699
  %7732 = vst [vmem:[#allocation3 + $0x8a8] sm:$0xff] %v7700
  %7733 = vst [vmem:[#allocation3 + $0x8f0] sm:$0xff] %v7701
  %v7734 = vld [vmem:[%s7077] sm:$0xe]
  %v7735 = vld [vmem:[%s7077 + $0x4] sm:$0xf]
  %v7736 = vld [vmem:[%s7077 + $0x8] sm:$0x1]
  %v7737 = vld [vmem:[%s7077 + $0xc] sm:$0xe]
  %v7738 = vld [vmem:[%s7077 + $0x10] sm:$0xf]
  %v7739 = vld [vmem:[%s7077 + $0x14] sm:$0x1]
  %v7740 = vld [vmem:[%s7077 + $0x18] sm:$0xe]
  %v7741 = vld [vmem:[%s7077 + $0x1c] sm:$0xf]
  %v7742 = vld [vmem:[%s7077 + $0x20] sm:$0x1]
  %v7743 = vld [vmem:[%s7077 + $0x24] sm:$0xe]
  %v7744 = vld [vmem:[%s7077 + $0x28] sm:$0xf]
  %v7745 = vld [vmem:[%s7077 + $0x2c] sm:$0x1]
  %v7746 = vld [vmem:[%s7077 + $0x30] sm:$0xe]
  %v7747 = vld [vmem:[%s7077 + $0x34] sm:$0xf]
  %v7748 = vld [vmem:[%s7077 + $0x38] sm:$0x1]
  %v7749 = vld [vmem:[%s7077 + $0x3c] sm:$0xe]
  %v7750 = vld [vmem:[%s7077 + $0x40] sm:$0xf]
  %v7751 = vld [vmem:[%s7077 + $0x44] sm:$0x1]
  %v7752 = vld [vmem:[%s7077 + $0x48] sm:$0xe]
  %v7753 = vld [vmem:[%s7077 + $0x4c] sm:$0xf]
  %v7754 = vld [vmem:[%s7077 + $0x50] sm:$0x1]
  %v7755 = vld [vmem:[%s7077 + $0x54] sm:$0xe]
  %v7756 = vld [vmem:[%s7077 + $0x58] sm:$0xf]
  %v7757 = vld [vmem:[%s7077 + $0x5c] sm:$0x1]
  %v7758 = vld [vmem:[%s7077 + $0x60] sm:$0xe]
  %v7759 = vld [vmem:[%s7077 + $0x64] sm:$0xf]
  %v7760 = vld [vmem:[%s7077 + $0x68] sm:$0x1]
  %v7761 = vld [vmem:[%s7077 + $0x6c] sm:$0xe]
  %v7762 = vld [vmem:[%s7077 + $0x70] sm:$0xf]
  %v7763 = vld [vmem:[%s7077 + $0x74] sm:$0x1]
  %v7764 = vld [vmem:[%s7077 + $0x78] sm:$0xe]
  %v7765 = vld [vmem:[%s7077 + $0x7c] sm:$0xf]
  %v7766 = vld [vmem:[%s7077 + $0x80] sm:$0x1]
  %v7767 = vld [vmem:[%s7077 + $0x84] sm:$0xe]
  %v7768 = vld [vmem:[%s7077 + $0x88] sm:$0xf]
  %v7769 = vld [vmem:[%s7077 + $0x8c] sm:$0x1]
  %v7770 = vld [vmem:[%s7077 + $0x90] sm:$0xe]
  %v7771 = vld [vmem:[%s7077 + $0x94] sm:$0xf]
  %v7772 = vld [vmem:[%s7077 + $0x98] sm:$0x1]
  %v7773 = vld [vmem:[%s7077 + $0x9c] sm:$0xe]
  %v7774 = vld [vmem:[%s7077 + $0xa0] sm:$0xf]
  %v7775 = vld [vmem:[%s7077 + $0xa4] sm:$0x1]
  %v7776 = vld [vmem:[%s7077 + $0xa8] sm:$0xe]
  %v7777 = vld [vmem:[%s7077 + $0xac] sm:$0xf]
  %v7778 = vld [vmem:[%s7077 + $0xb0] sm:$0x1]
  %v7779 = vld [vmem:[%s7077 + $0xb4] sm:$0xe]
  %v7780 = vld [vmem:[%s7077 + $0xb8] sm:$0xf]
  %v7781 = vld [vmem:[%s7077 + $0xbc] sm:$0x1]
  %v7830 = vrot.slane %v7734, 5
  %v7831 = vrot.slane %v7830, 4
  %v7832 = vrot.slane %v7735, 5
  %v7833 = vsel %vm3107, %v7831, %v7832
  %v7834 = vrot.slane %v7832, 4
  %v7835 = vrot.slane %v7736, 5
  %v7836 = vsel %vm3107, %v7834, %v7835
  %v7837 = vrot.slane %v7737, 5
  %v7838 = vrot.slane %v7837, 4
  %v7839 = vrot.slane %v7738, 5
  %v7840 = vsel %vm3107, %v7838, %v7839
  %v7841 = vrot.slane %v7839, 4
  %v7842 = vrot.slane %v7739, 5
  %v7843 = vsel %vm3107, %v7841, %v7842
  %v7844 = vrot.slane %v7740, 5
  %v7845 = vrot.slane %v7844, 4
  %v7846 = vrot.slane %v7741, 5
  %v7847 = vsel %vm3107, %v7845, %v7846
  %v7848 = vrot.slane %v7846, 4
  %v7849 = vrot.slane %v7742, 5
  %v7850 = vsel %vm3107, %v7848, %v7849
  %v7851 = vrot.slane %v7743, 5
  %v7852 = vrot.slane %v7851, 4
  %v7853 = vrot.slane %v7744, 5
  %v7854 = vsel %vm3107, %v7852, %v7853
  %v7855 = vrot.slane %v7853, 4
  %v7856 = vrot.slane %v7745, 5
  %v7857 = vsel %vm3107, %v7855, %v7856
  %v7858 = vrot.slane %v7746, 5
  %v7859 = vrot.slane %v7858, 4
  %v7860 = vrot.slane %v7747, 5
  %v7861 = vsel %vm3107, %v7859, %v7860
  %v7862 = vrot.slane %v7860, 4
  %v7863 = vrot.slane %v7748, 5
  %v7864 = vsel %vm3107, %v7862, %v7863
  %v7865 = vrot.slane %v7749, 5
  %v7866 = vrot.slane %v7865, 4
  %v7867 = vrot.slane %v7750, 5
  %v7868 = vsel %vm3107, %v7866, %v7867
  %v7869 = vrot.slane %v7867, 4
  %v7870 = vrot.slane %v7751, 5
  %v7871 = vsel %vm3107, %v7869, %v7870
  %v7872 = vrot.slane %v7752, 5
  %v7873 = vrot.slane %v7872, 4
  %v7874 = vrot.slane %v7753, 5
  %v7875 = vsel %vm3107, %v7873, %v7874
  %v7876 = vrot.slane %v7874, 4
  %v7877 = vrot.slane %v7754, 5
  %v7878 = vsel %vm3107, %v7876, %v7877
  %v7879 = vrot.slane %v7755, 5
  %v7880 = vrot.slane %v7879, 4
  %v7881 = vrot.slane %v7756, 5
  %v7882 = vsel %vm3107, %v7880, %v7881
  %v7883 = vrot.slane %v7881, 4
  %v7884 = vrot.slane %v7757, 5
  %v7885 = vsel %vm3107, %v7883, %v7884
  %v7886 = vrot.slane %v7758, 5
  %v7887 = vrot.slane %v7886, 4
  %v7888 = vrot.slane %v7759, 5
  %v7889 = vsel %vm3107, %v7887, %v7888
  %v7890 = vrot.slane %v7888, 4
  %v7891 = vrot.slane %v7760, 5
  %v7892 = vsel %vm3107, %v7890, %v7891
  %v7893 = vrot.slane %v7761, 5
  %v7894 = vrot.slane %v7893, 4
  %v7895 = vrot.slane %v7762, 5
  %v7896 = vsel %vm3107, %v7894, %v7895
  %v7897 = vrot.slane %v7895, 4
  %v7898 = vrot.slane %v7763, 5
  %v7899 = vsel %vm3107, %v7897, %v7898
  %v7900 = vrot.slane %v7764, 5
  %v7901 = vrot.slane %v7900, 4
  %v7902 = vrot.slane %v7765, 5
  %v7903 = vsel %vm3107, %v7901, %v7902
  %v7904 = vrot.slane %v7902, 4
  %v7905 = vrot.slane %v7766, 5
  %v7906 = vsel %vm3107, %v7904, %v7905
  %v7907 = vrot.slane %v7767, 5
  %v7908 = vrot.slane %v7907, 4
  %v7909 = vrot.slane %v7768, 5
  %v7910 = vsel %vm3107, %v7908, %v7909
  %v7911 = vrot.slane %v7909, 4
  %v7912 = vrot.slane %v7769, 5
  %v7913 = vsel %vm3107, %v7911, %v7912
  %v7914 = vrot.slane %v7770, 5
  %v7915 = vrot.slane %v7914, 4
  %v7916 = vrot.slane %v7771, 5
  %v7917 = vsel %vm3107, %v7915, %v7916
  %v7918 = vrot.slane %v7916, 4
  %v7919 = vrot.slane %v7772, 5
  %v7920 = vsel %vm3107, %v7918, %v7919
  %v7921 = vrot.slane %v7773, 5
  %v7922 = vrot.slane %v7921, 4
  %v7923 = vrot.slane %v7774, 5
  %v7924 = vsel %vm3107, %v7922, %v7923
  %v7925 = vrot.slane %v7923, 4
  %v7926 = vrot.slane %v7775, 5
  %v7927 = vsel %vm3107, %v7925, %v7926
  %v7928 = vrot.slane %v7776, 5
  %v7929 = vrot.slane %v7928, 4
  %v7930 = vrot.slane %v7777, 5
  %v7931 = vsel %vm3107, %v7929, %v7930
  %v7932 = vrot.slane %v7930, 4
  %v7933 = vrot.slane %v7778, 5
  %v7934 = vsel %vm3107, %v7932, %v7933
  %v7935 = vrot.slane %v7779, 5
  %v7936 = vrot.slane %v7935, 4
  %v7937 = vrot.slane %v7780, 5
  %v7938 = vsel %vm3107, %v7936, %v7937
  %v7939 = vrot.slane %v7937, 4
  %v7940 = vrot.slane %v7781, 5
  %v7941 = vsel %vm3107, %v7939, %v7940
  %v7942 = vunpack.c.l.b16 %v7833
  %v7943 = vunpack.c.l.b16 %v7836
  %v7944 = vunpack.c.l.b16 %v7840
  %v7945 = vunpack.c.l.b16 %v7843
  %v7946 = vunpack.c.l.b16 %v7847
  %v7947 = vunpack.c.l.b16 %v7850
  %v7948 = vunpack.c.l.b16 %v7854
  %v7949 = vunpack.c.l.b16 %v7857
  %v7950 = vunpack.c.l.b16 %v7861
  %v7951 = vunpack.c.l.b16 %v7864
  %v7952 = vunpack.c.l.b16 %v7868
  %v7953 = vunpack.c.l.b16 %v7871
  %v7954 = vunpack.c.l.b16 %v7875
  %v7955 = vunpack.c.l.b16 %v7878
  %v7956 = vunpack.c.l.b16 %v7882
  %v7957 = vunpack.c.l.b16 %v7885
  %v7958 = vunpack.c.l.b16 %v7889
  %v7959 = vunpack.c.l.b16 %v7892
  %v7960 = vunpack.c.l.b16 %v7896
  %v7961 = vunpack.c.l.b16 %v7899
  %v7962 = vunpack.c.l.b16 %v7903
  %v7963 = vunpack.c.l.b16 %v7906
  %v7964 = vunpack.c.l.b16 %v7910
  %v7965 = vunpack.c.l.b16 %v7913
  %v7966 = vunpack.c.l.b16 %v7917
  %v7967 = vunpack.c.l.b16 %v7920
  %v7968 = vunpack.c.l.b16 %v7924
  %v7969 = vunpack.c.l.b16 %v7927
  %v7970 = vunpack.c.l.b16 %v7931
  %v7971 = vunpack.c.l.b16 %v7934
  %v7972 = vunpack.c.l.b16 %v7938
  %v7973 = vunpack.c.l.b16 %v7941
  %v7974 = vpack.c.b16 %v7943, %v7942
  %v7975 = vpack.c.b16 %v7945, %v7944
  %v7976 = vpack.c.b16 %v7947, %v7946
  %v7977 = vpack.c.b16 %v7949, %v7948
  %v7978 = vpack.c.b16 %v7951, %v7950
  %v7979 = vpack.c.b16 %v7953, %v7952
  %v7980 = vpack.c.b16 %v7955, %v7954
  %v7981 = vpack.c.b16 %v7957, %v7956
  %v7982 = vpack.c.b16 %v7959, %v7958
  %v7983 = vpack.c.b16 %v7961, %v7960
  %v7984 = vpack.c.b16 %v7963, %v7962
  %v7985 = vpack.c.b16 %v7965, %v7964
  %v7986 = vpack.c.b16 %v7967, %v7966
  %v7987 = vpack.c.b16 %v7969, %v7968
  %v7988 = vpack.c.b16 %v7971, %v7970
  %v7989 = vpack.c.b16 %v7973, %v7972
  %8006 = vst [vmem:[#allocation3 + $0x4c0] sm:$0xff] %v7974
  %8007 = vst [vmem:[#allocation3 + $0x508] sm:$0xff] %v7975
  %8008 = vst [vmem:[#allocation3 + $0x550] sm:$0xff] %v7976
  %8009 = vst [vmem:[#allocation3 + $0x598] sm:$0xff] %v7977
  %8010 = vst [vmem:[#allocation3 + $0x5e0] sm:$0xff] %v7978
  %8011 = vst [vmem:[#allocation3 + $0x628] sm:$0xff] %v7979
  %8012 = vst [vmem:[#allocation3 + $0x670] sm:$0xff] %v7980
  %8013 = vst [vmem:[#allocation3 + $0x6b8] sm:$0xff] %v7981
  %8014 = vst [vmem:[#allocation3 + $0x700] sm:$0xff] %v7982
  %8015 = vst [vmem:[#allocation3 + $0x748] sm:$0xff] %v7983
  %8016 = vst [vmem:[#allocation3 + $0x790] sm:$0xff] %v7984
  %8017 = vst [vmem:[#allocation3 + $0x7d8] sm:$0xff] %v7985
  %8018 = vst [vmem:[#allocation3 + $0x820] sm:$0xff] %v7986
  %8019 = vst [vmem:[#allocation3 + $0x868] sm:$0xff] %v7987
  %8020 = vst [vmem:[#allocation3 + $0x8b0] sm:$0xff] %v7988
  %8021 = vst [vmem:[#allocation3 + $0x8f8] sm:$0xff] %v7989
  %v8022 = vld [vmem:[#allocation3] sm:$0xff]
  %v8023 = vld [vmem:[#allocation3 + $0x8] sm:$0xff]
  %v8024 = vld [vmem:[#allocation3 + $0x10] sm:$0xff]
  %v8025 = vld [vmem:[#allocation3 + $0x18] sm:$0xff]
  %v8026 = vld [vmem:[#allocation3 + $0x20] sm:$0xff]
  %v8027 = vld [vmem:[#allocation3 + $0x28] sm:$0xff]
  %v8028 = vld [vmem:[#allocation3 + $0x30] sm:$0xff]
  %v8029 = vld [vmem:[#allocation3 + $0x38] sm:$0xff]
  %v8030 = vld [vmem:[#allocation3 + $0x40] sm:$0xff]
  %v8031 = vld [vmem:[#allocation3 + $0x48] sm:$0xff]
  %v8032 = vld [vmem:[#allocation3 + $0x50] sm:$0xff]
  %v8033 = vld [vmem:[#allocation3 + $0x58] sm:$0xff]
  %v8034 = vld [vmem:[#allocation3 + $0x60] sm:$0xff]
  %v8035 = vld [vmem:[#allocation3 + $0x68] sm:$0xff]
  %v8036 = vld [vmem:[#allocation3 + $0x70] sm:$0xff]
  %v8037 = vld [vmem:[#allocation3 + $0x78] sm:$0xff]
  %v8038 = vld [vmem:[#allocation3 + $0x80] sm:$0xff]
  %v8039 = vld [vmem:[#allocation3 + $0x88] sm:$0xff]
  %v8040 = vld [vmem:[#allocation3 + $0x90] sm:$0xff]
  %v8041 = vld [vmem:[#allocation3 + $0x98] sm:$0xff]
  %v8042 = vld [vmem:[#allocation3 + $0xa0] sm:$0xff]
  %v8043 = vld [vmem:[#allocation3 + $0xa8] sm:$0xff]
  %v8044 = vld [vmem:[#allocation3 + $0xb0] sm:$0xff]
  %v8045 = vld [vmem:[#allocation3 + $0xb8] sm:$0xff]
  %v8046 = vld [vmem:[#allocation3 + $0xc0] sm:$0xff]
  %v8047 = vld [vmem:[#allocation3 + $0xc8] sm:$0xff]
  %v8048 = vld [vmem:[#allocation3 + $0xd0] sm:$0xff]
  %v8049 = vld [vmem:[#allocation3 + $0xd8] sm:$0xff]
  %v8050 = vld [vmem:[#allocation3 + $0xe0] sm:$0xff]
  %v8051 = vld [vmem:[#allocation3 + $0xe8] sm:$0xff]
  %v8052 = vld [vmem:[#allocation3 + $0xf0] sm:$0xff]
  %v8053 = vld [vmem:[#allocation3 + $0xf8] sm:$0xff]
  %v8054 = vld [vmem:[#allocation3 + $0x100] sm:$0xff]
  %v8055 = vld [vmem:[#allocation3 + $0x108] sm:$0xff]
  %v8056 = vld [vmem:[#allocation3 + $0x110] sm:$0xff]
  %v8057 = vld [vmem:[#allocation3 + $0x118] sm:$0xff]
  %v8058 = vld [vmem:[#allocation3 + $0x120] sm:$0xff]
  %v8059 = vld [vmem:[#allocation3 + $0x128] sm:$0xff]
  %v8060 = vld [vmem:[#allocation3 + $0x130] sm:$0xff]
  %v8061 = vld [vmem:[#allocation3 + $0x138] sm:$0xff]
  %v8062 = vld [vmem:[#allocation3 + $0x140] sm:$0xff]
  %v8063 = vld [vmem:[#allocation3 + $0x148] sm:$0xff]
  %v8064 = vld [vmem:[#allocation3 + $0x150] sm:$0xff]
  %v8065 = vld [vmem:[#allocation3 + $0x158] sm:$0xff]
  %v8066 = vld [vmem:[#allocation3 + $0x160] sm:$0xff]
  %v8067 = vld [vmem:[#allocation3 + $0x168] sm:$0xff]
  %v8068 = vld [vmem:[#allocation3 + $0x170] sm:$0xff]
  %v8069 = vld [vmem:[#allocation3 + $0x178] sm:$0xff]
  %v8070 = vld [vmem:[#allocation3 + $0x180] sm:$0xff]
  %v8071 = vld [vmem:[#allocation3 + $0x188] sm:$0xff]
  %v8072 = vld [vmem:[#allocation3 + $0x190] sm:$0xff]
  %v8073 = vld [vmem:[#allocation3 + $0x198] sm:$0xff]
  %v8074 = vld [vmem:[#allocation3 + $0x1a0] sm:$0xff]
  %v8075 = vld [vmem:[#allocation3 + $0x1a8] sm:$0xff]
  %v8076 = vld [vmem:[#allocation3 + $0x1b0] sm:$0xff]
  %v8077 = vld [vmem:[#allocation3 + $0x1b8] sm:$0xff]
  %v8078 = vld [vmem:[#allocation3 + $0x1c0] sm:$0xff]
  %v8079 = vld [vmem:[#allocation3 + $0x1c8] sm:$0xff]
  %v8080 = vld [vmem:[#allocation3 + $0x1d0] sm:$0xff]
  %v8081 = vld [vmem:[#allocation3 + $0x1d8] sm:$0xff]
  %v8082 = vld [vmem:[#allocation3 + $0x1e0] sm:$0xff]
  %v8083 = vld [vmem:[#allocation3 + $0x1e8] sm:$0xff]
  %v8084 = vld [vmem:[#allocation3 + $0x1f0] sm:$0xff]
  %v8085 = vld [vmem:[#allocation3 + $0x1f8] sm:$0xff]
  %v8086 = vld [vmem:[#allocation3 + $0x200] sm:$0xff]
  %v8087 = vld [vmem:[#allocation3 + $0x208] sm:$0xff]
  %v8088 = vld [vmem:[#allocation3 + $0x210] sm:$0xff]
  %v8089 = vld [vmem:[#allocation3 + $0x218] sm:$0xff]
  %v8090 = vld [vmem:[#allocation3 + $0x220] sm:$0xff]
  %v8091 = vld [vmem:[#allocation3 + $0x228] sm:$0xff]
  %v8092 = vld [vmem:[#allocation3 + $0x230] sm:$0xff]
  %v8093 = vld [vmem:[#allocation3 + $0x238] sm:$0xff]
  %v8094 = vld [vmem:[#allocation3 + $0x240] sm:$0xff]
  %v8095 = vld [vmem:[#allocation3 + $0x248] sm:$0xff]
  %v8096 = vld [vmem:[#allocation3 + $0x250] sm:$0xff]
  %v8097 = vld [vmem:[#allocation3 + $0x258] sm:$0xff]
  %v8098 = vld [vmem:[#allocation3 + $0x260] sm:$0xff]
  %v8099 = vld [vmem:[#allocation3 + $0x268] sm:$0xff]
  %v8100 = vld [vmem:[#allocation3 + $0x270] sm:$0xff]
  %v8101 = vld [vmem:[#allocation3 + $0x278] sm:$0xff]
  %v8102 = vld [vmem:[#allocation3 + $0x280] sm:$0xff]
  %v8103 = vld [vmem:[#allocation3 + $0x288] sm:$0xff]
  %v8104 = vld [vmem:[#allocation3 + $0x290] sm:$0xff]
  %v8105 = vld [vmem:[#allocation3 + $0x298] sm:$0xff]
  %v8106 = vld [vmem:[#allocation3 + $0x2a0] sm:$0xff]
  %v8107 = vld [vmem:[#allocation3 + $0x2a8] sm:$0xff]
  %v8108 = vld [vmem:[#allocation3 + $0x2b0] sm:$0xff]
  %v8109 = vld [vmem:[#allocation3 + $0x2b8] sm:$0xff]
  %v8110 = vld [vmem:[#allocation3 + $0x2c0] sm:$0xff]
  %v8111 = vld [vmem:[#allocation3 + $0x2c8] sm:$0xff]
  %v8112 = vld [vmem:[#allocation3 + $0x2d0] sm:$0xff]
  %v8113 = vld [vmem:[#allocation3 + $0x2d8] sm:$0xff]
  %v8114 = vld [vmem:[#allocation3 + $0x2e0] sm:$0xff]
  %v8115 = vld [vmem:[#allocation3 + $0x2e8] sm:$0xff]
  %v8116 = vld [vmem:[#allocation3 + $0x2f0] sm:$0xff]
  %v8117 = vld [vmem:[#allocation3 + $0x2f8] sm:$0xff]
  %v8118 = vld [vmem:[#allocation3 + $0x300] sm:$0xff]
  %v8119 = vld [vmem:[#allocation3 + $0x308] sm:$0xff]
  %v8120 = vld [vmem:[#allocation3 + $0x310] sm:$0xff]
  %v8121 = vld [vmem:[#allocation3 + $0x318] sm:$0xff]
  %v8122 = vld [vmem:[#allocation3 + $0x320] sm:$0xff]
  %v8123 = vld [vmem:[#allocation3 + $0x328] sm:$0xff]
  %v8124 = vld [vmem:[#allocation3 + $0x330] sm:$0xff]
  %v8125 = vld [vmem:[#allocation3 + $0x338] sm:$0xff]
  %v8126 = vld [vmem:[#allocation3 + $0x340] sm:$0xff]
  %v8127 = vld [vmem:[#allocation3 + $0x348] sm:$0xff]
  %v8128 = vld [vmem:[#allocation3 + $0x350] sm:$0xff]
  %v8129 = vld [vmem:[#allocation3 + $0x358] sm:$0xff]
  %v8130 = vld [vmem:[#allocation3 + $0x360] sm:$0xff]
  %v8131 = vld [vmem:[#allocation3 + $0x368] sm:$0xff]
  %v8132 = vld [vmem:[#allocation3 + $0x370] sm:$0xff]
  %v8133 = vld [vmem:[#allocation3 + $0x378] sm:$0xff]
  %v8134 = vld [vmem:[#allocation3 + $0x380] sm:$0xff]
  %v8135 = vld [vmem:[#allocation3 + $0x388] sm:$0xff]
  %v8136 = vld [vmem:[#allocation3 + $0x390] sm:$0xff]
  %v8137 = vld [vmem:[#allocation3 + $0x398] sm:$0xff]
  %v8138 = vld [vmem:[#allocation3 + $0x3a0] sm:$0xff]
  %v8139 = vld [vmem:[#allocation3 + $0x3a8] sm:$0xff]
  %v8140 = vld [vmem:[#allocation3 + $0x3b0] sm:$0xff]
  %v8141 = vld [vmem:[#allocation3 + $0x3b8] sm:$0xff]
  %v8142 = vld [vmem:[#allocation3 + $0x3c0] sm:$0xff]
  %v8143 = vld [vmem:[#allocation3 + $0x3c8] sm:$0xff]
  %v8144 = vld [vmem:[#allocation3 + $0x3d0] sm:$0xff]
  %v8145 = vld [vmem:[#allocation3 + $0x3d8] sm:$0xff]
  %v8146 = vld [vmem:[#allocation3 + $0x3e0] sm:$0xff]
  %v8147 = vld [vmem:[#allocation3 + $0x3e8] sm:$0xff]
  %v8148 = vld [vmem:[#allocation3 + $0x3f0] sm:$0xff]
  %v8149 = vld [vmem:[#allocation3 + $0x3f8] sm:$0xff]
  %v8150 = vld [vmem:[#allocation3 + $0x400] sm:$0xff]
  %v8151 = vld [vmem:[#allocation3 + $0x408] sm:$0xff]
  %v8152 = vld [vmem:[#allocation3 + $0x410] sm:$0xff]
  %v8153 = vld [vmem:[#allocation3 + $0x418] sm:$0xff]
  %v8154 = vld [vmem:[#allocation3 + $0x420] sm:$0xff]
  %v8155 = vld [vmem:[#allocation3 + $0x428] sm:$0xff]
  %v8156 = vld [vmem:[#allocation3 + $0x430] sm:$0xff]
  %v8157 = vld [vmem:[#allocation3 + $0x438] sm:$0xff]
  %v8158 = vld [vmem:[#allocation3 + $0x440] sm:$0xff]
  %v8159 = vld [vmem:[#allocation3 + $0x448] sm:$0xff]
  %v8160 = vld [vmem:[#allocation3 + $0x450] sm:$0xff]
  %v8161 = vld [vmem:[#allocation3 + $0x458] sm:$0xff]
  %v8162 = vld [vmem:[#allocation3 + $0x460] sm:$0xff]
  %v8163 = vld [vmem:[#allocation3 + $0x468] sm:$0xff]
  %v8164 = vld [vmem:[#allocation3 + $0x470] sm:$0xff]
  %v8165 = vld [vmem:[#allocation3 + $0x478] sm:$0xff]
  %v8166 = vld [vmem:[#allocation3 + $0x480] sm:$0xff]
  %v8167 = vld [vmem:[#allocation3 + $0x488] sm:$0xff]
  %v8168 = vld [vmem:[#allocation3 + $0x490] sm:$0xff]
  %v8169 = vld [vmem:[#allocation3 + $0x498] sm:$0xff]
  %v8170 = vld [vmem:[#allocation3 + $0x4a0] sm:$0xff]
  %v8171 = vld [vmem:[#allocation3 + $0x4a8] sm:$0xff]
  %v8172 = vld [vmem:[#allocation3 + $0x4b0] sm:$0xff]
  %v8173 = vld [vmem:[#allocation3 + $0x4b8] sm:$0xff]
  %v8174 = vld [vmem:[#allocation3 + $0x4c0] sm:$0xff]
  %v8175 = vld [vmem:[#allocation3 + $0x4c8] sm:$0xff]
  %v8176 = vld [vmem:[#allocation3 + $0x4d0] sm:$0xff]
  %v8177 = vld [vmem:[#allocation3 + $0x4d8] sm:$0xff]
  %v8178 = vld [vmem:[#allocation3 + $0x4e0] sm:$0xff]
  %v8179 = vld [vmem:[#allocation3 + $0x4e8] sm:$0xff]
  %v8180 = vld [vmem:[#allocation3 + $0x4f0] sm:$0xff]
  %v8181 = vld [vmem:[#allocation3 + $0x4f8] sm:$0xff]
  %v8182 = vld [vmem:[#allocation3 + $0x500] sm:$0xff]
  %v8183 = vld [vmem:[#allocation3 + $0x508] sm:$0xff]
  %v8184 = vld [vmem:[#allocation3 + $0x510] sm:$0xff]
  %v8185 = vld [vmem:[#allocation3 + $0x518] sm:$0xff]
  %v8186 = vld [vmem:[#allocation3 + $0x520] sm:$0xff]
  %v8187 = vld [vmem:[#allocation3 + $0x528] sm:$0xff]
  %v8188 = vld [vmem:[#allocation3 + $0x530] sm:$0xff]
  %v8189 = vld [vmem:[#allocation3 + $0x538] sm:$0xff]
  %v8190 = vld [vmem:[#allocation3 + $0x540] sm:$0xff]
  %v8191 = vld [vmem:[#allocation3 + $0x548] sm:$0xff]
  %v8192 = vld [vmem:[#allocation3 + $0x550] sm:$0xff]
  %v8193 = vld [vmem:[#allocation3 + $0x558] sm:$0xff]
  %v8194 = vld [vmem:[#allocation3 + $0x560] sm:$0xff]
  %v8195 = vld [vmem:[#allocation3 + $0x568] sm:$0xff]
  %v8196 = vld [vmem:[#allocation3 + $0x570] sm:$0xff]
  %v8197 = vld [vmem:[#allocation3 + $0x578] sm:$0xff]
  %v8198 = vld [vmem:[#allocation3 + $0x580] sm:$0xff]
  %v8199 = vld [vmem:[#allocation3 + $0x588] sm:$0xff]
  %v8200 = vld [vmem:[#allocation3 + $0x590] sm:$0xff]
  %v8201 = vld [vmem:[#allocation3 + $0x598] sm:$0xff]
  %v8202 = vld [vmem:[#allocation3 + $0x5a0] sm:$0xff]
  %v8203 = vld [vmem:[#allocation3 + $0x5a8] sm:$0xff]
  %v8204 = vld [vmem:[#allocation3 + $0x5b0] sm:$0xff]
  %v8205 = vld [vmem:[#allocation3 + $0x5b8] sm:$0xff]
  %v8206 = vld [vmem:[#allocation3 + $0x5c0] sm:$0xff]
  %v8207 = vld [vmem:[#allocation3 + $0x5c8] sm:$0xff]
  %v8208 = vld [vmem:[#allocation3 + $0x5d0] sm:$0xff]
  %v8209 = vld [vmem:[#allocation3 + $0x5d8] sm:$0xff]
  %v8210 = vld [vmem:[#allocation3 + $0x5e0] sm:$0xff]
  %v8211 = vld [vmem:[#allocation3 + $0x5e8] sm:$0xff]
  %v8212 = vld [vmem:[#allocation3 + $0x5f0] sm:$0xff]
  %v8213 = vld [vmem:[#allocation3 + $0x5f8] sm:$0xff]
  %v8214 = vld [vmem:[#allocation3 + $0x600] sm:$0xff]
  %v8215 = vld [vmem:[#allocation3 + $0x608] sm:$0xff]
  %v8216 = vld [vmem:[#allocation3 + $0x610] sm:$0xff]
  %v8217 = vld [vmem:[#allocation3 + $0x618] sm:$0xff]
  %v8218 = vld [vmem:[#allocation3 + $0x620] sm:$0xff]
  %v8219 = vld [vmem:[#allocation3 + $0x628] sm:$0xff]
  %v8220 = vld [vmem:[#allocation3 + $0x630] sm:$0xff]
  %v8221 = vld [vmem:[#allocation3 + $0x638] sm:$0xff]
  %v8222 = vld [vmem:[#allocation3 + $0x640] sm:$0xff]
  %v8223 = vld [vmem:[#allocation3 + $0x648] sm:$0xff]
  %v8224 = vld [vmem:[#allocation3 + $0x650] sm:$0xff]
  %v8225 = vld [vmem:[#allocation3 + $0x658] sm:$0xff]
  %v8226 = vld [vmem:[#allocation3 + $0x660] sm:$0xff]
  %v8227 = vld [vmem:[#allocation3 + $0x668] sm:$0xff]
  %v8228 = vld [vmem:[#allocation3 + $0x670] sm:$0xff]
  %v8229 = vld [vmem:[#allocation3 + $0x678] sm:$0xff]
  %v8230 = vld [vmem:[#allocation3 + $0x680] sm:$0xff]
  %v8231 = vld [vmem:[#allocation3 + $0x688] sm:$0xff]
  %v8232 = vld [vmem:[#allocation3 + $0x690] sm:$0xff]
  %v8233 = vld [vmem:[#allocation3 + $0x698] sm:$0xff]
  %v8234 = vld [vmem:[#allocation3 + $0x6a0] sm:$0xff]
  %v8235 = vld [vmem:[#allocation3 + $0x6a8] sm:$0xff]
  %v8236 = vld [vmem:[#allocation3 + $0x6b0] sm:$0xff]
  %v8237 = vld [vmem:[#allocation3 + $0x6b8] sm:$0xff]
  %v8238 = vld [vmem:[#allocation3 + $0x6c0] sm:$0xff]
  %v8239 = vld [vmem:[#allocation3 + $0x6c8] sm:$0xff]
  %v8240 = vld [vmem:[#allocation3 + $0x6d0] sm:$0xff]
  %v8241 = vld [vmem:[#allocation3 + $0x6d8] sm:$0xff]
  %v8242 = vld [vmem:[#allocation3 + $0x6e0] sm:$0xff]
  %v8243 = vld [vmem:[#allocation3 + $0x6e8] sm:$0xff]
  %v8244 = vld [vmem:[#allocation3 + $0x6f0] sm:$0xff]
  %v8245 = vld [vmem:[#allocation3 + $0x6f8] sm:$0xff]
  %v8246 = vld [vmem:[#allocation3 + $0x700] sm:$0xff]
  %v8247 = vld [vmem:[#allocation3 + $0x708] sm:$0xff]
  %v8248 = vld [vmem:[#allocation3 + $0x710] sm:$0xff]
  %v8249 = vld [vmem:[#allocation3 + $0x718] sm:$0xff]
  %v8250 = vld [vmem:[#allocation3 + $0x720] sm:$0xff]
  %v8251 = vld [vmem:[#allocation3 + $0x728] sm:$0xff]
  %v8252 = vld [vmem:[#allocation3 + $0x730] sm:$0xff]
  %v8253 = vld [vmem:[#allocation3 + $0x738] sm:$0xff]
  %v8254 = vld [vmem:[#allocation3 + $0x740] sm:$0xff]
  %v8255 = vld [vmem:[#allocation3 + $0x748] sm:$0xff]
  %v8256 = vld [vmem:[#allocation3 + $0x750] sm:$0xff]
  %v8257 = vld [vmem:[#allocation3 + $0x758] sm:$0xff]
  %v8258 = vld [vmem:[#allocation3 + $0x760] sm:$0xff]
  %v8259 = vld [vmem:[#allocation3 + $0x768] sm:$0xff]
  %v8260 = vld [vmem:[#allocation3 + $0x770] sm:$0xff]
  %v8261 = vld [vmem:[#allocation3 + $0x778] sm:$0xff]
  %v8262 = vld [vmem:[#allocation3 + $0x780] sm:$0xff]
  %v8263 = vld [vmem:[#allocation3 + $0x788] sm:$0xff]
  %v8264 = vld [vmem:[#allocation3 + $0x790] sm:$0xff]
  %v8265 = vld [vmem:[#allocation3 + $0x798] sm:$0xff]
  %v8266 = vld [vmem:[#allocation3 + $0x7a0] sm:$0xff]
  %v8267 = vld [vmem:[#allocation3 + $0x7a8] sm:$0xff]
  %v8268 = vld [vmem:[#allocation3 + $0x7b0] sm:$0xff]
  %v8269 = vld [vmem:[#allocation3 + $0x7b8] sm:$0xff]
  %v8270 = vld [vmem:[#allocation3 + $0x7c0] sm:$0xff]
  %v8271 = vld [vmem:[#allocation3 + $0x7c8] sm:$0xff]
  %v8272 = vld [vmem:[#allocation3 + $0x7d0] sm:$0xff]
  %v8273 = vld [vmem:[#allocation3 + $0x7d8] sm:$0xff]
  %v8274 = vld [vmem:[#allocation3 + $0x7e0] sm:$0xff]
  %v8275 = vld [vmem:[#allocation3 + $0x7e8] sm:$0xff]
  %v8276 = vld [vmem:[#allocation3 + $0x7f0] sm:$0xff]
  %v8277 = vld [vmem:[#allocation3 + $0x7f8] sm:$0xff]
  %v8278 = vld [vmem:[#allocation3 + $0x800] sm:$0xff]
  %v8279 = vld [vmem:[#allocation3 + $0x808] sm:$0xff]
  %v8280 = vld [vmem:[#allocation3 + $0x810] sm:$0xff]
  %v8281 = vld [vmem:[#allocation3 + $0x818] sm:$0xff]
  %v8282 = vld [vmem:[#allocation3 + $0x820] sm:$0xff]
  %v8283 = vld [vmem:[#allocation3 + $0x828] sm:$0xff]
  %v8284 = vld [vmem:[#allocation3 + $0x830] sm:$0xff]
  %v8285 = vld [vmem:[#allocation3 + $0x838] sm:$0xff]
  %v8286 = vld [vmem:[#allocation3 + $0x840] sm:$0xff]
  %v8287 = vld [vmem:[#allocation3 + $0x848] sm:$0xff]
  %v8288 = vld [vmem:[#allocation3 + $0x850] sm:$0xff]
  %v8289 = vld [vmem:[#allocation3 + $0x858] sm:$0xff]
  %v8290 = vld [vmem:[#allocation3 + $0x860] sm:$0xff]
  %v8291 = vld [vmem:[#allocation3 + $0x868] sm:$0xff]
  %v8292 = vld [vmem:[#allocation3 + $0x870] sm:$0xff]
  %v8293 = vld [vmem:[#allocation3 + $0x878] sm:$0xff]
  %v8294 = vld [vmem:[#allocation3 + $0x880] sm:$0xff]
  %v8295 = vld [vmem:[#allocation3 + $0x888] sm:$0xff]
  %v8296 = vld [vmem:[#allocation3 + $0x890] sm:$0xff]
  %v8297 = vld [vmem:[#allocation3 + $0x898] sm:$0xff]
  %v8298 = vld [vmem:[#allocation3 + $0x8a0] sm:$0xff]
  %v8299 = vld [vmem:[#allocation3 + $0x8a8] sm:$0xff]
  %v8300 = vld [vmem:[#allocation3 + $0x8b0] sm:$0xff]
  %v8301 = vld [vmem:[#allocation3 + $0x8b8] sm:$0xff]
  %v8302 = vld [vmem:[#allocation3 + $0x8c0] sm:$0xff]
  %v8303 = vld [vmem:[#allocation3 + $0x8c8] sm:$0xff]
  %v8304 = vld [vmem:[#allocation3 + $0x8d0] sm:$0xff]
  %v8305 = vld [vmem:[#allocation3 + $0x8d8] sm:$0xff]
  %v8306 = vld [vmem:[#allocation3 + $0x8e0] sm:$0xff]
  %v8307 = vld [vmem:[#allocation3 + $0x8e8] sm:$0xff]
  %v8308 = vld [vmem:[#allocation3 + $0x8f0] sm:$0xff]
  %v8309 = vld [vmem:[#allocation3 + $0x8f8] sm:$0xff]
  %v8310 = vld [vmem:[%s4] sm:$0xf]
  %v8311 = vld [vmem:[%s4 + $0x4] sm:$0xf]
  %v8312 = vld [vmem:[%s4 + $0x8] sm:$0xf]
  %v8313 = vld [vmem:[%s4 + $0xc] sm:$0xf]
  %v8314 = vld [vmem:[%s4 + $0x10] sm:$0xf]
  %v8315 = vld [vmem:[%s4 + $0x14] sm:$0xf]
  %v8316 = vld [vmem:[%s4 + $0x18] sm:$0xf]
  %v8317 = vld [vmem:[%s4 + $0x1c] sm:$0xf]
  %v8318 = vld [vmem:[%s4 + $0x20] sm:$0xf]
  %v8319 = vld [vmem:[%s4 + $0x24] sm:$0xf]
  %v8320 = vld [vmem:[%s4 + $0x28] sm:$0xf]
  %v8321 = vld [vmem:[%s4 + $0x2c] sm:$0xf]
  %v8322 = vld [vmem:[%s4 + $0x30] sm:$0xf]
  %v8323 = vld [vmem:[%s4 + $0x34] sm:$0xf]
  %v8324 = vld [vmem:[%s4 + $0x38] sm:$0xf]
  %v8325 = vld [vmem:[%s4 + $0x3c] sm:$0xf]
  %v8326 = vld [vmem:[%s4 + $0x40] sm:$0xf]
  %v8327 = vld [vmem:[%s4 + $0x44] sm:$0xf]
  %v8328 = vld [vmem:[%s4 + $0x48] sm:$0xf]
  %v8329 = vld [vmem:[%s4 + $0x4c] sm:$0xf]
  %v8330 = vld [vmem:[%s4 + $0x50] sm:$0xf]
  %v8331 = vld [vmem:[%s4 + $0x54] sm:$0xf]
  %v8332 = vld [vmem:[%s4 + $0x58] sm:$0xf]
  %v8333 = vld [vmem:[%s4 + $0x5c] sm:$0xf]
  %v8334 = vld [vmem:[%s4 + $0x60] sm:$0xf]
  %v8335 = vld [vmem:[%s4 + $0x64] sm:$0xf]
  %v8336 = vld [vmem:[%s4 + $0x68] sm:$0xf]
  %v8337 = vld [vmem:[%s4 + $0x6c] sm:$0xf]
  %v8338 = vld [vmem:[%s4 + $0x70] sm:$0xf]
  %v8339 = vld [vmem:[%s4 + $0x74] sm:$0xf]
  %v8340 = vld [vmem:[%s4 + $0x78] sm:$0xf]
  %v8341 = vld [vmem:[%s4 + $0x7c] sm:$0xf]
  %v8342 = vld [vmem:[%s4 + $0x80] sm:$0xf]
  %v8343 = vld [vmem:[%s4 + $0x84] sm:$0xf]
  %v8344 = vld [vmem:[%s4 + $0x88] sm:$0xf]
  %v8345 = vld [vmem:[%s4 + $0x8c] sm:$0xf]
  %v8346 = vld [vmem:[%s4 + $0x90] sm:$0xf]
  %v8347 = vld [vmem:[%s4 + $0x94] sm:$0xf]
  %v8348 = vld [vmem:[%s4 + $0x98] sm:$0xf]
  %v8349 = vld [vmem:[%s4 + $0x9c] sm:$0xf]
  %v8350 = vld [vmem:[%s4 + $0xa0] sm:$0xf]
  %v8351 = vld [vmem:[%s4 + $0xa4] sm:$0xf]
  %v8352 = vld [vmem:[%s4 + $0xa8] sm:$0xf]
  %v8353 = vld [vmem:[%s4 + $0xac] sm:$0xf]
  %v8354 = vld [vmem:[%s4 + $0xb0] sm:$0xf]
  %v8355 = vld [vmem:[%s4 + $0xb4] sm:$0xf]
  %v8356 = vld [vmem:[%s4 + $0xb8] sm:$0xf]
  %v8357 = vld [vmem:[%s4 + $0xbc] sm:$0xf]
  %v8358 = vld [vmem:[%s4 + $0xc0] sm:$0xf]
  %v8359 = vld [vmem:[%s4 + $0xc4] sm:$0xf]
  %v8360 = vld [vmem:[%s4 + $0xc8] sm:$0xf]
  %v8361 = vld [vmem:[%s4 + $0xcc] sm:$0xf]
  %v8362 = vld [vmem:[%s4 + $0xd0] sm:$0xf]
  %v8363 = vld [vmem:[%s4 + $0xd4] sm:$0xf]
  %v8364 = vld [vmem:[%s4 + $0xd8] sm:$0xf]
  %v8365 = vld [vmem:[%s4 + $0xdc] sm:$0xf]
  %v8366 = vld [vmem:[%s4 + $0xe0] sm:$0xf]
  %v8367 = vld [vmem:[%s4 + $0xe4] sm:$0xf]
  %v8368 = vld [vmem:[%s4 + $0xe8] sm:$0xf]
  %v8369 = vld [vmem:[%s4 + $0xec] sm:$0xf]
  %v8370 = vld [vmem:[%s4 + $0xf0] sm:$0xf]
  %v8371 = vld [vmem:[%s4 + $0xf4] sm:$0xf]
  %v8372 = vld [vmem:[%s4 + $0xf8] sm:$0xf]
  %v8373 = vld [vmem:[%s4 + $0xfc] sm:$0xf]
  %v8374 = vld [vmem:[%s4 + $0x100] sm:$0xf]
  %v8375 = vld [vmem:[%s4 + $0x104] sm:$0xf]
  %v8376 = vld [vmem:[%s4 + $0x108] sm:$0xf]
  %v8377 = vld [vmem:[%s4 + $0x10c] sm:$0xf]
  %v8378 = vld [vmem:[%s4 + $0x110] sm:$0xf]
  %v8379 = vld [vmem:[%s4 + $0x114] sm:$0xf]
  %v8380 = vld [vmem:[%s4 + $0x118] sm:$0xf]
  %v8381 = vld [vmem:[%s4 + $0x11c] sm:$0xf]
  %v8382 = vld [vmem:[%s4 + $0x120] sm:$0xf]
  %v8383 = vld [vmem:[%s4 + $0x124] sm:$0xf]
  %v8384 = vld [vmem:[%s4 + $0x128] sm:$0xf]
  %v8385 = vld [vmem:[%s4 + $0x12c] sm:$0xf]
  %v8386 = vld [vmem:[%s4 + $0x130] sm:$0xf]
  %v8387 = vld [vmem:[%s4 + $0x134] sm:$0xf]
  %v8388 = vld [vmem:[%s4 + $0x138] sm:$0xf]
  %v8389 = vld [vmem:[%s4 + $0x13c] sm:$0xf]
  %v8390 = vld [vmem:[%s4 + $0x140] sm:$0xf]
  %v8391 = vld [vmem:[%s4 + $0x144] sm:$0xf]
  %v8392 = vld [vmem:[%s4 + $0x148] sm:$0xf]
  %v8393 = vld [vmem:[%s4 + $0x14c] sm:$0xf]
  %v8394 = vld [vmem:[%s4 + $0x150] sm:$0xf]
  %v8395 = vld [vmem:[%s4 + $0x154] sm:$0xf]
  %v8396 = vld [vmem:[%s4 + $0x158] sm:$0xf]
  %v8397 = vld [vmem:[%s4 + $0x15c] sm:$0xf]
  %v8398 = vld [vmem:[%s4 + $0x160] sm:$0xf]
  %v8399 = vld [vmem:[%s4 + $0x164] sm:$0xf]
  %v8400 = vld [vmem:[%s4 + $0x168] sm:$0xf]
  %v8401 = vld [vmem:[%s4 + $0x16c] sm:$0xf]
  %v8402 = vld [vmem:[%s4 + $0x170] sm:$0xf]
  %v8403 = vld [vmem:[%s4 + $0x174] sm:$0xf]
  %v8404 = vld [vmem:[%s4 + $0x178] sm:$0xf]
  %v8405 = vld [vmem:[%s4 + $0x17c] sm:$0xf]
  %v8406 = vld [vmem:[%s4 + $0x180] sm:$0xf]
  %v8407 = vld [vmem:[%s4 + $0x184] sm:$0xf]
  %v8408 = vld [vmem:[%s4 + $0x188] sm:$0xf]
  %v8409 = vld [vmem:[%s4 + $0x18c] sm:$0xf]
  %v8410 = vld [vmem:[%s4 + $0x190] sm:$0xf]
  %v8411 = vld [vmem:[%s4 + $0x194] sm:$0xf]
  %v8412 = vld [vmem:[%s4 + $0x198] sm:$0xf]
  %v8413 = vld [vmem:[%s4 + $0x19c] sm:$0xf]
  %v8414 = vld [vmem:[%s4 + $0x1a0] sm:$0xf]
  %v8415 = vld [vmem:[%s4 + $0x1a4] sm:$0xf]
  %v8416 = vld [vmem:[%s4 + $0x1a8] sm:$0xf]
  %v8417 = vld [vmem:[%s4 + $0x1ac] sm:$0xf]
  %v8418 = vld [vmem:[%s4 + $0x1b0] sm:$0xf]
  %v8419 = vld [vmem:[%s4 + $0x1b4] sm:$0xf]
  %v8420 = vld [vmem:[%s4 + $0x1b8] sm:$0xf]
  %v8421 = vld [vmem:[%s4 + $0x1bc] sm:$0xf]
  %v8422 = vld [vmem:[%s4 + $0x1c0] sm:$0xf]
  %v8423 = vld [vmem:[%s4 + $0x1c4] sm:$0xf]
  %v8424 = vld [vmem:[%s4 + $0x1c8] sm:$0xf]
  %v8425 = vld [vmem:[%s4 + $0x1cc] sm:$0xf]
  %v8426 = vld [vmem:[%s4 + $0x1d0] sm:$0xf]
  %v8427 = vld [vmem:[%s4 + $0x1d4] sm:$0xf]
  %v8428 = vld [vmem:[%s4 + $0x1d8] sm:$0xf]
  %v8429 = vld [vmem:[%s4 + $0x1dc] sm:$0xf]
  %v8430 = vld [vmem:[%s4 + $0x1e0] sm:$0xf]
  %v8431 = vld [vmem:[%s4 + $0x1e4] sm:$0xf]
  %v8432 = vld [vmem:[%s4 + $0x1e8] sm:$0xf]
  %v8433 = vld [vmem:[%s4 + $0x1ec] sm:$0xf]
  %v8434 = vld [vmem:[%s4 + $0x1f0] sm:$0xf]
  %v8435 = vld [vmem:[%s4 + $0x1f4] sm:$0xf]
  %v8436 = vld [vmem:[%s4 + $0x1f8] sm:$0xf]
  %v8437 = vld [vmem:[%s4 + $0x1fc] sm:$0xf]
  %v8438 = vld [vmem:[%s4 + $0x200] sm:$0xf]
  %v8439 = vld [vmem:[%s4 + $0x204] sm:$0xf]
  %v8440 = vld [vmem:[%s4 + $0x208] sm:$0xf]
  %v8441 = vld [vmem:[%s4 + $0x20c] sm:$0xf]
  %v8442 = vld [vmem:[%s4 + $0x210] sm:$0xf]
  %v8443 = vld [vmem:[%s4 + $0x214] sm:$0xf]
  %v8444 = vld [vmem:[%s4 + $0x218] sm:$0xf]
  %v8445 = vld [vmem:[%s4 + $0x21c] sm:$0xf]
  %v8446 = vld [vmem:[%s4 + $0x220] sm:$0xf]
  %v8447 = vld [vmem:[%s4 + $0x224] sm:$0xf]
  %v8448 = vld [vmem:[%s4 + $0x228] sm:$0xf]
  %v8449 = vld [vmem:[%s4 + $0x22c] sm:$0xf]
  %v8450 = vld [vmem:[%s4 + $0x230] sm:$0xf]
  %v8451 = vld [vmem:[%s4 + $0x234] sm:$0xf]
  %v8452 = vld [vmem:[%s4 + $0x238] sm:$0xf]
  %v8453 = vld [vmem:[%s4 + $0x23c] sm:$0xf]
  %v8454 = vld [vmem:[%s1] sm:$0xf]
  %v8455 = vld [vmem:[%s1 + $0x4] sm:$0xf]
  %v8456 = vld [vmem:[%s1 + $0x8] sm:$0xf]
  %v8457 = vld [vmem:[%s1 + $0xc] sm:$0xf]
  %v8458 = vld [vmem:[%s1 + $0x10] sm:$0xf]
  %v8459 = vld [vmem:[%s1 + $0x14] sm:$0xf]
  %v8460 = vld [vmem:[%s1 + $0x18] sm:$0xf]
  %v8461 = vld [vmem:[%s1 + $0x1c] sm:$0xf]
  %v8462 = vld [vmem:[%s1 + $0x20] sm:$0xf]
  %v8463 = vld [vmem:[%s1 + $0x24] sm:$0xf]
  %v8464 = vld [vmem:[%s1 + $0x28] sm:$0xf]
  %v8465 = vld [vmem:[%s1 + $0x2c] sm:$0xf]
  %v8466 = vld [vmem:[%s1 + $0x30] sm:$0xf]
  %v8467 = vld [vmem:[%s1 + $0x34] sm:$0xf]
  %v8468 = vld [vmem:[%s1 + $0x38] sm:$0xf]
  %v8469 = vld [vmem:[%s1 + $0x3c] sm:$0xf]
  %v8470 = vld [vmem:[%s1 + $0x40] sm:$0xf]
  %v8471 = vld [vmem:[%s1 + $0x44] sm:$0xf]
  %v8472 = vld [vmem:[%s1 + $0x48] sm:$0xf]
  %v8473 = vld [vmem:[%s1 + $0x4c] sm:$0xf]
  %v8474 = vld [vmem:[%s1 + $0x50] sm:$0xf]
  %v8475 = vld [vmem:[%s1 + $0x54] sm:$0xf]
  %v8476 = vld [vmem:[%s1 + $0x58] sm:$0xf]
  %v8477 = vld [vmem:[%s1 + $0x5c] sm:$0xf]
  %v8478 = vld [vmem:[%s1 + $0x60] sm:$0xf]
  %v8479 = vld [vmem:[%s1 + $0x64] sm:$0xf]
  %v8480 = vld [vmem:[%s1 + $0x68] sm:$0xf]
  %v8481 = vld [vmem:[%s1 + $0x6c] sm:$0xf]
  %v8482 = vld [vmem:[%s1 + $0x70] sm:$0xf]
  %v8483 = vld [vmem:[%s1 + $0x74] sm:$0xf]
  %v8484 = vld [vmem:[%s1 + $0x78] sm:$0xf]
  %v8485 = vld [vmem:[%s1 + $0x7c] sm:$0xf]
  %v8486 = vld [vmem:[%s1 + $0x80] sm:$0xf]
  %v8487 = vld [vmem:[%s1 + $0x84] sm:$0xf]
  %v8488 = vld [vmem:[%s1 + $0x88] sm:$0xf]
  %v8489 = vld [vmem:[%s1 + $0x8c] sm:$0xf]
  %v8490 = vld [vmem:[%s1 + $0x90] sm:$0xf]
  %v8491 = vld [vmem:[%s1 + $0x94] sm:$0xf]
  %v8492 = vld [vmem:[%s1 + $0x98] sm:$0xf]
  %v8493 = vld [vmem:[%s1 + $0x9c] sm:$0xf]
  %v8494 = vld [vmem:[%s1 + $0xa0] sm:$0xf]
  %v8495 = vld [vmem:[%s1 + $0xa4] sm:$0xf]
  %v8496 = vld [vmem:[%s1 + $0xa8] sm:$0xf]
  %v8497 = vld [vmem:[%s1 + $0xac] sm:$0xf]
  %v8498 = vld [vmem:[%s1 + $0xb0] sm:$0xf]
  %v8499 = vld [vmem:[%s1 + $0xb4] sm:$0xf]
  %v8500 = vld [vmem:[%s1 + $0xb8] sm:$0xf]
  %v8501 = vld [vmem:[%s1 + $0xbc] sm:$0xf]
  %v8502 = vld [vmem:[%s1 + $0xc0] sm:$0xf]
  %v8503 = vld [vmem:[%s1 + $0xc4] sm:$0xf]
  %v8504 = vld [vmem:[%s1 + $0xc8] sm:$0xf]
  %v8505 = vld [vmem:[%s1 + $0xcc] sm:$0xf]
  %v8506 = vld [vmem:[%s1 + $0xd0] sm:$0xf]
  %v8507 = vld [vmem:[%s1 + $0xd4] sm:$0xf]
  %v8508 = vld [vmem:[%s1 + $0xd8] sm:$0xf]
  %v8509 = vld [vmem:[%s1 + $0xdc] sm:$0xf]
  %v8510 = vld [vmem:[%s1 + $0xe0] sm:$0xf]
  %v8511 = vld [vmem:[%s1 + $0xe4] sm:$0xf]
  %v8512 = vld [vmem:[%s1 + $0xe8] sm:$0xf]
  %v8513 = vld [vmem:[%s1 + $0xec] sm:$0xf]
  %v8514 = vld [vmem:[%s1 + $0xf0] sm:$0xf]
  %v8515 = vld [vmem:[%s1 + $0xf4] sm:$0xf]
  %v8516 = vld [vmem:[%s1 + $0xf8] sm:$0xf]
  %v8517 = vld [vmem:[%s1 + $0xfc] sm:$0xf]
  %v8518 = vld [vmem:[%s5] sm:$0x3]
  %v8583 = vunpack.c.l.b16 %v8454
  %v8584 = vunpack.c.l.b16 %v8455
  %v8585 = vunpack.c.l.b16 %v8456
  %v8586 = vunpack.c.l.b16 %v8457
  %v8587 = vunpack.c.l.b16 %v8458
  %v8588 = vunpack.c.l.b16 %v8459
  %v8589 = vunpack.c.l.b16 %v8460
  %v8590 = vunpack.c.l.b16 %v8461
  %v8591 = vunpack.c.l.b16 %v8462
  %v8592 = vunpack.c.l.b16 %v8463
  %v8593 = vunpack.c.l.b16 %v8464
  %v8594 = vunpack.c.l.b16 %v8465
  %v8595 = vunpack.c.l.b16 %v8466
  %v8596 = vunpack.c.l.b16 %v8467
  %v8597 = vunpack.c.l.b16 %v8468
  %v8598 = vunpack.c.l.b16 %v8469
  %v8599 = vunpack.c.l.b16 %v8470
  %v8600 = vunpack.c.l.b16 %v8471
  %v8601 = vunpack.c.l.b16 %v8472
  %v8602 = vunpack.c.l.b16 %v8473
  %v8603 = vunpack.c.l.b16 %v8474
  %v8604 = vunpack.c.l.b16 %v8475
  %v8605 = vunpack.c.l.b16 %v8476
  %v8606 = vunpack.c.l.b16 %v8477
  %v8607 = vunpack.c.l.b16 %v8478
  %v8608 = vunpack.c.l.b16 %v8479
  %v8609 = vunpack.c.l.b16 %v8480
  %v8610 = vunpack.c.l.b16 %v8481
  %v8611 = vunpack.c.l.b16 %v8482
  %v8612 = vunpack.c.l.b16 %v8483
  %v8613 = vunpack.c.l.b16 %v8484
  %v8614 = vunpack.c.l.b16 %v8485
  %v8615 = vunpack.c.l.b16 %v8486
  %v8616 = vunpack.c.l.b16 %v8487
  %v8617 = vunpack.c.l.b16 %v8488
  %v8618 = vunpack.c.l.b16 %v8489
  %v8619 = vunpack.c.l.b16 %v8490
  %v8620 = vunpack.c.l.b16 %v8491
  %v8621 = vunpack.c.l.b16 %v8492
  %v8622 = vunpack.c.l.b16 %v8493
  %v8623 = vunpack.c.l.b16 %v8494
  %v8624 = vunpack.c.l.b16 %v8495
  %v8625 = vunpack.c.l.b16 %v8496
  %v8626 = vunpack.c.l.b16 %v8497
  %v8627 = vunpack.c.l.b16 %v8498
  %v8628 = vunpack.c.l.b16 %v8499
  %v8629 = vunpack.c.l.b16 %v8500
  %v8630 = vunpack.c.l.b16 %v8501
  %v8631 = vunpack.c.l.b16 %v8502
  %v8632 = vunpack.c.l.b16 %v8503
  %v8633 = vunpack.c.l.b16 %v8504
  %v8634 = vunpack.c.l.b16 %v8505
  %v8635 = vunpack.c.l.b16 %v8506
  %v8636 = vunpack.c.l.b16 %v8507
  %v8637 = vunpack.c.l.b16 %v8508
  %v8638 = vunpack.c.l.b16 %v8509
  %v8639 = vunpack.c.l.b16 %v8510
  %v8640 = vunpack.c.l.b16 %v8511
  %v8641 = vunpack.c.l.b16 %v8512
  %v8642 = vunpack.c.l.b16 %v8513
  %v8643 = vunpack.c.l.b16 %v8514
  %v8644 = vunpack.c.l.b16 %v8515
  %v8645 = vunpack.c.l.b16 %v8516
  %v8646 = vunpack.c.l.b16 %v8517
  %v8647 = vpack.c.b16 %v8584, %v8583
  %v8648 = vpack.c.b16 %v8586, %v8585
  %v8649 = vpack.c.b16 %v8588, %v8587
  %v8650 = vpack.c.b16 %v8590, %v8589
  %v8651 = vpack.c.b16 %v8592, %v8591
  %v8652 = vpack.c.b16 %v8594, %v8593
  %v8653 = vpack.c.b16 %v8596, %v8595
  %v8654 = vpack.c.b16 %v8598, %v8597
  %v8655 = vpack.c.b16 %v8600, %v8599
  %v8656 = vpack.c.b16 %v8602, %v8601
  %v8657 = vpack.c.b16 %v8604, %v8603
  %v8658 = vpack.c.b16 %v8606, %v8605
  %v8659 = vpack.c.b16 %v8608, %v8607
  %v8660 = vpack.c.b16 %v8610, %v8609
  %v8661 = vpack.c.b16 %v8612, %v8611
  %v8662 = vpack.c.b16 %v8614, %v8613
  %v8663 = vpack.c.b16 %v8616, %v8615
  %v8664 = vpack.c.b16 %v8618, %v8617
  %v8665 = vpack.c.b16 %v8620, %v8619
  %v8666 = vpack.c.b16 %v8622, %v8621
  %v8667 = vpack.c.b16 %v8624, %v8623
  %v8668 = vpack.c.b16 %v8626, %v8625
  %v8669 = vpack.c.b16 %v8628, %v8627
  %v8670 = vpack.c.b16 %v8630, %v8629
  %v8671 = vpack.c.b16 %v8632, %v8631
  %v8672 = vpack.c.b16 %v8634, %v8633
  %v8673 = vpack.c.b16 %v8636, %v8635
  %v8674 = vpack.c.b16 %v8638, %v8637
  %v8675 = vpack.c.b16 %v8640, %v8639
  %v8676 = vpack.c.b16 %v8642, %v8641
  %v8677 = vpack.c.b16 %v8644, %v8643
  %v8678 = vpack.c.b16 %v8646, %v8645
  %vm8679 = vcmask 31744
  %v8681 = vsel %vm8679, %v8647, 0
  %v8684 = vsel %vm8679, %v8648, 0
  %v8687 = vsel %vm8679, %v8649, 0
  %v8690 = vsel %vm8679, %v8650, 0
  %v8693 = vsel %vm8679, %v8651, 0
  %v8696 = vsel %vm8679, %v8652, 0
  %v8699 = vsel %vm8679, %v8653, 0
  %v8702 = vsel %vm8679, %v8654, 0
  %v8705 = vsel %vm8679, %v8655, 0
  %v8708 = vsel %vm8679, %v8656, 0
  %v8711 = vsel %vm8679, %v8657, 0
  %v8714 = vsel %vm8679, %v8658, 0
  %v8717 = vsel %vm8679, %v8659, 0
  %v8720 = vsel %vm8679, %v8660, 0
  %v8723 = vsel %vm8679, %v8661, 0
  %v8726 = vsel %vm8679, %v8662, 0
  %v8729 = vsel %vm8679, %v8663, 0
  %v8732 = vsel %vm8679, %v8664, 0
  %v8735 = vsel %vm8679, %v8665, 0
  %v8738 = vsel %vm8679, %v8666, 0
  %v8741 = vsel %vm8679, %v8667, 0
  %v8744 = vsel %vm8679, %v8668, 0
  %v8747 = vsel %vm8679, %v8669, 0
  %v8750 = vsel %vm8679, %v8670, 0
  %v8753 = vsel %vm8679, %v8671, 0
  %v8756 = vsel %vm8679, %v8672, 0
  %v8759 = vsel %vm8679, %v8673, 0
  %v8762 = vsel %vm8679, %v8674, 0
  %v8765 = vsel %vm8679, %v8675, 0
  %v8768 = vsel %vm8679, %v8676, 0
  %v8771 = vsel %vm8679, %v8677, 0
  %v8774 = vsel %vm8679, %v8678, 0
  %v8777 = vsel %vm375, %v8518, 0
  %8779 = vmatprep.subr.bf16.mxu0 0
  %8780 = vmatpush1.bf16.msra.mxu0 %v8777
  %8781 = vmatprep.subr.bf16.mxu0 0
  %8782 = vmatpush1.bf16.msra.mxu0 0
  %8783 = vmatprep.subr.bf16.mxu0 0
  %8784 = vmatpush1.bf16.msra.mxu0 0
  %8785 = vmatprep.subr.bf16.mxu0 0
  %8786 = vmatpush1.bf16.msra.mxu0 0
  %8787 = vmatprep.subr.bf16.mxu0 0
  %8788 = vmatpush1.bf16.msra.mxu0 0
  %8789 = vmatprep.subr.bf16.mxu0 0
  %8790 = vmatpush1.bf16.msra.mxu0 0
  %8791 = vmatprep.subr.bf16.mxu0 0
  %8792 = vmatpush1.bf16.msra.mxu0 0
  %8793 = vmatprep.subr.bf16.mxu0 0
  %8794 = vmatpush1.bf16.msra.mxu0 0
  %8795 = vmatprep.subr.bf16.mxu0 0
  %8796 = vmatpush1.bf16.msra.mxu0 0
  %8797 = vmatprep.subr.bf16.mxu0 0
  %8798 = vmatpush1.bf16.msra.mxu0 0
  %8799 = vmatprep.subr.bf16.mxu0 0
  %8800 = vmatpush1.bf16.msra.mxu0 0
  %8801 = vmatprep.subr.bf16.mxu0 0
  %8802 = vmatpush1.bf16.msra.mxu0 0
  %8803 = vmatprep.subr.bf16.mxu0 0
  %8804 = vmatpush1.bf16.msra.mxu0 0
  %8805 = vmatprep.subr.bf16.mxu0 0
  %8806 = vmatpush1.bf16.msra.mxu0 0
  %8807 = vmatprep.subr.bf16.mxu0 0
  %8808 = vmatpush1.bf16.msra.mxu0 0
  %8809 = vmatprep.subr.bf16.mxu0 0
  %8810 = vmatpush1.bf16.msra.mxu0 0
  %8811 = vmatprep.mubr.bf16.mxu0 0
  %8812 = vmatmul.mubr.bf16.gmra.mrb[0].mxu0 %v8681
  %v8813 = vpop.f32.mrb[0].mxu0
  %v8814 = vadd.f32 0.0, %v8813
  %v8815 = vpop.f32.mrb[0].mxu0
  %v8816 = vpop.f32.mrb[0].mxu0
  %v8817 = vadd.f32 0.0, %v8816
  %v8818 = vpop.f32.mrb[0].mxu0
  %8819 = vmatprep.mubr.bf16.mxu0 0
  %8820 = vmatmul.mubr.bf16.gmra.mrb[0].mxu0 %v8684
  %v8821 = vpop.f32.mrb[0].mxu0
  %v8822 = vadd.f32 0.0, %v8821
  %v8823 = vpop.f32.mrb[0].mxu0
  %v8824 = vpop.f32.mrb[0].mxu0
  %v8825 = vadd.f32 0.0, %v8824
  %v8826 = vpop.f32.mrb[0].mxu0
  %8827 = vmatprep.mubr.bf16.mxu0 0
  %8828 = vmatmul.mubr.bf16.gmra.mrb[0].mxu0 %v8687
  %v8829 = vpop.f32.mrb[0].mxu0
  %v8830 = vadd.f32 0.0, %v8829
  %v8831 = vpop.f32.mrb[0].mxu0
  %v8832 = vpop.f32.mrb[0].mxu0
  %v8833 = vadd.f32 0.0, %v8832
  %v8834 = vpop.f32.mrb[0].mxu0
  %8835 = vmatprep.mubr.bf16.mxu0 0
  %8836 = vmatmul.mubr.bf16.gmra.mrb[0].mxu0 %v8690
  %v8837 = vpop.f32.mrb[0].mxu0
  %v8838 = vadd.f32 0.0, %v8837
  %v8839 = vpop.f32.mrb[0].mxu0
  %v8840 = vpop.f32.mrb[0].mxu0
  %v8841 = vadd.f32 0.0, %v8840
  %v8842 = vpop.f32.mrb[0].mxu0
  %8843 = vmatprep.mubr.bf16.mxu0 0
  %8844 = vmatmul.mubr.bf16.gmra.mrb[0].mxu0 %v8693
  %v8845 = vpop.f32.mrb[0].mxu0
  %v8846 = vadd.f32 0.0, %v8845
  %v8847 = vpop.f32.mrb[0].mxu0
  %v8848 = vpop.f32.mrb[0].mxu0
  %v8849 = vadd.f32 0.0, %v8848
  %v8850 = vpop.f32.mrb[0].mxu0
  %8851 = vmatprep.mubr.bf16.mxu0 0
  %8852 = vmatmul.mubr.bf16.gmra.mrb[0].mxu0 %v8696
  %v8853 = vpop.f32.mrb[0].mxu0
  %v8854 = vadd.f32 0.0, %v8853
  %v8855 = vpop.f32.mrb[0].mxu0
  %v8856 = vpop.f32.mrb[0].mxu0
  %v8857 = vadd.f32 0.0, %v8856
  %v8858 = vpop.f32.mrb[0].mxu0
  %8859 = vmatprep.mubr.bf16.mxu0 0
  %8860 = vmatmul.mubr.bf16.gmra.mrb[0].mxu0 %v8699
  %v8861 = vpop.f32.mrb[0].mxu0
  %v8862 = vadd.f32 0.0, %v8861
  %v8863 = vpop.f32.mrb[0].mxu0
  %v8864 = vpop.f32.mrb[0].mxu0
  %v8865 = vadd.f32 0.0, %v8864
  %v8866 = vpop.f32.mrb[0].mxu0
  %8867 = vmatprep.mubr.bf16.mxu0 0
  %8868 = vmatmul.mubr.bf16.gmra.mrb[0].mxu0 %v8702
  %v8869 = vpop.f32.mrb[0].mxu0
  %v8870 = vadd.f32 0.0, %v8869
  %v8871 = vpop.f32.mrb[0].mxu0
  %v8872 = vpop.f32.mrb[0].mxu0
  %v8873 = vadd.f32 0.0, %v8872
  %v8874 = vpop.f32.mrb[0].mxu0
  %8875 = vmatprep.mubr.bf16.mxu0 0
  %8876 = vmatmul.mubr.bf16.gmra.mrb[0].mxu0 %v8705
  %v8877 = vpop.f32.mrb[0].mxu0
  %v8878 = vadd.f32 0.0, %v8877
  %v8879 = vpop.f32.mrb[0].mxu0
  %v8880 = vpop.f32.mrb[0].mxu0
  %v8881 = vadd.f32 0.0, %v8880
  %v8882 = vpop.f32.mrb[0].mxu0
  %8883 = vmatprep.mubr.bf16.mxu0 0
  %8884 = vmatmul.mubr.bf16.gmra.mrb[0].mxu0 %v8708
  %v8885 = vpop.f32.mrb[0].mxu0
  %v8886 = vadd.f32 0.0, %v8885
  %v8887 = vpop.f32.mrb[0].mxu0
  %v8888 = vpop.f32.mrb[0].mxu0
  %v8889 = vadd.f32 0.0, %v8888
  %v8890 = vpop.f32.mrb[0].mxu0
  %8891 = vmatprep.mubr.bf16.mxu0 0
  %8892 = vmatmul.mubr.bf16.gmra.mrb[0].mxu0 %v8711
  %v8893 = vpop.f32.mrb[0].mxu0
  %v8894 = vadd.f32 0.0, %v8893
  %v8895 = vpop.f32.mrb[0].mxu0
  %v8896 = vpop.f32.mrb[0].mxu0
  %v8897 = vadd.f32 0.0, %v8896
  %v8898 = vpop.f32.mrb[0].mxu0
  %8899 = vmatprep.mubr.bf16.mxu0 0
  %8900 = vmatmul.mubr.bf16.gmra.mrb[0].mxu0 %v8714
  %v8901 = vpop.f32.mrb[0].mxu0
  %v8902 = vadd.f32 0.0, %v8901
  %v8903 = vpop.f32.mrb[0].mxu0
  %v8904 = vpop.f32.mrb[0].mxu0
  %v8905 = vadd.f32 0.0, %v8904
  %v8906 = vpop.f32.mrb[0].mxu0
  %8907 = vmatprep.mubr.bf16.mxu0 0
  %8908 = vmatmul.mubr.bf16.gmra.mrb[0].mxu0 %v8717
  %v8909 = vpop.f32.mrb[0].mxu0
  %v8910 = vadd.f32 0.0, %v8909
  %v8911 = vpop.f32.mrb[0].mxu0
  %v8912 = vpop.f32.mrb[0].mxu0
  %v8913 = vadd.f32 0.0, %v8912
  %v8914 = vpop.f32.mrb[0].mxu0
  %8915 = vmatprep.mubr.bf16.mxu0 0
  %8916 = vmatmul.mubr.bf16.gmra.mrb[0].mxu0 %v8720
  %v8917 = vpop.f32.mrb[0].mxu0
  %v8918 = vadd.f32 0.0, %v8917
  %v8919 = vpop.f32.mrb[0].mxu0
  %v8920 = vpop.f32.mrb[0].mxu0
  %v8921 = vadd.f32 0.0, %v8920
  %v8922 = vpop.f32.mrb[0].mxu0
  %8923 = vmatprep.mubr.bf16.mxu0 0
  %8924 = vmatmul.mubr.bf16.gmra.mrb[0].mxu0 %v8723
  %v8925 = vpop.f32.mrb[0].mxu0
  %v8926 = vadd.f32 0.0, %v8925
  %v8927 = vpop.f32.mrb[0].mxu0
  %v8928 = vpop.f32.mrb[0].mxu0
  %v8929 = vadd.f32 0.0, %v8928
  %v8930 = vpop.f32.mrb[0].mxu0
  %8931 = vmatprep.mubr.bf16.mxu0 0
  %8932 = vmatmul.mubr.bf16.gmra.mrb[0].mxu0 %v8726
  %v8933 = vpop.f32.mrb[0].mxu0
  %v8934 = vadd.f32 0.0, %v8933
  %v8935 = vpop.f32.mrb[0].mxu0
  %v8936 = vpop.f32.mrb[0].mxu0
  %v8937 = vadd.f32 0.0, %v8936
  %v8938 = vpop.f32.mrb[0].mxu0
  %8939 = vmatprep.mubr.bf16.mxu0 0
  %8940 = vmatmul.mubr.bf16.gmra.mrb[0].mxu0 %v8729
  %v8941 = vpop.f32.mrb[0].mxu0
  %v8942 = vadd.f32 0.0, %v8941
  %v8943 = vpop.f32.mrb[0].mxu0
  %v8944 = vpop.f32.mrb[0].mxu0
  %v8945 = vadd.f32 0.0, %v8944
  %v8946 = vpop.f32.mrb[0].mxu0
  %8947 = vmatprep.mubr.bf16.mxu0 0
  %8948 = vmatmul.mubr.bf16.gmra.mrb[0].mxu0 %v8732
  %v8949 = vpop.f32.mrb[0].mxu0
  %v8950 = vadd.f32 0.0, %v8949
  %v8951 = vpop.f32.mrb[0].mxu0
  %v8952 = vpop.f32.mrb[0].mxu0
  %v8953 = vadd.f32 0.0, %v8952
  %v8954 = vpop.f32.mrb[0].mxu0
  %8955 = vmatprep.mubr.bf16.mxu0 0
  %8956 = vmatmul.mubr.bf16.gmra.mrb[0].mxu0 %v8735
  %v8957 = vpop.f32.mrb[0].mxu0
  %v8958 = vadd.f32 0.0, %v8957
  %v8959 = vpop.f32.mrb[0].mxu0
  %v8960 = vpop.f32.mrb[0].mxu0
  %v8961 = vadd.f32 0.0, %v8960
  %v8962 = vpop.f32.mrb[0].mxu0
  %8963 = vmatprep.mubr.bf16.mxu0 0
  %8964 = vmatmul.mubr.bf16.gmra.mrb[0].mxu0 %v8738
  %v8965 = vpop.f32.mrb[0].mxu0
  %v8966 = vadd.f32 0.0, %v8965
  %v8967 = vpop.f32.mrb[0].mxu0
  %v8968 = vpop.f32.mrb[0].mxu0
  %v8969 = vadd.f32 0.0, %v8968
  %v8970 = vpop.f32.mrb[0].mxu0
  %8971 = vmatprep.mubr.bf16.mxu0 0
  %8972 = vmatmul.mubr.bf16.gmra.mrb[0].mxu0 %v8741
  %v8973 = vpop.f32.mrb[0].mxu0
  %v8974 = vadd.f32 0.0, %v8973
  %v8975 = vpop.f32.mrb[0].mxu0
  %v8976 = vpop.f32.mrb[0].mxu0
  %v8977 = vadd.f32 0.0, %v8976
  %v8978 = vpop.f32.mrb[0].mxu0
  %8979 = vmatprep.mubr.bf16.mxu0 0
  %8980 = vmatmul.mubr.bf16.gmra.mrb[0].mxu0 %v8744
  %v8981 = vpop.f32.mrb[0].mxu0
  %v8982 = vadd.f32 0.0, %v8981
  %v8983 = vpop.f32.mrb[0].mxu0
  %v8984 = vpop.f32.mrb[0].mxu0
  %v8985 = vadd.f32 0.0, %v8984
  %v8986 = vpop.f32.mrb[0].mxu0
  %8987 = vmatprep.mubr.bf16.mxu0 0
  %8988 = vmatmul.mubr.bf16.gmra.mrb[0].mxu0 %v8747
  %v8989 = vpop.f32.mrb[0].mxu0
  %v8990 = vadd.f32 0.0, %v8989
  %v8991 = vpop.f32.mrb[0].mxu0
  %v8992 = vpop.f32.mrb[0].mxu0
  %v8993 = vadd.f32 0.0, %v8992
  %v8994 = vpop.f32.mrb[0].mxu0
  %8995 = vmatprep.mubr.bf16.mxu0 0
  %8996 = vmatmul.mubr.bf16.gmra.mrb[0].mxu0 %v8750
  %v8997 = vpop.f32.mrb[0].mxu0
  %v8998 = vadd.f32 0.0, %v8997
  %v8999 = vpop.f32.mrb[0].mxu0
  %v9000 = vpop.f32.mrb[0].mxu0
  %v9001 = vadd.f32 0.0, %v9000
  %v9002 = vpop.f32.mrb[0].mxu0
  %9003 = vmatprep.mubr.bf16.mxu0 0
  %9004 = vmatmul.mubr.bf16.gmra.mrb[0].mxu0 %v8753
  %v9005 = vpop.f32.mrb[0].mxu0
  %v9006 = vadd.f32 0.0, %v9005
  %v9007 = vpop.f32.mrb[0].mxu0
  %v9008 = vpop.f32.mrb[0].mxu0
  %v9009 = vadd.f32 0.0, %v9008
  %v9010 = vpop.f32.mrb[0].mxu0
  %9011 = vmatprep.mubr.bf16.mxu0 0
  %9012 = vmatmul.mubr.bf16.gmra.mrb[0].mxu0 %v8756
  %v9013 = vpop.f32.mrb[0].mxu0
  %v9014 = vadd.f32 0.0, %v9013
  %v9015 = vpop.f32.mrb[0].mxu0
  %v9016 = vpop.f32.mrb[0].mxu0
  %v9017 = vadd.f32 0.0, %v9016
  %v9018 = vpop.f32.mrb[0].mxu0
  %9019 = vmatprep.mubr.bf16.mxu0 0
  %9020 = vmatmul.mubr.bf16.gmra.mrb[0].mxu0 %v8759
  %v9021 = vpop.f32.mrb[0].mxu0
  %v9022 = vadd.f32 0.0, %v9021
  %v9023 = vpop.f32.mrb[0].mxu0
  %v9024 = vpop.f32.mrb[0].mxu0
  %v9025 = vadd.f32 0.0, %v9024
  %v9026 = vpop.f32.mrb[0].mxu0
  %9027 = vmatprep.mubr.bf16.mxu0 0
  %9028 = vmatmul.mubr.bf16.gmra.mrb[0].mxu0 %v8762
  %v9029 = vpop.f32.mrb[0].mxu0
  %v9030 = vadd.f32 0.0, %v9029
  %v9031 = vpop.f32.mrb[0].mxu0
  %v9032 = vpop.f32.mrb[0].mxu0
  %v9033 = vadd.f32 0.0, %v9032
  %v9034 = vpop.f32.mrb[0].mxu0
  %9035 = vmatprep.mubr.bf16.mxu0 0
  %9036 = vmatmul.mubr.bf16.gmra.mrb[0].mxu0 %v8765
  %v9037 = vpop.f32.mrb[0].mxu0
  %v9038 = vadd.f32 0.0, %v9037
  %v9039 = vpop.f32.mrb[0].mxu0
  %v9040 = vpop.f32.mrb[0].mxu0
  %v9041 = vadd.f32 0.0, %v9040
  %v9042 = vpop.f32.mrb[0].mxu0
  %9043 = vmatprep.mubr.bf16.mxu0 0
  %9044 = vmatmul.mubr.bf16.gmra.mrb[0].mxu0 %v8768
  %v9045 = vpop.f32.mrb[0].mxu0
  %v9046 = vadd.f32 0.0, %v9045
  %v9047 = vpop.f32.mrb[0].mxu0
  %v9048 = vpop.f32.mrb[0].mxu0
  %v9049 = vadd.f32 0.0, %v9048
  %v9050 = vpop.f32.mrb[0].mxu0
  %9051 = vmatprep.mubr.bf16.mxu0 0
  %9052 = vmatmul.mubr.bf16.gmra.mrb[0].mxu0 %v8771
  %v9053 = vpop.f32.mrb[0].mxu0
  %v9054 = vadd.f32 0.0, %v9053
  %v9055 = vpop.f32.mrb[0].mxu0
  %v9056 = vpop.f32.mrb[0].mxu0
  %v9057 = vadd.f32 0.0, %v9056
  %v9058 = vpop.f32.mrb[0].mxu0
  %9059 = vmatprep.mubr.bf16.mxu0 0
  %9060 = vmatmul.mubr.bf16.gmra.mrb[0].mxu0 %v8774
  %v9061 = vpop.f32.mrb[0].mxu0
  %v9062 = vadd.f32 0.0, %v9061
  %v9063 = vpop.f32.mrb[0].mxu0
  %v9064 = vpop.f32.mrb[0].mxu0
  %v9065 = vadd.f32 0.0, %v9064
  %v9066 = vpop.f32.mrb[0].mxu0
  %9067 = vdwg.mxu0
  %v9212 = vunpack.c.l.b16 %v8310
  %v9213 = vunpack.c.l.b16 %v8311
  %v9214 = vunpack.c.l.b16 %v8312
  %v9215 = vunpack.c.l.b16 %v8313
  %v9216 = vunpack.c.l.b16 %v8314
  %v9217 = vunpack.c.l.b16 %v8315
  %v9218 = vunpack.c.l.b16 %v8316
  %v9219 = vunpack.c.l.b16 %v8317
  %v9220 = vunpack.c.l.b16 %v8318
  %v9221 = vunpack.c.l.b16 %v8319
  %v9222 = vunpack.c.l.b16 %v8320
  %v9223 = vunpack.c.l.b16 %v8321
  %v9224 = vunpack.c.l.b16 %v8322
  %v9225 = vunpack.c.l.b16 %v8323
  %v9226 = vunpack.c.l.b16 %v8324
  %v9227 = vunpack.c.l.b16 %v8325
  %v9228 = vunpack.c.l.b16 %v8326
  %v9229 = vunpack.c.l.b16 %v8327
  %v9230 = vunpack.c.l.b16 %v8328
  %v9231 = vunpack.c.l.b16 %v8329
  %v9232 = vunpack.c.l.b16 %v8330
  %v9233 = vunpack.c.l.b16 %v8331
  %v9234 = vunpack.c.l.b16 %v8332
  %v9235 = vunpack.c.l.b16 %v8333
  %v9236 = vunpack.c.l.b16 %v8334
  %v9237 = vunpack.c.l.b16 %v8335
  %v9238 = vunpack.c.l.b16 %v8336
  %v9239 = vunpack.c.l.b16 %v8337
  %v9240 = vunpack.c.l.b16 %v8338
  %v9241 = vunpack.c.l.b16 %v8339
  %v9242 = vunpack.c.l.b16 %v8340
  %v9243 = vunpack.c.l.b16 %v8341
  %v9244 = vunpack.c.l.b16 %v8342
  %v9245 = vunpack.c.l.b16 %v8343
  %v9246 = vunpack.c.l.b16 %v8344
  %v9247 = vunpack.c.l.b16 %v8345
  %v9248 = vunpack.c.l.b16 %v8346
  %v9249 = vunpack.c.l.b16 %v8347
  %v9250 = vunpack.c.l.b16 %v8348
  %v9251 = vunpack.c.l.b16 %v8349
  %v9252 = vunpack.c.l.b16 %v8350
  %v9253 = vunpack.c.l.b16 %v8351
  %v9254 = vunpack.c.l.b16 %v8352
  %v9255 = vunpack.c.l.b16 %v8353
  %v9256 = vunpack.c.l.b16 %v8354
  %v9257 = vunpack.c.l.b16 %v8355
  %v9258 = vunpack.c.l.b16 %v8356
  %v9259 = vunpack.c.l.b16 %v8357
  %v9260 = vunpack.c.l.b16 %v8358
  %v9261 = vunpack.c.l.b16 %v8359
  %v9262 = vunpack.c.l.b16 %v8360
  %v9263 = vunpack.c.l.b16 %v8361
  %v9264 = vunpack.c.l.b16 %v8362
  %v9265 = vunpack.c.l.b16 %v8363
  %v9266 = vunpack.c.l.b16 %v8364
  %v9267 = vunpack.c.l.b16 %v8365
  %v9268 = vunpack.c.l.b16 %v8366
  %v9269 = vunpack.c.l.b16 %v8367
  %v9270 = vunpack.c.l.b16 %v8368
  %v9271 = vunpack.c.l.b16 %v8369
  %v9272 = vunpack.c.l.b16 %v8370
  %v9273 = vunpack.c.l.b16 %v8371
  %v9274 = vunpack.c.l.b16 %v8372
  %v9275 = vunpack.c.l.b16 %v8373
  %v9276 = vunpack.c.l.b16 %v8374
  %v9277 = vunpack.c.l.b16 %v8375
  %v9278 = vunpack.c.l.b16 %v8376
  %v9279 = vunpack.c.l.b16 %v8377
  %v9280 = vunpack.c.l.b16 %v8378
  %v9281 = vunpack.c.l.b16 %v8379
  %v9282 = vunpack.c.l.b16 %v8380
  %v9283 = vunpack.c.l.b16 %v8381
  %v9284 = vunpack.c.l.b16 %v8382
  %v9285 = vunpack.c.l.b16 %v8383
  %v9286 = vunpack.c.l.b16 %v8384
  %v9287 = vunpack.c.l.b16 %v8385
  %v9288 = vunpack.c.l.b16 %v8386
  %v9289 = vunpack.c.l.b16 %v8387
  %v9290 = vunpack.c.l.b16 %v8388
  %v9291 = vunpack.c.l.b16 %v8389
  %v9292 = vunpack.c.l.b16 %v8390
  %v9293 = vunpack.c.l.b16 %v8391
  %v9294 = vunpack.c.l.b16 %v8392
  %v9295 = vunpack.c.l.b16 %v8393
  %v9296 = vunpack.c.l.b16 %v8394
  %v9297 = vunpack.c.l.b16 %v8395
  %v9298 = vunpack.c.l.b16 %v8396
  %v9299 = vunpack.c.l.b16 %v8397
  %v9300 = vunpack.c.l.b16 %v8398
  %v9301 = vunpack.c.l.b16 %v8399
  %v9302 = vunpack.c.l.b16 %v8400
  %v9303 = vunpack.c.l.b16 %v8401
  %v9304 = vunpack.c.l.b16 %v8402
  %v9305 = vunpack.c.l.b16 %v8403
  %v9306 = vunpack.c.l.b16 %v8404
  %v9307 = vunpack.c.l.b16 %v8405
  %v9308 = vunpack.c.l.b16 %v8406
  %v9309 = vunpack.c.l.b16 %v8407
  %v9310 = vunpack.c.l.b16 %v8408
  %v9311 = vunpack.c.l.b16 %v8409
  %v9312 = vunpack.c.l.b16 %v8410
  %v9313 = vunpack.c.l.b16 %v8411
  %v9314 = vunpack.c.l.b16 %v8412
  %v9315 = vunpack.c.l.b16 %v8413
  %v9316 = vunpack.c.l.b16 %v8414
  %v9317 = vunpack.c.l.b16 %v8415
  %v9318 = vunpack.c.l.b16 %v8416
  %v9319 = vunpack.c.l.b16 %v8417
  %v9320 = vunpack.c.l.b16 %v8418
  %v9321 = vunpack.c.l.b16 %v8419
  %v9322 = vunpack.c.l.b16 %v8420
  %v9323 = vunpack.c.l.b16 %v8421
  %v9324 = vunpack.c.l.b16 %v8422
  %v9325 = vunpack.c.l.b16 %v8423
  %v9326 = vunpack.c.l.b16 %v8424
  %v9327 = vunpack.c.l.b16 %v8425
  %v9328 = vunpack.c.l.b16 %v8426
  %v9329 = vunpack.c.l.b16 %v8427
  %v9330 = vunpack.c.l.b16 %v8428
  %v9331 = vunpack.c.l.b16 %v8429
  %v9332 = vunpack.c.l.b16 %v8430
  %v9333 = vunpack.c.l.b16 %v8431
  %v9334 = vunpack.c.l.b16 %v8432
  %v9335 = vunpack.c.l.b16 %v8433
  %v9336 = vunpack.c.l.b16 %v8434
  %v9337 = vunpack.c.l.b16 %v8435
  %v9338 = vunpack.c.l.b16 %v8436
  %v9339 = vunpack.c.l.b16 %v8437
  %v9340 = vunpack.c.l.b16 %v8438
  %v9341 = vunpack.c.l.b16 %v8439
  %v9342 = vunpack.c.l.b16 %v8440
  %v9343 = vunpack.c.l.b16 %v8441
  %v9344 = vunpack.c.l.b16 %v8442
  %v9345 = vunpack.c.l.b16 %v8443
  %v9346 = vunpack.c.l.b16 %v8444
  %v9347 = vunpack.c.l.b16 %v8445
  %v9348 = vunpack.c.l.b16 %v8446
  %v9349 = vunpack.c.l.b16 %v8447
  %v9350 = vunpack.c.l.b16 %v8448
  %v9351 = vunpack.c.l.b16 %v8449
  %v9352 = vunpack.c.l.b16 %v8450
  %v9353 = vunpack.c.l.b16 %v8451
  %v9354 = vunpack.c.l.b16 %v8452
  %v9355 = vunpack.c.l.b16 %v8453
  %v9356 = vpack.c.b16 %v9213, %v9212
  %v9357 = vpack.c.b16 %v9215, %v9214
  %v9358 = vpack.c.b16 %v9217, %v9216
  %v9359 = vpack.c.b16 %v9219, %v9218
  %v9360 = vpack.c.b16 %v9221, %v9220
  %v9361 = vpack.c.b16 %v9223, %v9222
  %v9362 = vpack.c.b16 %v9225, %v9224
  %v9363 = vpack.c.b16 %v9227, %v9226
  %v9364 = vpack.c.b16 %v9229, %v9228
  %v9365 = vpack.c.b16 %v9231, %v9230
  %v9366 = vpack.c.b16 %v9233, %v9232
  %v9367 = vpack.c.b16 %v9235, %v9234
  %v9368 = vpack.c.b16 %v9237, %v9236
  %v9369 = vpack.c.b16 %v9239, %v9238
  %v9370 = vpack.c.b16 %v9241, %v9240
  %v9371 = vpack.c.b16 %v9243, %v9242
  %v9372 = vpack.c.b16 %v9245, %v9244
  %v9373 = vpack.c.b16 %v9247, %v9246
  %v9374 = vpack.c.b16 %v9249, %v9248
  %v9375 = vpack.c.b16 %v9251, %v9250
  %v9376 = vpack.c.b16 %v9253, %v9252
  %v9377 = vpack.c.b16 %v9255, %v9254
  %v9378 = vpack.c.b16 %v9257, %v9256
  %v9379 = vpack.c.b16 %v9259, %v9258
  %v9380 = vpack.c.b16 %v9261, %v9260
  %v9381 = vpack.c.b16 %v9263, %v9262
  %v9382 = vpack.c.b16 %v9265, %v9264
  %v9383 = vpack.c.b16 %v9267, %v9266
  %v9384 = vpack.c.b16 %v9269, %v9268
  %v9385 = vpack.c.b16 %v9271, %v9270
  %v9386 = vpack.c.b16 %v9273, %v9272
  %v9387 = vpack.c.b16 %v9275, %v9274
  %v9388 = vpack.c.b16 %v9277, %v9276
  %v9389 = vpack.c.b16 %v9279, %v9278
  %v9390 = vpack.c.b16 %v9281, %v9280
  %v9391 = vpack.c.b16 %v9283, %v9282
  %v9392 = vpack.c.b16 %v9285, %v9284
  %v9393 = vpack.c.b16 %v9287, %v9286
  %v9394 = vpack.c.b16 %v9289, %v9288
  %v9395 = vpack.c.b16 %v9291, %v9290
  %v9396 = vpack.c.b16 %v9293, %v9292
  %v9397 = vpack.c.b16 %v9295, %v9294
  %v9398 = vpack.c.b16 %v9297, %v9296
  %v9399 = vpack.c.b16 %v9299, %v9298
  %v9400 = vpack.c.b16 %v9301, %v9300
  %v9401 = vpack.c.b16 %v9303, %v9302
  %v9402 = vpack.c.b16 %v9305, %v9304
  %v9403 = vpack.c.b16 %v9307, %v9306
  %v9404 = vpack.c.b16 %v9309, %v9308
  %v9405 = vpack.c.b16 %v9311, %v9310
  %v9406 = vpack.c.b16 %v9313, %v9312
  %v9407 = vpack.c.b16 %v9315, %v9314
  %v9408 = vpack.c.b16 %v9317, %v9316
  %v9409 = vpack.c.b16 %v9319, %v9318
  %v9410 = vpack.c.b16 %v9321, %v9320
  %v9411 = vpack.c.b16 %v9323, %v9322
  %v9412 = vpack.c.b16 %v9325, %v9324
  %v9413 = vpack.c.b16 %v9327, %v9326
  %v9414 = vpack.c.b16 %v9329, %v9328
  %v9415 = vpack.c.b16 %v9331, %v9330
  %v9416 = vpack.c.b16 %v9333, %v9332
  %v9417 = vpack.c.b16 %v9335, %v9334
  %v9418 = vpack.c.b16 %v9337, %v9336
  %v9419 = vpack.c.b16 %v9339, %v9338
  %v9420 = vpack.c.b16 %v9341, %v9340
  %v9421 = vpack.c.b16 %v9343, %v9342
  %v9422 = vpack.c.b16 %v9345, %v9344
  %v9423 = vpack.c.b16 %v9347, %v9346
  %v9424 = vpack.c.b16 %v9349, %v9348
  %v9425 = vpack.c.b16 %v9351, %v9350
  %v9426 = vpack.c.b16 %v9353, %v9352
  %v9427 = vpack.c.b16 %v9355, %v9354
  %9500 = vmatprep.subr.bf16.mxu0 0
  %9501 = vmatpush1.bf16.msra.mxu0 %v9356
  %9502 = vmatprep.subr.bf16.mxu0 0
  %9503 = vmatpush1.bf16.msra.mxu0 %v9357
  %9504 = vmatprep.subr.bf16.mxu0 0
  %9505 = vmatpush1.bf16.msra.mxu0 %v9358
  %9506 = vmatprep.subr.bf16.mxu0 0
  %9507 = vmatpush1.bf16.msra.mxu0 %v9359
  %9508 = vmatprep.subr.bf16.mxu0 0
  %9509 = vmatpush1.bf16.msra.mxu0 %v9360
  %9510 = vmatprep.subr.bf16.mxu0 0
  %9511 = vmatpush1.bf16.msra.mxu0 %v9361
  %9512 = vmatprep.subr.bf16.mxu0 0
  %9513 = vmatpush1.bf16.msra.mxu0 %v9362
  %9514 = vmatprep.subr.bf16.mxu0 0
  %9515 = vmatpush1.bf16.msra.mxu0 %v9363
  %9516 = vmatprep.subr.bf16.mxu0 0
  %9517 = vmatpush1.bf16.msra.mxu0 %v9364
  %9518 = vmatprep.subr.bf16.mxu0 0
  %9519 = vmatpush1.bf16.msra.mxu0 %v9365
  %9520 = vmatprep.subr.bf16.mxu0 0
  %9521 = vmatpush1.bf16.msra.mxu0 %v9366
  %9522 = vmatprep.subr.bf16.mxu0 0
  %9523 = vmatpush1.bf16.msra.mxu0 %v9367
  %9524 = vmatprep.subr.bf16.mxu0 0
  %9525 = vmatpush1.bf16.msra.mxu0 %v9368
  %9526 = vmatprep.subr.bf16.mxu0 0
  %9527 = vmatpush1.bf16.msra.mxu0 %v9369
  %9528 = vmatprep.subr.bf16.mxu0 0
  %9529 = vmatpush1.bf16.msra.mxu0 %v9370
  %9530 = vmatprep.subr.bf16.mxu0 0
  %9531 = vmatpush1.bf16.msra.mxu0 %v9371
  %9532 = vmatprep.mubr.bf16.mxu0 %v8023
  %9533 = vmatmul.mubr.bf16.gmra.mrb[0].mxu0 %v8022
  %v9534 = vpop.f32.mrb[0].mxu0
  %v9535 = vadd.f32 %v8814, %v9534
  %v9536 = vpop.f32.mrb[0].mxu0
  %v9537 = vpop.f32.mrb[0].mxu0
  %v9538 = vadd.f32 %v8817, %v9537
  %v9539 = vpop.f32.mrb[0].mxu0
  %9540 = vmatprep.mubr.bf16.mxu0 %v8032
  %9541 = vmatmul.mubr.bf16.gmra.mrb[0].mxu0 %v8031
  %v9542 = vpop.f32.mrb[0].mxu0
  %v9543 = vadd.f32 %v8822, %v9542
  %v9544 = vpop.f32.mrb[0].mxu0
  %v9545 = vpop.f32.mrb[0].mxu0
  %v9546 = vadd.f32 %v8825, %v9545
  %v9547 = vpop.f32.mrb[0].mxu0
  %9548 = vmatprep.mubr.bf16.mxu0 %v8041
  %9549 = vmatmul.mubr.bf16.gmra.mrb[0].mxu0 %v8040
  %v9550 = vpop.f32.mrb[0].mxu0
  %v9551 = vadd.f32 %v8830, %v9550
  %v9552 = vpop.f32.mrb[0].mxu0
  %v9553 = vpop.f32.mrb[0].mxu0
  %v9554 = vadd.f32 %v8833, %v9553
  %v9555 = vpop.f32.mrb[0].mxu0
  %9556 = vmatprep.mubr.bf16.mxu0 %v8050
  %9557 = vmatmul.mubr.bf16.gmra.mrb[0].mxu0 %v8049
  %v9558 = vpop.f32.mrb[0].mxu0
  %v9559 = vadd.f32 %v8838, %v9558
  %v9560 = vpop.f32.mrb[0].mxu0
  %v9561 = vpop.f32.mrb[0].mxu0
  %v9562 = vadd.f32 %v8841, %v9561
  %v9563 = vpop.f32.mrb[0].mxu0
  %9564 = vmatprep.mubr.bf16.mxu0 %v8059
  %9565 = vmatmul.mubr.bf16.gmra.mrb[0].mxu0 %v8058
  %v9566 = vpop.f32.mrb[0].mxu0
  %v9567 = vadd.f32 %v8846, %v9566
  %v9568 = vpop.f32.mrb[0].mxu0
  %v9569 = vpop.f32.mrb[0].mxu0
  %v9570 = vadd.f32 %v8849, %v9569
  %v9571 = vpop.f32.mrb[0].mxu0
  %9572 = vmatprep.mubr.bf16.mxu0 %v8068
  %9573 = vmatmul.mubr.bf16.gmra.mrb[0].mxu0 %v8067
  %v9574 = vpop.f32.mrb[0].mxu0
  %v9575 = vadd.f32 %v8854, %v9574
  %v9576 = vpop.f32.mrb[0].mxu0
  %v9577 = vpop.f32.mrb[0].mxu0
  %v9578 = vadd.f32 %v8857, %v9577
  %v9579 = vpop.f32.mrb[0].mxu0
  %9580 = vmatprep.mubr.bf16.mxu0 %v8077
  %9581 = vmatmul.mubr.bf16.gmra.mrb[0].mxu0 %v8076
  %v9582 = vpop.f32.mrb[0].mxu0
  %v9583 = vadd.f32 %v8862, %v9582
  %v9584 = vpop.f32.mrb[0].mxu0
  %v9585 = vpop.f32.mrb[0].mxu0
  %v9586 = vadd.f32 %v8865, %v9585
  %v9587 = vpop.f32.mrb[0].mxu0
  %9588 = vmatprep.mubr.bf16.mxu0 %v8086
  %9589 = vmatmul.mubr.bf16.gmra.mrb[0].mxu0 %v8085
  %v9590 = vpop.f32.mrb[0].mxu0
  %v9591 = vadd.f32 %v8870, %v9590
  %v9592 = vpop.f32.mrb[0].mxu0
  %v9593 = vpop.f32.mrb[0].mxu0
  %v9594 = vadd.f32 %v8873, %v9593
  %v9595 = vpop.f32.mrb[0].mxu0
  %9596 = vmatprep.mubr.bf16.mxu0 %v8095
  %9597 = vmatmul.mubr.bf16.gmra.mrb[0].mxu0 %v8094
  %v9598 = vpop.f32.mrb[0].mxu0
  %v9599 = vadd.f32 %v8878, %v9598
  %v9600 = vpop.f32.mrb[0].mxu0
  %v9601 = vpop.f32.mrb[0].mxu0
  %v9602 = vadd.f32 %v8881, %v9601
  %v9603 = vpop.f32.mrb[0].mxu0
  %9604 = vmatprep.mubr.bf16.mxu0 %v8104
  %9605 = vmatmul.mubr.bf16.gmra.mrb[0].mxu0 %v8103
  %v9606 = vpop.f32.mrb[0].mxu0
  %v9607 = vadd.f32 %v8886, %v9606
  %v9608 = vpop.f32.mrb[0].mxu0
  %v9609 = vpop.f32.mrb[0].mxu0
  %v9610 = vadd.f32 %v8889, %v9609
  %v9611 = vpop.f32.mrb[0].mxu0
  %9612 = vmatprep.mubr.bf16.mxu0 %v8113
  %9613 = vmatmul.mubr.bf16.gmra.mrb[0].mxu0 %v8112
  %v9614 = vpop.f32.mrb[0].mxu0
  %v9615 = vadd.f32 %v8894, %v9614
  %v9616 = vpop.f32.mrb[0].mxu0
  %v9617 = vpop.f32.mrb[0].mxu0
  %v9618 = vadd.f32 %v8897, %v9617
  %v9619 = vpop.f32.mrb[0].mxu0
  %9620 = vmatprep.mubr.bf16.mxu0 %v8122
  %9621 = vmatmul.mubr.bf16.gmra.mrb[0].mxu0 %v8121
  %v9622 = vpop.f32.mrb[0].mxu0
  %v9623 = vadd.f32 %v8902, %v9622
  %v9624 = vpop.f32.mrb[0].mxu0
  %v9625 = vpop.f32.mrb[0].mxu0
  %v9626 = vadd.f32 %v8905, %v9625
  %v9627 = vpop.f32.mrb[0].mxu0
  %9628 = vmatprep.mubr.bf16.mxu0 %v8131
  %9629 = vmatmul.mubr.bf16.gmra.mrb[0].mxu0 %v8130
  %v9630 = vpop.f32.mrb[0].mxu0
  %v9631 = vadd.f32 %v8910, %v9630
  %v9632 = vpop.f32.mrb[0].mxu0
  %v9633 = vpop.f32.mrb[0].mxu0
  %v9634 = vadd.f32 %v8913, %v9633
  %v9635 = vpop.f32.mrb[0].mxu0
  %9636 = vmatprep.mubr.bf16.mxu0 %v8140
  %9637 = vmatmul.mubr.bf16.gmra.mrb[0].mxu0 %v8139
  %v9638 = vpop.f32.mrb[0].mxu0
  %v9639 = vadd.f32 %v8918, %v9638
  %v9640 = vpop.f32.mrb[0].mxu0
  %v9641 = vpop.f32.mrb[0].mxu0
  %v9642 = vadd.f32 %v8921, %v9641
  %v9643 = vpop.f32.mrb[0].mxu0
  %9644 = vmatprep.mubr.bf16.mxu0 %v8149
  %9645 = vmatmul.mubr.bf16.gmra.mrb[0].mxu0 %v8148
  %v9646 = vpop.f32.mrb[0].mxu0
  %v9647 = vadd.f32 %v8926, %v9646
  %v9648 = vpop.f32.mrb[0].mxu0
  %v9649 = vpop.f32.mrb[0].mxu0
  %v9650 = vadd.f32 %v8929, %v9649
  %v9651 = vpop.f32.mrb[0].mxu0
  %9652 = vmatprep.mubr.bf16.mxu0 %v8158
  %9653 = vmatmul.mubr.bf16.gmra.mrb[0].mxu0 %v8157
  %v9654 = vpop.f32.mrb[0].mxu0
  %v9655 = vadd.f32 %v8934, %v9654
  %v9656 = vpop.f32.mrb[0].mxu0
  %v9657 = vpop.f32.mrb[0].mxu0
  %v9658 = vadd.f32 %v8937, %v9657
  %v9659 = vpop.f32.mrb[0].mxu0
  %9660 = vmatprep.mubr.bf16.mxu0 %v8167
  %9661 = vmatmul.mubr.bf16.gmra.mrb[0].mxu0 %v8166
  %v9662 = vpop.f32.mrb[0].mxu0
  %v9663 = vadd.f32 %v8942, %v9662
  %v9664 = vpop.f32.mrb[0].mxu0
  %v9665 = vpop.f32.mrb[0].mxu0
  %v9666 = vadd.f32 %v8945, %v9665
  %v9667 = vpop.f32.mrb[0].mxu0
  %9668 = vmatprep.mubr.bf16.mxu0 %v8176
  %9669 = vmatmul.mubr.bf16.gmra.mrb[0].mxu0 %v8175
  %v9670 = vpop.f32.mrb[0].mxu0
  %v9671 = vadd.f32 %v8950, %v9670
  %v9672 = vpop.f32.mrb[0].mxu0
  %v9673 = vpop.f32.mrb[0].mxu0
  %v9674 = vadd.f32 %v8953, %v9673
  %v9675 = vpop.f32.mrb[0].mxu0
  %9676 = vmatprep.mubr.bf16.mxu0 %v8185
  %9677 = vmatmul.mubr.bf16.gmra.mrb[0].mxu0 %v8184
  %v9678 = vpop.f32.mrb[0].mxu0
  %v9679 = vadd.f32 %v8958, %v9678
  %v9680 = vpop.f32.mrb[0].mxu0
  %v9681 = vpop.f32.mrb[0].mxu0
  %v9682 = vadd.f32 %v8961, %v9681
  %v9683 = vpop.f32.mrb[0].mxu0
  %9684 = vmatprep.mubr.bf16.mxu0 %v8194
  %9685 = vmatmul.mubr.bf16.gmra.mrb[0].mxu0 %v8193
  %v9686 = vpop.f32.mrb[0].mxu0
  %v9687 = vadd.f32 %v8966, %v9686
  %v9688 = vpop.f32.mrb[0].mxu0
  %v9689 = vpop.f32.mrb[0].mxu0
  %v9690 = vadd.f32 %v8969, %v9689
  %v9691 = vpop.f32.mrb[0].mxu0
  %9692 = vmatprep.mubr.bf16.mxu0 %v8203
  %9693 = vmatmul.mubr.bf16.gmra.mrb[0].mxu0 %v8202
  %v9694 = vpop.f32.mrb[0].mxu0
  %v9695 = vadd.f32 %v8974, %v9694
  %v9696 = vpop.f32.mrb[0].mxu0
  %v9697 = vpop.f32.mrb[0].mxu0
  %v9698 = vadd.f32 %v8977, %v9697
  %v9699 = vpop.f32.mrb[0].mxu0
  %9700 = vmatprep.mubr.bf16.mxu0 %v8212
  %9701 = vmatmul.mubr.bf16.gmra.mrb[0].mxu0 %v8211
  %v9702 = vpop.f32.mrb[0].mxu0
  %v9703 = vadd.f32 %v8982, %v9702
  %v9704 = vpop.f32.mrb[0].mxu0
  %v9705 = vpop.f32.mrb[0].mxu0
  %v9706 = vadd.f32 %v8985, %v9705
  %v9707 = vpop.f32.mrb[0].mxu0
  %9708 = vmatprep.mubr.bf16.mxu0 %v8221
  %9709 = vmatmul.mubr.bf16.gmra.mrb[0].mxu0 %v8220
  %v9710 = vpop.f32.mrb[0].mxu0
  %v9711 = vadd.f32 %v8990, %v9710
  %v9712 = vpop.f32.mrb[0].mxu0
  %v9713 = vpop.f32.mrb[0].mxu0
  %v9714 = vadd.f32 %v8993, %v9713
  %v9715 = vpop.f32.mrb[0].mxu0
  %9716 = vmatprep.mubr.bf16.mxu0 %v8230
  %9717 = vmatmul.mubr.bf16.gmra.mrb[0].mxu0 %v8229
  %v9718 = vpop.f32.mrb[0].mxu0
  %v9719 = vadd.f32 %v8998, %v9718
  %v9720 = vpop.f32.mrb[0].mxu0
  %v9721 = vpop.f32.mrb[0].mxu0
  %v9722 = vadd.f32 %v9001, %v9721
  %v9723 = vpop.f32.mrb[0].mxu0
  %9724 = vmatprep.mubr.bf16.mxu0 %v8239
  %9725 = vmatmul.mubr.bf16.gmra.mrb[0].mxu0 %v8238
  %v9726 = vpop.f32.mrb[0].mxu0
  %v9727 = vadd.f32 %v9006, %v9726
  %v9728 = vpop.f32.mrb[0].mxu0
  %v9729 = vpop.f32.mrb[0].mxu0
  %v9730 = vadd.f32 %v9009, %v9729
  %v9731 = vpop.f32.mrb[0].mxu0
  %9732 = vmatprep.mubr.bf16.mxu0 %v8248
  %9733 = vmatmul.mubr.bf16.gmra.mrb[0].mxu0 %v8247
  %v9734 = vpop.f32.mrb[0].mxu0
  %v9735 = vadd.f32 %v9014, %v9734
  %v9736 = vpop.f32.mrb[0].mxu0
  %v9737 = vpop.f32.mrb[0].mxu0
  %v9738 = vadd.f32 %v9017, %v9737
  %v9739 = vpop.f32.mrb[0].mxu0
  %9740 = vmatprep.mubr.bf16.mxu0 %v8257
  %9741 = vmatmul.mubr.bf16.gmra.mrb[0].mxu0 %v8256
  %v9742 = vpop.f32.mrb[0].mxu0
  %v9743 = vadd.f32 %v9022, %v9742
  %v9744 = vpop.f32.mrb[0].mxu0
  %v9745 = vpop.f32.mrb[0].mxu0
  %v9746 = vadd.f32 %v9025, %v9745
  %v9747 = vpop.f32.mrb[0].mxu0
  %9748 = vmatprep.mubr.bf16.mxu0 %v8266
  %9749 = vmatmul.mubr.bf16.gmra.mrb[0].mxu0 %v8265
  %v9750 = vpop.f32.mrb[0].mxu0
  %v9751 = vadd.f32 %v9030, %v9750
  %v9752 = vpop.f32.mrb[0].mxu0
  %v9753 = vpop.f32.mrb[0].mxu0
  %v9754 = vadd.f32 %v9033, %v9753
  %v9755 = vpop.f32.mrb[0].mxu0
  %9756 = vmatprep.mubr.bf16.mxu0 %v8275
  %9757 = vmatmul.mubr.bf16.gmra.mrb[0].mxu0 %v8274
  %v9758 = vpop.f32.mrb[0].mxu0
  %v9759 = vadd.f32 %v9038, %v9758
  %v9760 = vpop.f32.mrb[0].mxu0
  %v9761 = vpop.f32.mrb[0].mxu0
  %v9762 = vadd.f32 %v9041, %v9761
  %v9763 = vpop.f32.mrb[0].mxu0
  %9764 = vmatprep.mubr.bf16.mxu0 %v8284
  %9765 = vmatmul.mubr.bf16.gmra.mrb[0].mxu0 %v8283
  %v9766 = vpop.f32.mrb[0].mxu0
  %v9767 = vadd.f32 %v9046, %v9766
  %v9768 = vpop.f32.mrb[0].mxu0
  %v9769 = vpop.f32.mrb[0].mxu0
  %v9770 = vadd.f32 %v9049, %v9769
  %v9771 = vpop.f32.mrb[0].mxu0
  %9772 = vmatprep.mubr.bf16.mxu0 %v8293
  %9773 = vmatmul.mubr.bf16.gmra.mrb[0].mxu0 %v8292
  %v9774 = vpop.f32.mrb[0].mxu0
  %v9775 = vadd.f32 %v9054, %v9774
  %v9776 = vpop.f32.mrb[0].mxu0
  %v9777 = vpop.f32.mrb[0].mxu0
  %v9778 = vadd.f32 %v9057, %v9777
  %v9779 = vpop.f32.mrb[0].mxu0
  %9780 = vmatprep.mubr.bf16.mxu0 %v8302
  %9781 = vmatmul.mubr.bf16.gmra.mrb[0].mxu0 %v8301
  %v9782 = vpop.f32.mrb[0].mxu0
  %v9783 = vadd.f32 %v9062, %v9782
  %v9784 = vpop.f32.mrb[0].mxu0
  %v9785 = vpop.f32.mrb[0].mxu0
  %v9786 = vadd.f32 %v9065, %v9785
  %v9787 = vpop.f32.mrb[0].mxu0
  %9788 = vdwg.mxu0
  %9789 = vmatprep.subr.bf16.mxu0 0
  %9790 = vmatpush1.bf16.msra.mxu0 %v9372
  %9791 = vmatprep.subr.bf16.mxu0 0
  %9792 = vmatpush1.bf16.msra.mxu0 %v9373
  %9793 = vmatprep.subr.bf16.mxu0 0
  %9794 = vmatpush1.bf16.msra.mxu0 %v9374
  %9795 = vmatprep.subr.bf16.mxu0 0
  %9796 = vmatpush1.bf16.msra.mxu0 %v9375
  %9797 = vmatprep.subr.bf16.mxu0 0
  %9798 = vmatpush1.bf16.msra.mxu0 %v9376
  %9799 = vmatprep.subr.bf16.mxu0 0
  %9800 = vmatpush1.bf16.msra.mxu0 %v9377
  %9801 = vmatprep.subr.bf16.mxu0 0
  %9802 = vmatpush1.bf16.msra.mxu0 %v9378
  %9803 = vmatprep.subr.bf16.mxu0 0
  %9804 = vmatpush1.bf16.msra.mxu0 %v9379
  %9805 = vmatprep.subr.bf16.mxu0 0
  %9806 = vmatpush1.bf16.msra.mxu0 %v9380
  %9807 = vmatprep.subr.bf16.mxu0 0
  %9808 = vmatpush1.bf16.msra.mxu0 %v9381
  %9809 = vmatprep.subr.bf16.mxu0 0
  %9810 = vmatpush1.bf16.msra.mxu0 %v9382
  %9811 = vmatprep.subr.bf16.mxu0 0
  %9812 = vmatpush1.bf16.msra.mxu0 %v9383
  %9813 = vmatprep.subr.bf16.mxu0 0
  %9814 = vmatpush1.bf16.msra.mxu0 %v9384
  %9815 = vmatprep.subr.bf16.mxu0 0
  %9816 = vmatpush1.bf16.msra.mxu0 %v9385
  %9817 = vmatprep.subr.bf16.mxu0 0
  %9818 = vmatpush1.bf16.msra.mxu0 %v9386
  %9819 = vmatprep.subr.bf16.mxu0 0
  %9820 = vmatpush1.bf16.msra.mxu0 %v9387
  %9821 = vmatprep.mubr.bf16.mxu0 %v8025
  %9822 = vmatmul.mubr.bf16.gmra.mrb[0].mxu0 %v8024
  %v9823 = vpop.f32.mrb[0].mxu0
  %v9824 = vadd.f32 %v9535, %v9823
  %v9825 = vpop.f32.mrb[0].mxu0
  %v9826 = vpop.f32.mrb[0].mxu0
  %v9827 = vadd.f32 %v9538, %v9826
  %v9828 = vpop.f32.mrb[0].mxu0
  %9829 = vmatprep.mubr.bf16.mxu0 %v8034
  %9830 = vmatmul.mubr.bf16.gmra.mrb[0].mxu0 %v8033
  %v9831 = vpop.f32.mrb[0].mxu0
  %v9832 = vadd.f32 %v9543, %v9831
  %v9833 = vpop.f32.mrb[0].mxu0
  %v9834 = vpop.f32.mrb[0].mxu0
  %v9835 = vadd.f32 %v9546, %v9834
  %v9836 = vpop.f32.mrb[0].mxu0
  %9837 = vmatprep.mubr.bf16.mxu0 %v8043
  %9838 = vmatmul.mubr.bf16.gmra.mrb[0].mxu0 %v8042
  %v9839 = vpop.f32.mrb[0].mxu0
  %v9840 = vadd.f32 %v9551, %v9839
  %v9841 = vpop.f32.mrb[0].mxu0
  %v9842 = vpop.f32.mrb[0].mxu0
  %v9843 = vadd.f32 %v9554, %v9842
  %v9844 = vpop.f32.mrb[0].mxu0
  %9845 = vmatprep.mubr.bf16.mxu0 %v8052
  %9846 = vmatmul.mubr.bf16.gmra.mrb[0].mxu0 %v8051
  %v9847 = vpop.f32.mrb[0].mxu0
  %v9848 = vadd.f32 %v9559, %v9847
  %v9849 = vpop.f32.mrb[0].mxu0
  %v9850 = vpop.f32.mrb[0].mxu0
  %v9851 = vadd.f32 %v9562, %v9850
  %v9852 = vpop.f32.mrb[0].mxu0
  %9853 = vmatprep.mubr.bf16.mxu0 %v8061
  %9854 = vmatmul.mubr.bf16.gmra.mrb[0].mxu0 %v8060
  %v9855 = vpop.f32.mrb[0].mxu0
  %v9856 = vadd.f32 %v9567, %v9855
  %v9857 = vpop.f32.mrb[0].mxu0
  %v9858 = vpop.f32.mrb[0].mxu0
  %v9859 = vadd.f32 %v9570, %v9858
  %v9860 = vpop.f32.mrb[0].mxu0
  %9861 = vmatprep.mubr.bf16.mxu0 %v8070
  %9862 = vmatmul.mubr.bf16.gmra.mrb[0].mxu0 %v8069
  %v9863 = vpop.f32.mrb[0].mxu0
  %v9864 = vadd.f32 %v9575, %v9863
  %v9865 = vpop.f32.mrb[0].mxu0
  %v9866 = vpop.f32.mrb[0].mxu0
  %v9867 = vadd.f32 %v9578, %v9866
  %v9868 = vpop.f32.mrb[0].mxu0
  %9869 = vmatprep.mubr.bf16.mxu0 %v8079
  %9870 = vmatmul.mubr.bf16.gmra.mrb[0].mxu0 %v8078
  %v9871 = vpop.f32.mrb[0].mxu0
  %v9872 = vadd.f32 %v9583, %v9871
  %v9873 = vpop.f32.mrb[0].mxu0
  %v9874 = vpop.f32.mrb[0].mxu0
  %v9875 = vadd.f32 %v9586, %v9874
  %v9876 = vpop.f32.mrb[0].mxu0
  %9877 = vmatprep.mubr.bf16.mxu0 %v8088
  %9878 = vmatmul.mubr.bf16.gmra.mrb[0].mxu0 %v8087
  %v9879 = vpop.f32.mrb[0].mxu0
  %v9880 = vadd.f32 %v9591, %v9879
  %v9881 = vpop.f32.mrb[0].mxu0
  %v9882 = vpop.f32.mrb[0].mxu0
  %v9883 = vadd.f32 %v9594, %v9882
  %v9884 = vpop.f32.mrb[0].mxu0
  %9885 = vmatprep.mubr.bf16.mxu0 %v8097
  %9886 = vmatmul.mubr.bf16.gmra.mrb[0].mxu0 %v8096
  %v9887 = vpop.f32.mrb[0].mxu0
  %v9888 = vadd.f32 %v9599, %v9887
  %v9889 = vpop.f32.mrb[0].mxu0
  %v9890 = vpop.f32.mrb[0].mxu0
  %v9891 = vadd.f32 %v9602, %v9890
  %v9892 = vpop.f32.mrb[0].mxu0
  %9893 = vmatprep.mubr.bf16.mxu0 %v8106
  %9894 = vmatmul.mubr.bf16.gmra.mrb[0].mxu0 %v8105
  %v9895 = vpop.f32.mrb[0].mxu0
  %v9896 = vadd.f32 %v9607, %v9895
  %v9897 = vpop.f32.mrb[0].mxu0
  %v9898 = vpop.f32.mrb[0].mxu0
  %v9899 = vadd.f32 %v9610, %v9898
  %v9900 = vpop.f32.mrb[0].mxu0
  %9901 = vmatprep.mubr.bf16.mxu0 %v8115
  %9902 = vmatmul.mubr.bf16.gmra.mrb[0].mxu0 %v8114
  %v9903 = vpop.f32.mrb[0].mxu0
  %v9904 = vadd.f32 %v9615, %v9903
  %v9905 = vpop.f32.mrb[0].mxu0
  %v9906 = vpop.f32.mrb[0].mxu0
  %v9907 = vadd.f32 %v9618, %v9906
  %v9908 = vpop.f32.mrb[0].mxu0
  %9909 = vmatprep.mubr.bf16.mxu0 %v8124
  %9910 = vmatmul.mubr.bf16.gmra.mrb[0].mxu0 %v8123
  %v9911 = vpop.f32.mrb[0].mxu0
  %v9912 = vadd.f32 %v9623, %v9911
  %v9913 = vpop.f32.mrb[0].mxu0
  %v9914 = vpop.f32.mrb[0].mxu0
  %v9915 = vadd.f32 %v9626, %v9914
  %v9916 = vpop.f32.mrb[0].mxu0
  %9917 = vmatprep.mubr.bf16.mxu0 %v8133
  %9918 = vmatmul.mubr.bf16.gmra.mrb[0].mxu0 %v8132
  %v9919 = vpop.f32.mrb[0].mxu0
  %v9920 = vadd.f32 %v9631, %v9919
  %v9921 = vpop.f32.mrb[0].mxu0
  %v9922 = vpop.f32.mrb[0].mxu0
  %v9923 = vadd.f32 %v9634, %v9922
  %v9924 = vpop.f32.mrb[0].mxu0
  %9925 = vmatprep.mubr.bf16.mxu0 %v8142
  %9926 = vmatmul.mubr.bf16.gmra.mrb[0].mxu0 %v8141
  %v9927 = vpop.f32.mrb[0].mxu0
  %v9928 = vadd.f32 %v9639, %v9927
  %v9929 = vpop.f32.mrb[0].mxu0
  %v9930 = vpop.f32.mrb[0].mxu0
  %v9931 = vadd.f32 %v9642, %v9930
  %v9932 = vpop.f32.mrb[0].mxu0
  %9933 = vmatprep.mubr.bf16.mxu0 %v8151
  %9934 = vmatmul.mubr.bf16.gmra.mrb[0].mxu0 %v8150
  %v9935 = vpop.f32.mrb[0].mxu0
  %v9936 = vadd.f32 %v9647, %v9935
  %v9937 = vpop.f32.mrb[0].mxu0
  %v9938 = vpop.f32.mrb[0].mxu0
  %v9939 = vadd.f32 %v9650, %v9938
  %v9940 = vpop.f32.mrb[0].mxu0
  %9941 = vmatprep.mubr.bf16.mxu0 %v8160
  %9942 = vmatmul.mubr.bf16.gmra.mrb[0].mxu0 %v8159
  %v9943 = vpop.f32.mrb[0].mxu0
  %v9944 = vadd.f32 %v9655, %v9943
  %v9945 = vpop.f32.mrb[0].mxu0
  %v9946 = vpop.f32.mrb[0].mxu0
  %v9947 = vadd.f32 %v9658, %v9946
  %v9948 = vpop.f32.mrb[0].mxu0
  %9949 = vmatprep.mubr.bf16.mxu0 %v8169
  %9950 = vmatmul.mubr.bf16.gmra.mrb[0].mxu0 %v8168
  %v9951 = vpop.f32.mrb[0].mxu0
  %v9952 = vadd.f32 %v9663, %v9951
  %v9953 = vpop.f32.mrb[0].mxu0
  %v9954 = vpop.f32.mrb[0].mxu0
  %v9955 = vadd.f32 %v9666, %v9954
  %v9956 = vpop.f32.mrb[0].mxu0
  %9957 = vmatprep.mubr.bf16.mxu0 %v8178
  %9958 = vmatmul.mubr.bf16.gmra.mrb[0].mxu0 %v8177
  %v9959 = vpop.f32.mrb[0].mxu0
  %v9960 = vadd.f32 %v9671, %v9959
  %v9961 = vpop.f32.mrb[0].mxu0
  %v9962 = vpop.f32.mrb[0].mxu0
  %v9963 = vadd.f32 %v9674, %v9962
  %v9964 = vpop.f32.mrb[0].mxu0
  %9965 = vmatprep.mubr.bf16.mxu0 %v8187
  %9966 = vmatmul.mubr.bf16.gmra.mrb[0].mxu0 %v8186
  %v9967 = vpop.f32.mrb[0].mxu0
  %v9968 = vadd.f32 %v9679, %v9967
  %v9969 = vpop.f32.mrb[0].mxu0
  %v9970 = vpop.f32.mrb[0].mxu0
  %v9971 = vadd.f32 %v9682, %v9970
  %v9972 = vpop.f32.mrb[0].mxu0
  %9973 = vmatprep.mubr.bf16.mxu0 %v8196
  %9974 = vmatmul.mubr.bf16.gmra.mrb[0].mxu0 %v8195
  %v9975 = vpop.f32.mrb[0].mxu0
  %v9976 = vadd.f32 %v9687, %v9975
  %v9977 = vpop.f32.mrb[0].mxu0
  %v9978 = vpop.f32.mrb[0].mxu0
  %v9979 = vadd.f32 %v9690, %v9978
  %v9980 = vpop.f32.mrb[0].mxu0
  %9981 = vmatprep.mubr.bf16.mxu0 %v8205
  %9982 = vmatmul.mubr.bf16.gmra.mrb[0].mxu0 %v8204
  %v9983 = vpop.f32.mrb[0].mxu0
  %v9984 = vadd.f32 %v9695, %v9983
  %v9985 = vpop.f32.mrb[0].mxu0
  %v9986 = vpop.f32.mrb[0].mxu0
  %v9987 = vadd.f32 %v9698, %v9986
  %v9988 = vpop.f32.mrb[0].mxu0
  %9989 = vmatprep.mubr.bf16.mxu0 %v8214
  %9990 = vmatmul.mubr.bf16.gmra.mrb[0].mxu0 %v8213
  %v9991 = vpop.f32.mrb[0].mxu0
  %v9992 = vadd.f32 %v9703, %v9991
  %v9993 = vpop.f32.mrb[0].mxu0
  %v9994 = vpop.f32.mrb[0].mxu0
  %v9995 = vadd.f32 %v9706, %v9994
  %v9996 = vpop.f32.mrb[0].mxu0
  %9997 = vmatprep.mubr.bf16.mxu0 %v8223
  %9998 = vmatmul.mubr.bf16.gmra.mrb[0].mxu0 %v8222
  %v9999 = vpop.f32.mrb[0].mxu0
  %v10000 = vadd.f32 %v9711, %v9999
  %v10001 = vpop.f32.mrb[0].mxu0
  %v10002 = vpop.f32.mrb[0].mxu0
  %v10003 = vadd.f32 %v9714, %v10002
  %v10004 = vpop.f32.mrb[0].mxu0
  %10005 = vmatprep.mubr.bf16.mxu0 %v8232
  %10006 = vmatmul.mubr.bf16.gmra.mrb[0].mxu0 %v8231
  %v10007 = vpop.f32.mrb[0].mxu0
  %v10008 = vadd.f32 %v9719, %v10007
  %v10009 = vpop.f32.mrb[0].mxu0
  %v10010 = vpop.f32.mrb[0].mxu0
  %v10011 = vadd.f32 %v9722, %v10010
  %v10012 = vpop.f32.mrb[0].mxu0
  %10013 = vmatprep.mubr.bf16.mxu0 %v8241
  %10014 = vmatmul.mubr.bf16.gmra.mrb[0].mxu0 %v8240
  %v10015 = vpop.f32.mrb[0].mxu0
  %v10016 = vadd.f32 %v9727, %v10015
  %v10017 = vpop.f32.mrb[0].mxu0
  %v10018 = vpop.f32.mrb[0].mxu0
  %v10019 = vadd.f32 %v9730, %v10018
  %v10020 = vpop.f32.mrb[0].mxu0
  %10021 = vmatprep.mubr.bf16.mxu0 %v8250
  %10022 = vmatmul.mubr.bf16.gmra.mrb[0].mxu0 %v8249
  %v10023 = vpop.f32.mrb[0].mxu0
  %v10024 = vadd.f32 %v9735, %v10023
  %v10025 = vpop.f32.mrb[0].mxu0
  %v10026 = vpop.f32.mrb[0].mxu0
  %v10027 = vadd.f32 %v9738, %v10026
  %v10028 = vpop.f32.mrb[0].mxu0
  %10029 = vmatprep.mubr.bf16.mxu0 %v8259
  %10030 = vmatmul.mubr.bf16.gmra.mrb[0].mxu0 %v8258
  %v10031 = vpop.f32.mrb[0].mxu0
  %v10032 = vadd.f32 %v9743, %v10031
  %v10033 = vpop.f32.mrb[0].mxu0
  %v10034 = vpop.f32.mrb[0].mxu0
  %v10035 = vadd.f32 %v9746, %v10034
  %v10036 = vpop.f32.mrb[0].mxu0
  %10037 = vmatprep.mubr.bf16.mxu0 %v8268
  %10038 = vmatmul.mubr.bf16.gmra.mrb[0].mxu0 %v8267
  %v10039 = vpop.f32.mrb[0].mxu0
  %v10040 = vadd.f32 %v9751, %v10039
  %v10041 = vpop.f32.mrb[0].mxu0
  %v10042 = vpop.f32.mrb[0].mxu0
  %v10043 = vadd.f32 %v9754, %v10042
  %v10044 = vpop.f32.mrb[0].mxu0
  %10045 = vmatprep.mubr.bf16.mxu0 %v8277
  %10046 = vmatmul.mubr.bf16.gmra.mrb[0].mxu0 %v8276
  %v10047 = vpop.f32.mrb[0].mxu0
  %v10048 = vadd.f32 %v9759, %v10047
  %v10049 = vpop.f32.mrb[0].mxu0
  %v10050 = vpop.f32.mrb[0].mxu0
  %v10051 = vadd.f32 %v9762, %v10050
  %v10052 = vpop.f32.mrb[0].mxu0
  %10053 = vmatprep.mubr.bf16.mxu0 %v8286
  %10054 = vmatmul.mubr.bf16.gmra.mrb[0].mxu0 %v8285
  %v10055 = vpop.f32.mrb[0].mxu0
  %v10056 = vadd.f32 %v9767, %v10055
  %v10057 = vpop.f32.mrb[0].mxu0
  %v10058 = vpop.f32.mrb[0].mxu0
  %v10059 = vadd.f32 %v9770, %v10058
  %v10060 = vpop.f32.mrb[0].mxu0
  %10061 = vmatprep.mubr.bf16.mxu0 %v8295
  %10062 = vmatmul.mubr.bf16.gmra.mrb[0].mxu0 %v8294
  %v10063 = vpop.f32.mrb[0].mxu0
  %v10064 = vadd.f32 %v9775, %v10063
  %v10065 = vpop.f32.mrb[0].mxu0
  %v10066 = vpop.f32.mrb[0].mxu0
  %v10067 = vadd.f32 %v9778, %v10066
  %v10068 = vpop.f32.mrb[0].mxu0
  %10069 = vmatprep.mubr.bf16.mxu0 %v8304
  %10070 = vmatmul.mubr.bf16.gmra.mrb[0].mxu0 %v8303
  %v10071 = vpop.f32.mrb[0].mxu0
  %v10072 = vadd.f32 %v9783, %v10071
  %v10073 = vpop.f32.mrb[0].mxu0
  %v10074 = vpop.f32.mrb[0].mxu0
  %v10075 = vadd.f32 %v9786, %v10074
  %v10076 = vpop.f32.mrb[0].mxu0
  %10077 = vdwg.mxu0
  %10078 = vmatprep.subr.bf16.mxu0 0
  %10079 = vmatpush1.bf16.msra.mxu0 %v9388
  %10080 = vmatprep.subr.bf16.mxu0 0
  %10081 = vmatpush1.bf16.msra.mxu0 %v9389
  %10082 = vmatprep.subr.bf16.mxu0 0
  %10083 = vmatpush1.bf16.msra.mxu0 %v9390
  %10084 = vmatprep.subr.bf16.mxu0 0
  %10085 = vmatpush1.bf16.msra.mxu0 %v9391
  %10086 = vmatprep.subr.bf16.mxu0 0
  %10087 = vmatpush1.bf16.msra.mxu0 %v9392
  %10088 = vmatprep.subr.bf16.mxu0 0
  %10089 = vmatpush1.bf16.msra.mxu0 %v9393
  %10090 = vmatprep.subr.bf16.mxu0 0
  %10091 = vmatpush1.bf16.msra.mxu0 %v9394
  %10092 = vmatprep.subr.bf16.mxu0 0
  %10093 = vmatpush1.bf16.msra.mxu0 %v9395
  %10094 = vmatprep.subr.bf16.mxu0 0
  %10095 = vmatpush1.bf16.msra.mxu0 %v9396
  %10096 = vmatprep.subr.bf16.mxu0 0
  %10097 = vmatpush1.bf16.msra.mxu0 %v9397
  %10098 = vmatprep.subr.bf16.mxu0 0
  %10099 = vmatpush1.bf16.msra.mxu0 %v9398
  %10100 = vmatprep.subr.bf16.mxu0 0
  %10101 = vmatpush1.bf16.msra.mxu0 %v9399
  %10102 = vmatprep.subr.bf16.mxu0 0
  %10103 = vmatpush1.bf16.msra.mxu0 %v9400
  %10104 = vmatprep.subr.bf16.mxu0 0
  %10105 = vmatpush1.bf16.msra.mxu0 %v9401
  %10106 = vmatprep.subr.bf16.mxu0 0
  %10107 = vmatpush1.bf16.msra.mxu0 %v9402
  %10108 = vmatprep.subr.bf16.mxu0 0
  %10109 = vmatpush1.bf16.msra.mxu0 %v9403
  %10110 = vmatprep.mubr.bf16.mxu0 %v8027
  %10111 = vmatmul.mubr.bf16.gmra.mrb[0].mxu0 %v8026
  %v10112 = vpop.f32.mrb[0].mxu0
  %v10113 = vadd.f32 %v9824, %v10112
  %v10114 = vpop.f32.mrb[0].mxu0
  %v10115 = vpop.f32.mrb[0].mxu0
  %v10116 = vadd.f32 %v9827, %v10115
  %v10117 = vpop.f32.mrb[0].mxu0
  %10118 = vmatprep.mubr.bf16.mxu0 %v8036
  %10119 = vmatmul.mubr.bf16.gmra.mrb[0].mxu0 %v8035
  %v10120 = vpop.f32.mrb[0].mxu0
  %v10121 = vadd.f32 %v9832, %v10120
  %v10122 = vpop.f32.mrb[0].mxu0
  %v10123 = vpop.f32.mrb[0].mxu0
  %v10124 = vadd.f32 %v9835, %v10123
  %v10125 = vpop.f32.mrb[0].mxu0
  %10126 = vmatprep.mubr.bf16.mxu0 %v8045
  %10127 = vmatmul.mubr.bf16.gmra.mrb[0].mxu0 %v8044
  %v10128 = vpop.f32.mrb[0].mxu0
  %v10129 = vadd.f32 %v9840, %v10128
  %v10130 = vpop.f32.mrb[0].mxu0
  %v10131 = vpop.f32.mrb[0].mxu0
  %v10132 = vadd.f32 %v9843, %v10131
  %v10133 = vpop.f32.mrb[0].mxu0
  %10134 = vmatprep.mubr.bf16.mxu0 %v8054
  %10135 = vmatmul.mubr.bf16.gmra.mrb[0].mxu0 %v8053
  %v10136 = vpop.f32.mrb[0].mxu0
  %v10137 = vadd.f32 %v9848, %v10136
  %v10138 = vpop.f32.mrb[0].mxu0
  %v10139 = vpop.f32.mrb[0].mxu0
  %v10140 = vadd.f32 %v9851, %v10139
  %v10141 = vpop.f32.mrb[0].mxu0
  %10142 = vmatprep.mubr.bf16.mxu0 %v8063
  %10143 = vmatmul.mubr.bf16.gmra.mrb[0].mxu0 %v8062
  %v10144 = vpop.f32.mrb[0].mxu0
  %v10145 = vadd.f32 %v9856, %v10144
  %v10146 = vpop.f32.mrb[0].mxu0
  %v10147 = vpop.f32.mrb[0].mxu0
  %v10148 = vadd.f32 %v9859, %v10147
  %v10149 = vpop.f32.mrb[0].mxu0
  %10150 = vmatprep.mubr.bf16.mxu0 %v8072
  %10151 = vmatmul.mubr.bf16.gmra.mrb[0].mxu0 %v8071
  %v10152 = vpop.f32.mrb[0].mxu0
  %v10153 = vadd.f32 %v9864, %v10152
  %v10154 = vpop.f32.mrb[0].mxu0
  %v10155 = vpop.f32.mrb[0].mxu0
  %v10156 = vadd.f32 %v9867, %v10155
  %v10157 = vpop.f32.mrb[0].mxu0
  %10158 = vmatprep.mubr.bf16.mxu0 %v8081
  %10159 = vmatmul.mubr.bf16.gmra.mrb[0].mxu0 %v8080
  %v10160 = vpop.f32.mrb[0].mxu0
  %v10161 = vadd.f32 %v9872, %v10160
  %v10162 = vpop.f32.mrb[0].mxu0
  %v10163 = vpop.f32.mrb[0].mxu0
  %v10164 = vadd.f32 %v9875, %v10163
  %v10165 = vpop.f32.mrb[0].mxu0
  %10166 = vmatprep.mubr.bf16.mxu0 %v8090
  %10167 = vmatmul.mubr.bf16.gmra.mrb[0].mxu0 %v8089
  %v10168 = vpop.f32.mrb[0].mxu0
  %v10169 = vadd.f32 %v9880, %v10168
  %v10170 = vpop.f32.mrb[0].mxu0
  %v10171 = vpop.f32.mrb[0].mxu0
  %v10172 = vadd.f32 %v9883, %v10171
  %v10173 = vpop.f32.mrb[0].mxu0
  %10174 = vmatprep.mubr.bf16.mxu0 %v8099
  %10175 = vmatmul.mubr.bf16.gmra.mrb[0].mxu0 %v8098
  %v10176 = vpop.f32.mrb[0].mxu0
  %v10177 = vadd.f32 %v9888, %v10176
  %v10178 = vpop.f32.mrb[0].mxu0
  %v10179 = vpop.f32.mrb[0].mxu0
  %v10180 = vadd.f32 %v9891, %v10179
  %v10181 = vpop.f32.mrb[0].mxu0
  %10182 = vmatprep.mubr.bf16.mxu0 %v8108
  %10183 = vmatmul.mubr.bf16.gmra.mrb[0].mxu0 %v8107
  %v10184 = vpop.f32.mrb[0].mxu0
  %v10185 = vadd.f32 %v9896, %v10184
  %v10186 = vpop.f32.mrb[0].mxu0
  %v10187 = vpop.f32.mrb[0].mxu0
  %v10188 = vadd.f32 %v9899, %v10187
  %v10189 = vpop.f32.mrb[0].mxu0
  %10190 = vmatprep.mubr.bf16.mxu0 %v8117
  %10191 = vmatmul.mubr.bf16.gmra.mrb[0].mxu0 %v8116
  %v10192 = vpop.f32.mrb[0].mxu0
  %v10193 = vadd.f32 %v9904, %v10192
  %v10194 = vpop.f32.mrb[0].mxu0
  %v10195 = vpop.f32.mrb[0].mxu0
  %v10196 = vadd.f32 %v9907, %v10195
  %v10197 = vpop.f32.mrb[0].mxu0
  %10198 = vmatprep.mubr.bf16.mxu0 %v8126
  %10199 = vmatmul.mubr.bf16.gmra.mrb[0].mxu0 %v8125
  %v10200 = vpop.f32.mrb[0].mxu0
  %v10201 = vadd.f32 %v9912, %v10200
  %v10202 = vpop.f32.mrb[0].mxu0
  %v10203 = vpop.f32.mrb[0].mxu0
  %v10204 = vadd.f32 %v9915, %v10203
  %v10205 = vpop.f32.mrb[0].mxu0
  %10206 = vmatprep.mubr.bf16.mxu0 %v8135
  %10207 = vmatmul.mubr.bf16.gmra.mrb[0].mxu0 %v8134
  %v10208 = vpop.f32.mrb[0].mxu0
  %v10209 = vadd.f32 %v9920, %v10208
  %v10210 = vpop.f32.mrb[0].mxu0
  %v10211 = vpop.f32.mrb[0].mxu0
  %v10212 = vadd.f32 %v9923, %v10211
  %v10213 = vpop.f32.mrb[0].mxu0
  %10214 = vmatprep.mubr.bf16.mxu0 %v8144
  %10215 = vmatmul.mubr.bf16.gmra.mrb[0].mxu0 %v8143
  %v10216 = vpop.f32.mrb[0].mxu0
  %v10217 = vadd.f32 %v9928, %v10216
  %v10218 = vpop.f32.mrb[0].mxu0
  %v10219 = vpop.f32.mrb[0].mxu0
  %v10220 = vadd.f32 %v9931, %v10219
  %v10221 = vpop.f32.mrb[0].mxu0
  %10222 = vmatprep.mubr.bf16.mxu0 %v8153
  %10223 = vmatmul.mubr.bf16.gmra.mrb[0].mxu0 %v8152
  %v10224 = vpop.f32.mrb[0].mxu0
  %v10225 = vadd.f32 %v9936, %v10224
  %v10226 = vpop.f32.mrb[0].mxu0
  %v10227 = vpop.f32.mrb[0].mxu0
  %v10228 = vadd.f32 %v9939, %v10227
  %v10229 = vpop.f32.mrb[0].mxu0
  %10230 = vmatprep.mubr.bf16.mxu0 %v8162
  %10231 = vmatmul.mubr.bf16.gmra.mrb[0].mxu0 %v8161
  %v10232 = vpop.f32.mrb[0].mxu0
  %v10233 = vadd.f32 %v9944, %v10232
  %v10234 = vpop.f32.mrb[0].mxu0
  %v10235 = vpop.f32.mrb[0].mxu0
  %v10236 = vadd.f32 %v9947, %v10235
  %v10237 = vpop.f32.mrb[0].mxu0
  %10238 = vmatprep.mubr.bf16.mxu0 %v8171
  %10239 = vmatmul.mubr.bf16.gmra.mrb[0].mxu0 %v8170
  %v10240 = vpop.f32.mrb[0].mxu0
  %v10241 = vadd.f32 %v9952, %v10240
  %v10242 = vpop.f32.mrb[0].mxu0
  %v10243 = vpop.f32.mrb[0].mxu0
  %v10244 = vadd.f32 %v9955, %v10243
  %v10245 = vpop.f32.mrb[0].mxu0
  %10246 = vmatprep.mubr.bf16.mxu0 %v8180
  %10247 = vmatmul.mubr.bf16.gmra.mrb[0].mxu0 %v8179
  %v10248 = vpop.f32.mrb[0].mxu0
  %v10249 = vadd.f32 %v9960, %v10248
  %v10250 = vpop.f32.mrb[0].mxu0
  %v10251 = vpop.f32.mrb[0].mxu0
  %v10252 = vadd.f32 %v9963, %v10251
  %v10253 = vpop.f32.mrb[0].mxu0
  %10254 = vmatprep.mubr.bf16.mxu0 %v8189
  %10255 = vmatmul.mubr.bf16.gmra.mrb[0].mxu0 %v8188
  %v10256 = vpop.f32.mrb[0].mxu0
  %v10257 = vadd.f32 %v9968, %v10256
  %v10258 = vpop.f32.mrb[0].mxu0
  %v10259 = vpop.f32.mrb[0].mxu0
  %v10260 = vadd.f32 %v9971, %v10259
  %v10261 = vpop.f32.mrb[0].mxu0
  %10262 = vmatprep.mubr.bf16.mxu0 %v8198
  %10263 = vmatmul.mubr.bf16.gmra.mrb[0].mxu0 %v8197
  %v10264 = vpop.f32.mrb[0].mxu0
  %v10265 = vadd.f32 %v9976, %v10264
  %v10266 = vpop.f32.mrb[0].mxu0
  %v10267 = vpop.f32.mrb[0].mxu0
  %v10268 = vadd.f32 %v9979, %v10267
  %v10269 = vpop.f32.mrb[0].mxu0
  %10270 = vmatprep.mubr.bf16.mxu0 %v8207
  %10271 = vmatmul.mubr.bf16.gmra.mrb[0].mxu0 %v8206
  %v10272 = vpop.f32.mrb[0].mxu0
  %v10273 = vadd.f32 %v9984, %v10272
  %v10274 = vpop.f32.mrb[0].mxu0
  %v10275 = vpop.f32.mrb[0].mxu0
  %v10276 = vadd.f32 %v9987, %v10275
  %v10277 = vpop.f32.mrb[0].mxu0
  %10278 = vmatprep.mubr.bf16.mxu0 %v8216
  %10279 = vmatmul.mubr.bf16.gmra.mrb[0].mxu0 %v8215
  %v10280 = vpop.f32.mrb[0].mxu0
  %v10281 = vadd.f32 %v9992, %v10280
  %v10282 = vpop.f32.mrb[0].mxu0
  %v10283 = vpop.f32.mrb[0].mxu0
  %v10284 = vadd.f32 %v9995, %v10283
  %v10285 = vpop.f32.mrb[0].mxu0
  %10286 = vmatprep.mubr.bf16.mxu0 %v8225
  %10287 = vmatmul.mubr.bf16.gmra.mrb[0].mxu0 %v8224
  %v10288 = vpop.f32.mrb[0].mxu0
  %v10289 = vadd.f32 %v10000, %v10288
  %v10290 = vpop.f32.mrb[0].mxu0
  %v10291 = vpop.f32.mrb[0].mxu0
  %v10292 = vadd.f32 %v10003, %v10291
  %v10293 = vpop.f32.mrb[0].mxu0
  %10294 = vmatprep.mubr.bf16.mxu0 %v8234
  %10295 = vmatmul.mubr.bf16.gmra.mrb[0].mxu0 %v8233
  %v10296 = vpop.f32.mrb[0].mxu0
  %v10297 = vadd.f32 %v10008, %v10296
  %v10298 = vpop.f32.mrb[0].mxu0
  %v10299 = vpop.f32.mrb[0].mxu0
  %v10300 = vadd.f32 %v10011, %v10299
  %v10301 = vpop.f32.mrb[0].mxu0
  %10302 = vmatprep.mubr.bf16.mxu0 %v8243
  %10303 = vmatmul.mubr.bf16.gmra.mrb[0].mxu0 %v8242
  %v10304 = vpop.f32.mrb[0].mxu0
  %v10305 = vadd.f32 %v10016, %v10304
  %v10306 = vpop.f32.mrb[0].mxu0
  %v10307 = vpop.f32.mrb[0].mxu0
  %v10308 = vadd.f32 %v10019, %v10307
  %v10309 = vpop.f32.mrb[0].mxu0
  %10310 = vmatprep.mubr.bf16.mxu0 %v8252
  %10311 = vmatmul.mubr.bf16.gmra.mrb[0].mxu0 %v8251
  %v10312 = vpop.f32.mrb[0].mxu0
  %v10313 = vadd.f32 %v10024, %v10312
  %v10314 = vpop.f32.mrb[0].mxu0
  %v10315 = vpop.f32.mrb[0].mxu0
  %v10316 = vadd.f32 %v10027, %v10315
  %v10317 = vpop.f32.mrb[0].mxu0
  %10318 = vmatprep.mubr.bf16.mxu0 %v8261
  %10319 = vmatmul.mubr.bf16.gmra.mrb[0].mxu0 %v8260
  %v10320 = vpop.f32.mrb[0].mxu0
  %v10321 = vadd.f32 %v10032, %v10320
  %v10322 = vpop.f32.mrb[0].mxu0
  %v10323 = vpop.f32.mrb[0].mxu0
  %v10324 = vadd.f32 %v10035, %v10323
  %v10325 = vpop.f32.mrb[0].mxu0
  %10326 = vmatprep.mubr.bf16.mxu0 %v8270
  %10327 = vmatmul.mubr.bf16.gmra.mrb[0].mxu0 %v8269
  %v10328 = vpop.f32.mrb[0].mxu0
  %v10329 = vadd.f32 %v10040, %v10328
  %v10330 = vpop.f32.mrb[0].mxu0
  %v10331 = vpop.f32.mrb[0].mxu0
  %v10332 = vadd.f32 %v10043, %v10331
  %v10333 = vpop.f32.mrb[0].mxu0
  %10334 = vmatprep.mubr.bf16.mxu0 %v8279
  %10335 = vmatmul.mubr.bf16.gmra.mrb[0].mxu0 %v8278
  %v10336 = vpop.f32.mrb[0].mxu0
  %v10337 = vadd.f32 %v10048, %v10336
  %v10338 = vpop.f32.mrb[0].mxu0
  %v10339 = vpop.f32.mrb[0].mxu0
  %v10340 = vadd.f32 %v10051, %v10339
  %v10341 = vpop.f32.mrb[0].mxu0
  %10342 = vmatprep.mubr.bf16.mxu0 %v8288
  %10343 = vmatmul.mubr.bf16.gmra.mrb[0].mxu0 %v8287
  %v10344 = vpop.f32.mrb[0].mxu0
  %v10345 = vadd.f32 %v10056, %v10344
  %v10346 = vpop.f32.mrb[0].mxu0
  %v10347 = vpop.f32.mrb[0].mxu0
  %v10348 = vadd.f32 %v10059, %v10347
  %v10349 = vpop.f32.mrb[0].mxu0
  %10350 = vmatprep.mubr.bf16.mxu0 %v8297
  %10351 = vmatmul.mubr.bf16.gmra.mrb[0].mxu0 %v8296
  %v10352 = vpop.f32.mrb[0].mxu0
  %v10353 = vadd.f32 %v10064, %v10352
  %v10354 = vpop.f32.mrb[0].mxu0
  %v10355 = vpop.f32.mrb[0].mxu0
  %v10356 = vadd.f32 %v10067, %v10355
  %v10357 = vpop.f32.mrb[0].mxu0
  %10358 = vmatprep.mubr.bf16.mxu0 %v8306
  %10359 = vmatmul.mubr.bf16.gmra.mrb[0].mxu0 %v8305
  %v10360 = vpop.f32.mrb[0].mxu0
  %v10361 = vadd.f32 %v10072, %v10360
  %v10362 = vpop.f32.mrb[0].mxu0
  %v10363 = vpop.f32.mrb[0].mxu0
  %v10364 = vadd.f32 %v10075, %v10363
  %v10365 = vpop.f32.mrb[0].mxu0
  %10366 = vdwg.mxu0
  %10367 = vmatprep.subr.bf16.mxu0 0
  %10368 = vmatpush1.bf16.msra.mxu0 %v9404
  %10369 = vmatprep.subr.bf16.mxu0 0
  %10370 = vmatpush1.bf16.msra.mxu0 %v9405
  %10371 = vmatprep.subr.bf16.mxu0 0
  %10372 = vmatpush1.bf16.msra.mxu0 %v9406
  %10373 = vmatprep.subr.bf16.mxu0 0
  %10374 = vmatpush1.bf16.msra.mxu0 %v9407
  %10375 = vmatprep.subr.bf16.mxu0 0
  %10376 = vmatpush1.bf16.msra.mxu0 %v9408
  %10377 = vmatprep.subr.bf16.mxu0 0
  %10378 = vmatpush1.bf16.msra.mxu0 %v9409
  %10379 = vmatprep.subr.bf16.mxu0 0
  %10380 = vmatpush1.bf16.msra.mxu0 %v9410
  %10381 = vmatprep.subr.bf16.mxu0 0
  %10382 = vmatpush1.bf16.msra.mxu0 %v9411
  %10383 = vmatprep.subr.bf16.mxu0 0
  %10384 = vmatpush1.bf16.msra.mxu0 %v9412
  %10385 = vmatprep.subr.bf16.mxu0 0
  %10386 = vmatpush1.bf16.msra.mxu0 %v9413
  %10387 = vmatprep.subr.bf16.mxu0 0
  %10388 = vmatpush1.bf16.msra.mxu0 %v9414
  %10389 = vmatprep.subr.bf16.mxu0 0
  %10390 = vmatpush1.bf16.msra.mxu0 %v9415
  %10391 = vmatprep.subr.bf16.mxu0 0
  %10392 = vmatpush1.bf16.msra.mxu0 %v9416
  %10393 = vmatprep.subr.bf16.mxu0 0
  %10394 = vmatpush1.bf16.msra.mxu0 %v9417
  %10395 = vmatprep.subr.bf16.mxu0 0
  %10396 = vmatpush1.bf16.msra.mxu0 %v9418
  %10397 = vmatprep.subr.bf16.mxu0 0
  %10398 = vmatpush1.bf16.msra.mxu0 %v9419
  %10399 = vmatprep.mubr.bf16.mxu0 %v8029
  %10400 = vmatmul.mubr.bf16.gmra.mrb[0].mxu0 %v8028
  %v10401 = vpop.f32.mrb[0].mxu0
  %v10402 = vadd.f32 %v10113, %v10401
  %v10403 = vpop.f32.mrb[0].mxu0
  %v10404 = vpop.f32.mrb[0].mxu0
  %v10405 = vadd.f32 %v10116, %v10404
  %v10406 = vpop.f32.mrb[0].mxu0
  %10407 = vmatprep.mubr.bf16.mxu0 %v8038
  %10408 = vmatmul.mubr.bf16.gmra.mrb[0].mxu0 %v8037
  %v10409 = vpop.f32.mrb[0].mxu0
  %v10410 = vadd.f32 %v10121, %v10409
  %v10411 = vpop.f32.mrb[0].mxu0
  %v10412 = vpop.f32.mrb[0].mxu0
  %v10413 = vadd.f32 %v10124, %v10412
  %v10414 = vpop.f32.mrb[0].mxu0
  %10415 = vmatprep.mubr.bf16.mxu0 %v8047
  %10416 = vmatmul.mubr.bf16.gmra.mrb[0].mxu0 %v8046
  %v10417 = vpop.f32.mrb[0].mxu0
  %v10418 = vadd.f32 %v10129, %v10417
  %v10419 = vpop.f32.mrb[0].mxu0
  %v10420 = vpop.f32.mrb[0].mxu0
  %v10421 = vadd.f32 %v10132, %v10420
  %v10422 = vpop.f32.mrb[0].mxu0
  %10423 = vmatprep.mubr.bf16.mxu0 %v8056
  %10424 = vmatmul.mubr.bf16.gmra.mrb[0].mxu0 %v8055
  %v10425 = vpop.f32.mrb[0].mxu0
  %v10426 = vadd.f32 %v10137, %v10425
  %v10427 = vpop.f32.mrb[0].mxu0
  %v10428 = vpop.f32.mrb[0].mxu0
  %v10429 = vadd.f32 %v10140, %v10428
  %v10430 = vpop.f32.mrb[0].mxu0
  %10431 = vmatprep.mubr.bf16.mxu0 %v8065
  %10432 = vmatmul.mubr.bf16.gmra.mrb[0].mxu0 %v8064
  %v10433 = vpop.f32.mrb[0].mxu0
  %v10434 = vadd.f32 %v10145, %v10433
  %v10435 = vpop.f32.mrb[0].mxu0
  %v10436 = vpop.f32.mrb[0].mxu0
  %v10437 = vadd.f32 %v10148, %v10436
  %v10438 = vpop.f32.mrb[0].mxu0
  %10439 = vmatprep.mubr.bf16.mxu0 %v8074
  %10440 = vmatmul.mubr.bf16.gmra.mrb[0].mxu0 %v8073
  %v10441 = vpop.f32.mrb[0].mxu0
  %v10442 = vadd.f32 %v10153, %v10441
  %v10443 = vpop.f32.mrb[0].mxu0
  %v10444 = vpop.f32.mrb[0].mxu0
  %v10445 = vadd.f32 %v10156, %v10444
  %v10446 = vpop.f32.mrb[0].mxu0
  %10447 = vmatprep.mubr.bf16.mxu0 %v8083
  %10448 = vmatmul.mubr.bf16.gmra.mrb[0].mxu0 %v8082
  %v10449 = vpop.f32.mrb[0].mxu0
  %v10450 = vadd.f32 %v10161, %v10449
  %v10451 = vpop.f32.mrb[0].mxu0
  %v10452 = vpop.f32.mrb[0].mxu0
  %v10453 = vadd.f32 %v10164, %v10452
  %v10454 = vpop.f32.mrb[0].mxu0
  %10455 = vmatprep.mubr.bf16.mxu0 %v8092
  %10456 = vmatmul.mubr.bf16.gmra.mrb[0].mxu0 %v8091
  %v10457 = vpop.f32.mrb[0].mxu0
  %v10458 = vadd.f32 %v10169, %v10457
  %v10459 = vpop.f32.mrb[0].mxu0
  %v10460 = vpop.f32.mrb[0].mxu0
  %v10461 = vadd.f32 %v10172, %v10460
  %v10462 = vpop.f32.mrb[0].mxu0
  %10463 = vmatprep.mubr.bf16.mxu0 %v8101
  %10464 = vmatmul.mubr.bf16.gmra.mrb[0].mxu0 %v8100
  %v10465 = vpop.f32.mrb[0].mxu0
  %v10466 = vadd.f32 %v10177, %v10465
  %v10467 = vpop.f32.mrb[0].mxu0
  %v10468 = vpop.f32.mrb[0].mxu0
  %v10469 = vadd.f32 %v10180, %v10468
  %v10470 = vpop.f32.mrb[0].mxu0
  %10471 = vmatprep.mubr.bf16.mxu0 %v8110
  %10472 = vmatmul.mubr.bf16.gmra.mrb[0].mxu0 %v8109
  %v10473 = vpop.f32.mrb[0].mxu0
  %v10474 = vadd.f32 %v10185, %v10473
  %v10475 = vpop.f32.mrb[0].mxu0
  %v10476 = vpop.f32.mrb[0].mxu0
  %v10477 = vadd.f32 %v10188, %v10476
  %v10478 = vpop.f32.mrb[0].mxu0
  %10479 = vmatprep.mubr.bf16.mxu0 %v8119
  %10480 = vmatmul.mubr.bf16.gmra.mrb[0].mxu0 %v8118
  %v10481 = vpop.f32.mrb[0].mxu0
  %v10482 = vadd.f32 %v10193, %v10481
  %v10483 = vpop.f32.mrb[0].mxu0
  %v10484 = vpop.f32.mrb[0].mxu0
  %v10485 = vadd.f32 %v10196, %v10484
  %v10486 = vpop.f32.mrb[0].mxu0
  %10487 = vmatprep.mubr.bf16.mxu0 %v8128
  %10488 = vmatmul.mubr.bf16.gmra.mrb[0].mxu0 %v8127
  %v10489 = vpop.f32.mrb[0].mxu0
  %v10490 = vadd.f32 %v10201, %v10489
  %v10491 = vpop.f32.mrb[0].mxu0
  %v10492 = vpop.f32.mrb[0].mxu0
  %v10493 = vadd.f32 %v10204, %v10492
  %v10494 = vpop.f32.mrb[0].mxu0
  %10495 = vmatprep.mubr.bf16.mxu0 %v8137
  %10496 = vmatmul.mubr.bf16.gmra.mrb[0].mxu0 %v8136
  %v10497 = vpop.f32.mrb[0].mxu0
  %v10498 = vadd.f32 %v10209, %v10497
  %v10499 = vpop.f32.mrb[0].mxu0
  %v10500 = vpop.f32.mrb[0].mxu0
  %v10501 = vadd.f32 %v10212, %v10500
  %v10502 = vpop.f32.mrb[0].mxu0
  %10503 = vmatprep.mubr.bf16.mxu0 %v8146
  %10504 = vmatmul.mubr.bf16.gmra.mrb[0].mxu0 %v8145
  %v10505 = vpop.f32.mrb[0].mxu0
  %v10506 = vadd.f32 %v10217, %v10505
  %v10507 = vpop.f32.mrb[0].mxu0
  %v10508 = vpop.f32.mrb[0].mxu0
  %v10509 = vadd.f32 %v10220, %v10508
  %v10510 = vpop.f32.mrb[0].mxu0
  %10511 = vmatprep.mubr.bf16.mxu0 %v8155
  %10512 = vmatmul.mubr.bf16.gmra.mrb[0].mxu0 %v8154
  %v10513 = vpop.f32.mrb[0].mxu0
  %v10514 = vadd.f32 %v10225, %v10513
  %v10515 = vpop.f32.mrb[0].mxu0
  %v10516 = vpop.f32.mrb[0].mxu0
  %v10517 = vadd.f32 %v10228, %v10516
  %v10518 = vpop.f32.mrb[0].mxu0
  %10519 = vmatprep.mubr.bf16.mxu0 %v8164
  %10520 = vmatmul.mubr.bf16.gmra.mrb[0].mxu0 %v8163
  %v10521 = vpop.f32.mrb[0].mxu0
  %v10522 = vadd.f32 %v10233, %v10521
  %v10523 = vpop.f32.mrb[0].mxu0
  %v10524 = vpop.f32.mrb[0].mxu0
  %v10525 = vadd.f32 %v10236, %v10524
  %v10526 = vpop.f32.mrb[0].mxu0
  %10527 = vmatprep.mubr.bf16.mxu0 %v8173
  %10528 = vmatmul.mubr.bf16.gmra.mrb[0].mxu0 %v8172
  %v10529 = vpop.f32.mrb[0].mxu0
  %v10530 = vadd.f32 %v10241, %v10529
  %v10531 = vpop.f32.mrb[0].mxu0
  %v10532 = vpop.f32.mrb[0].mxu0
  %v10533 = vadd.f32 %v10244, %v10532
  %v10534 = vpop.f32.mrb[0].mxu0
  %10535 = vmatprep.mubr.bf16.mxu0 %v8182
  %10536 = vmatmul.mubr.bf16.gmra.mrb[0].mxu0 %v8181
  %v10537 = vpop.f32.mrb[0].mxu0
  %v10538 = vadd.f32 %v10249, %v10537
  %v10539 = vpop.f32.mrb[0].mxu0
  %v10540 = vpop.f32.mrb[0].mxu0
  %v10541 = vadd.f32 %v10252, %v10540
  %v10542 = vpop.f32.mrb[0].mxu0
  %10543 = vmatprep.mubr.bf16.mxu0 %v8191
  %10544 = vmatmul.mubr.bf16.gmra.mrb[0].mxu0 %v8190
  %v10545 = vpop.f32.mrb[0].mxu0
  %v10546 = vadd.f32 %v10257, %v10545
  %v10547 = vpop.f32.mrb[0].mxu0
  %v10548 = vpop.f32.mrb[0].mxu0
  %v10549 = vadd.f32 %v10260, %v10548
  %v10550 = vpop.f32.mrb[0].mxu0
  %10551 = vmatprep.mubr.bf16.mxu0 %v8200
  %10552 = vmatmul.mubr.bf16.gmra.mrb[0].mxu0 %v8199
  %v10553 = vpop.f32.mrb[0].mxu0
  %v10554 = vadd.f32 %v10265, %v10553
  %v10555 = vpop.f32.mrb[0].mxu0
  %v10556 = vpop.f32.mrb[0].mxu0
  %v10557 = vadd.f32 %v10268, %v10556
  %v10558 = vpop.f32.mrb[0].mxu0
  %10559 = vmatprep.mubr.bf16.mxu0 %v8209
  %10560 = vmatmul.mubr.bf16.gmra.mrb[0].mxu0 %v8208
  %v10561 = vpop.f32.mrb[0].mxu0
  %v10562 = vadd.f32 %v10273, %v10561
  %v10563 = vpop.f32.mrb[0].mxu0
  %v10564 = vpop.f32.mrb[0].mxu0
  %v10565 = vadd.f32 %v10276, %v10564
  %v10566 = vpop.f32.mrb[0].mxu0
  %10567 = vmatprep.mubr.bf16.mxu0 %v8218
  %10568 = vmatmul.mubr.bf16.gmra.mrb[0].mxu0 %v8217
  %v10569 = vpop.f32.mrb[0].mxu0
  %v10570 = vadd.f32 %v10281, %v10569
  %v10571 = vpop.f32.mrb[0].mxu0
  %v10572 = vpop.f32.mrb[0].mxu0
  %v10573 = vadd.f32 %v10284, %v10572
  %v10574 = vpop.f32.mrb[0].mxu0
  %10575 = vmatprep.mubr.bf16.mxu0 %v8227
  %10576 = vmatmul.mubr.bf16.gmra.mrb[0].mxu0 %v8226
  %v10577 = vpop.f32.mrb[0].mxu0
  %v10578 = vadd.f32 %v10289, %v10577
  %v10579 = vpop.f32.mrb[0].mxu0
  %v10580 = vpop.f32.mrb[0].mxu0
  %v10581 = vadd.f32 %v10292, %v10580
  %v10582 = vpop.f32.mrb[0].mxu0
  %10583 = vmatprep.mubr.bf16.mxu0 %v8236
  %10584 = vmatmul.mubr.bf16.gmra.mrb[0].mxu0 %v8235
  %v10585 = vpop.f32.mrb[0].mxu0
  %v10586 = vadd.f32 %v10297, %v10585
  %v10587 = vpop.f32.mrb[0].mxu0
  %v10588 = vpop.f32.mrb[0].mxu0
  %v10589 = vadd.f32 %v10300, %v10588
  %v10590 = vpop.f32.mrb[0].mxu0
  %10591 = vmatprep.mubr.bf16.mxu0 %v8245
  %10592 = vmatmul.mubr.bf16.gmra.mrb[0].mxu0 %v8244
  %v10593 = vpop.f32.mrb[0].mxu0
  %v10594 = vadd.f32 %v10305, %v10593
  %v10595 = vpop.f32.mrb[0].mxu0
  %v10596 = vpop.f32.mrb[0].mxu0
  %v10597 = vadd.f32 %v10308, %v10596
  %v10598 = vpop.f32.mrb[0].mxu0
  %10599 = vmatprep.mubr.bf16.mxu0 %v8254
  %10600 = vmatmul.mubr.bf16.gmra.mrb[0].mxu0 %v8253
  %v10601 = vpop.f32.mrb[0].mxu0
  %v10602 = vadd.f32 %v10313, %v10601
  %v10603 = vpop.f32.mrb[0].mxu0
  %v10604 = vpop.f32.mrb[0].mxu0
  %v10605 = vadd.f32 %v10316, %v10604
  %v10606 = vpop.f32.mrb[0].mxu0
  %10607 = vmatprep.mubr.bf16.mxu0 %v8263
  %10608 = vmatmul.mubr.bf16.gmra.mrb[0].mxu0 %v8262
  %v10609 = vpop.f32.mrb[0].mxu0
  %v10610 = vadd.f32 %v10321, %v10609
  %v10611 = vpop.f32.mrb[0].mxu0
  %v10612 = vpop.f32.mrb[0].mxu0
  %v10613 = vadd.f32 %v10324, %v10612
  %v10614 = vpop.f32.mrb[0].mxu0
  %10615 = vmatprep.mubr.bf16.mxu0 %v8272
  %10616 = vmatmul.mubr.bf16.gmra.mrb[0].mxu0 %v8271
  %v10617 = vpop.f32.mrb[0].mxu0
  %v10618 = vadd.f32 %v10329, %v10617
  %v10619 = vpop.f32.mrb[0].mxu0
  %v10620 = vpop.f32.mrb[0].mxu0
  %v10621 = vadd.f32 %v10332, %v10620
  %v10622 = vpop.f32.mrb[0].mxu0
  %10623 = vmatprep.mubr.bf16.mxu0 %v8281
  %10624 = vmatmul.mubr.bf16.gmra.mrb[0].mxu0 %v8280
  %v10625 = vpop.f32.mrb[0].mxu0
  %v10626 = vadd.f32 %v10337, %v10625
  %v10627 = vpop.f32.mrb[0].mxu0
  %v10628 = vpop.f32.mrb[0].mxu0
  %v10629 = vadd.f32 %v10340, %v10628
  %v10630 = vpop.f32.mrb[0].mxu0
  %10631 = vmatprep.mubr.bf16.mxu0 %v8290
  %10632 = vmatmul.mubr.bf16.gmra.mrb[0].mxu0 %v8289
  %v10633 = vpop.f32.mrb[0].mxu0
  %v10634 = vadd.f32 %v10345, %v10633
  %v10635 = vpop.f32.mrb[0].mxu0
  %v10636 = vpop.f32.mrb[0].mxu0
  %v10637 = vadd.f32 %v10348, %v10636
  %v10638 = vpop.f32.mrb[0].mxu0
  %10639 = vmatprep.mubr.bf16.mxu0 %v8299
  %10640 = vmatmul.mubr.bf16.gmra.mrb[0].mxu0 %v8298
  %v10641 = vpop.f32.mrb[0].mxu0
  %v10642 = vadd.f32 %v10353, %v10641
  %v10643 = vpop.f32.mrb[0].mxu0
  %v10644 = vpop.f32.mrb[0].mxu0
  %v10645 = vadd.f32 %v10356, %v10644
  %v10646 = vpop.f32.mrb[0].mxu0
  %10647 = vmatprep.mubr.bf16.mxu0 %v8308
  %10648 = vmatmul.mubr.bf16.gmra.mrb[0].mxu0 %v8307
  %v10649 = vpop.f32.mrb[0].mxu0
  %v10650 = vadd.f32 %v10361, %v10649
  %v10651 = vpop.f32.mrb[0].mxu0
  %v10652 = vpop.f32.mrb[0].mxu0
  %v10653 = vadd.f32 %v10364, %v10652
  %v10654 = vpop.f32.mrb[0].mxu0
  %10655 = vdwg.mxu0
  %10656 = vmatprep.subr.bf16.mxu0 0
  %10657 = vmatpush1.bf16.msra.mxu0 %v9420
  %10658 = vmatprep.subr.bf16.mxu0 0
  %10659 = vmatpush1.bf16.msra.mxu0 %v9421
  %10660 = vmatprep.subr.bf16.mxu0 0
  %10661 = vmatpush1.bf16.msra.mxu0 %v9422
  %10662 = vmatprep.subr.bf16.mxu0 0
  %10663 = vmatpush1.bf16.msra.mxu0 %v9423
  %10664 = vmatprep.subr.bf16.mxu0 0
  %10665 = vmatpush1.bf16.msra.mxu0 %v9424
  %10666 = vmatprep.subr.bf16.mxu0 0
  %10667 = vmatpush1.bf16.msra.mxu0 %v9425
  %10668 = vmatprep.subr.bf16.mxu0 0
  %10669 = vmatpush1.bf16.msra.mxu0 %v9426
  %10670 = vmatprep.subr.bf16.mxu0 0
  %10671 = vmatpush1.bf16.msra.mxu0 %v9427
  %10672 = vmatprep.subr.bf16.mxu0 0
  %10673 = vmatpush1.bf16.msra.mxu0 0
  %10674 = vmatprep.subr.bf16.mxu0 0
  %10675 = vmatpush1.bf16.msra.mxu0 0
  %10676 = vmatprep.subr.bf16.mxu0 0
  %10677 = vmatpush1.bf16.msra.mxu0 0
  %10678 = vmatprep.subr.bf16.mxu0 0
  %10679 = vmatpush1.bf16.msra.mxu0 0
  %10680 = vmatprep.subr.bf16.mxu0 0
  %10681 = vmatpush1.bf16.msra.mxu0 0
  %10682 = vmatprep.subr.bf16.mxu0 0
  %10683 = vmatpush1.bf16.msra.mxu0 0
  %10684 = vmatprep.subr.bf16.mxu0 0
  %10685 = vmatpush1.bf16.msra.mxu0 0
  %10686 = vmatprep.subr.bf16.mxu0 0
  %10687 = vmatpush1.bf16.msra.mxu0 0
  %10688 = vmatprep.mubr.bf16.mxu0 0
  %10689 = vmatmul.mubr.bf16.gmra.mrb[0].mxu0 %v8030
  %v10690 = vpop.f32.mrb[0].mxu0
  %v10691 = vadd.f32 %v10402, %v10690
  %v10692 = vpop.f32.mrb[0].mxu0
  %v10693 = vpop.f32.mrb[0].mxu0
  %v10694 = vadd.f32 %v10405, %v10693
  %v10695 = vpop.f32.mrb[0].mxu0
  %10696 = vmatprep.mubr.bf16.mxu0 0
  %10697 = vmatmul.mubr.bf16.gmra.mrb[0].mxu0 %v8039
  %v10698 = vpop.f32.mrb[0].mxu0
  %v10699 = vadd.f32 %v10410, %v10698
  %v10700 = vpop.f32.mrb[0].mxu0
  %v10701 = vpop.f32.mrb[0].mxu0
  %v10702 = vadd.f32 %v10413, %v10701
  %v10703 = vpop.f32.mrb[0].mxu0
  %10704 = vmatprep.mubr.bf16.mxu0 0
  %10705 = vmatmul.mubr.bf16.gmra.mrb[0].mxu0 %v8048
  %v10706 = vpop.f32.mrb[0].mxu0
  %v10707 = vadd.f32 %v10418, %v10706
  %v10708 = vpop.f32.mrb[0].mxu0
  %v10709 = vpop.f32.mrb[0].mxu0
  %v10710 = vadd.f32 %v10421, %v10709
  %v10711 = vpop.f32.mrb[0].mxu0
  %10712 = vmatprep.mubr.bf16.mxu0 0
  %10713 = vmatmul.mubr.bf16.gmra.mrb[0].mxu0 %v8057
  %v10714 = vpop.f32.mrb[0].mxu0
  %v10715 = vadd.f32 %v10426, %v10714
  %v10716 = vpop.f32.mrb[0].mxu0
  %v10717 = vpop.f32.mrb[0].mxu0
  %v10718 = vadd.f32 %v10429, %v10717
  %v10719 = vpop.f32.mrb[0].mxu0
  %10720 = vmatprep.mubr.bf16.mxu0 0
  %10721 = vmatmul.mubr.bf16.gmra.mrb[0].mxu0 %v8066
  %v10722 = vpop.f32.mrb[0].mxu0
  %v10723 = vadd.f32 %v10434, %v10722
  %v10724 = vpop.f32.mrb[0].mxu0
  %v10725 = vpop.f32.mrb[0].mxu0
  %v10726 = vadd.f32 %v10437, %v10725
  %v10727 = vpop.f32.mrb[0].mxu0
  %10728 = vmatprep.mubr.bf16.mxu0 0
  %10729 = vmatmul.mubr.bf16.gmra.mrb[0].mxu0 %v8075
  %v10730 = vpop.f32.mrb[0].mxu0
  %v10731 = vadd.f32 %v10442, %v10730
  %v10732 = vpop.f32.mrb[0].mxu0
  %v10733 = vpop.f32.mrb[0].mxu0
  %v10734 = vadd.f32 %v10445, %v10733
  %v10735 = vpop.f32.mrb[0].mxu0
  %10736 = vmatprep.mubr.bf16.mxu0 0
  %10737 = vmatmul.mubr.bf16.gmra.mrb[0].mxu0 %v8084
  %v10738 = vpop.f32.mrb[0].mxu0
  %v10739 = vadd.f32 %v10450, %v10738
  %v10740 = vpop.f32.mrb[0].mxu0
  %v10741 = vpop.f32.mrb[0].mxu0
  %v10742 = vadd.f32 %v10453, %v10741
  %v10743 = vpop.f32.mrb[0].mxu0
  %10744 = vmatprep.mubr.bf16.mxu0 0
  %10745 = vmatmul.mubr.bf16.gmra.mrb[0].mxu0 %v8093
  %v10746 = vpop.f32.mrb[0].mxu0
  %v10747 = vadd.f32 %v10458, %v10746
  %v10748 = vpop.f32.mrb[0].mxu0
  %v10749 = vpop.f32.mrb[0].mxu0
  %v10750 = vadd.f32 %v10461, %v10749
  %v10751 = vpop.f32.mrb[0].mxu0
  %10752 = vmatprep.mubr.bf16.mxu0 0
  %10753 = vmatmul.mubr.bf16.gmra.mrb[0].mxu0 %v8102
  %v10754 = vpop.f32.mrb[0].mxu0
  %v10755 = vadd.f32 %v10466, %v10754
  %v10756 = vpop.f32.mrb[0].mxu0
  %v10757 = vpop.f32.mrb[0].mxu0
  %v10758 = vadd.f32 %v10469, %v10757
  %v10759 = vpop.f32.mrb[0].mxu0
  %10760 = vmatprep.mubr.bf16.mxu0 0
  %10761 = vmatmul.mubr.bf16.gmra.mrb[0].mxu0 %v8111
  %v10762 = vpop.f32.mrb[0].mxu0
  %v10763 = vadd.f32 %v10474, %v10762
  %v10764 = vpop.f32.mrb[0].mxu0
  %v10765 = vpop.f32.mrb[0].mxu0
  %v10766 = vadd.f32 %v10477, %v10765
  %v10767 = vpop.f32.mrb[0].mxu0
  %10768 = vmatprep.mubr.bf16.mxu0 0
  %10769 = vmatmul.mubr.bf16.gmra.mrb[0].mxu0 %v8120
  %v10770 = vpop.f32.mrb[0].mxu0
  %v10771 = vadd.f32 %v10482, %v10770
  %v10772 = vpop.f32.mrb[0].mxu0
  %v10773 = vpop.f32.mrb[0].mxu0
  %v10774 = vadd.f32 %v10485, %v10773
  %v10775 = vpop.f32.mrb[0].mxu0
  %10776 = vmatprep.mubr.bf16.mxu0 0
  %10777 = vmatmul.mubr.bf16.gmra.mrb[0].mxu0 %v8129
  %v10778 = vpop.f32.mrb[0].mxu0
  %v10779 = vadd.f32 %v10490, %v10778
  %v10780 = vpop.f32.mrb[0].mxu0
  %v10781 = vpop.f32.mrb[0].mxu0
  %v10782 = vadd.f32 %v10493, %v10781
  %v10783 = vpop.f32.mrb[0].mxu0
  %10784 = vmatprep.mubr.bf16.mxu0 0
  %10785 = vmatmul.mubr.bf16.gmra.mrb[0].mxu0 %v8138
  %v10786 = vpop.f32.mrb[0].mxu0
  %v10787 = vadd.f32 %v10498, %v10786
  %v10788 = vpop.f32.mrb[0].mxu0
  %v10789 = vpop.f32.mrb[0].mxu0
  %v10790 = vadd.f32 %v10501, %v10789
  %v10791 = vpop.f32.mrb[0].mxu0
  %10792 = vmatprep.mubr.bf16.mxu0 0
  %10793 = vmatmul.mubr.bf16.gmra.mrb[0].mxu0 %v8147
  %v10794 = vpop.f32.mrb[0].mxu0
  %v10795 = vadd.f32 %v10506, %v10794
  %v10796 = vpop.f32.mrb[0].mxu0
  %v10797 = vpop.f32.mrb[0].mxu0
  %v10798 = vadd.f32 %v10509, %v10797
  %v10799 = vpop.f32.mrb[0].mxu0
  %10800 = vmatprep.mubr.bf16.mxu0 0
  %10801 = vmatmul.mubr.bf16.gmra.mrb[0].mxu0 %v8156
  %v10802 = vpop.f32.mrb[0].mxu0
  %v10803 = vadd.f32 %v10514, %v10802
  %v10804 = vpop.f32.mrb[0].mxu0
  %v10805 = vpop.f32.mrb[0].mxu0
  %v10806 = vadd.f32 %v10517, %v10805
  %v10807 = vpop.f32.mrb[0].mxu0
  %10808 = vmatprep.mubr.bf16.mxu0 0
  %10809 = vmatmul.mubr.bf16.gmra.mrb[0].mxu0 %v8165
  %v10810 = vpop.f32.mrb[0].mxu0
  %v10811 = vadd.f32 %v10522, %v10810
  %v10812 = vpop.f32.mrb[0].mxu0
  %v10813 = vpop.f32.mrb[0].mxu0
  %v10814 = vadd.f32 %v10525, %v10813
  %v10815 = vpop.f32.mrb[0].mxu0
  %10816 = vmatprep.mubr.bf16.mxu0 0
  %10817 = vmatmul.mubr.bf16.gmra.mrb[0].mxu0 %v8174
  %v10818 = vpop.f32.mrb[0].mxu0
  %v10819 = vadd.f32 %v10530, %v10818
  %v10820 = vpop.f32.mrb[0].mxu0
  %v10821 = vpop.f32.mrb[0].mxu0
  %v10822 = vadd.f32 %v10533, %v10821
  %v10823 = vpop.f32.mrb[0].mxu0
  %10824 = vmatprep.mubr.bf16.mxu0 0
  %10825 = vmatmul.mubr.bf16.gmra.mrb[0].mxu0 %v8183
  %v10826 = vpop.f32.mrb[0].mxu0
  %v10827 = vadd.f32 %v10538, %v10826
  %v10828 = vpop.f32.mrb[0].mxu0
  %v10829 = vpop.f32.mrb[0].mxu0
  %v10830 = vadd.f32 %v10541, %v10829
  %v10831 = vpop.f32.mrb[0].mxu0
  %10832 = vmatprep.mubr.bf16.mxu0 0
  %10833 = vmatmul.mubr.bf16.gmra.mrb[0].mxu0 %v8192
  %v10834 = vpop.f32.mrb[0].mxu0
  %v10835 = vadd.f32 %v10546, %v10834
  %v10836 = vpop.f32.mrb[0].mxu0
  %v10837 = vpop.f32.mrb[0].mxu0
  %v10838 = vadd.f32 %v10549, %v10837
  %v10839 = vpop.f32.mrb[0].mxu0
  %10840 = vmatprep.mubr.bf16.mxu0 0
  %10841 = vmatmul.mubr.bf16.gmra.mrb[0].mxu0 %v8201
  %v10842 = vpop.f32.mrb[0].mxu0
  %v10843 = vadd.f32 %v10554, %v10842
  %v10844 = vpop.f32.mrb[0].mxu0
  %v10845 = vpop.f32.mrb[0].mxu0
  %v10846 = vadd.f32 %v10557, %v10845
  %v10847 = vpop.f32.mrb[0].mxu0
  %10848 = vmatprep.mubr.bf16.mxu0 0
  %10849 = vmatmul.mubr.bf16.gmra.mrb[0].mxu0 %v8210
  %v10850 = vpop.f32.mrb[0].mxu0
  %v10851 = vadd.f32 %v10562, %v10850
  %v10852 = vpop.f32.mrb[0].mxu0
  %v10853 = vpop.f32.mrb[0].mxu0
  %v10854 = vadd.f32 %v10565, %v10853
  %v10855 = vpop.f32.mrb[0].mxu0
  %10856 = vmatprep.mubr.bf16.mxu0 0
  %10857 = vmatmul.mubr.bf16.gmra.mrb[0].mxu0 %v8219
  %v10858 = vpop.f32.mrb[0].mxu0
  %v10859 = vadd.f32 %v10570, %v10858
  %v10860 = vpop.f32.mrb[0].mxu0
  %v10861 = vpop.f32.mrb[0].mxu0
  %v10862 = vadd.f32 %v10573, %v10861
  %v10863 = vpop.f32.mrb[0].mxu0
  %10864 = vmatprep.mubr.bf16.mxu0 0
  %10865 = vmatmul.mubr.bf16.gmra.mrb[0].mxu0 %v8228
  %v10866 = vpop.f32.mrb[0].mxu0
  %v10867 = vadd.f32 %v10578, %v10866
  %v10868 = vpop.f32.mrb[0].mxu0
  %v10869 = vpop.f32.mrb[0].mxu0
  %v10870 = vadd.f32 %v10581, %v10869
  %v10871 = vpop.f32.mrb[0].mxu0
  %10872 = vmatprep.mubr.bf16.mxu0 0
  %10873 = vmatmul.mubr.bf16.gmra.mrb[0].mxu0 %v8237
  %v10874 = vpop.f32.mrb[0].mxu0
  %v10875 = vadd.f32 %v10586, %v10874
  %v10876 = vpop.f32.mrb[0].mxu0
  %v10877 = vpop.f32.mrb[0].mxu0
  %v10878 = vadd.f32 %v10589, %v10877
  %v10879 = vpop.f32.mrb[0].mxu0
  %10880 = vmatprep.mubr.bf16.mxu0 0
  %10881 = vmatmul.mubr.bf16.gmra.mrb[0].mxu0 %v8246
  %v10882 = vpop.f32.mrb[0].mxu0
  %v10883 = vadd.f32 %v10594, %v10882
  %v10884 = vpop.f32.mrb[0].mxu0
  %v10885 = vpop.f32.mrb[0].mxu0
  %v10886 = vadd.f32 %v10597, %v10885
  %v10887 = vpop.f32.mrb[0].mxu0
  %10888 = vmatprep.mubr.bf16.mxu0 0
  %10889 = vmatmul.mubr.bf16.gmra.mrb[0].mxu0 %v8255
  %v10890 = vpop.f32.mrb[0].mxu0
  %v10891 = vadd.f32 %v10602, %v10890
  %v10892 = vpop.f32.mrb[0].mxu0
  %v10893 = vpop.f32.mrb[0].mxu0
  %v10894 = vadd.f32 %v10605, %v10893
  %v10895 = vpop.f32.mrb[0].mxu0
  %10896 = vmatprep.mubr.bf16.mxu0 0
  %10897 = vmatmul.mubr.bf16.gmra.mrb[0].mxu0 %v8264
  %v10898 = vpop.f32.mrb[0].mxu0
  %v10899 = vadd.f32 %v10610, %v10898
  %v10900 = vpop.f32.mrb[0].mxu0
  %v10901 = vpop.f32.mrb[0].mxu0
  %v10902 = vadd.f32 %v10613, %v10901
  %v10903 = vpop.f32.mrb[0].mxu0
  %10904 = vmatprep.mubr.bf16.mxu0 0
  %10905 = vmatmul.mubr.bf16.gmra.mrb[0].mxu0 %v8273
  %v10906 = vpop.f32.mrb[0].mxu0
  %v10907 = vadd.f32 %v10618, %v10906
  %v10908 = vpop.f32.mrb[0].mxu0
  %v10909 = vpop.f32.mrb[0].mxu0
  %v10910 = vadd.f32 %v10621, %v10909
  %v10911 = vpop.f32.mrb[0].mxu0
  %10912 = vmatprep.mubr.bf16.mxu0 0
  %10913 = vmatmul.mubr.bf16.gmra.mrb[0].mxu0 %v8282
  %v10914 = vpop.f32.mrb[0].mxu0
  %v10915 = vadd.f32 %v10626, %v10914
  %v10916 = vpop.f32.mrb[0].mxu0
  %v10917 = vpop.f32.mrb[0].mxu0
  %v10918 = vadd.f32 %v10629, %v10917
  %v10919 = vpop.f32.mrb[0].mxu0
  %10920 = vmatprep.mubr.bf16.mxu0 0
  %10921 = vmatmul.mubr.bf16.gmra.mrb[0].mxu0 %v8291
  %v10922 = vpop.f32.mrb[0].mxu0
  %v10923 = vadd.f32 %v10634, %v10922
  %v10924 = vpop.f32.mrb[0].mxu0
  %v10925 = vpop.f32.mrb[0].mxu0
  %v10926 = vadd.f32 %v10637, %v10925
  %v10927 = vpop.f32.mrb[0].mxu0
  %10928 = vmatprep.mubr.bf16.mxu0 0
  %10929 = vmatmul.mubr.bf16.gmra.mrb[0].mxu0 %v8300
  %v10930 = vpop.f32.mrb[0].mxu0
  %v10931 = vadd.f32 %v10642, %v10930
  %v10932 = vpop.f32.mrb[0].mxu0
  %v10933 = vpop.f32.mrb[0].mxu0
  %v10934 = vadd.f32 %v10645, %v10933
  %v10935 = vpop.f32.mrb[0].mxu0
  %10936 = vmatprep.mubr.bf16.mxu0 0
  %10937 = vmatmul.mubr.bf16.gmra.mrb[0].mxu0 %v8309
  %v10938 = vpop.f32.mrb[0].mxu0
  %v10939 = vadd.f32 %v10650, %v10938
  %v10940 = vpop.f32.mrb[0].mxu0
  %v10941 = vpop.f32.mrb[0].mxu0
  %v10942 = vadd.f32 %v10653, %v10941
  %v10943 = vpop.f32.mrb[0].mxu0
  %10944 = vdwg.mxu0
  %v10945 = vld [vmem:[%s6] sm:$0x1]
  %v10947 = vlaneseq
  %v10948 = vshrl.u32 %v10947, 7
  %v10949 = vsub.s32 0, %v10948
  %v10950 = vrot.slane %v10945, %v10949
  %v10952 = vadd.f32 %v10691, %v10950
  %v10953 = vadd.f32 %v10694, %v10950
  %v10954 = vadd.f32 %v10699, %v10950
  %v10955 = vadd.f32 %v10702, %v10950
  %v10956 = vadd.f32 %v10707, %v10950
  %v10957 = vadd.f32 %v10710, %v10950
  %v10958 = vadd.f32 %v10715, %v10950
  %v10959 = vadd.f32 %v10718, %v10950
  %v10960 = vadd.f32 %v10723, %v10950
  %v10961 = vadd.f32 %v10726, %v10950
  %v10962 = vadd.f32 %v10731, %v10950
  %v10963 = vadd.f32 %v10734, %v10950
  %v10964 = vadd.f32 %v10739, %v10950
  %v10965 = vadd.f32 %v10742, %v10950
  %v10966 = vadd.f32 %v10747, %v10950
  %v10967 = vadd.f32 %v10750, %v10950
  %v10968 = vadd.f32 %v10755, %v10950
  %v10969 = vadd.f32 %v10758, %v10950
  %v10970 = vadd.f32 %v10763, %v10950
  %v10971 = vadd.f32 %v10766, %v10950
  %v10972 = vadd.f32 %v10771, %v10950
  %v10973 = vadd.f32 %v10774, %v10950
  %v10974 = vadd.f32 %v10779, %v10950
  %v10975 = vadd.f32 %v10782, %v10950
  %v10976 = vadd.f32 %v10787, %v10950
  %v10977 = vadd.f32 %v10790, %v10950
  %v10978 = vadd.f32 %v10795, %v10950
  %v10979 = vadd.f32 %v10798, %v10950
  %v10980 = vadd.f32 %v10803, %v10950
  %v10981 = vadd.f32 %v10806, %v10950
  %v10982 = vadd.f32 %v10811, %v10950
  %v10983 = vadd.f32 %v10814, %v10950
  %v10984 = vadd.f32 %v10819, %v10950
  %v10985 = vadd.f32 %v10822, %v10950
  %v10986 = vadd.f32 %v10827, %v10950
  %v10987 = vadd.f32 %v10830, %v10950
  %v10988 = vadd.f32 %v10835, %v10950
  %v10989 = vadd.f32 %v10838, %v10950
  %v10990 = vadd.f32 %v10843, %v10950
  %v10991 = vadd.f32 %v10846, %v10950
  %v10992 = vadd.f32 %v10851, %v10950
  %v10993 = vadd.f32 %v10854, %v10950
  %v10994 = vadd.f32 %v10859, %v10950
  %v10995 = vadd.f32 %v10862, %v10950
  %v10996 = vadd.f32 %v10867, %v10950
  %v10997 = vadd.f32 %v10870, %v10950
  %v10998 = vadd.f32 %v10875, %v10950
  %v10999 = vadd.f32 %v10878, %v10950
  %v11000 = vadd.f32 %v10883, %v10950
  %v11001 = vadd.f32 %v10886, %v10950
  %v11002 = vadd.f32 %v10891, %v10950
  %v11003 = vadd.f32 %v10894, %v10950
  %v11004 = vadd.f32 %v10899, %v10950
  %v11005 = vadd.f32 %v10902, %v10950
  %v11006 = vadd.f32 %v10907, %v10950
  %v11007 = vadd.f32 %v10910, %v10950
  %v11008 = vadd.f32 %v10915, %v10950
  %v11009 = vadd.f32 %v10918, %v10950
  %v11010 = vadd.f32 %v10923, %v10950
  %v11011 = vadd.f32 %v10926, %v10950
  %v11012 = vadd.f32 %v10931, %v10950
  %v11013 = vadd.f32 %v10934, %v10950
  %v11014 = vadd.f32 %v10939, %v10950
  %v11015 = vadd.f32 %v10942, %v10950
  %vm11016 = vcmp.gt.f32.partialorder %v10952, 0.0
  %vm11017 = vcmp.gt.f32.partialorder %v10953, 0.0
  %vm11018 = vcmp.gt.f32.partialorder %v10954, 0.0
  %vm11019 = vcmp.gt.f32.partialorder %v10955, 0.0
  %vm11020 = vcmp.gt.f32.partialorder %v10956, 0.0
  %vm11021 = vcmp.gt.f32.partialorder %v10957, 0.0
  %vm11022 = vcmp.gt.f32.partialorder %v10958, 0.0
  %vm11023 = vcmp.gt.f32.partialorder %v10959, 0.0
  %vm11024 = vcmp.gt.f32.partialorder %v10960, 0.0
  %vm11025 = vcmp.gt.f32.partialorder %v10961, 0.0
  %vm11026 = vcmp.gt.f32.partialorder %v10962, 0.0
  %vm11027 = vcmp.gt.f32.partialorder %v10963, 0.0
  %vm11028 = vcmp.gt.f32.partialorder %v10964, 0.0
  %vm11029 = vcmp.gt.f32.partialorder %v10965, 0.0
  %vm11030 = vcmp.gt.f32.partialorder %v10966, 0.0
  %vm11031 = vcmp.gt.f32.partialorder %v10967, 0.0
  %vm11032 = vcmp.gt.f32.partialorder %v10968, 0.0
  %vm11033 = vcmp.gt.f32.partialorder %v10969, 0.0
  %vm11034 = vcmp.gt.f32.partialorder %v10970, 0.0
  %vm11035 = vcmp.gt.f32.partialorder %v10971, 0.0
  %vm11036 = vcmp.gt.f32.partialorder %v10972, 0.0
  %vm11037 = vcmp.gt.f32.partialorder %v10973, 0.0
  %vm11038 = vcmp.gt.f32.partialorder %v10974, 0.0
  %vm11039 = vcmp.gt.f32.partialorder %v10975, 0.0
  %vm11040 = vcmp.gt.f32.partialorder %v10976, 0.0
  %vm11041 = vcmp.gt.f32.partialorder %v10977, 0.0
  %vm11042 = vcmp.gt.f32.partialorder %v10978, 0.0
  %vm11043 = vcmp.gt.f32.partialorder %v10979, 0.0
  %vm11044 = vcmp.gt.f32.partialorder %v10980, 0.0
  %vm11045 = vcmp.gt.f32.partialorder %v10981, 0.0
  %vm11046 = vcmp.gt.f32.partialorder %v10982, 0.0
  %vm11047 = vcmp.gt.f32.partialorder %v10983, 0.0
  %vm11048 = vcmp.gt.f32.partialorder %v10984, 0.0
  %vm11049 = vcmp.gt.f32.partialorder %v10985, 0.0
  %vm11050 = vcmp.gt.f32.partialorder %v10986, 0.0
  %vm11051 = vcmp.gt.f32.partialorder %v10987, 0.0
  %vm11052 = vcmp.gt.f32.partialorder %v10988, 0.0
  %vm11053 = vcmp.gt.f32.partialorder %v10989, 0.0
  %vm11054 = vcmp.gt.f32.partialorder %v10990, 0.0
  %vm11055 = vcmp.gt.f32.partialorder %v10991, 0.0
  %vm11056 = vcmp.gt.f32.partialorder %v10992, 0.0
  %vm11057 = vcmp.gt.f32.partialorder %v10993, 0.0
  %vm11058 = vcmp.gt.f32.partialorder %v10994, 0.0
  %vm11059 = vcmp.gt.f32.partialorder %v10995, 0.0
  %vm11060 = vcmp.gt.f32.partialorder %v10996, 0.0
  %vm11061 = vcmp.gt.f32.partialorder %v10997, 0.0
  %vm11062 = vcmp.gt.f32.partialorder %v10998, 0.0
  %vm11063 = vcmp.gt.f32.partialorder %v10999, 0.0
  %vm11064 = vcmp.gt.f32.partialorder %v11000, 0.0
  %vm11065 = vcmp.gt.f32.partialorder %v11001, 0.0
  %vm11066 = vcmp.gt.f32.partialorder %v11002, 0.0
  %vm11067 = vcmp.gt.f32.partialorder %v11003, 0.0
  %vm11068 = vcmp.gt.f32.partialorder %v11004, 0.0
  %vm11069 = vcmp.gt.f32.partialorder %v11005, 0.0
  %vm11070 = vcmp.gt.f32.partialorder %v11006, 0.0
  %vm11071 = vcmp.gt.f32.partialorder %v11007, 0.0
  %vm11072 = vcmp.gt.f32.partialorder %v11008, 0.0
  %vm11073 = vcmp.gt.f32.partialorder %v11009, 0.0
  %vm11074 = vcmp.gt.f32.partialorder %v11010, 0.0
  %vm11075 = vcmp.gt.f32.partialorder %v11011, 0.0
  %vm11076 = vcmp.gt.f32.partialorder %v11012, 0.0
  %vm11077 = vcmp.gt.f32.partialorder %v11013, 0.0
  %vm11078 = vcmp.gt.f32.partialorder %v11014, 0.0
  %vm11079 = vcmp.gt.f32.partialorder %v11015, 0.0
  %v11080 = vmin.f32 %v10952, 0.0
  %v11081 = vmin.f32 %v10953, 0.0
  %v11082 = vmin.f32 %v10954, 0.0
  %v11083 = vmin.f32 %v10955, 0.0
  %v11084 = vmin.f32 %v10956, 0.0
  %v11085 = vmin.f32 %v10957, 0.0
  %v11086 = vmin.f32 %v10958, 0.0
  %v11087 = vmin.f32 %v10959, 0.0
  %v11088 = vmin.f32 %v10960, 0.0
  %v11089 = vmin.f32 %v10961, 0.0
  %v11090 = vmin.f32 %v10962, 0.0
  %v11091 = vmin.f32 %v10963, 0.0
  %v11092 = vmin.f32 %v10964, 0.0
  %v11093 = vmin.f32 %v10965, 0.0
  %v11094 = vmin.f32 %v10966, 0.0
  %v11095 = vmin.f32 %v10967, 0.0
  %v11096 = vmin.f32 %v10968, 0.0
  %v11097 = vmin.f32 %v10969, 0.0
  %v11098 = vmin.f32 %v10970, 0.0
  %v11099 = vmin.f32 %v10971, 0.0
  %v11100 = vmin.f32 %v10972, 0.0
  %v11101 = vmin.f32 %v10973, 0.0
  %v11102 = vmin.f32 %v10974, 0.0
  %v11103 = vmin.f32 %v10975, 0.0
  %v11104 = vmin.f32 %v10976, 0.0
  %v11105 = vmin.f32 %v10977, 0.0
  %v11106 = vmin.f32 %v10978, 0.0
  %v11107 = vmin.f32 %v10979, 0.0
  %v11108 = vmin.f32 %v10980, 0.0
  %v11109 = vmin.f32 %v10981, 0.0
  %v11110 = vmin.f32 %v10982, 0.0
  %v11111 = vmin.f32 %v10983, 0.0
  %v11112 = vmin.f32 %v10984, 0.0
  %v11113 = vmin.f32 %v10985, 0.0
  %v11114 = vmin.f32 %v10986, 0.0
  %v11115 = vmin.f32 %v10987, 0.0
  %v11116 = vmin.f32 %v10988, 0.0
  %v11117 = vmin.f32 %v10989, 0.0
  %v11118 = vmin.f32 %v10990, 0.0
  %v11119 = vmin.f32 %v10991, 0.0
  %v11120 = vmin.f32 %v10992, 0.0
  %v11121 = vmin.f32 %v10993, 0.0
  %v11122 = vmin.f32 %v10994, 0.0
  %v11123 = vmin.f32 %v10995, 0.0
  %v11124 = vmin.f32 %v10996, 0.0
  %v11125 = vmin.f32 %v10997, 0.0
  %v11126 = vmin.f32 %v10998, 0.0
  %v11127 = vmin.f32 %v10999, 0.0
  %v11128 = vmin.f32 %v11000, 0.0
  %v11129 = vmin.f32 %v11001, 0.0
  %v11130 = vmin.f32 %v11002, 0.0
  %v11131 = vmin.f32 %v11003, 0.0
  %v11132 = vmin.f32 %v11004, 0.0
  %v11133 = vmin.f32 %v11005, 0.0
  %v11134 = vmin.f32 %v11006, 0.0
  %v11135 = vmin.f32 %v11007, 0.0
  %v11136 = vmin.f32 %v11008, 0.0
  %v11137 = vmin.f32 %v11009, 0.0
  %v11138 = vmin.f32 %v11010, 0.0
  %v11139 = vmin.f32 %v11011, 0.0
  %v11140 = vmin.f32 %v11012, 0.0
  %v11141 = vmin.f32 %v11013, 0.0
  %v11142 = vmin.f32 %v11014, 0.0
  %v11143 = vmin.f32 %v11015, 0.0
  %v11144 = vmul.f32 %v11080, 1.442695
  %v11145 = vpow.pop %v11144
  %v11146 = vmul.f32 %v11081, 1.442695
  %v11147 = vpow.pop %v11146
  %v11148 = vmul.f32 %v11082, 1.442695
  %v11149 = vpow.pop %v11148
  %v11150 = vmul.f32 %v11083, 1.442695
  %v11151 = vpow.pop %v11150
  %v11152 = vmul.f32 %v11084, 1.442695
  %v11153 = vpow.pop %v11152
  %v11154 = vmul.f32 %v11085, 1.442695
  %v11155 = vpow.pop %v11154
  %v11156 = vmul.f32 %v11086, 1.442695
  %v11157 = vpow.pop %v11156
  %v11158 = vmul.f32 %v11087, 1.442695
  %v11159 = vpow.pop %v11158
  %v11160 = vmul.f32 %v11088, 1.442695
  %v11161 = vpow.pop %v11160
  %v11162 = vmul.f32 %v11089, 1.442695
  %v11163 = vpow.pop %v11162
  %v11164 = vmul.f32 %v11090, 1.442695
  %v11165 = vpow.pop %v11164
  %v11166 = vmul.f32 %v11091, 1.442695
  %v11167 = vpow.pop %v11166
  %v11168 = vmul.f32 %v11092, 1.442695
  %v11169 = vpow.pop %v11168
  %v11170 = vmul.f32 %v11093, 1.442695
  %v11171 = vpow.pop %v11170
  %v11172 = vmul.f32 %v11094, 1.442695
  %v11173 = vpow.pop %v11172
  %v11174 = vmul.f32 %v11095, 1.442695
  %v11175 = vpow.pop %v11174
  %v11176 = vmul.f32 %v11096, 1.442695
  %v11177 = vpow.pop %v11176
  %v11178 = vmul.f32 %v11097, 1.442695
  %v11179 = vpow.pop %v11178
  %v11180 = vmul.f32 %v11098, 1.442695
  %v11181 = vpow.pop %v11180
  %v11182 = vmul.f32 %v11099, 1.442695
  %v11183 = vpow.pop %v11182
  %v11184 = vmul.f32 %v11100, 1.442695
  %v11185 = vpow.pop %v11184
  %v11186 = vmul.f32 %v11101, 1.442695
  %v11187 = vpow.pop %v11186
  %v11188 = vmul.f32 %v11102, 1.442695
  %v11189 = vpow.pop %v11188
  %v11190 = vmul.f32 %v11103, 1.442695
  %v11191 = vpow.pop %v11190
  %v11192 = vmul.f32 %v11104, 1.442695
  %v11193 = vpow.pop %v11192
  %v11194 = vmul.f32 %v11105, 1.442695
  %v11195 = vpow.pop %v11194
  %v11196 = vmul.f32 %v11106, 1.442695
  %v11197 = vpow.pop %v11196
  %v11198 = vmul.f32 %v11107, 1.442695
  %v11199 = vpow.pop %v11198
  %v11200 = vmul.f32 %v11108, 1.442695
  %v11201 = vpow.pop %v11200
  %v11202 = vmul.f32 %v11109, 1.442695
  %v11203 = vpow.pop %v11202
  %v11204 = vmul.f32 %v11110, 1.442695
  %v11205 = vpow.pop %v11204
  %v11206 = vmul.f32 %v11111, 1.442695
  %v11207 = vpow.pop %v11206
  %v11208 = vmul.f32 %v11112, 1.442695
  %v11209 = vpow.pop %v11208
  %v11210 = vmul.f32 %v11113, 1.442695
  %v11211 = vpow.pop %v11210
  %v11212 = vmul.f32 %v11114, 1.442695
  %v11213 = vpow.pop %v11212
  %v11214 = vmul.f32 %v11115, 1.442695
  %v11215 = vpow.pop %v11214
  %v11216 = vmul.f32 %v11116, 1.442695
  %v11217 = vpow.pop %v11216
  %v11218 = vmul.f32 %v11117, 1.442695
  %v11219 = vpow.pop %v11218
  %v11220 = vmul.f32 %v11118, 1.442695
  %v11221 = vpow.pop %v11220
  %v11222 = vmul.f32 %v11119, 1.442695
  %v11223 = vpow.pop %v11222
  %v11224 = vmul.f32 %v11120, 1.442695
  %v11225 = vpow.pop %v11224
  %v11226 = vmul.f32 %v11121, 1.442695
  %v11227 = vpow.pop %v11226
  %v11228 = vmul.f32 %v11122, 1.442695
  %v11229 = vpow.pop %v11228
  %v11230 = vmul.f32 %v11123, 1.442695
  %v11231 = vpow.pop %v11230
  %v11232 = vmul.f32 %v11124, 1.442695
  %v11233 = vpow.pop %v11232
  %v11234 = vmul.f32 %v11125, 1.442695
  %v11235 = vpow.pop %v11234
  %v11236 = vmul.f32 %v11126, 1.442695
  %v11237 = vpow.pop %v11236
  %v11238 = vmul.f32 %v11127, 1.442695
  %v11239 = vpow.pop %v11238
  %v11240 = vmul.f32 %v11128, 1.442695
  %v11241 = vpow.pop %v11240
  %v11242 = vmul.f32 %v11129, 1.442695
  %v11243 = vpow.pop %v11242
  %v11244 = vmul.f32 %v11130, 1.442695
  %v11245 = vpow.pop %v11244
  %v11246 = vmul.f32 %v11131, 1.442695
  %v11247 = vpow.pop %v11246
  %v11248 = vmul.f32 %v11132, 1.442695
  %v11249 = vpow.pop %v11248
  %v11250 = vmul.f32 %v11133, 1.442695
  %v11251 = vpow.pop %v11250
  %v11252 = vmul.f32 %v11134, 1.442695
  %v11253 = vpow.pop %v11252
  %v11254 = vmul.f32 %v11135, 1.442695
  %v11255 = vpow.pop %v11254
  %v11256 = vmul.f32 %v11136, 1.442695
  %v11257 = vpow.pop %v11256
  %v11258 = vmul.f32 %v11137, 1.442695
  %v11259 = vpow.pop %v11258
  %v11260 = vmul.f32 %v11138, 1.442695
  %v11261 = vpow.pop %v11260
  %v11262 = vmul.f32 %v11139, 1.442695
  %v11263 = vpow.pop %v11262
  %v11264 = vmul.f32 %v11140, 1.442695
  %v11265 = vpow.pop %v11264
  %v11266 = vmul.f32 %v11141, 1.442695
  %v11267 = vpow.pop %v11266
  %v11268 = vmul.f32 %v11142, 1.442695
  %v11269 = vpow.pop %v11268
  %v11270 = vmul.f32 %v11143, 1.442695
  %v11271 = vpow.pop %v11270
  %v11272 = vsub.f32 %v11145, 1.0
  %v11273 = vsub.f32 %v11147, 1.0
  %v11274 = vsub.f32 %v11149, 1.0
  %v11275 = vsub.f32 %v11151, 1.0
  %v11276 = vsub.f32 %v11153, 1.0
  %v11277 = vsub.f32 %v11155, 1.0
  %v11278 = vsub.f32 %v11157, 1.0
  %v11279 = vsub.f32 %v11159, 1.0
  %v11280 = vsub.f32 %v11161, 1.0
  %v11281 = vsub.f32 %v11163, 1.0
  %v11282 = vsub.f32 %v11165, 1.0
  %v11283 = vsub.f32 %v11167, 1.0
  %v11284 = vsub.f32 %v11169, 1.0
  %v11285 = vsub.f32 %v11171, 1.0
  %v11286 = vsub.f32 %v11173, 1.0
  %v11287 = vsub.f32 %v11175, 1.0
  %v11288 = vsub.f32 %v11177, 1.0
  %v11289 = vsub.f32 %v11179, 1.0
  %v11290 = vsub.f32 %v11181, 1.0
  %v11291 = vsub.f32 %v11183, 1.0
  %v11292 = vsub.f32 %v11185, 1.0
  %v11293 = vsub.f32 %v11187, 1.0
  %v11294 = vsub.f32 %v11189, 1.0
  %v11295 = vsub.f32 %v11191, 1.0
  %v11296 = vsub.f32 %v11193, 1.0
  %v11297 = vsub.f32 %v11195, 1.0
  %v11298 = vsub.f32 %v11197, 1.0
  %v11299 = vsub.f32 %v11199, 1.0
  %v11300 = vsub.f32 %v11201, 1.0
  %v11301 = vsub.f32 %v11203, 1.0
  %v11302 = vsub.f32 %v11205, 1.0
  %v11303 = vsub.f32 %v11207, 1.0
  %v11304 = vsub.f32 %v11209, 1.0
  %v11305 = vsub.f32 %v11211, 1.0
  %v11306 = vsub.f32 %v11213, 1.0
  %v11307 = vsub.f32 %v11215, 1.0
  %v11308 = vsub.f32 %v11217, 1.0
  %v11309 = vsub.f32 %v11219, 1.0
  %v11310 = vsub.f32 %v11221, 1.0
  %v11311 = vsub.f32 %v11223, 1.0
  %v11312 = vsub.f32 %v11225, 1.0
  %v11313 = vsub.f32 %v11227, 1.0
  %v11314 = vsub.f32 %v11229, 1.0
  %v11315 = vsub.f32 %v11231, 1.0
  %v11316 = vsub.f32 %v11233, 1.0
  %v11317 = vsub.f32 %v11235, 1.0
  %v11318 = vsub.f32 %v11237, 1.0
  %v11319 = vsub.f32 %v11239, 1.0
  %v11320 = vsub.f32 %v11241, 1.0
  %v11321 = vsub.f32 %v11243, 1.0
  %v11322 = vsub.f32 %v11245, 1.0
  %v11323 = vsub.f32 %v11247, 1.0
  %v11324 = vsub.f32 %v11249, 1.0
  %v11325 = vsub.f32 %v11251, 1.0
  %v11326 = vsub.f32 %v11253, 1.0
  %v11327 = vsub.f32 %v11255, 1.0
  %v11328 = vsub.f32 %v11257, 1.0
  %v11329 = vsub.f32 %v11259, 1.0
  %v11330 = vsub.f32 %v11261, 1.0
  %v11331 = vsub.f32 %v11263, 1.0
  %v11332 = vsub.f32 %v11265, 1.0
  %v11333 = vsub.f32 %v11267, 1.0
  %v11334 = vsub.f32 %v11269, 1.0
  %v11335 = vsub.f32 %v11271, 1.0
  %v11336 = vsel %vm11016, %v10952, %v11272
  %v11337 = vsel %vm11017, %v10953, %v11273
  %v11338 = vsel %vm11018, %v10954, %v11274
  %v11339 = vsel %vm11019, %v10955, %v11275
  %v11340 = vsel %vm11020, %v10956, %v11276
  %v11341 = vsel %vm11021, %v10957, %v11277
  %v11342 = vsel %vm11022, %v10958, %v11278
  %v11343 = vsel %vm11023, %v10959, %v11279
  %v11344 = vsel %vm11024, %v10960, %v11280
  %v11345 = vsel %vm11025, %v10961, %v11281
  %v11346 = vsel %vm11026, %v10962, %v11282
  %v11347 = vsel %vm11027, %v10963, %v11283
  %v11348 = vsel %vm11028, %v10964, %v11284
  %v11349 = vsel %vm11029, %v10965, %v11285
  %v11350 = vsel %vm11030, %v10966, %v11286
  %v11351 = vsel %vm11031, %v10967, %v11287
  %v11352 = vsel %vm11032, %v10968, %v11288
  %v11353 = vsel %vm11033, %v10969, %v11289
  %v11354 = vsel %vm11034, %v10970, %v11290
  %v11355 = vsel %vm11035, %v10971, %v11291
  %v11356 = vsel %vm11036, %v10972, %v11292
  %v11357 = vsel %vm11037, %v10973, %v11293
  %v11358 = vsel %vm11038, %v10974, %v11294
  %v11359 = vsel %vm11039, %v10975, %v11295
  %v11360 = vsel %vm11040, %v10976, %v11296
  %v11361 = vsel %vm11041, %v10977, %v11297
  %v11362 = vsel %vm11042, %v10978, %v11298
  %v11363 = vsel %vm11043, %v10979, %v11299
  %v11364 = vsel %vm11044, %v10980, %v11300
  %v11365 = vsel %vm11045, %v10981, %v11301
  %v11366 = vsel %vm11046, %v10982, %v11302
  %v11367 = vsel %vm11047, %v10983, %v11303
  %v11368 = vsel %vm11048, %v10984, %v11304
  %v11369 = vsel %vm11049, %v10985, %v11305
  %v11370 = vsel %vm11050, %v10986, %v11306
  %v11371 = vsel %vm11051, %v10987, %v11307
  %v11372 = vsel %vm11052, %v10988, %v11308
  %v11373 = vsel %vm11053, %v10989, %v11309
  %v11374 = vsel %vm11054, %v10990, %v11310
  %v11375 = vsel %vm11055, %v10991, %v11311
  %v11376 = vsel %vm11056, %v10992, %v11312
  %v11377 = vsel %vm11057, %v10993, %v11313
  %v11378 = vsel %vm11058, %v10994, %v11314
  %v11379 = vsel %vm11059, %v10995, %v11315
  %v11380 = vsel %vm11060, %v10996, %v11316
  %v11381 = vsel %vm11061, %v10997, %v11317
  %v11382 = vsel %vm11062, %v10998, %v11318
  %v11383 = vsel %vm11063, %v10999, %v11319
  %v11384 = vsel %vm11064, %v11000, %v11320
  %v11385 = vsel %vm11065, %v11001, %v11321
  %v11386 = vsel %vm11066, %v11002, %v11322
  %v11387 = vsel %vm11067, %v11003, %v11323
  %v11388 = vsel %vm11068, %v11004, %v11324
  %v11389 = vsel %vm11069, %v11005, %v11325
  %v11390 = vsel %vm11070, %v11006, %v11326
  %v11391 = vsel %vm11071, %v11007, %v11327
  %v11392 = vsel %vm11072, %v11008, %v11328
  %v11393 = vsel %vm11073, %v11009, %v11329
  %v11394 = vsel %vm11074, %v11010, %v11330
  %v11395 = vsel %vm11075, %v11011, %v11331
  %v11396 = vsel %vm11076, %v11012, %v11332
  %v11397 = vsel %vm11077, %v11013, %v11333
  %v11398 = vsel %vm11078, %v11014, %v11334
  %v11399 = vsel %vm11079, %v11015, %v11335
  %v11400 = vpack.c.bf16 %v11337, %v11336
  %v11401 = vpack.c.bf16 %v11339, %v11338
  %v11402 = vpack.c.bf16 %v11341, %v11340
  %v11403 = vpack.c.bf16 %v11343, %v11342
  %v11404 = vpack.c.bf16 %v11345, %v11344
  %v11405 = vpack.c.bf16 %v11347, %v11346
  %v11406 = vpack.c.bf16 %v11349, %v11348
  %v11407 = vpack.c.bf16 %v11351, %v11350
  %v11408 = vpack.c.bf16 %v11353, %v11352
  %v11409 = vpack.c.bf16 %v11355, %v11354
  %v11410 = vpack.c.bf16 %v11357, %v11356
  %v11411 = vpack.c.bf16 %v11359, %v11358
  %v11412 = vpack.c.bf16 %v11361, %v11360
  %v11413 = vpack.c.bf16 %v11363, %v11362
  %v11414 = vpack.c.bf16 %v11365, %v11364
  %v11415 = vpack.c.bf16 %v11367, %v11366
  %v11416 = vpack.c.bf16 %v11369, %v11368
  %v11417 = vpack.c.bf16 %v11371, %v11370
  %v11418 = vpack.c.bf16 %v11373, %v11372
  %v11419 = vpack.c.bf16 %v11375, %v11374
  %v11420 = vpack.c.bf16 %v11377, %v11376
  %v11421 = vpack.c.bf16 %v11379, %v11378
  %v11422 = vpack.c.bf16 %v11381, %v11380
  %v11423 = vpack.c.bf16 %v11383, %v11382
  %v11424 = vpack.c.bf16 %v11385, %v11384
  %v11425 = vpack.c.bf16 %v11387, %v11386
  %v11426 = vpack.c.bf16 %v11389, %v11388
  %v11427 = vpack.c.bf16 %v11391, %v11390
  %v11428 = vpack.c.bf16 %v11393, %v11392
  %v11429 = vpack.c.bf16 %v11395, %v11394
  %v11430 = vpack.c.bf16 %v11397, %v11396
  %v11431 = vpack.c.bf16 %v11399, %v11398
  %v11464 = vunpack.c.l.b16 %v11400
  %v11465 = vunpack.c.h.b16 %v11400
  %v11466 = vunpack.c.l.b16 %v11401
  %v11467 = vunpack.c.h.b16 %v11401
  %v11468 = vunpack.c.l.b16 %v11402
  %v11469 = vunpack.c.h.b16 %v11402
  %v11470 = vunpack.c.l.b16 %v11403
  %v11471 = vunpack.c.h.b16 %v11403
  %v11472 = vunpack.c.l.b16 %v11404
  %v11473 = vunpack.c.h.b16 %v11404
  %v11474 = vunpack.c.l.b16 %v11405
  %v11475 = vunpack.c.h.b16 %v11405
  %v11476 = vunpack.c.l.b16 %v11406
  %v11477 = vunpack.c.h.b16 %v11406
  %v11478 = vunpack.c.l.b16 %v11407
  %v11479 = vunpack.c.h.b16 %v11407
  %v11480 = vunpack.c.l.b16 %v11408
  %v11481 = vunpack.c.h.b16 %v11408
  %v11482 = vunpack.c.l.b16 %v11409
  %v11483 = vunpack.c.h.b16 %v11409
  %v11484 = vunpack.c.l.b16 %v11410
  %v11485 = vunpack.c.h.b16 %v11410
  %v11486 = vunpack.c.l.b16 %v11411
  %v11487 = vunpack.c.h.b16 %v11411
  %v11488 = vunpack.c.l.b16 %v11412
  %v11489 = vunpack.c.h.b16 %v11412
  %v11490 = vunpack.c.l.b16 %v11413
  %v11491 = vunpack.c.h.b16 %v11413
  %v11492 = vunpack.c.l.b16 %v11414
  %v11493 = vunpack.c.h.b16 %v11414
  %v11494 = vunpack.c.l.b16 %v11415
  %v11495 = vunpack.c.h.b16 %v11415
  %v11496 = vunpack.c.l.b16 %v11416
  %v11497 = vunpack.c.h.b16 %v11416
  %v11498 = vunpack.c.l.b16 %v11417
  %v11499 = vunpack.c.h.b16 %v11417
  %v11500 = vunpack.c.l.b16 %v11418
  %v11501 = vunpack.c.h.b16 %v11418
  %v11502 = vunpack.c.l.b16 %v11419
  %v11503 = vunpack.c.h.b16 %v11419
  %v11504 = vunpack.c.l.b16 %v11420
  %v11505 = vunpack.c.h.b16 %v11420
  %v11506 = vunpack.c.l.b16 %v11421
  %v11507 = vunpack.c.h.b16 %v11421
  %v11508 = vunpack.c.l.b16 %v11422
  %v11509 = vunpack.c.h.b16 %v11422
  %v11510 = vunpack.c.l.b16 %v11423
  %v11511 = vunpack.c.h.b16 %v11423
  %v11512 = vunpack.c.l.b16 %v11424
  %v11513 = vunpack.c.h.b16 %v11424
  %v11514 = vunpack.c.l.b16 %v11425
  %v11515 = vunpack.c.h.b16 %v11425
  %v11516 = vunpack.c.l.b16 %v11426
  %v11517 = vunpack.c.h.b16 %v11426
  %v11518 = vunpack.c.l.b16 %v11427
  %v11519 = vunpack.c.h.b16 %v11427
  %v11520 = vunpack.c.l.b16 %v11428
  %v11521 = vunpack.c.h.b16 %v11428
  %v11522 = vunpack.c.l.b16 %v11429
  %v11523 = vunpack.c.h.b16 %v11429
  %v11524 = vunpack.c.l.b16 %v11430
  %v11525 = vunpack.c.h.b16 %v11430
  %v11526 = vunpack.c.l.b16 %v11431
  %v11527 = vunpack.c.h.b16 %v11431
  %v11528 = vpack.c.b16 %v11464, %v11464
  %v11529 = vpack.c.b16 %v11465, %v11465
  %v11530 = vpack.c.b16 %v11466, %v11466
  %v11531 = vpack.c.b16 %v11467, %v11467
  %v11532 = vpack.c.b16 %v11468, %v11468
  %v11533 = vpack.c.b16 %v11469, %v11469
  %v11534 = vpack.c.b16 %v11470, %v11470
  %v11535 = vpack.c.b16 %v11471, %v11471
  %v11536 = vpack.c.b16 %v11472, %v11472
  %v11537 = vpack.c.b16 %v11473, %v11473
  %v11538 = vpack.c.b16 %v11474, %v11474
  %v11539 = vpack.c.b16 %v11475, %v11475
  %v11540 = vpack.c.b16 %v11476, %v11476
  %v11541 = vpack.c.b16 %v11477, %v11477
  %v11542 = vpack.c.b16 %v11478, %v11478
  %v11543 = vpack.c.b16 %v11479, %v11479
  %v11544 = vpack.c.b16 %v11480, %v11480
  %v11545 = vpack.c.b16 %v11481, %v11481
  %v11546 = vpack.c.b16 %v11482, %v11482
  %v11547 = vpack.c.b16 %v11483, %v11483
  %v11548 = vpack.c.b16 %v11484, %v11484
  %v11549 = vpack.c.b16 %v11485, %v11485
  %v11550 = vpack.c.b16 %v11486, %v11486
  %v11551 = vpack.c.b16 %v11487, %v11487
  %v11552 = vpack.c.b16 %v11488, %v11488
  %v11553 = vpack.c.b16 %v11489, %v11489
  %v11554 = vpack.c.b16 %v11490, %v11490
  %v11555 = vpack.c.b16 %v11491, %v11491
  %v11556 = vpack.c.b16 %v11492, %v11492
  %v11557 = vpack.c.b16 %v11493, %v11493
  %v11558 = vpack.c.b16 %v11494, %v11494
  %v11559 = vpack.c.b16 %v11495, %v11495
  %v11560 = vpack.c.b16 %v11496, %v11496
  %v11561 = vpack.c.b16 %v11497, %v11497
  %v11562 = vpack.c.b16 %v11498, %v11498
  %v11563 = vpack.c.b16 %v11499, %v11499
  %v11564 = vpack.c.b16 %v11500, %v11500
  %v11565 = vpack.c.b16 %v11501, %v11501
  %v11566 = vpack.c.b16 %v11502, %v11502
  %v11567 = vpack.c.b16 %v11503, %v11503
  %v11568 = vpack.c.b16 %v11504, %v11504
  %v11569 = vpack.c.b16 %v11505, %v11505
  %v11570 = vpack.c.b16 %v11506, %v11506
  %v11571 = vpack.c.b16 %v11507, %v11507
  %v11572 = vpack.c.b16 %v11508, %v11508
  %v11573 = vpack.c.b16 %v11509, %v11509
  %v11574 = vpack.c.b16 %v11510, %v11510
  %v11575 = vpack.c.b16 %v11511, %v11511
  %v11576 = vpack.c.b16 %v11512, %v11512
  %v11577 = vpack.c.b16 %v11513, %v11513
  %v11578 = vpack.c.b16 %v11514, %v11514
  %v11579 = vpack.c.b16 %v11515, %v11515
  %v11580 = vpack.c.b16 %v11516, %v11516
  %v11581 = vpack.c.b16 %v11517, %v11517
  %v11582 = vpack.c.b16 %v11518, %v11518
  %v11583 = vpack.c.b16 %v11519, %v11519
  %v11584 = vpack.c.b16 %v11520, %v11520
  %v11585 = vpack.c.b16 %v11521, %v11521
  %v11586 = vpack.c.b16 %v11522, %v11522
  %v11587 = vpack.c.b16 %v11523, %v11523
  %v11588 = vpack.c.b16 %v11524, %v11524
  %v11589 = vpack.c.b16 %v11525, %v11525
  %v11590 = vpack.c.b16 %v11526, %v11526
  %v11591 = vpack.c.b16 %v11527, %v11527
  %11656 = vst [vmem:[%s7] sm:$0xf] %v11528
  %11657 = vst [vmem:[%s7 + $0x4] sm:$0xf] %v11529
  %11658 = vst [vmem:[%s7 + $0x8] sm:$0xf] %v11530
  %11659 = vst [vmem:[%s7 + $0xc] sm:$0xf] %v11531
  %11660 = vst [vmem:[%s7 + $0x10] sm:$0xf] %v11532
  %11661 = vst [vmem:[%s7 + $0x14] sm:$0xf] %v11533
  %11662 = vst [vmem:[%s7 + $0x18] sm:$0xf] %v11534
  %11663 = vst [vmem:[%s7 + $0x1c] sm:$0xf] %v11535
  %11664 = vst [vmem:[%s7 + $0x20] sm:$0xf] %v11536
  %11665 = vst [vmem:[%s7 + $0x24] sm:$0xf] %v11537
  %11666 = vst [vmem:[%s7 + $0x28] sm:$0xf] %v11538
  %11667 = vst [vmem:[%s7 + $0x2c] sm:$0xf] %v11539
  %11668 = vst [vmem:[%s7 + $0x30] sm:$0xf] %v11540
  %11669 = vst [vmem:[%s7 + $0x34] sm:$0xf] %v11541
  %11670 = vst [vmem:[%s7 + $0x38] sm:$0xf] %v11542
  %11671 = vst [vmem:[%s7 + $0x3c] sm:$0xf] %v11543
  %11672 = vst [vmem:[%s7 + $0x40] sm:$0xf] %v11544
  %11673 = vst [vmem:[%s7 + $0x44] sm:$0xf] %v11545
  %11674 = vst [vmem:[%s7 + $0x48] sm:$0xf] %v11546
  %11675 = vst [vmem:[%s7 + $0x4c] sm:$0xf] %v11547
  %11676 = vst [vmem:[%s7 + $0x50] sm:$0xf] %v11548
  %11677 = vst [vmem:[%s7 + $0x54] sm:$0xf] %v11549
  %11678 = vst [vmem:[%s7 + $0x58] sm:$0xf] %v11550
  %11679 = vst [vmem:[%s7 + $0x5c] sm:$0xf] %v11551
  %11680 = vst [vmem:[%s7 + $0x60] sm:$0xf] %v11552
  %11681 = vst [vmem:[%s7 + $0x64] sm:$0xf] %v11553
  %11682 = vst [vmem:[%s7 + $0x68] sm:$0xf] %v11554
  %11683 = vst [vmem:[%s7 + $0x6c] sm:$0xf] %v11555
  %11684 = vst [vmem:[%s7 + $0x70] sm:$0xf] %v11556
  %11685 = vst [vmem:[%s7 + $0x74] sm:$0xf] %v11557
  %11686 = vst [vmem:[%s7 + $0x78] sm:$0xf] %v11558
  %11687 = vst [vmem:[%s7 + $0x7c] sm:$0xf] %v11559
  %11688 = vst [vmem:[%s7 + $0x80] sm:$0xf] %v11560
  %11689 = vst [vmem:[%s7 + $0x84] sm:$0xf] %v11561
  %11690 = vst [vmem:[%s7 + $0x88] sm:$0xf] %v11562
  %11691 = vst [vmem:[%s7 + $0x8c] sm:$0xf] %v11563
  %11692 = vst [vmem:[%s7 + $0x90] sm:$0xf] %v11564
  %11693 = vst [vmem:[%s7 + $0x94] sm:$0xf] %v11565
  %11694 = vst [vmem:[%s7 + $0x98] sm:$0xf] %v11566
  %11695 = vst [vmem:[%s7 + $0x9c] sm:$0xf] %v11567
  %11696 = vst [vmem:[%s7 + $0xa0] sm:$0xf] %v11568
  %11697 = vst [vmem:[%s7 + $0xa4] sm:$0xf] %v11569
  %11698 = vst [vmem:[%s7 + $0xa8] sm:$0xf] %v11570
  %11699 = vst [vmem:[%s7 + $0xac] sm:$0xf] %v11571
  %11700 = vst [vmem:[%s7 + $0xb0] sm:$0xf] %v11572
  %11701 = vst [vmem:[%s7 + $0xb4] sm:$0xf] %v11573
  %11702 = vst [vmem:[%s7 + $0xb8] sm:$0xf] %v11574
  %11703 = vst [vmem:[%s7 + $0xbc] sm:$0xf] %v11575
  %11704 = vst [vmem:[%s7 + $0xc0] sm:$0xf] %v11576
  %11705 = vst [vmem:[%s7 + $0xc4] sm:$0xf] %v11577
  %11706 = vst [vmem:[%s7 + $0xc8] sm:$0xf] %v11578
  %11707 = vst [vmem:[%s7 + $0xcc] sm:$0xf] %v11579
  %11708 = vst [vmem:[%s7 + $0xd0] sm:$0xf] %v11580
  %11709 = vst [vmem:[%s7 + $0xd4] sm:$0xf] %v11581
  %11710 = vst [vmem:[%s7 + $0xd8] sm:$0xf] %v11582
  %11711 = vst [vmem:[%s7 + $0xdc] sm:$0xf] %v11583
  %11712 = vst [vmem:[%s7 + $0xe0] sm:$0xf] %v11584
  %11713 = vst [vmem:[%s7 + $0xe4] sm:$0xf] %v11585
  %11714 = vst [vmem:[%s7 + $0xe8] sm:$0xf] %v11586
  %11715 = vst [vmem:[%s7 + $0xec] sm:$0xf] %v11587
  %11716 = vst [vmem:[%s7 + $0xf0] sm:$0xf] %v11588
  %11717 = vst [vmem:[%s7 + $0xf4] sm:$0xf] %v11589
  %11718 = vst [vmem:[%s7 + $0xf8] sm:$0xf] %v11590
  %11719 = vst [vmem:[%s7 + $0xfc] sm:$0xf] %v11591
  // Predicated region
  $region30: #{_lambda_.1} parent=0 // pred_check
    _
  $region31: #{_lambda_.1} parent=0 // pred_check_branch
    %11721 = sbr.rel (0) target = $region33
  $region32: #{_lambda_.1} parent=0 // pred_region
    _
  $region33: #{_lambda_.1} parent=0 // pred_fallthru
    _
  // Predicated region
  $region34: #{_lambda_.1} parent=0 // pred_check
    _
  $region35: #{_lambda_.1} parent=0 // pred_check_branch
    %11723 = sbr.rel (0) target = $region37
  $region36: #{_lambda_.1} parent=0 // pred_region
    _
  $region37: #{_lambda_.1} parent=0 // pred_fallthru
    _

</llo_original>
